<compile_context>
chip_gen: v5e
topology: v5e:2x2
jax: 0.10.0
libtpu: 0.0.40
codegen_flags: <defaults>
</compile_context>

<pallas_src>
import numpy as np
import jax
import jax.numpy as jnp
from jax import lax
from jax.experimental import pallas as pl
from jax.experimental.pallas import tpu as pltpu


# ---------------------------------------------------------------------------
# Host-side constants: bilinear 2x upsample (align_corners=False) as matrices.
# ---------------------------------------------------------------------------
def _row_upsample_matrix(h_in):
    """(2*h_in + 4, h_in): 2x bilinear row upsample w/ clamped edges, plus two
    zero rows top & bottom (the conv's H padding)."""
    m = np.zeros((2 * h_in + 4, h_in), np.float32)
    for i in range(h_in):
        m[2 + 2 * i, max(i - 1, 0)] += 0.25
        m[2 + 2 * i, i] += 0.75
        m[2 + 2 * i + 1, i] += 0.75
        m[2 + 2 * i + 1, min(i + 1, h_in - 1)] += 0.25
    return m


def _col_upsample_taps(w_in):
    """D[kw, w_out, j] = A_pad[w_out + kw, j] where A is the (2*w_in, w_in)
    2x bilinear column-upsample matrix, zero-padded by 2 rows on each side
    (the conv's W padding)."""
    a = np.zeros((2 * w_in + 4, w_in), np.float32)
    for j in range(w_in):
        a[2 + 2 * j, max(j - 1, 0)] += 0.25
        a[2 + 2 * j, j] += 0.75
        a[2 + 2 * j + 1, j] += 0.75
        a[2 + 2 * j + 1, min(j + 1, w_in - 1)] += 0.25
    w_out = 2 * w_in
    d = np.zeros((5, w_out, w_in), np.float32)
    for kw in range(5):
        d[kw] = a[kw:kw + w_out]
    return d


def _fold_conv(w_hwio, w_in, k_width=None):
    """Fold column-upsample + column padding + kw taps into the conv weight.

    w_hwio: (5, 5, Cin, Cout).  Returns M: (5, k_width*Cin, 2*w_in*Cout) such
    that  y[h, w*Cout+co] = sum_kh (P[kh:kh+Hout] @ M[kh])[h, w*Cout+co],
    where P is the row-upsampled, row-padded input in (H, W*Cin) lane layout.
    k_width > w_in lets the kernel feed an uncropped width (extra K rows = 0),
    which folds the `[:, :7]` column crop into the matmul."""
    d = jnp.asarray(_col_upsample_taps(w_in))                 # (5, 2*w_in, w_in)
    cin, cout = w_hwio.shape[2], w_hwio.shape[3]
    m = jnp.einsum('xwj,hxio->hjiwo', d, w_hwio)              # (5, w_in, Cin, 2*w_in, Cout)
    if k_width is None:
        k_width = w_in
    if k_width > w_in:
        pad = jnp.zeros((5, k_width - w_in, cin, 2 * w_in, cout), jnp.float32)
        m = jnp.concatenate([m, pad], axis=1)
    return m.reshape(5, k_width * cin, 2 * w_in * cout)


# ---------------------------------------------------------------------------
# Fused decoder kernel: one grid step == one batch element, all in VMEM.
# ---------------------------------------------------------------------------
def _decoder_kernel(x_ref, wfc_ref, bfc_ref,
                    bp1_ref, m1_ref, b1_ref,
                    bp2_ref, m2_ref, b2_ref,
                    bp3_ref, m3_ref, b3_ref,
                    o_ref):
    f32 = jnp.float32
    row_w = bfc_ref.shape[1]                                  # 4*C1 lanes per seed row

    # --- preprocess: Linear (one MXU matmul) -> (4, 4*C1) seed in (H, W*C) ---
    h = jnp.dot(x_ref[0], wfc_ref[...], preferred_element_type=f32)   # (1, 16*C1)
    seed = jnp.concatenate(
        [h[:, r * row_w:(r + 1) * row_w] for r in range(4)], axis=0)  # (4, 4*C1)
    seed = jnp.maximum(seed + bfc_ref[...], 0.0)

    def stage(x, bp_ref, m_ref, b_ref, h_out, act):
        # Row upsample + clamp + 2-row zero pad: one small matmul.
        p = jnp.dot(bp_ref[...], x, preferred_element_type=f32)       # (2H+4, Win*Cin)
        # 5x5 conv: column upsample / padding / crop / kw taps are all folded
        # into m_ref; only 5 sublane-shifted slices + 5 accumulated matmuls.
        acc = jnp.dot(p[0:h_out], m_ref[0], preferred_element_type=f32)
        for kh in range(1, 5):
            acc = acc + jnp.dot(p[kh:kh + h_out], m_ref[kh],
                                preferred_element_type=f32)
        acc = acc + b_ref[...]
        if act == "relu":
            return jnp.maximum(acc, 0.0)
        return jax.nn.sigmoid(acc)

    y1 = stage(seed, bp1_ref, m1_ref, b1_ref, 8, "relu")      # (8, 8*C2)
    y2 = stage(y1[0:7, :], bp2_ref, m2_ref, b2_ref, 14, "relu")  # (14, 14*C3)  (crop folded)
    y3 = stage(y2, bp3_ref, m3_ref, b3_ref, 28, "sigmoid")    # (28, 28) lane-dense

    o_ref[0] = y3


# ---------------------------------------------------------------------------
# Wrapper: one-time weight re-layout + a single fused pallas_call.
# ---------------------------------------------------------------------------
def decoder_forward(params, x, dim):
    B = x.shape[0]
    C1, C2, C3 = 4 * dim, 2 * dim, dim

    # Linear weights/bias permuted to the merged (H, W*C) seed layout.
    wfc_m = (params["w_fc"].reshape(dim, C1, 4, 4)
             .transpose(0, 2, 3, 1).reshape(dim, 16 * C1))            # (dim, 16*C1)
    bfc_seed = (params["b_fc"].reshape(C1, 4, 4)
                .transpose(1, 2, 0).reshape(4, 4 * C1))               # (4, 4*C1)

    # Row-upsample(+pad) matrices and column-upsample-folded conv weights.
    bp1 = jnp.asarray(_row_upsample_matrix(4))                        # (12, 4)
    bp2 = jnp.asarray(_row_upsample_matrix(7))                        # (18, 7)
    bp3 = jnp.asarray(_row_upsample_matrix(14))                       # (32, 14)
    m1 = _fold_conv(params["w_c1"], 4)                                # (5, 4*C1, 8*C2)
    m2 = _fold_conv(params["w_c2"], 7, k_width=8)                     # (5, 8*C2, 14*C3)
    m3 = _fold_conv(params["w_c3"], 14)                               # (5, 14*C3, 28)

    # Biases in merged lane layout (value depends only on co).
    b1_m = jnp.tile(params["b_c1"], 8)[None, :]                       # (1, 8*C2)
    b2_m = jnp.tile(params["b_c2"], 14)[None, :]                      # (1, 14*C3)
    b3_m = jnp.tile(params["b_c3"], 28)[None, :]                      # (1, 28)

    full2 = lambda a: pl.BlockSpec(a.shape, lambda b: (0, 0))
    full3 = lambda a: pl.BlockSpec(a.shape, lambda b: (0, 0, 0))

    out = pl.pallas_call(
        _decoder_kernel,
        out_shape=jax.ShapeDtypeStruct((B, 28, 28), jnp.float32),
        grid_spec=pltpu.PrefetchScalarGridSpec(
            num_scalar_prefetch=0,
            grid=(B,),
            in_specs=[
                pl.BlockSpec((1, 1, dim), lambda b: (b, 0, 0)),
                full2(wfc_m), full2(bfc_seed),
                full2(bp1), full3(m1), full2(b1_m),
                full2(bp2), full3(m2), full2(b2_m),
                full2(bp3), full3(m3), full2(b3_m),
            ],
            out_specs=pl.BlockSpec((1, 28, 28), lambda b: (b, 0, 0)),
        ),
        compiler_params=pltpu.CompilerParams(
            dimension_semantics=("parallel",),
            vmem_limit_bytes=32 * 1024 * 1024),
    )(x.reshape(B, 1, dim), wfc_m, bfc_seed,
      bp1, m1, b1_m, bp2, m2, b2_m, bp3, m3, b3_m)

    return out.reshape(B, 1, 28, 28)


# ---------------------------------------------------------------------------
# Parameters (deterministic init); weight_norm(dim=None): w = g*v/||v||, g=||v||
# ---------------------------------------------------------------------------
def _weight_norm(v):
    g = jnp.sqrt(jnp.sum(v * v))
    return g * v / jnp.sqrt(jnp.sum(v * v))


def init_params(key, dim):
    ks = jax.random.split(key, 8)
    n = lambda k, shp: 0.05 * jax.random.normal(k, shp, jnp.float32)
    return {
        "w_fc": _weight_norm(n(ks[0], (dim, 4 * 4 * 4 * dim))),
        "b_fc": n(ks[1], (4 * 4 * 4 * dim,)),
        "w_c1": _weight_norm(n(ks[2], (5, 5, 4 * dim, 2 * dim))),   # HWIO
        "b_c1": n(ks[3], (2 * dim,)),
        "w_c2": _weight_norm(n(ks[4], (5, 5, 2 * dim, dim))),
        "b_c2": n(ks[5], (dim,)),
        "w_c3": _weight_norm(n(ks[6], (5, 5, dim, 1))),
        "b_c3": n(ks[7], (1,)),
    }


# ---------------------------------------------------------------------------
# Pure-JAX reference (lax.conv) for the correctness check
# ---------------------------------------------------------------------------
def _up1d_ref(x, axis):
    x = jnp.moveaxis(x, axis, 0)
    xm = jnp.concatenate([x[:1], x[:-1]], axis=0)
    xp = jnp.concatenate([x[1:], x[-1:]], axis=0)
    ev = 0.25 * xm + 0.75 * x
    od = 0.75 * x + 0.25 * xp
    y = jnp.stack([ev, od], axis=1).reshape((2 * x.shape[0],) + x.shape[1:])
    return jnp.moveaxis(y, 0, axis)


def decoder_forward_ref(params, x, dim):
    B = x.shape[0]
    h = jnp.maximum(x @ params["w_fc"] + params["b_fc"], 0.0)
    h = h.reshape(B, 4 * dim, 4, 4).transpose(0, 2, 3, 1)

    def conv(h, w, b):
        return lax.conv_general_dilated(
            h, w, (1, 1), [(2, 2), (2, 2)],
            dimension_numbers=("NHWC", "HWIO", "NHWC")) + b

    up = lambda t: _up1d_ref(_up1d_ref(t, 1), 2)
    h = up(h)
    h = jnp.maximum(conv(h, params["w_c1"], params["b_c1"]), 0.0)
    h = h[:, :7, :7, :]
    h = up(h)
    h = jnp.maximum(conv(h, params["w_c2"], params["b_c2"]), 0.0)
    h = up(h)
    h = jax.nn.sigmoid(conv(h, params["w_c3"], params["b_c3"]))
    return h.transpose(0, 3, 1, 2).reshape(-1, 1, 28, 28)


if __name__ == "__main__":
    dim = 24
    B = 2
    key = jax.random.PRNGKey(0)
    kx, kp = jax.random.split(key)
    x = jax.random.normal(kx, (B, dim), jnp.float32)
    params = init_params(kp, dim)

    fwd = jax.jit(decoder_forward, static_argnums=2)
    out = jax.block_until_ready(fwd(params, x, dim))
    assert out.shape == (B, 1, 28, 28), out.shape

    ref = jax.block_until_ready(decoder_forward_ref(params, x, dim))
    if not bool(jnp.allclose(out, ref, rtol=1e-4, atol=1e-4)):
        err = float(jnp.max(jnp.abs(out - ref)))
        raise AssertionError(f"Pallas decoder mismatch vs reference (max abs err {err})")

    print("KERNEL_OK")
</pallas_src>

<mosaic_0001>
module attributes {stable_mosaic.version = 11 : i64} {
  func.func @_decoder_kernel(%arg0: i32, %arg1: memref<1x1x24xf32, #tpu.memory_space<vmem>>, %arg2: memref<24x1536xf32, #tpu.memory_space<vmem>>, %arg3: memref<4x384xf32, #tpu.memory_space<vmem>>, %arg4: memref<12x4xf32, #tpu.memory_space<vmem>>, %arg5: memref<5x384x384xf32, #tpu.memory_space<vmem>>, %arg6: memref<1x384xf32, #tpu.memory_space<vmem>>, %arg7: memref<18x7xf32, #tpu.memory_space<vmem>>, %arg8: memref<5x384x336xf32, #tpu.memory_space<vmem>>, %arg9: memref<1x336xf32, #tpu.memory_space<vmem>>, %arg10: memref<32x14xf32, #tpu.memory_space<vmem>>, %arg11: memref<5x336x28xf32, #tpu.memory_space<vmem>>, %arg12: memref<1x28xf32, #tpu.memory_space<vmem>>, %arg13: memref<1x28x28xf32, #tpu.memory_space<vmem>>) attributes {dimension_semantics = [#tpu.dimension_semantics<parallel>], iteration_bounds = array<i64: 2>, scalar_prefetch = 0 : i64, scratch_operands = 0 : i64, tpu.core_type = #tpu.core_type<tc>, window_params = [{transform_indices = @transform_0, window_bounds = array<i64: 1, 1, 24>}, {pipeline_mode = #tpu.pipeline_mode<synchronous>, transform_indices = @transform_1, window_bounds = array<i64: 24, 1536>}, {pipeline_mode = #tpu.pipeline_mode<synchronous>, transform_indices = @transform_2, window_bounds = array<i64: 4, 384>}, {pipeline_mode = #tpu.pipeline_mode<synchronous>, transform_indices = @transform_3, window_bounds = array<i64: 12, 4>}, {pipeline_mode = #tpu.pipeline_mode<synchronous>, transform_indices = @transform_4, window_bounds = array<i64: 5, 384, 384>}, {pipeline_mode = #tpu.pipeline_mode<synchronous>, transform_indices = @transform_5, window_bounds = array<i64: 1, 384>}, {pipeline_mode = #tpu.pipeline_mode<synchronous>, transform_indices = @transform_6, window_bounds = array<i64: 18, 7>}, {pipeline_mode = #tpu.pipeline_mode<synchronous>, transform_indices = @transform_7, window_bounds = array<i64: 5, 384, 336>}, {pipeline_mode = #tpu.pipeline_mode<synchronous>, transform_indices = @transform_8, window_bounds = array<i64: 1, 336>}, {pipeline_mode = #tpu.pipeline_mode<synchronous>, transform_indices = @transform_9, window_bounds = array<i64: 32, 14>}, {pipeline_mode = #tpu.pipeline_mode<synchronous>, transform_indices = @transform_10, window_bounds = array<i64: 5, 336, 28>}, {pipeline_mode = #tpu.pipeline_mode<synchronous>, transform_indices = @transform_11, window_bounds = array<i64: 1, 28>}, {transform_indices = @transform_12, window_bounds = array<i64: 1, 28, 28>}]} {
    %c0 = arith.constant 0 : index
    %c0_0 = arith.constant 0 : index
    %c0_1 = arith.constant 0 : index
    %0 = vector.load %arg1[%c0, %c0_0, %c0_1] : memref<1x1x24xf32, #tpu.memory_space<vmem>>, vector<1x1x24xf32>
    %1 = vector.shape_cast %0 : vector<1x1x24xf32> to vector<1x24xf32>
    %c0_2 = arith.constant 0 : index
    %c0_3 = arith.constant 0 : index
    %2 = vector.load %arg2[%c0_2, %c0_3] : memref<24x1536xf32, #tpu.memory_space<vmem>>, vector<24x1536xf32>
    %cst = arith.constant dense<0.000000e+00> : vector<1x1536xf32>
    %3 = tpu.matmul %1, %2, %cst {dimension_numbers = #tpu.dot_dimension_numbers<[1], [0], [0], [1], [0, 0, 1, 1], [], []>} : vector<1x24xf32>, vector<24x1536xf32>, vector<1x1536xf32> -> vector<1x1536xf32>
    %4 = vector.extract_strided_slice %3 {offsets = [0, 0], sizes = [1, 384], strides = [1, 1]} : vector<1x1536xf32> to vector<1x384xf32>
    %5 = vector.extract_strided_slice %3 {offsets = [0, 384], sizes = [1, 384], strides = [1, 1]} : vector<1x1536xf32> to vector<1x384xf32>
    %6 = vector.extract_strided_slice %3 {offsets = [0, 768], sizes = [1, 384], strides = [1, 1]} : vector<1x1536xf32> to vector<1x384xf32>
    %7 = vector.extract_strided_slice %3 {offsets = [0, 1152], sizes = [1, 384], strides = [1, 1]} : vector<1x1536xf32> to vector<1x384xf32>
    %8 = tpu.concatenate %4, %5, %6, %7 in 0 : vector<1x384xf32>, vector<1x384xf32>, vector<1x384xf32>, vector<1x384xf32> -> vector<4x384xf32>
    %c0_4 = arith.constant 0 : index
    %c0_5 = arith.constant 0 : index
    %9 = vector.load %arg3[%c0_4, %c0_5] : memref<4x384xf32, #tpu.memory_space<vmem>>, vector<4x384xf32>
    %10 = arith.addf %8, %9 : vector<4x384xf32>
    %cst_6 = arith.constant 0.000000e+00 : f32
    %11 = vector.broadcast %cst_6 : f32 to vector<4x384xf32>
    %12 = arith.maximumf %10, %11 : vector<4x384xf32>
    %c0_7 = arith.constant 0 : index
    %c0_8 = arith.constant 0 : index
    %13 = vector.load %arg4[%c0_7, %c0_8] : memref<12x4xf32, #tpu.memory_space<vmem>>, vector<12x4xf32>
    %cst_9 = arith.constant dense<0.000000e+00> : vector<12x384xf32>
    %14 = tpu.matmul %13, %12, %cst_9 {dimension_numbers = #tpu.dot_dimension_numbers<[1], [0], [0], [1], [0, 0, 1, 1], [], []>} : vector<12x4xf32>, vector<4x384xf32>, vector<12x384xf32> -> vector<12x384xf32>
    %15 = vector.extract_strided_slice %14 {offsets = [0, 0], sizes = [8, 384], strides = [1, 1]} : vector<12x384xf32> to vector<8x384xf32>
    %c0_10 = arith.constant 0 : index
    %c0_11 = arith.constant 0 : index
    %c0_12 = arith.constant 0 : index
    %16 = vector.load %arg5[%c0_10, %c0_11, %c0_12] : memref<5x384x384xf32, #tpu.memory_space<vmem>>, vector<1x384x384xf32>
    %17 = vector.shape_cast %16 : vector<1x384x384xf32> to vector<384x384xf32>
    %cst_13 = arith.constant dense<0.000000e+00> : vector<8x384xf32>
    %18 = tpu.matmul %15, %17, %cst_13 {dimension_numbers = #tpu.dot_dimension_numbers<[1], [0], [0], [1], [0, 0, 1, 1], [], []>} : vector<8x384xf32>, vector<384x384xf32>, vector<8x384xf32> -> vector<8x384xf32>
    %19 = vector.extract_strided_slice %14 {offsets = [1, 0], sizes = [8, 384], strides = [1, 1]} : vector<12x384xf32> to vector<8x384xf32>
    %c1 = arith.constant 1 : index
    %c0_14 = arith.constant 0 : index
    %c0_15 = arith.constant 0 : index
    %20 = vector.load %arg5[%c1, %c0_14, %c0_15] : memref<5x384x384xf32, #tpu.memory_space<vmem>>, vector<1x384x384xf32>
    %21 = vector.shape_cast %20 : vector<1x384x384xf32> to vector<384x384xf32>
    %cst_16 = arith.constant dense<0.000000e+00> : vector<8x384xf32>
    %22 = tpu.matmul %19, %21, %cst_16 {dimension_numbers = #tpu.dot_dimension_numbers<[1], [0], [0], [1], [0, 0, 1, 1], [], []>} : vector<8x384xf32>, vector<384x384xf32>, vector<8x384xf32> -> vector<8x384xf32>
    %23 = arith.addf %18, %22 : vector<8x384xf32>
    %24 = vector.extract_strided_slice %14 {offsets = [2, 0], sizes = [8, 384], strides = [1, 1]} : vector<12x384xf32> to vector<8x384xf32>
    %c2 = arith.constant 2 : index
    %c0_17 = arith.constant 0 : index
    %c0_18 = arith.constant 0 : index
    %25 = vector.load %arg5[%c2, %c0_17, %c0_18] : memref<5x384x384xf32, #tpu.memory_space<vmem>>, vector<1x384x384xf32>
    %26 = vector.shape_cast %25 : vector<1x384x384xf32> to vector<384x384xf32>
    %cst_19 = arith.constant dense<0.000000e+00> : vector<8x384xf32>
    %27 = tpu.matmul %24, %26, %cst_19 {dimension_numbers = #tpu.dot_dimension_numbers<[1], [0], [0], [1], [0, 0, 1, 1], [], []>} : vector<8x384xf32>, vector<384x384xf32>, vector<8x384xf32> -> vector<8x384xf32>
    %28 = arith.addf %23, %27 : vector<8x384xf32>
    %29 = vector.extract_strided_slice %14 {offsets = [3, 0], sizes = [8, 384], strides = [1, 1]} : vector<12x384xf32> to vector<8x384xf32>
    %c3 = arith.constant 3 : index
    %c0_20 = arith.constant 0 : index
    %c0_21 = arith.constant 0 : index
    %30 = vector.load %arg5[%c3, %c0_20, %c0_21] : memref<5x384x384xf32, #tpu.memory_space<vmem>>, vector<1x384x384xf32>
    %31 = vector.shape_cast %30 : vector<1x384x384xf32> to vector<384x384xf32>
    %cst_22 = arith.constant dense<0.000000e+00> : vector<8x384xf32>
    %32 = tpu.matmul %29, %31, %cst_22 {dimension_numbers = #tpu.dot_dimension_numbers<[1], [0], [0], [1], [0, 0, 1, 1], [], []>} : vector<8x384xf32>, vector<384x384xf32>, vector<8x384xf32> -> vector<8x384xf32>
    %33 = arith.addf %28, %32 : vector<8x384xf32>
    %34 = vector.extract_strided_slice %14 {offsets = [4, 0], sizes = [8, 384], strides = [1, 1]} : vector<12x384xf32> to vector<8x384xf32>
    %c4 = arith.constant 4 : index
    %c0_23 = arith.constant 0 : index
    %c0_24 = arith.constant 0 : index
    %35 = vector.load %arg5[%c4, %c0_23, %c0_24] : memref<5x384x384xf32, #tpu.memory_space<vmem>>, vector<1x384x384xf32>
    %36 = vector.shape_cast %35 : vector<1x384x384xf32> to vector<384x384xf32>
    %cst_25 = arith.constant dense<0.000000e+00> : vector<8x384xf32>
    %37 = tpu.matmul %34, %36, %cst_25 {dimension_numbers = #tpu.dot_dimension_numbers<[1], [0], [0], [1], [0, 0, 1, 1], [], []>} : vector<8x384xf32>, vector<384x384xf32>, vector<8x384xf32> -> vector<8x384xf32>
    %38 = arith.addf %33, %37 : vector<8x384xf32>
    %c0_26 = arith.constant 0 : index
    %c0_27 = arith.constant 0 : index
    %39 = vector.load %arg6[%c0_26, %c0_27] : memref<1x384xf32, #tpu.memory_space<vmem>>, vector<1x384xf32>
    %40 = vector.broadcast %39 : vector<1x384xf32> to vector<8x384xf32>
    %41 = arith.addf %38, %40 : vector<8x384xf32>
    %cst_28 = arith.constant 0.000000e+00 : f32
    %42 = vector.broadcast %cst_28 : f32 to vector<8x384xf32>
    %43 = arith.maximumf %41, %42 : vector<8x384xf32>
    %44 = vector.extract_strided_slice %43 {offsets = [0, 0], sizes = [7, 384], strides = [1, 1]} : vector<8x384xf32> to vector<7x384xf32>
    %c0_29 = arith.constant 0 : index
    %c0_30 = arith.constant 0 : index
    %45 = vector.load %arg7[%c0_29, %c0_30] : memref<18x7xf32, #tpu.memory_space<vmem>>, vector<18x7xf32>
    %cst_31 = arith.constant dense<0.000000e+00> : vector<18x384xf32>
    %46 = tpu.matmul %45, %44, %cst_31 {dimension_numbers = #tpu.dot_dimension_numbers<[1], [0], [0], [1], [0, 0, 1, 1], [], []>} : vector<18x7xf32>, vector<7x384xf32>, vector<18x384xf32> -> vector<18x384xf32>
    %47 = vector.extract_strided_slice %46 {offsets = [0, 0], sizes = [14, 384], strides = [1, 1]} : vector<18x384xf32> to vector<14x384xf32>
    %c0_32 = arith.constant 0 : index
    %c0_33 = arith.constant 0 : index
    %c0_34 = arith.constant 0 : index
    %48 = vector.load %arg8[%c0_32, %c0_33, %c0_34] : memref<5x384x336xf32, #tpu.memory_space<vmem>>, vector<1x384x336xf32>
    %49 = vector.shape_cast %48 : vector<1x384x336xf32> to vector<384x336xf32>
    %cst_35 = arith.constant dense<0.000000e+00> : vector<14x336xf32>
    %50 = tpu.matmul %47, %49, %cst_35 {dimension_numbers = #tpu.dot_dimension_numbers<[1], [0], [0], [1], [0, 0, 1, 1], [], []>} : vector<14x384xf32>, vector<384x336xf32>, vector<14x336xf32> -> vector<14x336xf32>
    %51 = vector.extract_strided_slice %46 {offsets = [1, 0], sizes = [14, 384], strides = [1, 1]} : vector<18x384xf32> to vector<14x384xf32>
    %c1_36 = arith.constant 1 : index
    %c0_37 = arith.constant 0 : index
    %c0_38 = arith.constant 0 : index
    %52 = vector.load %arg8[%c1_36, %c0_37, %c0_38] : memref<5x384x336xf32, #tpu.memory_space<vmem>>, vector<1x384x336xf32>
    %53 = vector.shape_cast %52 : vector<1x384x336xf32> to vector<384x336xf32>
    %cst_39 = arith.constant dense<0.000000e+00> : vector<14x336xf32>
    %54 = tpu.matmul %51, %53, %cst_39 {dimension_numbers = #tpu.dot_dimension_numbers<[1], [0], [0], [1], [0, 0, 1, 1], [], []>} : vector<14x384xf32>, vector<384x336xf32>, vector<14x336xf32> -> vector<14x336xf32>
    %55 = arith.addf %50, %54 : vector<14x336xf32>
    %56 = vector.extract_strided_slice %46 {offsets = [2, 0], sizes = [14, 384], strides = [1, 1]} : vector<18x384xf32> to vector<14x384xf32>
    %c2_40 = arith.constant 2 : index
    %c0_41 = arith.constant 0 : index
    %c0_42 = arith.constant 0 : index
    %57 = vector.load %arg8[%c2_40, %c0_41, %c0_42] : memref<5x384x336xf32, #tpu.memory_space<vmem>>, vector<1x384x336xf32>
    %58 = vector.shape_cast %57 : vector<1x384x336xf32> to vector<384x336xf32>
    %cst_43 = arith.constant dense<0.000000e+00> : vector<14x336xf32>
    %59 = tpu.matmul %56, %58, %cst_43 {dimension_numbers = #tpu.dot_dimension_numbers<[1], [0], [0], [1], [0, 0, 1, 1], [], []>} : vector<14x384xf32>, vector<384x336xf32>, vector<14x336xf32> -> vector<14x336xf32>
    %60 = arith.addf %55, %59 : vector<14x336xf32>
    %61 = vector.extract_strided_slice %46 {offsets = [3, 0], sizes = [14, 384], strides = [1, 1]} : vector<18x384xf32> to vector<14x384xf32>
    %c3_44 = arith.constant 3 : index
    %c0_45 = arith.constant 0 : index
    %c0_46 = arith.constant 0 : index
    %62 = vector.load %arg8[%c3_44, %c0_45, %c0_46] : memref<5x384x336xf32, #tpu.memory_space<vmem>>, vector<1x384x336xf32>
    %63 = vector.shape_cast %62 : vector<1x384x336xf32> to vector<384x336xf32>
    %cst_47 = arith.constant dense<0.000000e+00> : vector<14x336xf32>
    %64 = tpu.matmul %61, %63, %cst_47 {dimension_numbers = #tpu.dot_dimension_numbers<[1], [0], [0], [1], [0, 0, 1, 1], [], []>} : vector<14x384xf32>, vector<384x336xf32>, vector<14x336xf32> -> vector<14x336xf32>
    %65 = arith.addf %60, %64 : vector<14x336xf32>
    %66 = vector.extract_strided_slice %46 {offsets = [4, 0], sizes = [14, 384], strides = [1, 1]} : vector<18x384xf32> to vector<14x384xf32>
    %c4_48 = arith.constant 4 : index
    %c0_49 = arith.constant 0 : index
    %c0_50 = arith.constant 0 : index
    %67 = vector.load %arg8[%c4_48, %c0_49, %c0_50] : memref<5x384x336xf32, #tpu.memory_space<vmem>>, vector<1x384x336xf32>
    %68 = vector.shape_cast %67 : vector<1x384x336xf32> to vector<384x336xf32>
    %cst_51 = arith.constant dense<0.000000e+00> : vector<14x336xf32>
    %69 = tpu.matmul %66, %68, %cst_51 {dimension_numbers = #tpu.dot_dimension_numbers<[1], [0], [0], [1], [0, 0, 1, 1], [], []>} : vector<14x384xf32>, vector<384x336xf32>, vector<14x336xf32> -> vector<14x336xf32>
    %70 = arith.addf %65, %69 : vector<14x336xf32>
    %c0_52 = arith.constant 0 : index
    %c0_53 = arith.constant 0 : index
    %71 = vector.load %arg9[%c0_52, %c0_53] : memref<1x336xf32, #tpu.memory_space<vmem>>, vector<1x336xf32>
    %72 = vector.broadcast %71 : vector<1x336xf32> to vector<14x336xf32>
    %73 = arith.addf %70, %72 : vector<14x336xf32>
    %cst_54 = arith.constant 0.000000e+00 : f32
    %74 = vector.broadcast %cst_54 : f32 to vector<14x336xf32>
    %75 = arith.maximumf %73, %74 : vector<14x336xf32>
    %c0_55 = arith.constant 0 : index
    %c0_56 = arith.constant 0 : index
    %76 = vector.load %arg10[%c0_55, %c0_56] : memref<32x14xf32, #tpu.memory_space<vmem>>, vector<32x14xf32>
    %cst_57 = arith.constant dense<0.000000e+00> : vector<32x336xf32>
    %77 = tpu.matmul %76, %75, %cst_57 {dimension_numbers = #tpu.dot_dimension_numbers<[1], [0], [0], [1], [0, 0, 1, 1], [], []>} : vector<32x14xf32>, vector<14x336xf32>, vector<32x336xf32> -> vector<32x336xf32>
    %78 = vector.extract_strided_slice %77 {offsets = [0, 0], sizes = [28, 336], strides = [1, 1]} : vector<32x336xf32> to vector<28x336xf32>
    %c0_58 = arith.constant 0 : index
    %c0_59 = arith.constant 0 : index
    %c0_60 = arith.constant 0 : index
    %79 = vector.load %arg11[%c0_58, %c0_59, %c0_60] : memref<5x336x28xf32, #tpu.memory_space<vmem>>, vector<1x336x28xf32>
    %80 = vector.shape_cast %79 : vector<1x336x28xf32> to vector<336x28xf32>
    %cst_61 = arith.constant dense<0.000000e+00> : vector<28x28xf32>
    %81 = tpu.matmul %78, %80, %cst_61 {dimension_numbers = #tpu.dot_dimension_numbers<[1], [0], [0], [1], [0, 0, 1, 1], [], []>} : vector<28x336xf32>, vector<336x28xf32>, vector<28x28xf32> -> vector<28x28xf32>
    %82 = vector.extract_strided_slice %77 {offsets = [1, 0], sizes = [28, 336], strides = [1, 1]} : vector<32x336xf32> to vector<28x336xf32>
    %c1_62 = arith.constant 1 : index
    %c0_63 = arith.constant 0 : index
    %c0_64 = arith.constant 0 : index
    %83 = vector.load %arg11[%c1_62, %c0_63, %c0_64] : memref<5x336x28xf32, #tpu.memory_space<vmem>>, vector<1x336x28xf32>
    %84 = vector.shape_cast %83 : vector<1x336x28xf32> to vector<336x28xf32>
    %cst_65 = arith.constant dense<0.000000e+00> : vector<28x28xf32>
    %85 = tpu.matmul %82, %84, %cst_65 {dimension_numbers = #tpu.dot_dimension_numbers<[1], [0], [0], [1], [0, 0, 1, 1], [], []>} : vector<28x336xf32>, vector<336x28xf32>, vector<28x28xf32> -> vector<28x28xf32>
    %86 = arith.addf %81, %85 : vector<28x28xf32>
    %87 = vector.extract_strided_slice %77 {offsets = [2, 0], sizes = [28, 336], strides = [1, 1]} : vector<32x336xf32> to vector<28x336xf32>
    %c2_66 = arith.constant 2 : index
    %c0_67 = arith.constant 0 : index
    %c0_68 = arith.constant 0 : index
    %88 = vector.load %arg11[%c2_66, %c0_67, %c0_68] : memref<5x336x28xf32, #tpu.memory_space<vmem>>, vector<1x336x28xf32>
    %89 = vector.shape_cast %88 : vector<1x336x28xf32> to vector<336x28xf32>
    %cst_69 = arith.constant dense<0.000000e+00> : vector<28x28xf32>
    %90 = tpu.matmul %87, %89, %cst_69 {dimension_numbers = #tpu.dot_dimension_numbers<[1], [0], [0], [1], [0, 0, 1, 1], [], []>} : vector<28x336xf32>, vector<336x28xf32>, vector<28x28xf32> -> vector<28x28xf32>
    %91 = arith.addf %86, %90 : vector<28x28xf32>
    %92 = vector.extract_strided_slice %77 {offsets = [3, 0], sizes = [28, 336], strides = [1, 1]} : vector<32x336xf32> to vector<28x336xf32>
    %c3_70 = arith.constant 3 : index
    %c0_71 = arith.constant 0 : index
    %c0_72 = arith.constant 0 : index
    %93 = vector.load %arg11[%c3_70, %c0_71, %c0_72] : memref<5x336x28xf32, #tpu.memory_space<vmem>>, vector<1x336x28xf32>
    %94 = vector.shape_cast %93 : vector<1x336x28xf32> to vector<336x28xf32>
    %cst_73 = arith.constant dense<0.000000e+00> : vector<28x28xf32>
    %95 = tpu.matmul %92, %94, %cst_73 {dimension_numbers = #tpu.dot_dimension_numbers<[1], [0], [0], [1], [0, 0, 1, 1], [], []>} : vector<28x336xf32>, vector<336x28xf32>, vector<28x28xf32> -> vector<28x28xf32>
    %96 = arith.addf %91, %95 : vector<28x28xf32>
    %97 = vector.extract_strided_slice %77 {offsets = [4, 0], sizes = [28, 336], strides = [1, 1]} : vector<32x336xf32> to vector<28x336xf32>
    %c4_74 = arith.constant 4 : index
    %c0_75 = arith.constant 0 : index
    %c0_76 = arith.constant 0 : index
    %98 = vector.load %arg11[%c4_74, %c0_75, %c0_76] : memref<5x336x28xf32, #tpu.memory_space<vmem>>, vector<1x336x28xf32>
    %99 = vector.shape_cast %98 : vector<1x336x28xf32> to vector<336x28xf32>
    %cst_77 = arith.constant dense<0.000000e+00> : vector<28x28xf32>
    %100 = tpu.matmul %97, %99, %cst_77 {dimension_numbers = #tpu.dot_dimension_numbers<[1], [0], [0], [1], [0, 0, 1, 1], [], []>} : vector<28x336xf32>, vector<336x28xf32>, vector<28x28xf32> -> vector<28x28xf32>
    %101 = arith.addf %96, %100 : vector<28x28xf32>
    %c0_78 = arith.constant 0 : index
    %c0_79 = arith.constant 0 : index
    %102 = vector.load %arg12[%c0_78, %c0_79] : memref<1x28xf32, #tpu.memory_space<vmem>>, vector<1x28xf32>
    %103 = vector.broadcast %102 : vector<1x28xf32> to vector<28x28xf32>
    %104 = arith.addf %101, %103 : vector<28x28xf32>
    %105 = arith.negf %104 : vector<28x28xf32>
    %106 = math.exp %105 : vector<28x28xf32>
    %cst_80 = arith.constant 1.000000e+00 : f32
    %107 = vector.broadcast %cst_80 : f32 to vector<28x28xf32>
    %108 = arith.addf %107, %106 : vector<28x28xf32>
    %109 = arith.divf %107, %108 : vector<28x28xf32>
    %c0_81 = arith.constant 0 : index
    %c0_82 = arith.constant 0 : index
    %c0_83 = arith.constant 0 : index
    %110 = vector.load %arg13[%c0_81, %c0_82, %c0_83] : memref<1x28x28xf32, #tpu.memory_space<vmem>>, vector<1x28x28xf32>
    %111 = vector.shape_cast %110 : vector<1x28x28xf32> to vector<28x28xf32>
    %112 = vector.shape_cast %109 : vector<28x28xf32> to vector<1x28x28xf32>
    tpu.vector_store %arg13[%c0_81, %c0_82, %c0_83], %112 {strides = array<i32>} : memref<1x28x28xf32, #tpu.memory_space<vmem>>, vector<1x28x28xf32>,
    return
  }
  func.func @transform_0(%arg0: i32) -> (i32, i32, i32) {
    %c0_i32 = arith.constant 0 : i32
    %c0_i32_0 = arith.constant 0 : i32
    %c0_i32_1 = arith.constant 0 : i32
    return %arg0, %c0_i32, %c0_i32_0 : i32, i32, i32
  }
  func.func @transform_1(%arg0: i32) -> (i32, i32) {
    %c0_i32 = arith.constant 0 : i32
    %c0_i32_0 = arith.constant 0 : i32
    %c0_i32_1 = arith.constant 0 : i32
    return %c0_i32, %c0_i32_0 : i32, i32
  }
  func.func @transform_2(%arg0: i32) -> (i32, i32) {
    %c0_i32 = arith.constant 0 : i32
    %c0_i32_0 = arith.constant 0 : i32
    %c0_i32_1 = arith.constant 0 : i32
    return %c0_i32, %c0_i32_0 : i32, i32
  }
  func.func @transform_3(%arg0: i32) -> (i32, i32) {
    %c0_i32 = arith.constant 0 : i32
    %c0_i32_0 = arith.constant 0 : i32
    %c0_i32_1 = arith.constant 0 : i32
    return %c0_i32, %c0_i32_0 : i32, i32
  }
  func.func @transform_4(%arg0: i32) -> (i32, i32, i32) {
    %c0_i32 = arith.constant 0 : i32
    %c0_i32_0 = arith.constant 0 : i32
    %c0_i32_1 = arith.constant 0 : i32
    %c0_i32_2 = arith.constant 0 : i32
    return %c0_i32, %c0_i32_0, %c0_i32_1 : i32, i32, i32
  }
  func.func @transform_5(%arg0: i32) -> (i32, i32) {
    %c0_i32 = arith.constant 0 : i32
    %c0_i32_0 = arith.constant 0 : i32
    %c0_i32_1 = arith.constant 0 : i32
    return %c0_i32, %c0_i32_0 : i32, i32
  }
  func.func @transform_6(%arg0: i32) -> (i32, i32) {
    %c0_i32 = arith.constant 0 : i32
    %c0_i32_0 = arith.constant 0 : i32
    %c0_i32_1 = arith.constant 0 : i32
    return %c0_i32, %c0_i32_0 : i32, i32
  }
  func.func @transform_7(%arg0: i32) -> (i32, i32, i32) {
    %c0_i32 = arith.constant 0 : i32
    %c0_i32_0 = arith.constant 0 : i32
    %c0_i32_1 = arith.constant 0 : i32
    %c0_i32_2 = arith.constant 0 : i32
    return %c0_i32, %c0_i32_0, %c0_i32_1 : i32, i32, i32
  }
  func.func @transform_8(%arg0: i32) -> (i32, i32) {
    %c0_i32 = arith.constant 0 : i32
    %c0_i32_0 = arith.constant 0 : i32
    %c0_i32_1 = arith.constant 0 : i32
    return %c0_i32, %c0_i32_0 : i32, i32
  }
  func.func @transform_9(%arg0: i32) -> (i32, i32) {
    %c0_i32 = arith.constant 0 : i32
    %c0_i32_0 = arith.constant 0 : i32
    %c0_i32_1 = arith.constant 0 : i32
    return %c0_i32, %c0_i32_0 : i32, i32
  }
  func.func @transform_10(%arg0: i32) -> (i32, i32, i32) {
    %c0_i32 = arith.constant 0 : i32
    %c0_i32_0 = arith.constant 0 : i32
    %c0_i32_1 = arith.constant 0 : i32
    %c0_i32_2 = arith.constant 0 : i32
    return %c0_i32, %c0_i32_0, %c0_i32_1 : i32, i32, i32
  }
  func.func @transform_11(%arg0: i32) -> (i32, i32) {
    %c0_i32 = arith.constant 0 : i32
    %c0_i32_0 = arith.constant 0 : i32
    %c0_i32_1 = arith.constant 0 : i32
    return %c0_i32, %c0_i32_0 : i32, i32
  }
  func.func @transform_12(%arg0: i32) -> (i32, i32, i32) {
    %c0_i32 = arith.constant 0 : i32
    %c0_i32_0 = arith.constant 0 : i32
    %c0_i32_1 = arith.constant 0 : i32
    return %arg0, %c0_i32, %c0_i32_0 : i32, i32, i32
  }
}

</mosaic_0001>

<llo_original>
// kernel: tile.23
$region0: #{tile.23}
  #allocation0 [shape = 's32[1]{0}', space=sflag, size = 0x4, scoped, tag = 'scoped memory for tile.23']
  %s0 = inlined_call_operand.vmem [shape: f32[24], index: 0, kind: input, shape index: {}]
  %s1 = inlined_call_operand.vmem [shape: f32[14,24], index: 1, kind: output, shape index: {}]
  // Predicated region
  $region2: #{tile.23} parent=0 // pred_check
    _
  $region3: #{tile.23} parent=0 // pred_check_branch
    %3 = sbr.rel (0) target = $region5
  $region4: #{tile.23} parent=0 // pred_region
    _
  $region5: #{tile.23} parent=0 // pred_fallthru
    _
  %v4 = vld [vmem:[%s0] ss:$0 sm:$0xff]
  %5 = vst [vmem:[%s1] sm:$0xff] %v4
  %s6 = scalar_lea.vmem %s1, 8
  %7 = vst [vmem:[%s6] sm:$0xff] %v4

// kernel: tile.24
$region0: #{tile.24}
  %s0 = inlined_call_operand.vmem [shape: f32[14,24], index: 0, kind: input, shape index: {}]
  %s1 = inlined_call_operand.vmem [shape: f32[1,336], index: 1, kind: output, shape index: {}]
  $region1: #{tile.24} parent=0
    #allocation0 [shape = 'u8[12288]{0}', space=vmem, size = 0x3000, scoped, tag = 'scoped mem for output reshape']
    %v2 = vld [vmem:[%s0] sm:$0x1]
    %vm3 = vcmask 195584
    %4 = vst.msk [vmem:[#allocation0] sm:$0x1] %vm3, %v2
    %s5 = scalar_lea.vmem %s0, 5
    %v6 = vld [vmem:[%s5] sm:$0x1]
    %s7 = scalar_lea.vmem %s0, 5
    %v8 = vld [vmem:[%s7] sm:$0x1]
    %vm9 = vcmask 64512
    %v10 = vsel %vm9, %v8, %v6
    %11 = vrot.lane.b32.xlu0 %v10, 120
    %v12 = vpop.permute.xlu0 %11
    %vm13 = vcmask 130048
    %s14 = scalar_lea.vmem [#allocation0], 8
    %15 = vst.msk [vmem:[%s14] sm:$0x1] %vm13, %v12
    %vm16 = vcmask 1048512
    %17 = vst.msk [vmem:[#allocation0] sm:$0x1] %vm16, %v12
    %s18 = scalar_lea.vmem %s0, 10
    %v19 = vld [vmem:[%s18] sm:$0x1]
    %s20 = scalar_lea.vmem %s0, 10
    %v21 = vld [vmem:[%s20] sm:$0x1]
    %vm22 = vcmask 130048
    %v23 = vsel %vm22, %v21, %v19
    %24 = vrot.lane.b32.xlu0 %v23, 112
    %v25 = vpop.permute.xlu0 %24
    %vm26 = vcmask 64512
    %s27 = scalar_lea.vmem [#allocation0], 16
    %28 = vst.msk [vmem:[%s27] sm:$0x1] %vm26, %v25
    %vm29 = vcmask 1048448
    %s30 = scalar_lea.vmem [#allocation0], 8
    %31 = vst.msk [vmem:[%s30] sm:$0x1] %vm29, %v25
    %s32 = scalar_lea.vmem %s0, 4
    %v33 = vld [vmem:[%s32] sm:$0x1]
    %34 = vrot.lane.b32.xlu0 %v33, 96
    %v35 = vpop.permute.xlu0 %34
    %vm36 = vcmask 982784
    %37 = vst.msk [vmem:[#allocation0] sm:$0x1] %vm36, %v35
    %s38 = scalar_lea.vmem %s0, 9
    %v39 = vld [vmem:[%s38] sm:$0x1]
    %40 = vrot.lane.b32.xlu0 %v39, 88
    %v41 = vpop.permute.xlu0 %40
    %vm42 = vcmask 917184
    %s43 = scalar_lea.vmem [#allocation0], 8
    %44 = vst.msk [vmem:[%s43] sm:$0x1] %vm42, %v41
    %s45 = scalar_lea.vmem %s0, 3
    %v46 = vld [vmem:[%s45] sm:$0x1]
    %47 = vrot.lane.b32.xlu0 %v46, 72
    %v48 = vpop.permute.xlu0 %47
    %vm49 = vcmask 785984
    %50 = vst.msk [vmem:[#allocation0] sm:$0x1] %vm49, %v48
    %s51 = scalar_lea.vmem %s0, 8
    %v52 = vld [vmem:[%s51] sm:$0x1]
    %53 = vrot.lane.b32.xlu0 %v52, 64
    %v54 = vpop.permute.xlu0 %53
    %vm55 = vcmask 720384
    %s56 = scalar_lea.vmem [#allocation0], 8
    %57 = vst.msk [vmem:[%s56] sm:$0x1] %vm55, %v54
    %s58 = scalar_lea.vmem %s0, 13
    %v59 = vld [vmem:[%s58] sm:$0x1]
    %60 = vrot.lane.b32.xlu0 %v59, 56
    %v61 = vpop.permute.xlu0 %60
    %vm62 = vcmask 654784
    %s63 = scalar_lea.vmem [#allocation0], 16
    %64 = vst.msk [vmem:[%s63] sm:$0x1] %vm62, %v61
    %s65 = scalar_lea.vmem %s0, 2
    %v66 = vld [vmem:[%s65] sm:$0x1]
    %67 = vrot.lane.b32.xlu0 %v66, 48
    %v68 = vpop.permute.xlu0 %67
    %vm69 = vcmask 589184
    %70 = vst.msk [vmem:[#allocation0] sm:$0x1] %vm69, %v68
    %s71 = scalar_lea.vmem %s0, 7
    %v72 = vld [vmem:[%s71] sm:$0x1]
    %73 = vrot.lane.b32.xlu0 %v72, 40
    %v74 = vpop.permute.xlu0 %73
    %vm75 = vcmask 523584
    %s76 = scalar_lea.vmem [#allocation0], 8
    %77 = vst.msk [vmem:[%s76] sm:$0x1] %vm75, %v74
    %s78 = scalar_lea.vmem %s0, 12
    %v79 = vld [vmem:[%s78] sm:$0x1]
    %80 = vrot.lane.b32.xlu0 %v79, 32
    %v81 = vpop.permute.xlu0 %80
    %vm82 = vcmask 457984
    %s83 = scalar_lea.vmem [#allocation0], 16
    %84 = vst.msk [vmem:[%s83] sm:$0x1] %vm82, %v81
    %s85 = scalar_lea.vmem %s0, 1
    %v86 = vld [vmem:[%s85] sm:$0x1]
    %87 = vrot.lane.b32.xlu0 %v86, 24
    %v88 = vpop.permute.xlu0 %87
    %vm89 = vcmask 392384
    %90 = vst.msk [vmem:[#allocation0] sm:$0x1] %vm89, %v88
    %s91 = scalar_lea.vmem %s0, 6
    %v92 = vld [vmem:[%s91] sm:$0x1]
    %93 = vrot.lane.b32.xlu0 %v92, 16
    %v94 = vpop.permute.xlu0 %93
    %vm95 = vcmask 326784
    %s96 = scalar_lea.vmem [#allocation0], 8
    %97 = vst.msk [vmem:[%s96] sm:$0x1] %vm95, %v94
    %s98 = scalar_lea.vmem %s0, 11
    %v99 = vld [vmem:[%s98] sm:$0x1]
    %100 = vrot.lane.b32.xlu0 %v99, 8
    %v101 = vpop.permute.xlu0 %100
    %vm102 = vcmask 261184
    %s103 = scalar_lea.vmem [#allocation0], 16
    %104 = vst.msk [vmem:[%s103] sm:$0x1] %vm102, %v101
    %s106 = ssub.s32 2, 1
    %v107 = vld [vmem:[#allocation0] sm:%s106]
    %s109 = ssub.s32 2, 1
    %110 = vst [vmem:[%s1] sm:%s109] %v107
    %s111 = scalar_lea.vmem [#allocation0], 8
    %v112 = vld [vmem:[%s111] sm:%s106]
    %s114 = ssub.s32 2, 1
    %s115 = scalar_lea.vmem %s1, 1
    %116 = vst [vmem:[%s115] sm:%s114] %v112
    %s117 = scalar_lea.vmem [#allocation0], 16
    %v118 = vld [vmem:[%s117] sm:%s106]
    %s120 = ssub.s32 2, 1
    %s121 = scalar_lea.vmem %s1, 2
    %122 = vst [vmem:[%s121] sm:%s120] %v118

// kernel: tile.18
$region0: #{tile.18}
  #allocation0 [shape = 's32[1]{0}', space=sflag, size = 0x4, scoped, tag = 'scoped memory for tile.18']
  %s0 = inlined_call_operand.vmem [shape: f32[48], index: 0, kind: input, shape index: {}]
  %s1 = inlined_call_operand.vmem [shape: f32[8,48], index: 1, kind: output, shape index: {}]
  // Predicated region
  $region2: #{tile.18} parent=0 // pred_check
    _
  $region3: #{tile.18} parent=0 // pred_check_branch
    %3 = sbr.rel (0) target = $region5
  $region4: #{tile.18} parent=0 // pred_region
    _
  $region5: #{tile.18} parent=0 // pred_fallthru
    _
  %v4 = vld [vmem:[%s0] ss:$0 sm:$0xff]
  %5 = vst [vmem:[%s1] sm:$0xff] %v4

// kernel: tile.19
$region0: #{tile.19}
  %s0 = inlined_call_operand.vmem [shape: f32[8,48], index: 0, kind: input, shape index: {}]
  %s1 = inlined_call_operand.vmem [shape: f32[1,384], index: 1, kind: output, shape index: {}]
  $region1: #{tile.19} parent=0
    #allocation0 [shape = 'u8[12288]{0}', space=vmem, size = 0x3000, scoped, tag = 'scoped mem for output reshape']
    %v2 = vld [vmem:[%s0] sm:$0x1]
    %vm3 = vcmask 392192
    %4 = vst.msk [vmem:[#allocation0] sm:$0x1] %vm3, %v2
    %s5 = scalar_lea.vmem %s0, 5
    %v6 = vld [vmem:[%s5] sm:$0x1]
    %s7 = scalar_lea.vmem %s0, 5
    %v8 = vld [vmem:[%s7] sm:$0x1]
    %vm9 = vcmask 130048
    %v10 = vsel %vm9, %v8, %v6
    %11 = vrot.lane.b32.xlu0 %v10, 112
    %v12 = vpop.permute.xlu0 %11
    %vm13 = vcmask 261120
    %s14 = scalar_lea.vmem [#allocation0], 16
    %15 = vst.msk [vmem:[%s14] sm:$0x1] %vm13, %v12
    %vm16 = vcmask 1048448
    %s17 = scalar_lea.vmem [#allocation0], 8
    %18 = vst.msk [vmem:[%s17] sm:$0x1] %vm16, %v12
    %s19 = scalar_lea.vmem %s0, 2
    %v20 = vld [vmem:[%s19] sm:$0x1]
    %s21 = scalar_lea.vmem %s0, 2
    %v22 = vld [vmem:[%s21] sm:$0x1]
    %vm23 = vcmask 261120
    %v24 = vsel %vm23, %v22, %v20
    %25 = vrot.lane.b32.xlu0 %v24, 96
    %v26 = vpop.permute.xlu0 %25
    %vm27 = vcmask 130048
    %s28 = scalar_lea.vmem [#allocation0], 8
    %29 = vst.msk [vmem:[%s28] sm:$0x1] %vm27, %v26
    %vm30 = vcmask 1048320
    %31 = vst.msk [vmem:[#allocation0] sm:$0x1] %vm30, %v26
    %s32 = scalar_lea.vmem %s0, 7
    %v33 = vld [vmem:[%s32] sm:$0x1]
    %34 = vrot.lane.b32.xlu0 %v33, 80
    %v35 = vpop.permute.xlu0 %34
    %vm36 = vcmask 1048192
    %s37 = scalar_lea.vmem [#allocation0], 16
    %38 = vst.msk [vmem:[%s37] sm:$0x1] %vm36, %v35
    %s39 = scalar_lea.vmem %s0, 4
    %v40 = vld [vmem:[%s39] sm:$0x1]
    %41 = vrot.lane.b32.xlu0 %v40, 64
    %v42 = vpop.permute.xlu0 %41
    %vm43 = vcmask 916992
    %s44 = scalar_lea.vmem [#allocation0], 8
    %45 = vst.msk [vmem:[%s44] sm:$0x1] %vm43, %v42
    %s46 = scalar_lea.vmem %s0, 1
    %v47 = vld [vmem:[%s46] sm:$0x1]
    %48 = vrot.lane.b32.xlu0 %v47, 48
    %v49 = vpop.permute.xlu0 %48
    %vm50 = vcmask 785792
    %51 = vst.msk [vmem:[#allocation0] sm:$0x1] %vm50, %v49
    %s52 = scalar_lea.vmem %s0, 6
    %v53 = vld [vmem:[%s52] sm:$0x1]
    %54 = vrot.lane.b32.xlu0 %v53, 32
    %v55 = vpop.permute.xlu0 %54
    %vm56 = vcmask 654592
    %s57 = scalar_lea.vmem [#allocation0], 16
    %58 = vst.msk [vmem:[%s57] sm:$0x1] %vm56, %v55
    %s59 = scalar_lea.vmem %s0, 3
    %v60 = vld [vmem:[%s59] sm:$0x1]
    %61 = vrot.lane.b32.xlu0 %v60, 16
    %v62 = vpop.permute.xlu0 %61
    %vm63 = vcmask 523392
    %s64 = scalar_lea.vmem [#allocation0], 8
    %65 = vst.msk [vmem:[%s64] sm:$0x1] %vm63, %v62
    %s67 = ssub.s32 2, 1
    %v68 = vld [vmem:[#allocation0] sm:%s67]
    %s70 = ssub.s32 2, 1
    %71 = vst [vmem:[%s1] sm:%s70] %v68
    %s72 = scalar_lea.vmem [#allocation0], 8
    %v73 = vld [vmem:[%s72] sm:%s67]
    %s75 = ssub.s32 2, 1
    %s76 = scalar_lea.vmem %s1, 1
    %77 = vst [vmem:[%s76] sm:%s75] %v73
    %s78 = scalar_lea.vmem [#allocation0], 16
    %v79 = vld [vmem:[%s78] sm:%s67]
    %s81 = ssub.s32 2, 1
    %s82 = scalar_lea.vmem %s1, 2
    %83 = vst [vmem:[%s82] sm:%s81] %v79

// kernel: decoder_forward.1
$region0: #{decoder_forward.1}
  #allocation0 [shape = 'u32[]', space=smem, size = 0x4, offset = 0x4, fixed_abs, tag = 'smem constant byte address 0x4 - core index']
  #allocation1 [shape = 'u32[72,128]{1,0:T(1,128)}', space=vmem, size = 0x9000, scoped, tag = 'internal scratch']
  %s0 = inlined_call_operand.vmem [shape: f32[2,1,24], index: 0, kind: input, shape index: {}]
  %s1 = inlined_call_operand.vmem [shape: f32[24,1536], index: 1, kind: input, shape index: {}]
  %s2 = inlined_call_operand.vmem [shape: f32[4,384], index: 2, kind: input, shape index: {}]
  %s3 = inlined_call_operand.vmem [shape: f32[12,4], index: 3, kind: input, shape index: {}]
  %s4 = inlined_call_operand.vmem [shape: f32[5,384,384], index: 4, kind: input, shape index: {}]
  %s5 = inlined_call_operand.vmem [shape: f32[1,384], index: 5, kind: input, shape index: {}]
  %s6 = inlined_call_operand.vmem [shape: f32[18,7], index: 6, kind: input, shape index: {}]
  %s7 = inlined_call_operand.vmem [shape: f32[5,384,336], index: 7, kind: input, shape index: {}]
  %s8 = inlined_call_operand.vmem [shape: f32[1,336], index: 8, kind: input, shape index: {}]
  %s9 = inlined_call_operand.vmem [shape: f32[32,14], index: 9, kind: input, shape index: {}]
  %s10 = inlined_call_operand.vmem [shape: f32[5,336,28], index: 10, kind: input, shape index: {}]
  %s11 = inlined_call_operand.vmem [shape: f32[1,28], index: 11, kind: input, shape index: {}]
  %s12 = inlined_call_operand.vmem [shape: f32[2,28,28], index: 12, kind: output, shape index: {}]
  %s13 = sld [smem:[#allocation0]]
  $region81: #{decoder_forward.1} parent=0
    _
  %s15 = ssub.s32 1, %s13
  %s16 = scalar_select 0, %s15, %s13
  loop: start=0, step=1, limit=4
  $region2: #{decoder_forward.1} parent=0 // loop_pre_header
    _
  $region3: #{decoder_forward.1} parent=0 // loop_header
    %s18 = sphi 0, %s22
    %p19 = scmp.ge.s32.totalorder %s18, 4
    %s28 = sphi 0, %s30
    %s31 = sphi 0, %s28
    %s32 = sphi 0, %s31
    %s48 = sphi 0, %s32
    %s52 = sphi 0, %s52
    %s54 = sphi 0, %s52
    %s55 = sphi 0, %s54
    %s69 = sphi 0, %s55
    %s73 = sphi 0, %s73
    %s75 = sphi 0, %s73
    %s76 = sphi 0, %s75
    %s90 = sphi 0, %s76
    %s94 = sphi 0, %s94
    %s96 = sphi 0, %s94
    %s97 = sphi 0, %s96
    %s111 = sphi 0, %s97
    %s115 = sphi 0, %s115
    %s117 = sphi 0, %s115
    %s118 = sphi 0, %s117
    %s132 = sphi 0, %s118
    %s136 = sphi 0, %s136
    %s138 = sphi 0, %s136
    %s139 = sphi 0, %s138
    %s153 = sphi 0, %s139
    %s157 = sphi 0, %s157
    %s159 = sphi 0, %s157
    %s160 = sphi 0, %s159
    %s174 = sphi 0, %s160
    %s178 = sphi 0, %s178
    %s180 = sphi 0, %s178
    %s181 = sphi 0, %s180
    %s195 = sphi 0, %s181
    %s199 = sphi 0, %s199
    %s201 = sphi 0, %s199
    %s202 = sphi 0, %s201
    %s216 = sphi 0, %s202
    %s220 = sphi 0, %s220
    %s222 = sphi 0, %s220
    %s223 = sphi 0, %s222
    %s237 = sphi 0, %s223
    %s241 = sphi 0, %s241
    %s243 = sphi 0, %s241
    %s244 = sphi 0, %s243
    %s258 = sphi 0, %s244
    %s262 = sphi 0, %s262
    %s264 = sphi 0, %s262
    %s265 = sphi 0, %s264
    %s279 = sphi 0, %s265
    %s285 = sphi 0, %s287
    %s288 = sphi 0, %s285
    %s289 = sphi 0, %s288
    %s305 = sphi 0, %s289
  $region4: #{decoder_forward.1} parent=0 // loop_header_branch
    %21 = sbr.rel (%p19) target = $region8
  $region5: #{decoder_forward.1} parent=0 // loop_body
    %s23 = ssub.s32 %s18, 1
    %s24 = ssub.s32 %s18, 2
    %s25 = sadd.s32 %s18, 1
    %s26 = ssub.s32 %s18, %s25
    %p27 = scmp.eq.s32.totalorder %s26, 0
    %s29 = sadd.s32 %s28, 1
    %s30 = scalar_select %p27, %s28, %s29
    %p33 = pneg %p27
    %p34 = scmp.eq.s32.totalorder %s18, 1
    %p35 = por %p33, %p34
    %p36 = scmp.ne.s32.totalorder %s28, %s31
    %p37 = scmp.eq.s32.totalorder %s18, 0
    %p38 = por %p36, %p37
    %p39 = scmp.ne.s32.totalorder %s28, %s31
    %p40 = scmp.eq.s32.totalorder %s23, 1
    %p41 = por %p39, %p40
    %p42 = scmp.ne.s32.totalorder %s31, %s32
    %p43 = scmp.eq.s32.totalorder %s23, 0
    %p44 = por %p42, %p43
    %p45 = scmp.ne.s32.totalorder %s31, %s32
    %p46 = scmp.eq.s32.totalorder %s24, 1
    %p47 = por %p45, %p46
    %p49 = scmp.ne.s32.totalorder %s32, %s48
    %p50 = scmp.eq.s32.totalorder %s24, 0
    %p51 = por %p49, %p50
    %s53 = sadd.s32 %s52, 1
    %p56 = scmp.eq.s32.totalorder %s18, 1
    %p57 = scmp.ne.s32.totalorder %s52, %s54
    %p58 = scmp.eq.s32.totalorder %s18, 0
    %p59 = por %p57, %p58
    %p60 = scmp.ne.s32.totalorder %s52, %s54
    %p61 = scmp.eq.s32.totalorder %s23, 1
    %p62 = por %p60, %p61
    %p63 = scmp.ne.s32.totalorder %s54, %s55
    %p64 = scmp.eq.s32.totalorder %s23, 0
    %p65 = por %p63, %p64
    %p66 = scmp.ne.s32.totalorder %s54, %s55
    %p67 = scmp.eq.s32.totalorder %s24, 1
    %p68 = por %p66, %p67
    %p70 = scmp.ne.s32.totalorder %s55, %s69
    %p71 = scmp.eq.s32.totalorder %s24, 0
    %p72 = por %p70, %p71
    %s74 = sadd.s32 %s73, 1
    %p77 = scmp.eq.s32.totalorder %s18, 1
    %p78 = scmp.ne.s32.totalorder %s73, %s75
    %p79 = scmp.eq.s32.totalorder %s18, 0
    %p80 = por %p78, %p79
    %p81 = scmp.ne.s32.totalorder %s73, %s75
    %p82 = scmp.eq.s32.totalorder %s23, 1
    %p83 = por %p81, %p82
    %p84 = scmp.ne.s32.totalorder %s75, %s76
    %p85 = scmp.eq.s32.totalorder %s23, 0
    %p86 = por %p84, %p85
    %p87 = scmp.ne.s32.totalorder %s75, %s76
    %p88 = scmp.eq.s32.totalorder %s24, 1
    %p89 = por %p87, %p88
    %p91 = scmp.ne.s32.totalorder %s76, %s90
    %p92 = scmp.eq.s32.totalorder %s24, 0
    %p93 = por %p91, %p92
    %s95 = sadd.s32 %s94, 1
    %p98 = scmp.eq.s32.totalorder %s18, 1
    %p99 = scmp.ne.s32.totalorder %s94, %s96
    %p100 = scmp.eq.s32.totalorder %s18, 0
    %p101 = por %p99, %p100
    %p102 = scmp.ne.s32.totalorder %s94, %s96
    %p103 = scmp.eq.s32.totalorder %s23, 1
    %p104 = por %p102, %p103
    %p105 = scmp.ne.s32.totalorder %s96, %s97
    %p106 = scmp.eq.s32.totalorder %s23, 0
    %p107 = por %p105, %p106
    %p108 = scmp.ne.s32.totalorder %s96, %s97
    %p109 = scmp.eq.s32.totalorder %s24, 1
    %p110 = por %p108, %p109
    %p112 = scmp.ne.s32.totalorder %s97, %s111
    %p113 = scmp.eq.s32.totalorder %s24, 0
    %p114 = por %p112, %p113
    %s116 = sadd.s32 %s115, 1
    %p119 = scmp.eq.s32.totalorder %s18, 1
    %p120 = scmp.ne.s32.totalorder %s115, %s117
    %p121 = scmp.eq.s32.totalorder %s18, 0
    %p122 = por %p120, %p121
    %p123 = scmp.ne.s32.totalorder %s115, %s117
    %p124 = scmp.eq.s32.totalorder %s23, 1
    %p125 = por %p123, %p124
    %p126 = scmp.ne.s32.totalorder %s117, %s118
    %p127 = scmp.eq.s32.totalorder %s23, 0
    %p128 = por %p126, %p127
    %p129 = scmp.ne.s32.totalorder %s117, %s118
    %p130 = scmp.eq.s32.totalorder %s24, 1
    %p131 = por %p129, %p130
    %p133 = scmp.ne.s32.totalorder %s118, %s132
    %p134 = scmp.eq.s32.totalorder %s24, 0
    %p135 = por %p133, %p134
    %s137 = sadd.s32 %s136, 1
    %p140 = scmp.eq.s32.totalorder %s18, 1
    %p141 = scmp.ne.s32.totalorder %s136, %s138
    %p142 = scmp.eq.s32.totalorder %s18, 0
    %p143 = por %p141, %p142
    %p144 = scmp.ne.s32.totalorder %s136, %s138
    %p145 = scmp.eq.s32.totalorder %s23, 1
    %p146 = por %p144, %p145
    %p147 = scmp.ne.s32.totalorder %s138, %s139
    %p148 = scmp.eq.s32.totalorder %s23, 0
    %p149 = por %p147, %p148
    %p150 = scmp.ne.s32.totalorder %s138, %s139
    %p151 = scmp.eq.s32.totalorder %s24, 1
    %p152 = por %p150, %p151
    %p154 = scmp.ne.s32.totalorder %s139, %s153
    %p155 = scmp.eq.s32.totalorder %s24, 0
    %p156 = por %p154, %p155
    %s158 = sadd.s32 %s157, 1
    %p161 = scmp.eq.s32.totalorder %s18, 1
    %p162 = scmp.ne.s32.totalorder %s157, %s159
    %p163 = scmp.eq.s32.totalorder %s18, 0
    %p164 = por %p162, %p163
    %p165 = scmp.ne.s32.totalorder %s157, %s159
    %p166 = scmp.eq.s32.totalorder %s23, 1
    %p167 = por %p165, %p166
    %p168 = scmp.ne.s32.totalorder %s159, %s160
    %p169 = scmp.eq.s32.totalorder %s23, 0
    %p170 = por %p168, %p169
    %p171 = scmp.ne.s32.totalorder %s159, %s160
    %p172 = scmp.eq.s32.totalorder %s24, 1
    %p173 = por %p171, %p172
    %p175 = scmp.ne.s32.totalorder %s160, %s174
    %p176 = scmp.eq.s32.totalorder %s24, 0
    %p177 = por %p175, %p176
    %s179 = sadd.s32 %s178, 1
    %p182 = scmp.eq.s32.totalorder %s18, 1
    %p183 = scmp.ne.s32.totalorder %s178, %s180
    %p184 = scmp.eq.s32.totalorder %s18, 0
    %p185 = por %p183, %p184
    %p186 = scmp.ne.s32.totalorder %s178, %s180
    %p187 = scmp.eq.s32.totalorder %s23, 1
    %p188 = por %p186, %p187
    %p189 = scmp.ne.s32.totalorder %s180, %s181
    %p190 = scmp.eq.s32.totalorder %s23, 0
    %p191 = por %p189, %p190
    %p192 = scmp.ne.s32.totalorder %s180, %s181
    %p193 = scmp.eq.s32.totalorder %s24, 1
    %p194 = por %p192, %p193
    %p196 = scmp.ne.s32.totalorder %s181, %s195
    %p197 = scmp.eq.s32.totalorder %s24, 0
    %p198 = por %p196, %p197
    %s200 = sadd.s32 %s199, 1
    %p203 = scmp.eq.s32.totalorder %s18, 1
    %p204 = scmp.ne.s32.totalorder %s199, %s201
    %p205 = scmp.eq.s32.totalorder %s18, 0
    %p206 = por %p204, %p205
    %p207 = scmp.ne.s32.totalorder %s199, %s201
    %p208 = scmp.eq.s32.totalorder %s23, 1
    %p209 = por %p207, %p208
    %p210 = scmp.ne.s32.totalorder %s201, %s202
    %p211 = scmp.eq.s32.totalorder %s23, 0
    %p212 = por %p210, %p211
    %p213 = scmp.ne.s32.totalorder %s201, %s202
    %p214 = scmp.eq.s32.totalorder %s24, 1
    %p215 = por %p213, %p214
    %p217 = scmp.ne.s32.totalorder %s202, %s216
    %p218 = scmp.eq.s32.totalorder %s24, 0
    %p219 = por %p217, %p218
    %s221 = sadd.s32 %s220, 1
    %p224 = scmp.eq.s32.totalorder %s18, 1
    %p225 = scmp.ne.s32.totalorder %s220, %s222
    %p226 = scmp.eq.s32.totalorder %s18, 0
    %p227 = por %p225, %p226
    %p228 = scmp.ne.s32.totalorder %s220, %s222
    %p229 = scmp.eq.s32.totalorder %s23, 1
    %p230 = por %p228, %p229
    %p231 = scmp.ne.s32.totalorder %s222, %s223
    %p232 = scmp.eq.s32.totalorder %s23, 0
    %p233 = por %p231, %p232
    %p234 = scmp.ne.s32.totalorder %s222, %s223
    %p235 = scmp.eq.s32.totalorder %s24, 1
    %p236 = por %p234, %p235
    %p238 = scmp.ne.s32.totalorder %s223, %s237
    %p239 = scmp.eq.s32.totalorder %s24, 0
    %p240 = por %p238, %p239
    %s242 = sadd.s32 %s241, 1
    %p245 = scmp.eq.s32.totalorder %s18, 1
    %p246 = scmp.ne.s32.totalorder %s241, %s243
    %p247 = scmp.eq.s32.totalorder %s18, 0
    %p248 = por %p246, %p247
    %p249 = scmp.ne.s32.totalorder %s241, %s243
    %p250 = scmp.eq.s32.totalorder %s23, 1
    %p251 = por %p249, %p250
    %p252 = scmp.ne.s32.totalorder %s243, %s244
    %p253 = scmp.eq.s32.totalorder %s23, 0
    %p254 = por %p252, %p253
    %p255 = scmp.ne.s32.totalorder %s243, %s244
    %p256 = scmp.eq.s32.totalorder %s24, 1
    %p257 = por %p255, %p256
    %p259 = scmp.ne.s32.totalorder %s244, %s258
    %p260 = scmp.eq.s32.totalorder %s24, 0
    %p261 = por %p259, %p260
    %s263 = sadd.s32 %s262, 1
    %p266 = scmp.eq.s32.totalorder %s18, 1
    %p267 = scmp.ne.s32.totalorder %s262, %s264
    %p268 = scmp.eq.s32.totalorder %s18, 0
    %p269 = por %p267, %p268
    %p270 = scmp.ne.s32.totalorder %s262, %s264
    %p271 = scmp.eq.s32.totalorder %s23, 1
    %p272 = por %p270, %p271
    %p273 = scmp.ne.s32.totalorder %s264, %s265
    %p274 = scmp.eq.s32.totalorder %s23, 0
    %p275 = por %p273, %p274
    %p276 = scmp.ne.s32.totalorder %s264, %s265
    %p277 = scmp.eq.s32.totalorder %s24, 1
    %p278 = por %p276, %p277
    %p280 = scmp.ne.s32.totalorder %s265, %s279
    %p281 = scmp.eq.s32.totalorder %s24, 0
    %p282 = por %p280, %p281
    %s283 = ssub.s32 %s18, %s25
    %p284 = scmp.eq.s32.totalorder %s283, 0
    %s286 = sadd.s32 %s285, 1
    %s287 = scalar_select %p284, %s285, %s286
    %p290 = pneg %p284
    %p291 = scmp.eq.s32.totalorder %s18, 1
    %p292 = por %p290, %p291
    %p293 = scmp.ne.s32.totalorder %s285, %s288
    %p294 = scmp.eq.s32.totalorder %s18, 0
    %p295 = por %p293, %p294
    %p296 = scmp.ne.s32.totalorder %s285, %s288
    %p297 = scmp.eq.s32.totalorder %s23, 1
    %p298 = por %p296, %p297
    %p299 = scmp.ne.s32.totalorder %s288, %s289
    %p300 = scmp.eq.s32.totalorder %s23, 0
    %p301 = por %p299, %p300
    %p302 = scmp.ne.s32.totalorder %s288, %s289
    %p303 = scmp.eq.s32.totalorder %s24, 1
    %p304 = por %p302, %p303
    %p306 = scmp.ne.s32.totalorder %s289, %s305
    %p307 = scmp.eq.s32.totalorder %s24, 0
    %p308 = por %p306, %p307
    %p309 = scmp.le.s32.totalorder 1, %s18
    %p310 = scmp.lt.s32.totalorder %s18, 3
    %p311 = pnand %p309, %p310
    %p312 = pneg %p311
    // Predicated region
    $region9: #{decoder_forward.1} parent=5 // pred_check
      _
    $region10: #{decoder_forward.1} parent=5 // pred_check_branch
      %314 = sbr.rel (%p311) target = $region12
    $region11: #{decoder_forward.1} parent=5 // pred_region
      %s315 = ssub.s32 %s18, 1
      // Predicated region
      $region13: #{decoder_forward.1} parent=11 // pred_check
        %p316 = pneg %p65
      $region14: #{decoder_forward.1} parent=11 // pred_check_branch
        %318 = sbr.rel (%p316) target = $region16
      $region15: #{decoder_forward.1} parent=11 // pred_region
        _
      $region16: #{decoder_forward.1} parent=11 // pred_fallthru
        _
      // Predicated region
      $region17: #{decoder_forward.1} parent=11 // pred_check
        %p319 = pneg %p86
      $region18: #{decoder_forward.1} parent=11 // pred_check_branch
        %321 = sbr.rel (%p319) target = $region20
      $region19: #{decoder_forward.1} parent=11 // pred_region
        _
      $region20: #{decoder_forward.1} parent=11 // pred_fallthru
        _
      // Predicated region
      $region21: #{decoder_forward.1} parent=11 // pred_check
        %p322 = pneg %p107
      $region22: #{decoder_forward.1} parent=11 // pred_check_branch
        %324 = sbr.rel (%p322) target = $region24
      $region23: #{decoder_forward.1} parent=11 // pred_region
        _
      $region24: #{decoder_forward.1} parent=11 // pred_fallthru
        _
      // Predicated region
      $region25: #{decoder_forward.1} parent=11 // pred_check
        %p325 = pneg %p128
      $region26: #{decoder_forward.1} parent=11 // pred_check_branch
        %327 = sbr.rel (%p325) target = $region28
      $region27: #{decoder_forward.1} parent=11 // pred_region
        _
      $region28: #{decoder_forward.1} parent=11 // pred_fallthru
        _
      // Predicated region
      $region29: #{decoder_forward.1} parent=11 // pred_check
        %p328 = pneg %p149
      $region30: #{decoder_forward.1} parent=11 // pred_check_branch
        %330 = sbr.rel (%p328) target = $region32
      $region31: #{decoder_forward.1} parent=11 // pred_region
        _
      $region32: #{decoder_forward.1} parent=11 // pred_fallthru
        _
      // Predicated region
      $region33: #{decoder_forward.1} parent=11 // pred_check
        %p331 = pneg %p170
      $region34: #{decoder_forward.1} parent=11 // pred_check_branch
        %333 = sbr.rel (%p331) target = $region36
      $region35: #{decoder_forward.1} parent=11 // pred_region
        _
      $region36: #{decoder_forward.1} parent=11 // pred_fallthru
        _
      // Predicated region
      $region37: #{decoder_forward.1} parent=11 // pred_check
        %p334 = pneg %p191
      $region38: #{decoder_forward.1} parent=11 // pred_check_branch
        %336 = sbr.rel (%p334) target = $region40
      $region39: #{decoder_forward.1} parent=11 // pred_region
        _
      $region40: #{decoder_forward.1} parent=11 // pred_fallthru
        _
      // Predicated region
      $region41: #{decoder_forward.1} parent=11 // pred_check
        %p337 = pneg %p212
      $region42: #{decoder_forward.1} parent=11 // pred_check_branch
        %339 = sbr.rel (%p337) target = $region44
      $region43: #{decoder_forward.1} parent=11 // pred_region
        _
      $region44: #{decoder_forward.1} parent=11 // pred_fallthru
        _
      // Predicated region
      $region45: #{decoder_forward.1} parent=11 // pred_check
        %p340 = pneg %p233
      $region46: #{decoder_forward.1} parent=11 // pred_check_branch
        %342 = sbr.rel (%p340) target = $region48
      $region47: #{decoder_forward.1} parent=11 // pred_region
        _
      $region48: #{decoder_forward.1} parent=11 // pred_fallthru
        _
      // Predicated region
      $region49: #{decoder_forward.1} parent=11 // pred_check
        %p343 = pneg %p254
      $region50: #{decoder_forward.1} parent=11 // pred_check_branch
        %345 = sbr.rel (%p343) target = $region52
      $region51: #{decoder_forward.1} parent=11 // pred_region
        _
      $region52: #{decoder_forward.1} parent=11 // pred_fallthru
        _
      // Predicated region
      $region53: #{decoder_forward.1} parent=11 // pred_check
        %p346 = pneg %p275
      $region54: #{decoder_forward.1} parent=11 // pred_check_branch
        %348 = sbr.rel (%p346) target = $region56
      $region55: #{decoder_forward.1} parent=11 // pred_region
        _
      $region56: #{decoder_forward.1} parent=11 // pred_fallthru
        _
    $region12: #{decoder_forward.1} parent=5 // pred_fallthru
      _
    %p349 = scmp.lt.s32.totalorder %s18, 2
    // Predicated region
    $region57: #{decoder_forward.1} parent=5 // pred_check
      %p350 = pneg %p349
    $region58: #{decoder_forward.1} parent=5 // pred_check_branch
      %352 = sbr.rel (%p350) target = $region60
    $region59: #{decoder_forward.1} parent=5 // pred_region
      // Predicated region
      $region61: #{decoder_forward.1} parent=59 // pred_check
        %p353 = pneg %p38
      $region62: #{decoder_forward.1} parent=59 // pred_check_branch
        %355 = sbr.rel (%p353) target = $region64
      $region63: #{decoder_forward.1} parent=59 // pred_region
        %p356 = scmp.lt.s32.totalorder %s18, 1
        %s357 = scalar_select %p356, %s18, 1
        %s358 = scalar_lea.vmem %s0, %s357
      $region64: #{decoder_forward.1} parent=59 // pred_fallthru
        _
    $region60: #{decoder_forward.1} parent=5 // pred_fallthru
      _
    %p359 = scmp.le.s32.totalorder 1, %s18
    %p360 = scmp.lt.s32.totalorder %s18, 3
    %p361 = pnand %p359, %p360
    %p362 = pneg %p361
    // Predicated region
    $region65: #{decoder_forward.1} parent=5 // pred_check
      _
    $region66: #{decoder_forward.1} parent=5 // pred_check_branch
      %364 = sbr.rel (%p361) target = $region68
    $region67: #{decoder_forward.1} parent=5 // pred_region
      %s365 = ssub.s32 %s18, 1
      %p366 = scmp.lt.s32.totalorder %s23, 1
      %s367 = scalar_select %p366, %s23, 1
      %s368 = scalar_lea.vmem %s0, %s367
      %p369 = pneg %p44
      %p370 = pneg %p41
      %p371 = pneg %p65
      %p372 = pneg %p62
      %p373 = pneg %p86
      %p374 = pneg %p83
      %p375 = pneg %p107
      %p376 = pneg %p104
      %p377 = pneg %p128
      %p378 = pneg %p125
      %p379 = pneg %p149
      %p380 = pneg %p146
      %p381 = pneg %p170
      %p382 = pneg %p167
      %p383 = pneg %p191
      %p384 = pneg %p188
      %p385 = pneg %p212
      %p386 = pneg %p209
      %p387 = pneg %p233
      %p388 = pneg %p230
      %p389 = pneg %p254
      %p390 = pneg %p251
      %p391 = pneg %p275
      %p392 = pneg %p272
      %p393 = pneg %p301
      %p394 = pneg %p298
      %p395 = scmp.lt.s32.totalorder %s23, 1
      %s396 = scalar_select %p395, %s23, 1
      %s397 = smul.addr %s396, 4
      %s398 = smul.addr %s397, 8
      %s399 = scalar_lea.vmem %s12, %s398
      %p400 = scmp.lt.s32.totalorder %s23, 1
      %s401 = scalar_select %p400, %s23, 1
      %s402 = scalar_lea.vmem %s0, %s401
      %p403 = scmp.lt.s32.totalorder %s23, 1
      %s404 = scalar_select %p403, %s23, 1
      %s405 = smul.addr %s404, 4
      %s406 = smul.addr %s405, 8
      %s407 = scalar_lea.vmem %s12, %s406
      %v408 = vld [vmem:[%s402] sm:$0x1]
      %v409 = vld [vmem:[%s1] sm:$0xff]
      %v410 = vld [vmem:[%s1 + $0x8] sm:$0xff]
      %v411 = vld [vmem:[%s1 + $0x10] sm:$0xff]
      %v412 = vld [vmem:[%s1 + $0x18] sm:$0xff]
      %v413 = vld [vmem:[%s1 + $0x20] sm:$0xff]
      %v414 = vld [vmem:[%s1 + $0x28] sm:$0xff]
      %v415 = vld [vmem:[%s1 + $0x30] sm:$0xff]
      %v416 = vld [vmem:[%s1 + $0x38] sm:$0xff]
      %v417 = vld [vmem:[%s1 + $0x40] sm:$0xff]
      %v418 = vld [vmem:[%s1 + $0x48] sm:$0xff]
      %v419 = vld [vmem:[%s1 + $0x50] sm:$0xff]
      %v420 = vld [vmem:[%s1 + $0x58] sm:$0xff]
      %v421 = vld [vmem:[%s1 + $0x60] sm:$0xff]
      %v422 = vld [vmem:[%s1 + $0x68] sm:$0xff]
      %v423 = vld [vmem:[%s1 + $0x70] sm:$0xff]
      %v424 = vld [vmem:[%s1 + $0x78] sm:$0xff]
      %v425 = vld [vmem:[%s1 + $0x80] sm:$0xff]
      %v426 = vld [vmem:[%s1 + $0x88] sm:$0xff]
      %v427 = vld [vmem:[%s1 + $0x90] sm:$0xff]
      %v428 = vld [vmem:[%s1 + $0x98] sm:$0xff]
      %v429 = vld [vmem:[%s1 + $0xa0] sm:$0xff]
      %v430 = vld [vmem:[%s1 + $0xa8] sm:$0xff]
      %v431 = vld [vmem:[%s1 + $0xb0] sm:$0xff]
      %v432 = vld [vmem:[%s1 + $0xb8] sm:$0xff]
      %v433 = vld [vmem:[%s1 + $0xc0] sm:$0xff]
      %v434 = vld [vmem:[%s1 + $0xc8] sm:$0xff]
      %v435 = vld [vmem:[%s1 + $0xd0] sm:$0xff]
      %v436 = vld [vmem:[%s1 + $0xd8] sm:$0xff]
      %v437 = vld [vmem:[%s1 + $0xe0] sm:$0xff]
      %v438 = vld [vmem:[%s1 + $0xe8] sm:$0xff]
      %v439 = vld [vmem:[%s1 + $0xf0] sm:$0xff]
      %v440 = vld [vmem:[%s1 + $0xf8] sm:$0xff]
      %v441 = vld [vmem:[%s1 + $0x100] sm:$0xff]
      %v442 = vld [vmem:[%s1 + $0x108] sm:$0xff]
      %v443 = vld [vmem:[%s1 + $0x110] sm:$0xff]
      %v444 = vld [vmem:[%s1 + $0x118] sm:$0xff]
      %vm445 = vcmask 195584
      %v447 = vsel %vm445, %v408, 0
      %449 = vmatpush.msra.mxu0 0.0
      %450 = vmatpush.msra.mxu0 0.0
      %451 = vmatpush.msra.mxu0 0.0
      %452 = vmatpush.msra.mxu0 0.0
      %453 = vmatpush.msra.mxu0 0.0
      %454 = vmatpush.msra.mxu0 0.0
      %455 = vmatpush.msra.mxu0 0.0
      %456 = vmatpush.msra.mxu0 0.0
      %457 = vmatpush.msra.mxu0 0.0
      %458 = vmatpush.msra.mxu0 0.0
      %459 = vmatpush.msra.mxu0 0.0
      %460 = vmatpush.msra.mxu0 0.0
      %461 = vmatpush.msra.mxu0 0.0
      %462 = vmatpush.msra.mxu0 %v433
      %463 = vmatpush.msra.mxu0 %v421
      %464 = vmatpush.msra.mxu0 %v409
      %465 = vmatmul.f32.gmra.mxu0 %v447
      %v466 = vpop.f32.mrf.mxu0
      %v467 = vadd.f32 0.0, %v466
      %468 = vdwg.mxu0
      %469 = vmatpush.msra.mxu0 0.0
      %470 = vmatpush.msra.mxu0 0.0
      %471 = vmatpush.msra.mxu0 0.0
      %472 = vmatpush.msra.mxu0 0.0
      %473 = vmatpush.msra.mxu0 0.0
      %474 = vmatpush.msra.mxu0 0.0
      %475 = vmatpush.msra.mxu0 0.0
      %476 = vmatpush.msra.mxu0 0.0
      %477 = vmatpush.msra.mxu0 0.0
      %478 = vmatpush.msra.mxu0 0.0
      %479 = vmatpush.msra.mxu0 0.0
      %480 = vmatpush.msra.mxu0 0.0
      %481 = vmatpush.msra.mxu0 0.0
      %482 = vmatpush.msra.mxu0 %v434
      %483 = vmatpush.msra.mxu0 %v422
      %484 = vmatpush.msra.mxu0 %v410
      %485 = vmatmul.f32.gmra.mxu0 %v447
      %v486 = vpop.f32.mrf.mxu0
      %v487 = vadd.f32 0.0, %v486
      %488 = vdwg.mxu0
      %489 = vmatpush.msra.mxu0 0.0
      %490 = vmatpush.msra.mxu0 0.0
      %491 = vmatpush.msra.mxu0 0.0
      %492 = vmatpush.msra.mxu0 0.0
      %493 = vmatpush.msra.mxu0 0.0
      %494 = vmatpush.msra.mxu0 0.0
      %495 = vmatpush.msra.mxu0 0.0
      %496 = vmatpush.msra.mxu0 0.0
      %497 = vmatpush.msra.mxu0 0.0
      %498 = vmatpush.msra.mxu0 0.0
      %499 = vmatpush.msra.mxu0 0.0
      %500 = vmatpush.msra.mxu0 0.0
      %501 = vmatpush.msra.mxu0 0.0
      %502 = vmatpush.msra.mxu0 %v435
      %503 = vmatpush.msra.mxu0 %v423
      %504 = vmatpush.msra.mxu0 %v411
      %505 = vmatmul.f32.gmra.mxu0 %v447
      %v506 = vpop.f32.mrf.mxu0
      %v507 = vadd.f32 0.0, %v506
      %508 = vdwg.mxu0
      %509 = vmatpush.msra.mxu0 0.0
      %510 = vmatpush.msra.mxu0 0.0
      %511 = vmatpush.msra.mxu0 0.0
      %512 = vmatpush.msra.mxu0 0.0
      %513 = vmatpush.msra.mxu0 0.0
      %514 = vmatpush.msra.mxu0 0.0
      %515 = vmatpush.msra.mxu0 0.0
      %516 = vmatpush.msra.mxu0 0.0
      %517 = vmatpush.msra.mxu0 0.0
      %518 = vmatpush.msra.mxu0 0.0
      %519 = vmatpush.msra.mxu0 0.0
      %520 = vmatpush.msra.mxu0 0.0
      %521 = vmatpush.msra.mxu0 0.0
      %522 = vmatpush.msra.mxu0 %v436
      %523 = vmatpush.msra.mxu0 %v424
      %524 = vmatpush.msra.mxu0 %v412
      %525 = vmatmul.f32.gmra.mxu0 %v447
      %v526 = vpop.f32.mrf.mxu0
      %v527 = vadd.f32 0.0, %v526
      %528 = vdwg.mxu0
      %529 = vmatpush.msra.mxu0 0.0
      %530 = vmatpush.msra.mxu0 0.0
      %531 = vmatpush.msra.mxu0 0.0
      %532 = vmatpush.msra.mxu0 0.0
      %533 = vmatpush.msra.mxu0 0.0
      %534 = vmatpush.msra.mxu0 0.0
      %535 = vmatpush.msra.mxu0 0.0
      %536 = vmatpush.msra.mxu0 0.0
      %537 = vmatpush.msra.mxu0 0.0
      %538 = vmatpush.msra.mxu0 0.0
      %539 = vmatpush.msra.mxu0 0.0
      %540 = vmatpush.msra.mxu0 0.0
      %541 = vmatpush.msra.mxu0 0.0
      %542 = vmatpush.msra.mxu0 %v437
      %543 = vmatpush.msra.mxu0 %v425
      %544 = vmatpush.msra.mxu0 %v413
      %545 = vmatmul.f32.gmra.mxu0 %v447
      %v546 = vpop.f32.mrf.mxu0
      %v547 = vadd.f32 0.0, %v546
      %548 = vdwg.mxu0
      %549 = vmatpush.msra.mxu0 0.0
      %550 = vmatpush.msra.mxu0 0.0
      %551 = vmatpush.msra.mxu0 0.0
      %552 = vmatpush.msra.mxu0 0.0
      %553 = vmatpush.msra.mxu0 0.0
      %554 = vmatpush.msra.mxu0 0.0
      %555 = vmatpush.msra.mxu0 0.0
      %556 = vmatpush.msra.mxu0 0.0
      %557 = vmatpush.msra.mxu0 0.0
      %558 = vmatpush.msra.mxu0 0.0
      %559 = vmatpush.msra.mxu0 0.0
      %560 = vmatpush.msra.mxu0 0.0
      %561 = vmatpush.msra.mxu0 0.0
      %562 = vmatpush.msra.mxu0 %v438
      %563 = vmatpush.msra.mxu0 %v426
      %564 = vmatpush.msra.mxu0 %v414
      %565 = vmatmul.f32.gmra.mxu0 %v447
      %v566 = vpop.f32.mrf.mxu0
      %v567 = vadd.f32 0.0, %v566
      %568 = vdwg.mxu0
      %569 = vmatpush.msra.mxu0 0.0
      %570 = vmatpush.msra.mxu0 0.0
      %571 = vmatpush.msra.mxu0 0.0
      %572 = vmatpush.msra.mxu0 0.0
      %573 = vmatpush.msra.mxu0 0.0
      %574 = vmatpush.msra.mxu0 0.0
      %575 = vmatpush.msra.mxu0 0.0
      %576 = vmatpush.msra.mxu0 0.0
      %577 = vmatpush.msra.mxu0 0.0
      %578 = vmatpush.msra.mxu0 0.0
      %579 = vmatpush.msra.mxu0 0.0
      %580 = vmatpush.msra.mxu0 0.0
      %581 = vmatpush.msra.mxu0 0.0
      %582 = vmatpush.msra.mxu0 %v439
      %583 = vmatpush.msra.mxu0 %v427
      %584 = vmatpush.msra.mxu0 %v415
      %585 = vmatmul.f32.gmra.mxu0 %v447
      %v586 = vpop.f32.mrf.mxu0
      %v587 = vadd.f32 0.0, %v586
      %588 = vdwg.mxu0
      %589 = vmatpush.msra.mxu0 0.0
      %590 = vmatpush.msra.mxu0 0.0
      %591 = vmatpush.msra.mxu0 0.0
      %592 = vmatpush.msra.mxu0 0.0
      %593 = vmatpush.msra.mxu0 0.0
      %594 = vmatpush.msra.mxu0 0.0
      %595 = vmatpush.msra.mxu0 0.0
      %596 = vmatpush.msra.mxu0 0.0
      %597 = vmatpush.msra.mxu0 0.0
      %598 = vmatpush.msra.mxu0 0.0
      %599 = vmatpush.msra.mxu0 0.0
      %600 = vmatpush.msra.mxu0 0.0
      %601 = vmatpush.msra.mxu0 0.0
      %602 = vmatpush.msra.mxu0 %v440
      %603 = vmatpush.msra.mxu0 %v428
      %604 = vmatpush.msra.mxu0 %v416
      %605 = vmatmul.f32.gmra.mxu0 %v447
      %v606 = vpop.f32.mrf.mxu0
      %v607 = vadd.f32 0.0, %v606
      %608 = vdwg.mxu0
      %609 = vmatpush.msra.mxu0 0.0
      %610 = vmatpush.msra.mxu0 0.0
      %611 = vmatpush.msra.mxu0 0.0
      %612 = vmatpush.msra.mxu0 0.0
      %613 = vmatpush.msra.mxu0 0.0
      %614 = vmatpush.msra.mxu0 0.0
      %615 = vmatpush.msra.mxu0 0.0
      %616 = vmatpush.msra.mxu0 0.0
      %617 = vmatpush.msra.mxu0 0.0
      %618 = vmatpush.msra.mxu0 0.0
      %619 = vmatpush.msra.mxu0 0.0
      %620 = vmatpush.msra.mxu0 0.0
      %621 = vmatpush.msra.mxu0 0.0
      %622 = vmatpush.msra.mxu0 %v441
      %623 = vmatpush.msra.mxu0 %v429
      %624 = vmatpush.msra.mxu0 %v417
      %625 = vmatmul.f32.gmra.mxu0 %v447
      %v626 = vpop.f32.mrf.mxu0
      %v627 = vadd.f32 0.0, %v626
      %628 = vdwg.mxu0
      %629 = vmatpush.msra.mxu0 0.0
      %630 = vmatpush.msra.mxu0 0.0
      %631 = vmatpush.msra.mxu0 0.0
      %632 = vmatpush.msra.mxu0 0.0
      %633 = vmatpush.msra.mxu0 0.0
      %634 = vmatpush.msra.mxu0 0.0
      %635 = vmatpush.msra.mxu0 0.0
      %636 = vmatpush.msra.mxu0 0.0
      %637 = vmatpush.msra.mxu0 0.0
      %638 = vmatpush.msra.mxu0 0.0
      %639 = vmatpush.msra.mxu0 0.0
      %640 = vmatpush.msra.mxu0 0.0
      %641 = vmatpush.msra.mxu0 0.0
      %642 = vmatpush.msra.mxu0 %v442
      %643 = vmatpush.msra.mxu0 %v430
      %644 = vmatpush.msra.mxu0 %v418
      %645 = vmatmul.f32.gmra.mxu0 %v447
      %v646 = vpop.f32.mrf.mxu0
      %v647 = vadd.f32 0.0, %v646
      %648 = vdwg.mxu0
      %649 = vmatpush.msra.mxu0 0.0
      %650 = vmatpush.msra.mxu0 0.0
      %651 = vmatpush.msra.mxu0 0.0
      %652 = vmatpush.msra.mxu0 0.0
      %653 = vmatpush.msra.mxu0 0.0
      %654 = vmatpush.msra.mxu0 0.0
      %655 = vmatpush.msra.mxu0 0.0
      %656 = vmatpush.msra.mxu0 0.0
      %657 = vmatpush.msra.mxu0 0.0
      %658 = vmatpush.msra.mxu0 0.0
      %659 = vmatpush.msra.mxu0 0.0
      %660 = vmatpush.msra.mxu0 0.0
      %661 = vmatpush.msra.mxu0 0.0
      %662 = vmatpush.msra.mxu0 %v443
      %663 = vmatpush.msra.mxu0 %v431
      %664 = vmatpush.msra.mxu0 %v419
      %665 = vmatmul.f32.gmra.mxu0 %v447
      %v666 = vpop.f32.mrf.mxu0
      %v667 = vadd.f32 0.0, %v666
      %668 = vdwg.mxu0
      %669 = vmatpush.msra.mxu0 0.0
      %670 = vmatpush.msra.mxu0 0.0
      %671 = vmatpush.msra.mxu0 0.0
      %672 = vmatpush.msra.mxu0 0.0
      %673 = vmatpush.msra.mxu0 0.0
      %674 = vmatpush.msra.mxu0 0.0
      %675 = vmatpush.msra.mxu0 0.0
      %676 = vmatpush.msra.mxu0 0.0
      %677 = vmatpush.msra.mxu0 0.0
      %678 = vmatpush.msra.mxu0 0.0
      %679 = vmatpush.msra.mxu0 0.0
      %680 = vmatpush.msra.mxu0 0.0
      %681 = vmatpush.msra.mxu0 0.0
      %682 = vmatpush.msra.mxu0 %v444
      %683 = vmatpush.msra.mxu0 %v432
      %684 = vmatpush.msra.mxu0 %v420
      %685 = vmatmul.f32.gmra.mxu0 %v447
      %v686 = vpop.f32.mrf.mxu0
      %v687 = vadd.f32 0.0, %v686
      %688 = vdwg.mxu0
      %v692 = vrot.slane %v527, 7
      %v693 = vrot.slane %v547, 7
      %v694 = vrot.slane %v567, 7
      %v701 = vrot.slane %v587, 6
      %v702 = vrot.slane %v607, 6
      %v703 = vrot.slane %v627, 6
      %v710 = vrot.slane %v647, 5
      %v711 = vrot.slane %v667, 5
      %v712 = vrot.slane %v687, 5
      %vm716 = vcmask 1040384
      %v717 = vsel %vm716, %v467, %v692
      %v718 = vsel %vm716, %v487, %v693
      %v719 = vsel %vm716, %v507, %v694
      %vm720 = vcmask 1041408
      %v721 = vsel %vm720, %v717, %v701
      %v722 = vsel %vm720, %v718, %v702
      %v723 = vsel %vm720, %v719, %v703
      %vm724 = vcmask 1042432
      %v725 = vsel %vm724, %v721, %v710
      %v726 = vsel %vm724, %v722, %v711
      %v727 = vsel %vm724, %v723, %v712
      %v728 = vld [vmem:[%s2] sm:$0xff]
      %v729 = vld [vmem:[%s2 + $0x8] sm:$0xf]
      %732 = vst [vmem:[#allocation1] ss:$2 sm:$0xff] %v728
      %s733 = scalar_lea.vmem [#allocation1], 16
      %734 = vst [vmem:[%s733] ss:$2 sm:$0xff] %v729
      %v735 = vld.sshfl [vmem:[#allocation1] sm:$0xff pattern:$0x75316420]
      %v736 = vld.sshfl [vmem:[#allocation1 + $0x8] sm:$0xff pattern:$0x75316420]
      %v737 = vld.sshfl [vmem:[#allocation1 + $0x10] sm:$0xff pattern:$0x75316420]
      %v741 = vadd.f32 %v725, %v735
      %v742 = vadd.f32 %v726, %v736
      %v743 = vadd.f32 %v727, %v737
      %v744 = vmax.f32 %v741, 0.0
      %v745 = vmax.f32 %v742, 0.0
      %v746 = vmax.f32 %v743, 0.0
      %v747 = vld [vmem:[%s3] sm:$0xff]
      %v748 = vld [vmem:[%s3 + $0x8] sm:$0xf]
      %vm749 = vcmask 31744
      %v751 = vsel %vm749, %v747, 0
      %v754 = vsel %vm749, %v748, 0
      %vm756 = vcmask 1043456
      %v758 = vsel %vm756, %v744, 0
      %v761 = vsel %vm756, %v745, 0
      %v764 = vsel %vm756, %v746, 0
      %766 = vmatpush.msra.mxu0 0.0
      %767 = vmatpush.msra.mxu0 0.0
      %768 = vmatpush.msra.mxu0 0.0
      %769 = vmatpush.msra.mxu0 0.0
      %770 = vmatpush.msra.mxu0 0.0
      %771 = vmatpush.msra.mxu0 0.0
      %772 = vmatpush.msra.mxu0 0.0
      %773 = vmatpush.msra.mxu0 0.0
      %774 = vmatpush.msra.mxu0 0.0
      %775 = vmatpush.msra.mxu0 0.0
      %776 = vmatpush.msra.mxu0 0.0
      %777 = vmatpush.msra.mxu0 0.0
      %778 = vmatpush.msra.mxu0 0.0
      %779 = vmatpush.msra.mxu0 0.0
      %780 = vmatpush.msra.mxu0 0.0
      %781 = vmatpush.msra.mxu0 %v758
      %782 = vmatmul.f32.gmra.mxu0 %v751
      %v783 = vpop.f32.mrf.mxu0
      %v784 = vadd.f32 0.0, %v783
      %785 = vmatmul.f32.gmra.mxu0 %v754
      %v786 = vpop.f32.mrf.mxu0
      %v787 = vadd.f32 0.0, %v786
      %788 = vdwg.mxu0
      %789 = vmatpush.msra.mxu0 0.0
      %790 = vmatpush.msra.mxu0 0.0
      %791 = vmatpush.msra.mxu0 0.0
      %792 = vmatpush.msra.mxu0 0.0
      %793 = vmatpush.msra.mxu0 0.0
      %794 = vmatpush.msra.mxu0 0.0
      %795 = vmatpush.msra.mxu0 0.0
      %796 = vmatpush.msra.mxu0 0.0
      %797 = vmatpush.msra.mxu0 0.0
      %798 = vmatpush.msra.mxu0 0.0
      %799 = vmatpush.msra.mxu0 0.0
      %800 = vmatpush.msra.mxu0 0.0
      %801 = vmatpush.msra.mxu0 0.0
      %802 = vmatpush.msra.mxu0 0.0
      %803 = vmatpush.msra.mxu0 0.0
      %804 = vmatpush.msra.mxu0 %v761
      %805 = vmatmul.f32.gmra.mxu0 %v751
      %v806 = vpop.f32.mrf.mxu0
      %v807 = vadd.f32 0.0, %v806
      %808 = vmatmul.f32.gmra.mxu0 %v754
      %v809 = vpop.f32.mrf.mxu0
      %v810 = vadd.f32 0.0, %v809
      %811 = vdwg.mxu0
      %812 = vmatpush.msra.mxu0 0.0
      %813 = vmatpush.msra.mxu0 0.0
      %814 = vmatpush.msra.mxu0 0.0
      %815 = vmatpush.msra.mxu0 0.0
      %816 = vmatpush.msra.mxu0 0.0
      %817 = vmatpush.msra.mxu0 0.0
      %818 = vmatpush.msra.mxu0 0.0
      %819 = vmatpush.msra.mxu0 0.0
      %820 = vmatpush.msra.mxu0 0.0
      %821 = vmatpush.msra.mxu0 0.0
      %822 = vmatpush.msra.mxu0 0.0
      %823 = vmatpush.msra.mxu0 0.0
      %824 = vmatpush.msra.mxu0 0.0
      %825 = vmatpush.msra.mxu0 0.0
      %826 = vmatpush.msra.mxu0 0.0
      %827 = vmatpush.msra.mxu0 %v764
      %828 = vmatmul.f32.gmra.mxu0 %v751
      %v829 = vpop.f32.mrf.mxu0
      %v830 = vadd.f32 0.0, %v829
      %831 = vmatmul.f32.gmra.mxu0 %v754
      %v832 = vpop.f32.mrf.mxu0
      %v833 = vadd.f32 0.0, %v832
      %834 = vdwg.mxu0
      %v835 = vld [vmem:[%s4] sm:$0xff]
      %v836 = vld [vmem:[%s4 + $0x8] sm:$0xff]
      %v837 = vld [vmem:[%s4 + $0x10] sm:$0xff]
      %v838 = vld [vmem:[%s4 + $0x18] sm:$0xff]
      %v839 = vld [vmem:[%s4 + $0x20] sm:$0xff]
      %v840 = vld [vmem:[%s4 + $0x28] sm:$0xff]
      %v841 = vld [vmem:[%s4 + $0x30] sm:$0xff]
      %v842 = vld [vmem:[%s4 + $0x38] sm:$0xff]
      %v843 = vld [vmem:[%s4 + $0x40] sm:$0xff]
      %v844 = vld [vmem:[%s4 + $0x48] sm:$0xff]
      %v845 = vld [vmem:[%s4 + $0x50] sm:$0xff]
      %v846 = vld [vmem:[%s4 + $0x58] sm:$0xff]
      %v847 = vld [vmem:[%s4 + $0x60] sm:$0xff]
      %v848 = vld [vmem:[%s4 + $0x68] sm:$0xff]
      %v849 = vld [vmem:[%s4 + $0x70] sm:$0xff]
      %v850 = vld [vmem:[%s4 + $0x78] sm:$0xff]
      %v851 = vld [vmem:[%s4 + $0x80] sm:$0xff]
      %v852 = vld [vmem:[%s4 + $0x88] sm:$0xff]
      %v853 = vld [vmem:[%s4 + $0x90] sm:$0xff]
      %v854 = vld [vmem:[%s4 + $0x98] sm:$0xff]
      %v855 = vld [vmem:[%s4 + $0xa0] sm:$0xff]
      %v856 = vld [vmem:[%s4 + $0xa8] sm:$0xff]
      %v857 = vld [vmem:[%s4 + $0xb0] sm:$0xff]
      %v858 = vld [vmem:[%s4 + $0xb8] sm:$0xff]
      %v859 = vld [vmem:[%s4 + $0xc0] sm:$0xff]
      %v860 = vld [vmem:[%s4 + $0xc8] sm:$0xff]
      %v861 = vld [vmem:[%s4 + $0xd0] sm:$0xff]
      %v862 = vld [vmem:[%s4 + $0xd8] sm:$0xff]
      %v863 = vld [vmem:[%s4 + $0xe0] sm:$0xff]
      %v864 = vld [vmem:[%s4 + $0xe8] sm:$0xff]
      %v865 = vld [vmem:[%s4 + $0xf0] sm:$0xff]
      %v866 = vld [vmem:[%s4 + $0xf8] sm:$0xff]
      %v867 = vld [vmem:[%s4 + $0x100] sm:$0xff]
      %v868 = vld [vmem:[%s4 + $0x108] sm:$0xff]
      %v869 = vld [vmem:[%s4 + $0x110] sm:$0xff]
      %v870 = vld [vmem:[%s4 + $0x118] sm:$0xff]
      %v871 = vld [vmem:[%s4 + $0x120] sm:$0xff]
      %v872 = vld [vmem:[%s4 + $0x128] sm:$0xff]
      %v873 = vld [vmem:[%s4 + $0x130] sm:$0xff]
      %v874 = vld [vmem:[%s4 + $0x138] sm:$0xff]
      %v875 = vld [vmem:[%s4 + $0x140] sm:$0xff]
      %v876 = vld [vmem:[%s4 + $0x148] sm:$0xff]
      %v877 = vld [vmem:[%s4 + $0x150] sm:$0xff]
      %v878 = vld [vmem:[%s4 + $0x158] sm:$0xff]
      %v879 = vld [vmem:[%s4 + $0x160] sm:$0xff]
      %v880 = vld [vmem:[%s4 + $0x168] sm:$0xff]
      %v881 = vld [vmem:[%s4 + $0x170] sm:$0xff]
      %v882 = vld [vmem:[%s4 + $0x178] sm:$0xff]
      %v883 = vld [vmem:[%s4 + $0x180] sm:$0xff]
      %v884 = vld [vmem:[%s4 + $0x188] sm:$0xff]
      %v885 = vld [vmem:[%s4 + $0x190] sm:$0xff]
      %v886 = vld [vmem:[%s4 + $0x198] sm:$0xff]
      %v887 = vld [vmem:[%s4 + $0x1a0] sm:$0xff]
      %v888 = vld [vmem:[%s4 + $0x1a8] sm:$0xff]
      %v889 = vld [vmem:[%s4 + $0x1b0] sm:$0xff]
      %v890 = vld [vmem:[%s4 + $0x1b8] sm:$0xff]
      %v891 = vld [vmem:[%s4 + $0x1c0] sm:$0xff]
      %v892 = vld [vmem:[%s4 + $0x1c8] sm:$0xff]
      %v893 = vld [vmem:[%s4 + $0x1d0] sm:$0xff]
      %v894 = vld [vmem:[%s4 + $0x1d8] sm:$0xff]
      %v895 = vld [vmem:[%s4 + $0x1e0] sm:$0xff]
      %v896 = vld [vmem:[%s4 + $0x1e8] sm:$0xff]
      %v897 = vld [vmem:[%s4 + $0x1f0] sm:$0xff]
      %v898 = vld [vmem:[%s4 + $0x1f8] sm:$0xff]
      %v899 = vld [vmem:[%s4 + $0x200] sm:$0xff]
      %v900 = vld [vmem:[%s4 + $0x208] sm:$0xff]
      %v901 = vld [vmem:[%s4 + $0x210] sm:$0xff]
      %v902 = vld [vmem:[%s4 + $0x218] sm:$0xff]
      %v903 = vld [vmem:[%s4 + $0x220] sm:$0xff]
      %v904 = vld [vmem:[%s4 + $0x228] sm:$0xff]
      %v905 = vld [vmem:[%s4 + $0x230] sm:$0xff]
      %v906 = vld [vmem:[%s4 + $0x238] sm:$0xff]
      %v907 = vld [vmem:[%s4 + $0x240] sm:$0xff]
      %v908 = vld [vmem:[%s4 + $0x248] sm:$0xff]
      %v909 = vld [vmem:[%s4 + $0x250] sm:$0xff]
      %v910 = vld [vmem:[%s4 + $0x258] sm:$0xff]
      %v911 = vld [vmem:[%s4 + $0x260] sm:$0xff]
      %v912 = vld [vmem:[%s4 + $0x268] sm:$0xff]
      %v913 = vld [vmem:[%s4 + $0x270] sm:$0xff]
      %v914 = vld [vmem:[%s4 + $0x278] sm:$0xff]
      %v915 = vld [vmem:[%s4 + $0x280] sm:$0xff]
      %v916 = vld [vmem:[%s4 + $0x288] sm:$0xff]
      %v917 = vld [vmem:[%s4 + $0x290] sm:$0xff]
      %v918 = vld [vmem:[%s4 + $0x298] sm:$0xff]
      %v919 = vld [vmem:[%s4 + $0x2a0] sm:$0xff]
      %v920 = vld [vmem:[%s4 + $0x2a8] sm:$0xff]
      %v921 = vld [vmem:[%s4 + $0x2b0] sm:$0xff]
      %v922 = vld [vmem:[%s4 + $0x2b8] sm:$0xff]
      %v923 = vld [vmem:[%s4 + $0x2c0] sm:$0xff]
      %v924 = vld [vmem:[%s4 + $0x2c8] sm:$0xff]
      %v925 = vld [vmem:[%s4 + $0x2d0] sm:$0xff]
      %v926 = vld [vmem:[%s4 + $0x2d8] sm:$0xff]
      %v927 = vld [vmem:[%s4 + $0x2e0] sm:$0xff]
      %v928 = vld [vmem:[%s4 + $0x2e8] sm:$0xff]
      %v929 = vld [vmem:[%s4 + $0x2f0] sm:$0xff]
      %v930 = vld [vmem:[%s4 + $0x2f8] sm:$0xff]
      %v931 = vld [vmem:[%s4 + $0x300] sm:$0xff]
      %v932 = vld [vmem:[%s4 + $0x308] sm:$0xff]
      %v933 = vld [vmem:[%s4 + $0x310] sm:$0xff]
      %v934 = vld [vmem:[%s4 + $0x318] sm:$0xff]
      %v935 = vld [vmem:[%s4 + $0x320] sm:$0xff]
      %v936 = vld [vmem:[%s4 + $0x328] sm:$0xff]
      %v937 = vld [vmem:[%s4 + $0x330] sm:$0xff]
      %v938 = vld [vmem:[%s4 + $0x338] sm:$0xff]
      %v939 = vld [vmem:[%s4 + $0x340] sm:$0xff]
      %v940 = vld [vmem:[%s4 + $0x348] sm:$0xff]
      %v941 = vld [vmem:[%s4 + $0x350] sm:$0xff]
      %v942 = vld [vmem:[%s4 + $0x358] sm:$0xff]
      %v943 = vld [vmem:[%s4 + $0x360] sm:$0xff]
      %v944 = vld [vmem:[%s4 + $0x368] sm:$0xff]
      %v945 = vld [vmem:[%s4 + $0x370] sm:$0xff]
      %v946 = vld [vmem:[%s4 + $0x378] sm:$0xff]
      %v947 = vld [vmem:[%s4 + $0x380] sm:$0xff]
      %v948 = vld [vmem:[%s4 + $0x388] sm:$0xff]
      %v949 = vld [vmem:[%s4 + $0x390] sm:$0xff]
      %v950 = vld [vmem:[%s4 + $0x398] sm:$0xff]
      %v951 = vld [vmem:[%s4 + $0x3a0] sm:$0xff]
      %v952 = vld [vmem:[%s4 + $0x3a8] sm:$0xff]
      %v953 = vld [vmem:[%s4 + $0x3b0] sm:$0xff]
      %v954 = vld [vmem:[%s4 + $0x3b8] sm:$0xff]
      %v955 = vld [vmem:[%s4 + $0x3c0] sm:$0xff]
      %v956 = vld [vmem:[%s4 + $0x3c8] sm:$0xff]
      %v957 = vld [vmem:[%s4 + $0x3d0] sm:$0xff]
      %v958 = vld [vmem:[%s4 + $0x3d8] sm:$0xff]
      %v959 = vld [vmem:[%s4 + $0x3e0] sm:$0xff]
      %v960 = vld [vmem:[%s4 + $0x3e8] sm:$0xff]
      %v961 = vld [vmem:[%s4 + $0x3f0] sm:$0xff]
      %v962 = vld [vmem:[%s4 + $0x3f8] sm:$0xff]
      %v963 = vld [vmem:[%s4 + $0x400] sm:$0xff]
      %v964 = vld [vmem:[%s4 + $0x408] sm:$0xff]
      %v965 = vld [vmem:[%s4 + $0x410] sm:$0xff]
      %v966 = vld [vmem:[%s4 + $0x418] sm:$0xff]
      %v967 = vld [vmem:[%s4 + $0x420] sm:$0xff]
      %v968 = vld [vmem:[%s4 + $0x428] sm:$0xff]
      %v969 = vld [vmem:[%s4 + $0x430] sm:$0xff]
      %v970 = vld [vmem:[%s4 + $0x438] sm:$0xff]
      %v971 = vld [vmem:[%s4 + $0x440] sm:$0xff]
      %v972 = vld [vmem:[%s4 + $0x448] sm:$0xff]
      %v973 = vld [vmem:[%s4 + $0x450] sm:$0xff]
      %v974 = vld [vmem:[%s4 + $0x458] sm:$0xff]
      %v975 = vld [vmem:[%s4 + $0x460] sm:$0xff]
      %v976 = vld [vmem:[%s4 + $0x468] sm:$0xff]
      %v977 = vld [vmem:[%s4 + $0x470] sm:$0xff]
      %v978 = vld [vmem:[%s4 + $0x478] sm:$0xff]
      %s979 = scalar_lea.vmem %s4, 1152
      %v980 = vld [vmem:[%s979] sm:$0xff]
      %v981 = vld [vmem:[%s979 + $0x8] sm:$0xff]
      %v982 = vld [vmem:[%s979 + $0x10] sm:$0xff]
      %v983 = vld [vmem:[%s979 + $0x18] sm:$0xff]
      %v984 = vld [vmem:[%s979 + $0x20] sm:$0xff]
      %v985 = vld [vmem:[%s979 + $0x28] sm:$0xff]
      %v986 = vld [vmem:[%s979 + $0x30] sm:$0xff]
      %v987 = vld [vmem:[%s979 + $0x38] sm:$0xff]
      %v988 = vld [vmem:[%s979 + $0x40] sm:$0xff]
      %v989 = vld [vmem:[%s979 + $0x48] sm:$0xff]
      %v990 = vld [vmem:[%s979 + $0x50] sm:$0xff]
      %v991 = vld [vmem:[%s979 + $0x58] sm:$0xff]
      %v992 = vld [vmem:[%s979 + $0x60] sm:$0xff]
      %v993 = vld [vmem:[%s979 + $0x68] sm:$0xff]
      %v994 = vld [vmem:[%s979 + $0x70] sm:$0xff]
      %v995 = vld [vmem:[%s979 + $0x78] sm:$0xff]
      %v996 = vld [vmem:[%s979 + $0x80] sm:$0xff]
      %v997 = vld [vmem:[%s979 + $0x88] sm:$0xff]
      %v998 = vld [vmem:[%s979 + $0x90] sm:$0xff]
      %v999 = vld [vmem:[%s979 + $0x98] sm:$0xff]
      %v1000 = vld [vmem:[%s979 + $0xa0] sm:$0xff]
      %v1001 = vld [vmem:[%s979 + $0xa8] sm:$0xff]
      %v1002 = vld [vmem:[%s979 + $0xb0] sm:$0xff]
      %v1003 = vld [vmem:[%s979 + $0xb8] sm:$0xff]
      %v1004 = vld [vmem:[%s979 + $0xc0] sm:$0xff]
      %v1005 = vld [vmem:[%s979 + $0xc8] sm:$0xff]
      %v1006 = vld [vmem:[%s979 + $0xd0] sm:$0xff]
      %v1007 = vld [vmem:[%s979 + $0xd8] sm:$0xff]
      %v1008 = vld [vmem:[%s979 + $0xe0] sm:$0xff]
      %v1009 = vld [vmem:[%s979 + $0xe8] sm:$0xff]
      %v1010 = vld [vmem:[%s979 + $0xf0] sm:$0xff]
      %v1011 = vld [vmem:[%s979 + $0xf8] sm:$0xff]
      %v1012 = vld [vmem:[%s979 + $0x100] sm:$0xff]
      %v1013 = vld [vmem:[%s979 + $0x108] sm:$0xff]
      %v1014 = vld [vmem:[%s979 + $0x110] sm:$0xff]
      %v1015 = vld [vmem:[%s979 + $0x118] sm:$0xff]
      %v1016 = vld [vmem:[%s979 + $0x120] sm:$0xff]
      %v1017 = vld [vmem:[%s979 + $0x128] sm:$0xff]
      %v1018 = vld [vmem:[%s979 + $0x130] sm:$0xff]
      %v1019 = vld [vmem:[%s979 + $0x138] sm:$0xff]
      %v1020 = vld [vmem:[%s979 + $0x140] sm:$0xff]
      %v1021 = vld [vmem:[%s979 + $0x148] sm:$0xff]
      %v1022 = vld [vmem:[%s979 + $0x150] sm:$0xff]
      %v1023 = vld [vmem:[%s979 + $0x158] sm:$0xff]
      %v1024 = vld [vmem:[%s979 + $0x160] sm:$0xff]
      %v1025 = vld [vmem:[%s979 + $0x168] sm:$0xff]
      %v1026 = vld [vmem:[%s979 + $0x170] sm:$0xff]
      %v1027 = vld [vmem:[%s979 + $0x178] sm:$0xff]
      %v1028 = vld [vmem:[%s979 + $0x180] sm:$0xff]
      %v1029 = vld [vmem:[%s979 + $0x188] sm:$0xff]
      %v1030 = vld [vmem:[%s979 + $0x190] sm:$0xff]
      %v1031 = vld [vmem:[%s979 + $0x198] sm:$0xff]
      %v1032 = vld [vmem:[%s979 + $0x1a0] sm:$0xff]
      %v1033 = vld [vmem:[%s979 + $0x1a8] sm:$0xff]
      %v1034 = vld [vmem:[%s979 + $0x1b0] sm:$0xff]
      %v1035 = vld [vmem:[%s979 + $0x1b8] sm:$0xff]
      %v1036 = vld [vmem:[%s979 + $0x1c0] sm:$0xff]
      %v1037 = vld [vmem:[%s979 + $0x1c8] sm:$0xff]
      %v1038 = vld [vmem:[%s979 + $0x1d0] sm:$0xff]
      %v1039 = vld [vmem:[%s979 + $0x1d8] sm:$0xff]
      %v1040 = vld [vmem:[%s979 + $0x1e0] sm:$0xff]
      %v1041 = vld [vmem:[%s979 + $0x1e8] sm:$0xff]
      %v1042 = vld [vmem:[%s979 + $0x1f0] sm:$0xff]
      %v1043 = vld [vmem:[%s979 + $0x1f8] sm:$0xff]
      %v1044 = vld [vmem:[%s979 + $0x200] sm:$0xff]
      %v1045 = vld [vmem:[%s979 + $0x208] sm:$0xff]
      %v1046 = vld [vmem:[%s979 + $0x210] sm:$0xff]
      %v1047 = vld [vmem:[%s979 + $0x218] sm:$0xff]
      %v1048 = vld [vmem:[%s979 + $0x220] sm:$0xff]
      %v1049 = vld [vmem:[%s979 + $0x228] sm:$0xff]
      %v1050 = vld [vmem:[%s979 + $0x230] sm:$0xff]
      %v1051 = vld [vmem:[%s979 + $0x238] sm:$0xff]
      %v1052 = vld [vmem:[%s979 + $0x240] sm:$0xff]
      %v1053 = vld [vmem:[%s979 + $0x248] sm:$0xff]
      %v1054 = vld [vmem:[%s979 + $0x250] sm:$0xff]
      %v1055 = vld [vmem:[%s979 + $0x258] sm:$0xff]
      %v1056 = vld [vmem:[%s979 + $0x260] sm:$0xff]
      %v1057 = vld [vmem:[%s979 + $0x268] sm:$0xff]
      %v1058 = vld [vmem:[%s979 + $0x270] sm:$0xff]
      %v1059 = vld [vmem:[%s979 + $0x278] sm:$0xff]
      %v1060 = vld [vmem:[%s979 + $0x280] sm:$0xff]
      %v1061 = vld [vmem:[%s979 + $0x288] sm:$0xff]
      %v1062 = vld [vmem:[%s979 + $0x290] sm:$0xff]
      %v1063 = vld [vmem:[%s979 + $0x298] sm:$0xff]
      %v1064 = vld [vmem:[%s979 + $0x2a0] sm:$0xff]
      %v1065 = vld [vmem:[%s979 + $0x2a8] sm:$0xff]
      %v1066 = vld [vmem:[%s979 + $0x2b0] sm:$0xff]
      %v1067 = vld [vmem:[%s979 + $0x2b8] sm:$0xff]
      %v1068 = vld [vmem:[%s979 + $0x2c0] sm:$0xff]
      %v1069 = vld [vmem:[%s979 + $0x2c8] sm:$0xff]
      %v1070 = vld [vmem:[%s979 + $0x2d0] sm:$0xff]
      %v1071 = vld [vmem:[%s979 + $0x2d8] sm:$0xff]
      %v1072 = vld [vmem:[%s979 + $0x2e0] sm:$0xff]
      %v1073 = vld [vmem:[%s979 + $0x2e8] sm:$0xff]
      %v1074 = vld [vmem:[%s979 + $0x2f0] sm:$0xff]
      %v1075 = vld [vmem:[%s979 + $0x2f8] sm:$0xff]
      %v1076 = vld [vmem:[%s979 + $0x300] sm:$0xff]
      %v1077 = vld [vmem:[%s979 + $0x308] sm:$0xff]
      %v1078 = vld [vmem:[%s979 + $0x310] sm:$0xff]
      %v1079 = vld [vmem:[%s979 + $0x318] sm:$0xff]
      %v1080 = vld [vmem:[%s979 + $0x320] sm:$0xff]
      %v1081 = vld [vmem:[%s979 + $0x328] sm:$0xff]
      %v1082 = vld [vmem:[%s979 + $0x330] sm:$0xff]
      %v1083 = vld [vmem:[%s979 + $0x338] sm:$0xff]
      %v1084 = vld [vmem:[%s979 + $0x340] sm:$0xff]
      %v1085 = vld [vmem:[%s979 + $0x348] sm:$0xff]
      %v1086 = vld [vmem:[%s979 + $0x350] sm:$0xff]
      %v1087 = vld [vmem:[%s979 + $0x358] sm:$0xff]
      %v1088 = vld [vmem:[%s979 + $0x360] sm:$0xff]
      %v1089 = vld [vmem:[%s979 + $0x368] sm:$0xff]
      %v1090 = vld [vmem:[%s979 + $0x370] sm:$0xff]
      %v1091 = vld [vmem:[%s979 + $0x378] sm:$0xff]
      %v1092 = vld [vmem:[%s979 + $0x380] sm:$0xff]
      %v1093 = vld [vmem:[%s979 + $0x388] sm:$0xff]
      %v1094 = vld [vmem:[%s979 + $0x390] sm:$0xff]
      %v1095 = vld [vmem:[%s979 + $0x398] sm:$0xff]
      %v1096 = vld [vmem:[%s979 + $0x3a0] sm:$0xff]
      %v1097 = vld [vmem:[%s979 + $0x3a8] sm:$0xff]
      %v1098 = vld [vmem:[%s979 + $0x3b0] sm:$0xff]
      %v1099 = vld [vmem:[%s979 + $0x3b8] sm:$0xff]
      %v1100 = vld [vmem:[%s979 + $0x3c0] sm:$0xff]
      %v1101 = vld [vmem:[%s979 + $0x3c8] sm:$0xff]
      %v1102 = vld [vmem:[%s979 + $0x3d0] sm:$0xff]
      %v1103 = vld [vmem:[%s979 + $0x3d8] sm:$0xff]
      %v1104 = vld [vmem:[%s979 + $0x3e0] sm:$0xff]
      %v1105 = vld [vmem:[%s979 + $0x3e8] sm:$0xff]
      %v1106 = vld [vmem:[%s979 + $0x3f0] sm:$0xff]
      %v1107 = vld [vmem:[%s979 + $0x3f8] sm:$0xff]
      %v1108 = vld [vmem:[%s979 + $0x400] sm:$0xff]
      %v1109 = vld [vmem:[%s979 + $0x408] sm:$0xff]
      %v1110 = vld [vmem:[%s979 + $0x410] sm:$0xff]
      %v1111 = vld [vmem:[%s979 + $0x418] sm:$0xff]
      %v1112 = vld [vmem:[%s979 + $0x420] sm:$0xff]
      %v1113 = vld [vmem:[%s979 + $0x428] sm:$0xff]
      %v1114 = vld [vmem:[%s979 + $0x430] sm:$0xff]
      %v1115 = vld [vmem:[%s979 + $0x438] sm:$0xff]
      %v1116 = vld [vmem:[%s979 + $0x440] sm:$0xff]
      %v1117 = vld [vmem:[%s979 + $0x448] sm:$0xff]
      %v1118 = vld [vmem:[%s979 + $0x450] sm:$0xff]
      %v1119 = vld [vmem:[%s979 + $0x458] sm:$0xff]
      %v1120 = vld [vmem:[%s979 + $0x460] sm:$0xff]
      %v1121 = vld [vmem:[%s979 + $0x468] sm:$0xff]
      %v1122 = vld [vmem:[%s979 + $0x470] sm:$0xff]
      %v1123 = vld [vmem:[%s979 + $0x478] sm:$0xff]
      %vm1130 = vcmask 1046528
      %v1131 = vrot.slane %v784, 1
      %v1132 = vrot.slane %v787, 1
      %v1133 = vsel %vm1130, %v1131, %v1132
      %v1134 = vrot.slane %v807, 1
      %v1135 = vrot.slane %v810, 1
      %v1136 = vsel %vm1130, %v1134, %v1135
      %v1137 = vrot.slane %v830, 1
      %v1138 = vrot.slane %v833, 1
      %v1139 = vsel %vm1130, %v1137, %v1138
      %1143 = vmatpush.msra.mxu0 %v1025
      %1144 = vmatpush.msra.mxu0 %v1022
      %1145 = vmatpush.msra.mxu0 %v1019
      %1146 = vmatpush.msra.mxu0 %v1016
      %1147 = vmatpush.msra.mxu0 %v1013
      %1148 = vmatpush.msra.mxu0 %v1010
      %1149 = vmatpush.msra.mxu0 %v1007
      %1150 = vmatpush.msra.mxu0 %v1004
      %1151 = vmatpush.msra.mxu0 %v1001
      %1152 = vmatpush.msra.mxu0 %v998
      %1153 = vmatpush.msra.mxu0 %v995
      %1154 = vmatpush.msra.mxu0 %v992
      %1155 = vmatpush.msra.mxu0 %v989
      %1156 = vmatpush.msra.mxu0 %v986
      %1157 = vmatpush.msra.mxu0 %v983
      %1158 = vmatpush.msra.mxu0 %v980
      %1159 = vmatmul.f32.gmra.mxu0 %v1133
      %v1160 = vpop.f32.mrf.mxu0
      %v1161 = vadd.f32 0.0, %v1160
      %1162 = vdwg.mxu0
      %1163 = vmatpush.msra.mxu0 %v1073
      %1164 = vmatpush.msra.mxu0 %v1070
      %1165 = vmatpush.msra.mxu0 %v1067
      %1166 = vmatpush.msra.mxu0 %v1064
      %1167 = vmatpush.msra.mxu0 %v1061
      %1168 = vmatpush.msra.mxu0 %v1058
      %1169 = vmatpush.msra.mxu0 %v1055
      %1170 = vmatpush.msra.mxu0 %v1052
      %1171 = vmatpush.msra.mxu0 %v1049
      %1172 = vmatpush.msra.mxu0 %v1046
      %1173 = vmatpush.msra.mxu0 %v1043
      %1174 = vmatpush.msra.mxu0 %v1040
      %1175 = vmatpush.msra.mxu0 %v1037
      %1176 = vmatpush.msra.mxu0 %v1034
      %1177 = vmatpush.msra.mxu0 %v1031
      %1178 = vmatpush.msra.mxu0 %v1028
      %1179 = vmatmul.f32.gmra.mxu0 %v1136
      %v1180 = vpop.f32.mrf.mxu0
      %v1181 = vadd.f32 %v1161, %v1180
      %1182 = vdwg.mxu0
      %1183 = vmatpush.msra.mxu0 %v1121
      %1184 = vmatpush.msra.mxu0 %v1118
      %1185 = vmatpush.msra.mxu0 %v1115
      %1186 = vmatpush.msra.mxu0 %v1112
      %1187 = vmatpush.msra.mxu0 %v1109
      %1188 = vmatpush.msra.mxu0 %v1106
      %1189 = vmatpush.msra.mxu0 %v1103
      %1190 = vmatpush.msra.mxu0 %v1100
      %1191 = vmatpush.msra.mxu0 %v1097
      %1192 = vmatpush.msra.mxu0 %v1094
      %1193 = vmatpush.msra.mxu0 %v1091
      %1194 = vmatpush.msra.mxu0 %v1088
      %1195 = vmatpush.msra.mxu0 %v1085
      %1196 = vmatpush.msra.mxu0 %v1082
      %1197 = vmatpush.msra.mxu0 %v1079
      %1198 = vmatpush.msra.mxu0 %v1076
      %1199 = vmatmul.f32.gmra.mxu0 %v1139
      %v1200 = vpop.f32.mrf.mxu0
      %v1201 = vadd.f32 %v1181, %v1200
      %1202 = vdwg.mxu0
      %1203 = vmatpush.msra.mxu0 %v1026
      %1204 = vmatpush.msra.mxu0 %v1023
      %1205 = vmatpush.msra.mxu0 %v1020
      %1206 = vmatpush.msra.mxu0 %v1017
      %1207 = vmatpush.msra.mxu0 %v1014
      %1208 = vmatpush.msra.mxu0 %v1011
      %1209 = vmatpush.msra.mxu0 %v1008
      %1210 = vmatpush.msra.mxu0 %v1005
      %1211 = vmatpush.msra.mxu0 %v1002
      %1212 = vmatpush.msra.mxu0 %v999
      %1213 = vmatpush.msra.mxu0 %v996
      %1214 = vmatpush.msra.mxu0 %v993
      %1215 = vmatpush.msra.mxu0 %v990
      %1216 = vmatpush.msra.mxu0 %v987
      %1217 = vmatpush.msra.mxu0 %v984
      %1218 = vmatpush.msra.mxu0 %v981
      %1219 = vmatmul.f32.gmra.mxu0 %v1133
      %v1220 = vpop.f32.mrf.mxu0
      %v1221 = vadd.f32 0.0, %v1220
      %1222 = vdwg.mxu0
      %1223 = vmatpush.msra.mxu0 %v1074
      %1224 = vmatpush.msra.mxu0 %v1071
      %1225 = vmatpush.msra.mxu0 %v1068
      %1226 = vmatpush.msra.mxu0 %v1065
      %1227 = vmatpush.msra.mxu0 %v1062
      %1228 = vmatpush.msra.mxu0 %v1059
      %1229 = vmatpush.msra.mxu0 %v1056
      %1230 = vmatpush.msra.mxu0 %v1053
      %1231 = vmatpush.msra.mxu0 %v1050
      %1232 = vmatpush.msra.mxu0 %v1047
      %1233 = vmatpush.msra.mxu0 %v1044
      %1234 = vmatpush.msra.mxu0 %v1041
      %1235 = vmatpush.msra.mxu0 %v1038
      %1236 = vmatpush.msra.mxu0 %v1035
      %1237 = vmatpush.msra.mxu0 %v1032
      %1238 = vmatpush.msra.mxu0 %v1029
      %1239 = vmatmul.f32.gmra.mxu0 %v1136
      %v1240 = vpop.f32.mrf.mxu0
      %v1241 = vadd.f32 %v1221, %v1240
      %1242 = vdwg.mxu0
      %1243 = vmatpush.msra.mxu0 %v1122
      %1244 = vmatpush.msra.mxu0 %v1119
      %1245 = vmatpush.msra.mxu0 %v1116
      %1246 = vmatpush.msra.mxu0 %v1113
      %1247 = vmatpush.msra.mxu0 %v1110
      %1248 = vmatpush.msra.mxu0 %v1107
      %1249 = vmatpush.msra.mxu0 %v1104
      %1250 = vmatpush.msra.mxu0 %v1101
      %1251 = vmatpush.msra.mxu0 %v1098
      %1252 = vmatpush.msra.mxu0 %v1095
      %1253 = vmatpush.msra.mxu0 %v1092
      %1254 = vmatpush.msra.mxu0 %v1089
      %1255 = vmatpush.msra.mxu0 %v1086
      %1256 = vmatpush.msra.mxu0 %v1083
      %1257 = vmatpush.msra.mxu0 %v1080
      %1258 = vmatpush.msra.mxu0 %v1077
      %1259 = vmatmul.f32.gmra.mxu0 %v1139
      %v1260 = vpop.f32.mrf.mxu0
      %v1261 = vadd.f32 %v1241, %v1260
      %1262 = vdwg.mxu0
      %1263 = vmatpush.msra.mxu0 %v1027
      %1264 = vmatpush.msra.mxu0 %v1024
      %1265 = vmatpush.msra.mxu0 %v1021
      %1266 = vmatpush.msra.mxu0 %v1018
      %1267 = vmatpush.msra.mxu0 %v1015
      %1268 = vmatpush.msra.mxu0 %v1012
      %1269 = vmatpush.msra.mxu0 %v1009
      %1270 = vmatpush.msra.mxu0 %v1006
      %1271 = vmatpush.msra.mxu0 %v1003
      %1272 = vmatpush.msra.mxu0 %v1000
      %1273 = vmatpush.msra.mxu0 %v997
      %1274 = vmatpush.msra.mxu0 %v994
      %1275 = vmatpush.msra.mxu0 %v991
      %1276 = vmatpush.msra.mxu0 %v988
      %1277 = vmatpush.msra.mxu0 %v985
      %1278 = vmatpush.msra.mxu0 %v982
      %1279 = vmatmul.f32.gmra.mxu0 %v1133
      %v1280 = vpop.f32.mrf.mxu0
      %v1281 = vadd.f32 0.0, %v1280
      %1282 = vdwg.mxu0
      %1283 = vmatpush.msra.mxu0 %v1075
      %1284 = vmatpush.msra.mxu0 %v1072
      %1285 = vmatpush.msra.mxu0 %v1069
      %1286 = vmatpush.msra.mxu0 %v1066
      %1287 = vmatpush.msra.mxu0 %v1063
      %1288 = vmatpush.msra.mxu0 %v1060
      %1289 = vmatpush.msra.mxu0 %v1057
      %1290 = vmatpush.msra.mxu0 %v1054
      %1291 = vmatpush.msra.mxu0 %v1051
      %1292 = vmatpush.msra.mxu0 %v1048
      %1293 = vmatpush.msra.mxu0 %v1045
      %1294 = vmatpush.msra.mxu0 %v1042
      %1295 = vmatpush.msra.mxu0 %v1039
      %1296 = vmatpush.msra.mxu0 %v1036
      %1297 = vmatpush.msra.mxu0 %v1033
      %1298 = vmatpush.msra.mxu0 %v1030
      %1299 = vmatmul.f32.gmra.mxu0 %v1136
      %v1300 = vpop.f32.mrf.mxu0
      %v1301 = vadd.f32 %v1281, %v1300
      %1302 = vdwg.mxu0
      %1303 = vmatpush.msra.mxu0 %v1123
      %1304 = vmatpush.msra.mxu0 %v1120
      %1305 = vmatpush.msra.mxu0 %v1117
      %1306 = vmatpush.msra.mxu0 %v1114
      %1307 = vmatpush.msra.mxu0 %v1111
      %1308 = vmatpush.msra.mxu0 %v1108
      %1309 = vmatpush.msra.mxu0 %v1105
      %1310 = vmatpush.msra.mxu0 %v1102
      %1311 = vmatpush.msra.mxu0 %v1099
      %1312 = vmatpush.msra.mxu0 %v1096
      %1313 = vmatpush.msra.mxu0 %v1093
      %1314 = vmatpush.msra.mxu0 %v1090
      %1315 = vmatpush.msra.mxu0 %v1087
      %1316 = vmatpush.msra.mxu0 %v1084
      %1317 = vmatpush.msra.mxu0 %v1081
      %1318 = vmatpush.msra.mxu0 %v1078
      %1319 = vmatmul.f32.gmra.mxu0 %v1139
      %v1320 = vpop.f32.mrf.mxu0
      %v1321 = vadd.f32 %v1301, %v1320
      %1322 = vdwg.mxu0
      %1323 = vmatpush.msra.mxu0 %v880
      %1324 = vmatpush.msra.mxu0 %v877
      %1325 = vmatpush.msra.mxu0 %v874
      %1326 = vmatpush.msra.mxu0 %v871
      %1327 = vmatpush.msra.mxu0 %v868
      %1328 = vmatpush.msra.mxu0 %v865
      %1329 = vmatpush.msra.mxu0 %v862
      %1330 = vmatpush.msra.mxu0 %v859
      %1331 = vmatpush.msra.mxu0 %v856
      %1332 = vmatpush.msra.mxu0 %v853
      %1333 = vmatpush.msra.mxu0 %v850
      %1334 = vmatpush.msra.mxu0 %v847
      %1335 = vmatpush.msra.mxu0 %v844
      %1336 = vmatpush.msra.mxu0 %v841
      %1337 = vmatpush.msra.mxu0 %v838
      %1338 = vmatpush.msra.mxu0 %v835
      %1339 = vmatmul.f32.gmra.mxu0 %v784
      %v1340 = vpop.f32.mrf.mxu0
      %v1341 = vadd.f32 %v1201, %v1340
      %1342 = vdwg.mxu0
      %1343 = vmatpush.msra.mxu0 %v928
      %1344 = vmatpush.msra.mxu0 %v925
      %1345 = vmatpush.msra.mxu0 %v922
      %1346 = vmatpush.msra.mxu0 %v919
      %1347 = vmatpush.msra.mxu0 %v916
      %1348 = vmatpush.msra.mxu0 %v913
      %1349 = vmatpush.msra.mxu0 %v910
      %1350 = vmatpush.msra.mxu0 %v907
      %1351 = vmatpush.msra.mxu0 %v904
      %1352 = vmatpush.msra.mxu0 %v901
      %1353 = vmatpush.msra.mxu0 %v898
      %1354 = vmatpush.msra.mxu0 %v895
      %1355 = vmatpush.msra.mxu0 %v892
      %1356 = vmatpush.msra.mxu0 %v889
      %1357 = vmatpush.msra.mxu0 %v886
      %1358 = vmatpush.msra.mxu0 %v883
      %1359 = vmatmul.f32.gmra.mxu0 %v807
      %v1360 = vpop.f32.mrf.mxu0
      %v1361 = vadd.f32 %v1341, %v1360
      %1362 = vdwg.mxu0
      %1363 = vmatpush.msra.mxu0 %v976
      %1364 = vmatpush.msra.mxu0 %v973
      %1365 = vmatpush.msra.mxu0 %v970
      %1366 = vmatpush.msra.mxu0 %v967
      %1367 = vmatpush.msra.mxu0 %v964
      %1368 = vmatpush.msra.mxu0 %v961
      %1369 = vmatpush.msra.mxu0 %v958
      %1370 = vmatpush.msra.mxu0 %v955
      %1371 = vmatpush.msra.mxu0 %v952
      %1372 = vmatpush.msra.mxu0 %v949
      %1373 = vmatpush.msra.mxu0 %v946
      %1374 = vmatpush.msra.mxu0 %v943
      %1375 = vmatpush.msra.mxu0 %v940
      %1376 = vmatpush.msra.mxu0 %v937
      %1377 = vmatpush.msra.mxu0 %v934
      %1378 = vmatpush.msra.mxu0 %v931
      %1379 = vmatmul.f32.gmra.mxu0 %v830
      %v1380 = vpop.f32.mrf.mxu0
      %v1381 = vadd.f32 %v1361, %v1380
      %1382 = vdwg.mxu0
      %1383 = vmatpush.msra.mxu0 %v881
      %1384 = vmatpush.msra.mxu0 %v878
      %1385 = vmatpush.msra.mxu0 %v875
      %1386 = vmatpush.msra.mxu0 %v872
      %1387 = vmatpush.msra.mxu0 %v869
      %1388 = vmatpush.msra.mxu0 %v866
      %1389 = vmatpush.msra.mxu0 %v863
      %1390 = vmatpush.msra.mxu0 %v860
      %1391 = vmatpush.msra.mxu0 %v857
      %1392 = vmatpush.msra.mxu0 %v854
      %1393 = vmatpush.msra.mxu0 %v851
      %1394 = vmatpush.msra.mxu0 %v848
      %1395 = vmatpush.msra.mxu0 %v845
      %1396 = vmatpush.msra.mxu0 %v842
      %1397 = vmatpush.msra.mxu0 %v839
      %1398 = vmatpush.msra.mxu0 %v836
      %1399 = vmatmul.f32.gmra.mxu0 %v784
      %v1400 = vpop.f32.mrf.mxu0
      %v1401 = vadd.f32 %v1261, %v1400
      %1402 = vdwg.mxu0
      %1403 = vmatpush.msra.mxu0 %v929
      %1404 = vmatpush.msra.mxu0 %v926
      %1405 = vmatpush.msra.mxu0 %v923
      %1406 = vmatpush.msra.mxu0 %v920
      %1407 = vmatpush.msra.mxu0 %v917
      %1408 = vmatpush.msra.mxu0 %v914
      %1409 = vmatpush.msra.mxu0 %v911
      %1410 = vmatpush.msra.mxu0 %v908
      %1411 = vmatpush.msra.mxu0 %v905
      %1412 = vmatpush.msra.mxu0 %v902
      %1413 = vmatpush.msra.mxu0 %v899
      %1414 = vmatpush.msra.mxu0 %v896
      %1415 = vmatpush.msra.mxu0 %v893
      %1416 = vmatpush.msra.mxu0 %v890
      %1417 = vmatpush.msra.mxu0 %v887
      %1418 = vmatpush.msra.mxu0 %v884
      %1419 = vmatmul.f32.gmra.mxu0 %v807
      %v1420 = vpop.f32.mrf.mxu0
      %v1421 = vadd.f32 %v1401, %v1420
      %1422 = vdwg.mxu0
      %1423 = vmatpush.msra.mxu0 %v977
      %1424 = vmatpush.msra.mxu0 %v974
      %1425 = vmatpush.msra.mxu0 %v971
      %1426 = vmatpush.msra.mxu0 %v968
      %1427 = vmatpush.msra.mxu0 %v965
      %1428 = vmatpush.msra.mxu0 %v962
      %1429 = vmatpush.msra.mxu0 %v959
      %1430 = vmatpush.msra.mxu0 %v956
      %1431 = vmatpush.msra.mxu0 %v953
      %1432 = vmatpush.msra.mxu0 %v950
      %1433 = vmatpush.msra.mxu0 %v947
      %1434 = vmatpush.msra.mxu0 %v944
      %1435 = vmatpush.msra.mxu0 %v941
      %1436 = vmatpush.msra.mxu0 %v938
      %1437 = vmatpush.msra.mxu0 %v935
      %1438 = vmatpush.msra.mxu0 %v932
      %1439 = vmatmul.f32.gmra.mxu0 %v830
      %v1440 = vpop.f32.mrf.mxu0
      %v1441 = vadd.f32 %v1421, %v1440
      %1442 = vdwg.mxu0
      %1443 = vmatpush.msra.mxu0 %v882
      %1444 = vmatpush.msra.mxu0 %v879
      %1445 = vmatpush.msra.mxu0 %v876
      %1446 = vmatpush.msra.mxu0 %v873
      %1447 = vmatpush.msra.mxu0 %v870
      %1448 = vmatpush.msra.mxu0 %v867
      %1449 = vmatpush.msra.mxu0 %v864
      %1450 = vmatpush.msra.mxu0 %v861
      %1451 = vmatpush.msra.mxu0 %v858
      %1452 = vmatpush.msra.mxu0 %v855
      %1453 = vmatpush.msra.mxu0 %v852
      %1454 = vmatpush.msra.mxu0 %v849
      %1455 = vmatpush.msra.mxu0 %v846
      %1456 = vmatpush.msra.mxu0 %v843
      %1457 = vmatpush.msra.mxu0 %v840
      %1458 = vmatpush.msra.mxu0 %v837
      %1459 = vmatmul.f32.gmra.mxu0 %v784
      %v1460 = vpop.f32.mrf.mxu0
      %v1461 = vadd.f32 %v1321, %v1460
      %1462 = vdwg.mxu0
      %1463 = vmatpush.msra.mxu0 %v930
      %1464 = vmatpush.msra.mxu0 %v927
      %1465 = vmatpush.msra.mxu0 %v924
      %1466 = vmatpush.msra.mxu0 %v921
      %1467 = vmatpush.msra.mxu0 %v918
      %1468 = vmatpush.msra.mxu0 %v915
      %1469 = vmatpush.msra.mxu0 %v912
      %1470 = vmatpush.msra.mxu0 %v909
      %1471 = vmatpush.msra.mxu0 %v906
      %1472 = vmatpush.msra.mxu0 %v903
      %1473 = vmatpush.msra.mxu0 %v900
      %1474 = vmatpush.msra.mxu0 %v897
      %1475 = vmatpush.msra.mxu0 %v894
      %1476 = vmatpush.msra.mxu0 %v891
      %1477 = vmatpush.msra.mxu0 %v888
      %1478 = vmatpush.msra.mxu0 %v885
      %1479 = vmatmul.f32.gmra.mxu0 %v807
      %v1480 = vpop.f32.mrf.mxu0
      %v1481 = vadd.f32 %v1461, %v1480
      %1482 = vdwg.mxu0
      %1483 = vmatpush.msra.mxu0 %v978
      %1484 = vmatpush.msra.mxu0 %v975
      %1485 = vmatpush.msra.mxu0 %v972
      %1486 = vmatpush.msra.mxu0 %v969
      %1487 = vmatpush.msra.mxu0 %v966
      %1488 = vmatpush.msra.mxu0 %v963
      %1489 = vmatpush.msra.mxu0 %v960
      %1490 = vmatpush.msra.mxu0 %v957
      %1491 = vmatpush.msra.mxu0 %v954
      %1492 = vmatpush.msra.mxu0 %v951
      %1493 = vmatpush.msra.mxu0 %v948
      %1494 = vmatpush.msra.mxu0 %v945
      %1495 = vmatpush.msra.mxu0 %v942
      %1496 = vmatpush.msra.mxu0 %v939
      %1497 = vmatpush.msra.mxu0 %v936
      %1498 = vmatpush.msra.mxu0 %v933
      %1499 = vmatmul.f32.gmra.mxu0 %v830
      %v1500 = vpop.f32.mrf.mxu0
      %v1501 = vadd.f32 %v1481, %v1500
      %1502 = vdwg.mxu0
      %s1503 = scalar_lea.vmem %s4, 2304
      %v1504 = vld [vmem:[%s1503] sm:$0xff]
      %v1505 = vld [vmem:[%s1503 + $0x8] sm:$0xff]
      %v1506 = vld [vmem:[%s1503 + $0x10] sm:$0xff]
      %v1507 = vld [vmem:[%s1503 + $0x18] sm:$0xff]
      %v1508 = vld [vmem:[%s1503 + $0x20] sm:$0xff]
      %v1509 = vld [vmem:[%s1503 + $0x28] sm:$0xff]
      %v1510 = vld [vmem:[%s1503 + $0x30] sm:$0xff]
      %v1511 = vld [vmem:[%s1503 + $0x38] sm:$0xff]
      %v1512 = vld [vmem:[%s1503 + $0x40] sm:$0xff]
      %v1513 = vld [vmem:[%s1503 + $0x48] sm:$0xff]
      %v1514 = vld [vmem:[%s1503 + $0x50] sm:$0xff]
      %v1515 = vld [vmem:[%s1503 + $0x58] sm:$0xff]
      %v1516 = vld [vmem:[%s1503 + $0x60] sm:$0xff]
      %v1517 = vld [vmem:[%s1503 + $0x68] sm:$0xff]
      %v1518 = vld [vmem:[%s1503 + $0x70] sm:$0xff]
      %v1519 = vld [vmem:[%s1503 + $0x78] sm:$0xff]
      %v1520 = vld [vmem:[%s1503 + $0x80] sm:$0xff]
      %v1521 = vld [vmem:[%s1503 + $0x88] sm:$0xff]
      %v1522 = vld [vmem:[%s1503 + $0x90] sm:$0xff]
      %v1523 = vld [vmem:[%s1503 + $0x98] sm:$0xff]
      %v1524 = vld [vmem:[%s1503 + $0xa0] sm:$0xff]
      %v1525 = vld [vmem:[%s1503 + $0xa8] sm:$0xff]
      %v1526 = vld [vmem:[%s1503 + $0xb0] sm:$0xff]
      %v1527 = vld [vmem:[%s1503 + $0xb8] sm:$0xff]
      %v1528 = vld [vmem:[%s1503 + $0xc0] sm:$0xff]
      %v1529 = vld [vmem:[%s1503 + $0xc8] sm:$0xff]
      %v1530 = vld [vmem:[%s1503 + $0xd0] sm:$0xff]
      %v1531 = vld [vmem:[%s1503 + $0xd8] sm:$0xff]
      %v1532 = vld [vmem:[%s1503 + $0xe0] sm:$0xff]
      %v1533 = vld [vmem:[%s1503 + $0xe8] sm:$0xff]
      %v1534 = vld [vmem:[%s1503 + $0xf0] sm:$0xff]
      %v1535 = vld [vmem:[%s1503 + $0xf8] sm:$0xff]
      %v1536 = vld [vmem:[%s1503 + $0x100] sm:$0xff]
      %v1537 = vld [vmem:[%s1503 + $0x108] sm:$0xff]
      %v1538 = vld [vmem:[%s1503 + $0x110] sm:$0xff]
      %v1539 = vld [vmem:[%s1503 + $0x118] sm:$0xff]
      %v1540 = vld [vmem:[%s1503 + $0x120] sm:$0xff]
      %v1541 = vld [vmem:[%s1503 + $0x128] sm:$0xff]
      %v1542 = vld [vmem:[%s1503 + $0x130] sm:$0xff]
      %v1543 = vld [vmem:[%s1503 + $0x138] sm:$0xff]
      %v1544 = vld [vmem:[%s1503 + $0x140] sm:$0xff]
      %v1545 = vld [vmem:[%s1503 + $0x148] sm:$0xff]
      %v1546 = vld [vmem:[%s1503 + $0x150] sm:$0xff]
      %v1547 = vld [vmem:[%s1503 + $0x158] sm:$0xff]
      %v1548 = vld [vmem:[%s1503 + $0x160] sm:$0xff]
      %v1549 = vld [vmem:[%s1503 + $0x168] sm:$0xff]
      %v1550 = vld [vmem:[%s1503 + $0x170] sm:$0xff]
      %v1551 = vld [vmem:[%s1503 + $0x178] sm:$0xff]
      %v1552 = vld [vmem:[%s1503 + $0x180] sm:$0xff]
      %v1553 = vld [vmem:[%s1503 + $0x188] sm:$0xff]
      %v1554 = vld [vmem:[%s1503 + $0x190] sm:$0xff]
      %v1555 = vld [vmem:[%s1503 + $0x198] sm:$0xff]
      %v1556 = vld [vmem:[%s1503 + $0x1a0] sm:$0xff]
      %v1557 = vld [vmem:[%s1503 + $0x1a8] sm:$0xff]
      %v1558 = vld [vmem:[%s1503 + $0x1b0] sm:$0xff]
      %v1559 = vld [vmem:[%s1503 + $0x1b8] sm:$0xff]
      %v1560 = vld [vmem:[%s1503 + $0x1c0] sm:$0xff]
      %v1561 = vld [vmem:[%s1503 + $0x1c8] sm:$0xff]
      %v1562 = vld [vmem:[%s1503 + $0x1d0] sm:$0xff]
      %v1563 = vld [vmem:[%s1503 + $0x1d8] sm:$0xff]
      %v1564 = vld [vmem:[%s1503 + $0x1e0] sm:$0xff]
      %v1565 = vld [vmem:[%s1503 + $0x1e8] sm:$0xff]
      %v1566 = vld [vmem:[%s1503 + $0x1f0] sm:$0xff]
      %v1567 = vld [vmem:[%s1503 + $0x1f8] sm:$0xff]
      %v1568 = vld [vmem:[%s1503 + $0x200] sm:$0xff]
      %v1569 = vld [vmem:[%s1503 + $0x208] sm:$0xff]
      %v1570 = vld [vmem:[%s1503 + $0x210] sm:$0xff]
      %v1571 = vld [vmem:[%s1503 + $0x218] sm:$0xff]
      %v1572 = vld [vmem:[%s1503 + $0x220] sm:$0xff]
      %v1573 = vld [vmem:[%s1503 + $0x228] sm:$0xff]
      %v1574 = vld [vmem:[%s1503 + $0x230] sm:$0xff]
      %v1575 = vld [vmem:[%s1503 + $0x238] sm:$0xff]
      %v1576 = vld [vmem:[%s1503 + $0x240] sm:$0xff]
      %v1577 = vld [vmem:[%s1503 + $0x248] sm:$0xff]
      %v1578 = vld [vmem:[%s1503 + $0x250] sm:$0xff]
      %v1579 = vld [vmem:[%s1503 + $0x258] sm:$0xff]
      %v1580 = vld [vmem:[%s1503 + $0x260] sm:$0xff]
      %v1581 = vld [vmem:[%s1503 + $0x268] sm:$0xff]
      %v1582 = vld [vmem:[%s1503 + $0x270] sm:$0xff]
      %v1583 = vld [vmem:[%s1503 + $0x278] sm:$0xff]
      %v1584 = vld [vmem:[%s1503 + $0x280] sm:$0xff]
      %v1585 = vld [vmem:[%s1503 + $0x288] sm:$0xff]
      %v1586 = vld [vmem:[%s1503 + $0x290] sm:$0xff]
      %v1587 = vld [vmem:[%s1503 + $0x298] sm:$0xff]
      %v1588 = vld [vmem:[%s1503 + $0x2a0] sm:$0xff]
      %v1589 = vld [vmem:[%s1503 + $0x2a8] sm:$0xff]
      %v1590 = vld [vmem:[%s1503 + $0x2b0] sm:$0xff]
      %v1591 = vld [vmem:[%s1503 + $0x2b8] sm:$0xff]
      %v1592 = vld [vmem:[%s1503 + $0x2c0] sm:$0xff]
      %v1593 = vld [vmem:[%s1503 + $0x2c8] sm:$0xff]
      %v1594 = vld [vmem:[%s1503 + $0x2d0] sm:$0xff]
      %v1595 = vld [vmem:[%s1503 + $0x2d8] sm:$0xff]
      %v1596 = vld [vmem:[%s1503 + $0x2e0] sm:$0xff]
      %v1597 = vld [vmem:[%s1503 + $0x2e8] sm:$0xff]
      %v1598 = vld [vmem:[%s1503 + $0x2f0] sm:$0xff]
      %v1599 = vld [vmem:[%s1503 + $0x2f8] sm:$0xff]
      %v1600 = vld [vmem:[%s1503 + $0x300] sm:$0xff]
      %v1601 = vld [vmem:[%s1503 + $0x308] sm:$0xff]
      %v1602 = vld [vmem:[%s1503 + $0x310] sm:$0xff]
      %v1603 = vld [vmem:[%s1503 + $0x318] sm:$0xff]
      %v1604 = vld [vmem:[%s1503 + $0x320] sm:$0xff]
      %v1605 = vld [vmem:[%s1503 + $0x328] sm:$0xff]
      %v1606 = vld [vmem:[%s1503 + $0x330] sm:$0xff]
      %v1607 = vld [vmem:[%s1503 + $0x338] sm:$0xff]
      %v1608 = vld [vmem:[%s1503 + $0x340] sm:$0xff]
      %v1609 = vld [vmem:[%s1503 + $0x348] sm:$0xff]
      %v1610 = vld [vmem:[%s1503 + $0x350] sm:$0xff]
      %v1611 = vld [vmem:[%s1503 + $0x358] sm:$0xff]
      %v1612 = vld [vmem:[%s1503 + $0x360] sm:$0xff]
      %v1613 = vld [vmem:[%s1503 + $0x368] sm:$0xff]
      %v1614 = vld [vmem:[%s1503 + $0x370] sm:$0xff]
      %v1615 = vld [vmem:[%s1503 + $0x378] sm:$0xff]
      %v1616 = vld [vmem:[%s1503 + $0x380] sm:$0xff]
      %v1617 = vld [vmem:[%s1503 + $0x388] sm:$0xff]
      %v1618 = vld [vmem:[%s1503 + $0x390] sm:$0xff]
      %v1619 = vld [vmem:[%s1503 + $0x398] sm:$0xff]
      %v1620 = vld [vmem:[%s1503 + $0x3a0] sm:$0xff]
      %v1621 = vld [vmem:[%s1503 + $0x3a8] sm:$0xff]
      %v1622 = vld [vmem:[%s1503 + $0x3b0] sm:$0xff]
      %v1623 = vld [vmem:[%s1503 + $0x3b8] sm:$0xff]
      %v1624 = vld [vmem:[%s1503 + $0x3c0] sm:$0xff]
      %v1625 = vld [vmem:[%s1503 + $0x3c8] sm:$0xff]
      %v1626 = vld [vmem:[%s1503 + $0x3d0] sm:$0xff]
      %v1627 = vld [vmem:[%s1503 + $0x3d8] sm:$0xff]
      %v1628 = vld [vmem:[%s1503 + $0x3e0] sm:$0xff]
      %v1629 = vld [vmem:[%s1503 + $0x3e8] sm:$0xff]
      %v1630 = vld [vmem:[%s1503 + $0x3f0] sm:$0xff]
      %v1631 = vld [vmem:[%s1503 + $0x3f8] sm:$0xff]
      %v1632 = vld [vmem:[%s1503 + $0x400] sm:$0xff]
      %v1633 = vld [vmem:[%s1503 + $0x408] sm:$0xff]
      %v1634 = vld [vmem:[%s1503 + $0x410] sm:$0xff]
      %v1635 = vld [vmem:[%s1503 + $0x418] sm:$0xff]
      %v1636 = vld [vmem:[%s1503 + $0x420] sm:$0xff]
      %v1637 = vld [vmem:[%s1503 + $0x428] sm:$0xff]
      %v1638 = vld [vmem:[%s1503 + $0x430] sm:$0xff]
      %v1639 = vld [vmem:[%s1503 + $0x438] sm:$0xff]
      %v1640 = vld [vmem:[%s1503 + $0x440] sm:$0xff]
      %v1641 = vld [vmem:[%s1503 + $0x448] sm:$0xff]
      %v1642 = vld [vmem:[%s1503 + $0x450] sm:$0xff]
      %v1643 = vld [vmem:[%s1503 + $0x458] sm:$0xff]
      %v1644 = vld [vmem:[%s1503 + $0x460] sm:$0xff]
      %v1645 = vld [vmem:[%s1503 + $0x468] sm:$0xff]
      %v1646 = vld [vmem:[%s1503 + $0x470] sm:$0xff]
      %v1647 = vld [vmem:[%s1503 + $0x478] sm:$0xff]
      %vm1648 = vcmask 1045504
      %v1649 = vrot.slane %v784, 2
      %v1650 = vrot.slane %v787, 2
      %v1651 = vsel %vm1648, %v1649, %v1650
      %v1652 = vrot.slane %v807, 2
      %v1653 = vrot.slane %v810, 2
      %v1654 = vsel %vm1648, %v1652, %v1653
      %v1655 = vrot.slane %v830, 2
      %v1656 = vrot.slane %v833, 2
      %v1657 = vsel %vm1648, %v1655, %v1656
      %1661 = vmatpush.msra.mxu0 %v1549
      %1662 = vmatpush.msra.mxu0 %v1546
      %1663 = vmatpush.msra.mxu0 %v1543
      %1664 = vmatpush.msra.mxu0 %v1540
      %1665 = vmatpush.msra.mxu0 %v1537
      %1666 = vmatpush.msra.mxu0 %v1534
      %1667 = vmatpush.msra.mxu0 %v1531
      %1668 = vmatpush.msra.mxu0 %v1528
      %1669 = vmatpush.msra.mxu0 %v1525
      %1670 = vmatpush.msra.mxu0 %v1522
      %1671 = vmatpush.msra.mxu0 %v1519
      %1672 = vmatpush.msra.mxu0 %v1516
      %1673 = vmatpush.msra.mxu0 %v1513
      %1674 = vmatpush.msra.mxu0 %v1510
      %1675 = vmatpush.msra.mxu0 %v1507
      %1676 = vmatpush.msra.mxu0 %v1504
      %1677 = vmatmul.f32.gmra.mxu0 %v1651
      %v1678 = vpop.f32.mrf.mxu0
      %v1679 = vadd.f32 0.0, %v1678
      %1680 = vdwg.mxu0
      %1681 = vmatpush.msra.mxu0 %v1597
      %1682 = vmatpush.msra.mxu0 %v1594
      %1683 = vmatpush.msra.mxu0 %v1591
      %1684 = vmatpush.msra.mxu0 %v1588
      %1685 = vmatpush.msra.mxu0 %v1585
      %1686 = vmatpush.msra.mxu0 %v1582
      %1687 = vmatpush.msra.mxu0 %v1579
      %1688 = vmatpush.msra.mxu0 %v1576
      %1689 = vmatpush.msra.mxu0 %v1573
      %1690 = vmatpush.msra.mxu0 %v1570
      %1691 = vmatpush.msra.mxu0 %v1567
      %1692 = vmatpush.msra.mxu0 %v1564
      %1693 = vmatpush.msra.mxu0 %v1561
      %1694 = vmatpush.msra.mxu0 %v1558
      %1695 = vmatpush.msra.mxu0 %v1555
      %1696 = vmatpush.msra.mxu0 %v1552
      %1697 = vmatmul.f32.gmra.mxu0 %v1654
      %v1698 = vpop.f32.mrf.mxu0
      %v1699 = vadd.f32 %v1679, %v1698
      %1700 = vdwg.mxu0
      %1701 = vmatpush.msra.mxu0 %v1645
      %1702 = vmatpush.msra.mxu0 %v1642
      %1703 = vmatpush.msra.mxu0 %v1639
      %1704 = vmatpush.msra.mxu0 %v1636
      %1705 = vmatpush.msra.mxu0 %v1633
      %1706 = vmatpush.msra.mxu0 %v1630
      %1707 = vmatpush.msra.mxu0 %v1627
      %1708 = vmatpush.msra.mxu0 %v1624
      %1709 = vmatpush.msra.mxu0 %v1621
      %1710 = vmatpush.msra.mxu0 %v1618
      %1711 = vmatpush.msra.mxu0 %v1615
      %1712 = vmatpush.msra.mxu0 %v1612
      %1713 = vmatpush.msra.mxu0 %v1609
      %1714 = vmatpush.msra.mxu0 %v1606
      %1715 = vmatpush.msra.mxu0 %v1603
      %1716 = vmatpush.msra.mxu0 %v1600
      %1717 = vmatmul.f32.gmra.mxu0 %v1657
      %v1718 = vpop.f32.mrf.mxu0
      %v1719 = vadd.f32 %v1699, %v1718
      %1720 = vdwg.mxu0
      %1721 = vmatpush.msra.mxu0 %v1550
      %1722 = vmatpush.msra.mxu0 %v1547
      %1723 = vmatpush.msra.mxu0 %v1544
      %1724 = vmatpush.msra.mxu0 %v1541
      %1725 = vmatpush.msra.mxu0 %v1538
      %1726 = vmatpush.msra.mxu0 %v1535
      %1727 = vmatpush.msra.mxu0 %v1532
      %1728 = vmatpush.msra.mxu0 %v1529
      %1729 = vmatpush.msra.mxu0 %v1526
      %1730 = vmatpush.msra.mxu0 %v1523
      %1731 = vmatpush.msra.mxu0 %v1520
      %1732 = vmatpush.msra.mxu0 %v1517
      %1733 = vmatpush.msra.mxu0 %v1514
      %1734 = vmatpush.msra.mxu0 %v1511
      %1735 = vmatpush.msra.mxu0 %v1508
      %1736 = vmatpush.msra.mxu0 %v1505
      %1737 = vmatmul.f32.gmra.mxu0 %v1651
      %v1738 = vpop.f32.mrf.mxu0
      %v1739 = vadd.f32 0.0, %v1738
      %1740 = vdwg.mxu0
      %1741 = vmatpush.msra.mxu0 %v1598
      %1742 = vmatpush.msra.mxu0 %v1595
      %1743 = vmatpush.msra.mxu0 %v1592
      %1744 = vmatpush.msra.mxu0 %v1589
      %1745 = vmatpush.msra.mxu0 %v1586
      %1746 = vmatpush.msra.mxu0 %v1583
      %1747 = vmatpush.msra.mxu0 %v1580
      %1748 = vmatpush.msra.mxu0 %v1577
      %1749 = vmatpush.msra.mxu0 %v1574
      %1750 = vmatpush.msra.mxu0 %v1571
      %1751 = vmatpush.msra.mxu0 %v1568
      %1752 = vmatpush.msra.mxu0 %v1565
      %1753 = vmatpush.msra.mxu0 %v1562
      %1754 = vmatpush.msra.mxu0 %v1559
      %1755 = vmatpush.msra.mxu0 %v1556
      %1756 = vmatpush.msra.mxu0 %v1553
      %1757 = vmatmul.f32.gmra.mxu0 %v1654
      %v1758 = vpop.f32.mrf.mxu0
      %v1759 = vadd.f32 %v1739, %v1758
      %1760 = vdwg.mxu0
      %1761 = vmatpush.msra.mxu0 %v1646
      %1762 = vmatpush.msra.mxu0 %v1643
      %1763 = vmatpush.msra.mxu0 %v1640
      %1764 = vmatpush.msra.mxu0 %v1637
      %1765 = vmatpush.msra.mxu0 %v1634
      %1766 = vmatpush.msra.mxu0 %v1631
      %1767 = vmatpush.msra.mxu0 %v1628
      %1768 = vmatpush.msra.mxu0 %v1625
      %1769 = vmatpush.msra.mxu0 %v1622
      %1770 = vmatpush.msra.mxu0 %v1619
      %1771 = vmatpush.msra.mxu0 %v1616
      %1772 = vmatpush.msra.mxu0 %v1613
      %1773 = vmatpush.msra.mxu0 %v1610
      %1774 = vmatpush.msra.mxu0 %v1607
      %1775 = vmatpush.msra.mxu0 %v1604
      %1776 = vmatpush.msra.mxu0 %v1601
      %1777 = vmatmul.f32.gmra.mxu0 %v1657
      %v1778 = vpop.f32.mrf.mxu0
      %v1779 = vadd.f32 %v1759, %v1778
      %1780 = vdwg.mxu0
      %1781 = vmatpush.msra.mxu0 %v1551
      %1782 = vmatpush.msra.mxu0 %v1548
      %1783 = vmatpush.msra.mxu0 %v1545
      %1784 = vmatpush.msra.mxu0 %v1542
      %1785 = vmatpush.msra.mxu0 %v1539
      %1786 = vmatpush.msra.mxu0 %v1536
      %1787 = vmatpush.msra.mxu0 %v1533
      %1788 = vmatpush.msra.mxu0 %v1530
      %1789 = vmatpush.msra.mxu0 %v1527
      %1790 = vmatpush.msra.mxu0 %v1524
      %1791 = vmatpush.msra.mxu0 %v1521
      %1792 = vmatpush.msra.mxu0 %v1518
      %1793 = vmatpush.msra.mxu0 %v1515
      %1794 = vmatpush.msra.mxu0 %v1512
      %1795 = vmatpush.msra.mxu0 %v1509
      %1796 = vmatpush.msra.mxu0 %v1506
      %1797 = vmatmul.f32.gmra.mxu0 %v1651
      %v1798 = vpop.f32.mrf.mxu0
      %v1799 = vadd.f32 0.0, %v1798
      %1800 = vdwg.mxu0
      %1801 = vmatpush.msra.mxu0 %v1599
      %1802 = vmatpush.msra.mxu0 %v1596
      %1803 = vmatpush.msra.mxu0 %v1593
      %1804 = vmatpush.msra.mxu0 %v1590
      %1805 = vmatpush.msra.mxu0 %v1587
      %1806 = vmatpush.msra.mxu0 %v1584
      %1807 = vmatpush.msra.mxu0 %v1581
      %1808 = vmatpush.msra.mxu0 %v1578
      %1809 = vmatpush.msra.mxu0 %v1575
      %1810 = vmatpush.msra.mxu0 %v1572
      %1811 = vmatpush.msra.mxu0 %v1569
      %1812 = vmatpush.msra.mxu0 %v1566
      %1813 = vmatpush.msra.mxu0 %v1563
      %1814 = vmatpush.msra.mxu0 %v1560
      %1815 = vmatpush.msra.mxu0 %v1557
      %1816 = vmatpush.msra.mxu0 %v1554
      %1817 = vmatmul.f32.gmra.mxu0 %v1654
      %v1818 = vpop.f32.mrf.mxu0
      %v1819 = vadd.f32 %v1799, %v1818
      %1820 = vdwg.mxu0
      %1821 = vmatpush.msra.mxu0 %v1647
      %1822 = vmatpush.msra.mxu0 %v1644
      %1823 = vmatpush.msra.mxu0 %v1641
      %1824 = vmatpush.msra.mxu0 %v1638
      %1825 = vmatpush.msra.mxu0 %v1635
      %1826 = vmatpush.msra.mxu0 %v1632
      %1827 = vmatpush.msra.mxu0 %v1629
      %1828 = vmatpush.msra.mxu0 %v1626
      %1829 = vmatpush.msra.mxu0 %v1623
      %1830 = vmatpush.msra.mxu0 %v1620
      %1831 = vmatpush.msra.mxu0 %v1617
      %1832 = vmatpush.msra.mxu0 %v1614
      %1833 = vmatpush.msra.mxu0 %v1611
      %1834 = vmatpush.msra.mxu0 %v1608
      %1835 = vmatpush.msra.mxu0 %v1605
      %1836 = vmatpush.msra.mxu0 %v1602
      %1837 = vmatmul.f32.gmra.mxu0 %v1657
      %v1838 = vpop.f32.mrf.mxu0
      %v1839 = vadd.f32 %v1819, %v1838
      %1840 = vdwg.mxu0
      %v1841 = vadd.f32 %v1381, %v1719
      %v1842 = vadd.f32 %v1441, %v1779
      %v1843 = vadd.f32 %v1501, %v1839
      %s1844 = scalar_lea.vmem %s4, 3456
      %v1845 = vld [vmem:[%s1844] sm:$0xff]
      %v1846 = vld [vmem:[%s1844 + $0x8] sm:$0xff]
      %v1847 = vld [vmem:[%s1844 + $0x10] sm:$0xff]
      %v1848 = vld [vmem:[%s1844 + $0x18] sm:$0xff]
      %v1849 = vld [vmem:[%s1844 + $0x20] sm:$0xff]
      %v1850 = vld [vmem:[%s1844 + $0x28] sm:$0xff]
      %v1851 = vld [vmem:[%s1844 + $0x30] sm:$0xff]
      %v1852 = vld [vmem:[%s1844 + $0x38] sm:$0xff]
      %v1853 = vld [vmem:[%s1844 + $0x40] sm:$0xff]
      %v1854 = vld [vmem:[%s1844 + $0x48] sm:$0xff]
      %v1855 = vld [vmem:[%s1844 + $0x50] sm:$0xff]
      %v1856 = vld [vmem:[%s1844 + $0x58] sm:$0xff]
      %v1857 = vld [vmem:[%s1844 + $0x60] sm:$0xff]
      %v1858 = vld [vmem:[%s1844 + $0x68] sm:$0xff]
      %v1859 = vld [vmem:[%s1844 + $0x70] sm:$0xff]
      %v1860 = vld [vmem:[%s1844 + $0x78] sm:$0xff]
      %v1861 = vld [vmem:[%s1844 + $0x80] sm:$0xff]
      %v1862 = vld [vmem:[%s1844 + $0x88] sm:$0xff]
      %v1863 = vld [vmem:[%s1844 + $0x90] sm:$0xff]
      %v1864 = vld [vmem:[%s1844 + $0x98] sm:$0xff]
      %v1865 = vld [vmem:[%s1844 + $0xa0] sm:$0xff]
      %v1866 = vld [vmem:[%s1844 + $0xa8] sm:$0xff]
      %v1867 = vld [vmem:[%s1844 + $0xb0] sm:$0xff]
      %v1868 = vld [vmem:[%s1844 + $0xb8] sm:$0xff]
      %v1869 = vld [vmem:[%s1844 + $0xc0] sm:$0xff]
      %v1870 = vld [vmem:[%s1844 + $0xc8] sm:$0xff]
      %v1871 = vld [vmem:[%s1844 + $0xd0] sm:$0xff]
      %v1872 = vld [vmem:[%s1844 + $0xd8] sm:$0xff]
      %v1873 = vld [vmem:[%s1844 + $0xe0] sm:$0xff]
      %v1874 = vld [vmem:[%s1844 + $0xe8] sm:$0xff]
      %v1875 = vld [vmem:[%s1844 + $0xf0] sm:$0xff]
      %v1876 = vld [vmem:[%s1844 + $0xf8] sm:$0xff]
      %v1877 = vld [vmem:[%s1844 + $0x100] sm:$0xff]
      %v1878 = vld [vmem:[%s1844 + $0x108] sm:$0xff]
      %v1879 = vld [vmem:[%s1844 + $0x110] sm:$0xff]
      %v1880 = vld [vmem:[%s1844 + $0x118] sm:$0xff]
      %v1881 = vld [vmem:[%s1844 + $0x120] sm:$0xff]
      %v1882 = vld [vmem:[%s1844 + $0x128] sm:$0xff]
      %v1883 = vld [vmem:[%s1844 + $0x130] sm:$0xff]
      %v1884 = vld [vmem:[%s1844 + $0x138] sm:$0xff]
      %v1885 = vld [vmem:[%s1844 + $0x140] sm:$0xff]
      %v1886 = vld [vmem:[%s1844 + $0x148] sm:$0xff]
      %v1887 = vld [vmem:[%s1844 + $0x150] sm:$0xff]
      %v1888 = vld [vmem:[%s1844 + $0x158] sm:$0xff]
      %v1889 = vld [vmem:[%s1844 + $0x160] sm:$0xff]
      %v1890 = vld [vmem:[%s1844 + $0x168] sm:$0xff]
      %v1891 = vld [vmem:[%s1844 + $0x170] sm:$0xff]
      %v1892 = vld [vmem:[%s1844 + $0x178] sm:$0xff]
      %v1893 = vld [vmem:[%s1844 + $0x180] sm:$0xff]
      %v1894 = vld [vmem:[%s1844 + $0x188] sm:$0xff]
      %v1895 = vld [vmem:[%s1844 + $0x190] sm:$0xff]
      %v1896 = vld [vmem:[%s1844 + $0x198] sm:$0xff]
      %v1897 = vld [vmem:[%s1844 + $0x1a0] sm:$0xff]
      %v1898 = vld [vmem:[%s1844 + $0x1a8] sm:$0xff]
      %v1899 = vld [vmem:[%s1844 + $0x1b0] sm:$0xff]
      %v1900 = vld [vmem:[%s1844 + $0x1b8] sm:$0xff]
      %v1901 = vld [vmem:[%s1844 + $0x1c0] sm:$0xff]
      %v1902 = vld [vmem:[%s1844 + $0x1c8] sm:$0xff]
      %v1903 = vld [vmem:[%s1844 + $0x1d0] sm:$0xff]
      %v1904 = vld [vmem:[%s1844 + $0x1d8] sm:$0xff]
      %v1905 = vld [vmem:[%s1844 + $0x1e0] sm:$0xff]
      %v1906 = vld [vmem:[%s1844 + $0x1e8] sm:$0xff]
      %v1907 = vld [vmem:[%s1844 + $0x1f0] sm:$0xff]
      %v1908 = vld [vmem:[%s1844 + $0x1f8] sm:$0xff]
      %v1909 = vld [vmem:[%s1844 + $0x200] sm:$0xff]
      %v1910 = vld [vmem:[%s1844 + $0x208] sm:$0xff]
      %v1911 = vld [vmem:[%s1844 + $0x210] sm:$0xff]
      %v1912 = vld [vmem:[%s1844 + $0x218] sm:$0xff]
      %v1913 = vld [vmem:[%s1844 + $0x220] sm:$0xff]
      %v1914 = vld [vmem:[%s1844 + $0x228] sm:$0xff]
      %v1915 = vld [vmem:[%s1844 + $0x230] sm:$0xff]
      %v1916 = vld [vmem:[%s1844 + $0x238] sm:$0xff]
      %v1917 = vld [vmem:[%s1844 + $0x240] sm:$0xff]
      %v1918 = vld [vmem:[%s1844 + $0x248] sm:$0xff]
      %v1919 = vld [vmem:[%s1844 + $0x250] sm:$0xff]
      %v1920 = vld [vmem:[%s1844 + $0x258] sm:$0xff]
      %v1921 = vld [vmem:[%s1844 + $0x260] sm:$0xff]
      %v1922 = vld [vmem:[%s1844 + $0x268] sm:$0xff]
      %v1923 = vld [vmem:[%s1844 + $0x270] sm:$0xff]
      %v1924 = vld [vmem:[%s1844 + $0x278] sm:$0xff]
      %v1925 = vld [vmem:[%s1844 + $0x280] sm:$0xff]
      %v1926 = vld [vmem:[%s1844 + $0x288] sm:$0xff]
      %v1927 = vld [vmem:[%s1844 + $0x290] sm:$0xff]
      %v1928 = vld [vmem:[%s1844 + $0x298] sm:$0xff]
      %v1929 = vld [vmem:[%s1844 + $0x2a0] sm:$0xff]
      %v1930 = vld [vmem:[%s1844 + $0x2a8] sm:$0xff]
      %v1931 = vld [vmem:[%s1844 + $0x2b0] sm:$0xff]
      %v1932 = vld [vmem:[%s1844 + $0x2b8] sm:$0xff]
      %v1933 = vld [vmem:[%s1844 + $0x2c0] sm:$0xff]
      %v1934 = vld [vmem:[%s1844 + $0x2c8] sm:$0xff]
      %v1935 = vld [vmem:[%s1844 + $0x2d0] sm:$0xff]
      %v1936 = vld [vmem:[%s1844 + $0x2d8] sm:$0xff]
      %v1937 = vld [vmem:[%s1844 + $0x2e0] sm:$0xff]
      %v1938 = vld [vmem:[%s1844 + $0x2e8] sm:$0xff]
      %v1939 = vld [vmem:[%s1844 + $0x2f0] sm:$0xff]
      %v1940 = vld [vmem:[%s1844 + $0x2f8] sm:$0xff]
      %v1941 = vld [vmem:[%s1844 + $0x300] sm:$0xff]
      %v1942 = vld [vmem:[%s1844 + $0x308] sm:$0xff]
      %v1943 = vld [vmem:[%s1844 + $0x310] sm:$0xff]
      %v1944 = vld [vmem:[%s1844 + $0x318] sm:$0xff]
      %v1945 = vld [vmem:[%s1844 + $0x320] sm:$0xff]
      %v1946 = vld [vmem:[%s1844 + $0x328] sm:$0xff]
      %v1947 = vld [vmem:[%s1844 + $0x330] sm:$0xff]
      %v1948 = vld [vmem:[%s1844 + $0x338] sm:$0xff]
      %v1949 = vld [vmem:[%s1844 + $0x340] sm:$0xff]
      %v1950 = vld [vmem:[%s1844 + $0x348] sm:$0xff]
      %v1951 = vld [vmem:[%s1844 + $0x350] sm:$0xff]
      %v1952 = vld [vmem:[%s1844 + $0x358] sm:$0xff]
      %v1953 = vld [vmem:[%s1844 + $0x360] sm:$0xff]
      %v1954 = vld [vmem:[%s1844 + $0x368] sm:$0xff]
      %v1955 = vld [vmem:[%s1844 + $0x370] sm:$0xff]
      %v1956 = vld [vmem:[%s1844 + $0x378] sm:$0xff]
      %v1957 = vld [vmem:[%s1844 + $0x380] sm:$0xff]
      %v1958 = vld [vmem:[%s1844 + $0x388] sm:$0xff]
      %v1959 = vld [vmem:[%s1844 + $0x390] sm:$0xff]
      %v1960 = vld [vmem:[%s1844 + $0x398] sm:$0xff]
      %v1961 = vld [vmem:[%s1844 + $0x3a0] sm:$0xff]
      %v1962 = vld [vmem:[%s1844 + $0x3a8] sm:$0xff]
      %v1963 = vld [vmem:[%s1844 + $0x3b0] sm:$0xff]
      %v1964 = vld [vmem:[%s1844 + $0x3b8] sm:$0xff]
      %v1965 = vld [vmem:[%s1844 + $0x3c0] sm:$0xff]
      %v1966 = vld [vmem:[%s1844 + $0x3c8] sm:$0xff]
      %v1967 = vld [vmem:[%s1844 + $0x3d0] sm:$0xff]
      %v1968 = vld [vmem:[%s1844 + $0x3d8] sm:$0xff]
      %v1969 = vld [vmem:[%s1844 + $0x3e0] sm:$0xff]
      %v1970 = vld [vmem:[%s1844 + $0x3e8] sm:$0xff]
      %v1971 = vld [vmem:[%s1844 + $0x3f0] sm:$0xff]
      %v1972 = vld [vmem:[%s1844 + $0x3f8] sm:$0xff]
      %v1973 = vld [vmem:[%s1844 + $0x400] sm:$0xff]
      %v1974 = vld [vmem:[%s1844 + $0x408] sm:$0xff]
      %v1975 = vld [vmem:[%s1844 + $0x410] sm:$0xff]
      %v1976 = vld [vmem:[%s1844 + $0x418] sm:$0xff]
      %v1977 = vld [vmem:[%s1844 + $0x420] sm:$0xff]
      %v1978 = vld [vmem:[%s1844 + $0x428] sm:$0xff]
      %v1979 = vld [vmem:[%s1844 + $0x430] sm:$0xff]
      %v1980 = vld [vmem:[%s1844 + $0x438] sm:$0xff]
      %v1981 = vld [vmem:[%s1844 + $0x440] sm:$0xff]
      %v1982 = vld [vmem:[%s1844 + $0x448] sm:$0xff]
      %v1983 = vld [vmem:[%s1844 + $0x450] sm:$0xff]
      %v1984 = vld [vmem:[%s1844 + $0x458] sm:$0xff]
      %v1985 = vld [vmem:[%s1844 + $0x460] sm:$0xff]
      %v1986 = vld [vmem:[%s1844 + $0x468] sm:$0xff]
      %v1987 = vld [vmem:[%s1844 + $0x470] sm:$0xff]
      %v1988 = vld [vmem:[%s1844 + $0x478] sm:$0xff]
      %vm1989 = vcmask 1044480
      %v1990 = vrot.slane %v784, 3
      %v1991 = vrot.slane %v787, 3
      %v1992 = vsel %vm1989, %v1990, %v1991
      %v1993 = vrot.slane %v807, 3
      %v1994 = vrot.slane %v810, 3
      %v1995 = vsel %vm1989, %v1993, %v1994
      %v1996 = vrot.slane %v830, 3
      %v1997 = vrot.slane %v833, 3
      %v1998 = vsel %vm1989, %v1996, %v1997
      %2002 = vmatpush.msra.mxu0 %v1890
      %2003 = vmatpush.msra.mxu0 %v1887
      %2004 = vmatpush.msra.mxu0 %v1884
      %2005 = vmatpush.msra.mxu0 %v1881
      %2006 = vmatpush.msra.mxu0 %v1878
      %2007 = vmatpush.msra.mxu0 %v1875
      %2008 = vmatpush.msra.mxu0 %v1872
      %2009 = vmatpush.msra.mxu0 %v1869
      %2010 = vmatpush.msra.mxu0 %v1866
      %2011 = vmatpush.msra.mxu0 %v1863
      %2012 = vmatpush.msra.mxu0 %v1860
      %2013 = vmatpush.msra.mxu0 %v1857
      %2014 = vmatpush.msra.mxu0 %v1854
      %2015 = vmatpush.msra.mxu0 %v1851
      %2016 = vmatpush.msra.mxu0 %v1848
      %2017 = vmatpush.msra.mxu0 %v1845
      %2018 = vmatmul.f32.gmra.mxu0 %v1992
      %v2019 = vpop.f32.mrf.mxu0
      %v2020 = vadd.f32 0.0, %v2019
      %2021 = vdwg.mxu0
      %2022 = vmatpush.msra.mxu0 %v1938
      %2023 = vmatpush.msra.mxu0 %v1935
      %2024 = vmatpush.msra.mxu0 %v1932
      %2025 = vmatpush.msra.mxu0 %v1929
      %2026 = vmatpush.msra.mxu0 %v1926
      %2027 = vmatpush.msra.mxu0 %v1923
      %2028 = vmatpush.msra.mxu0 %v1920
      %2029 = vmatpush.msra.mxu0 %v1917
      %2030 = vmatpush.msra.mxu0 %v1914
      %2031 = vmatpush.msra.mxu0 %v1911
      %2032 = vmatpush.msra.mxu0 %v1908
      %2033 = vmatpush.msra.mxu0 %v1905
      %2034 = vmatpush.msra.mxu0 %v1902
      %2035 = vmatpush.msra.mxu0 %v1899
      %2036 = vmatpush.msra.mxu0 %v1896
      %2037 = vmatpush.msra.mxu0 %v1893
      %2038 = vmatmul.f32.gmra.mxu0 %v1995
      %v2039 = vpop.f32.mrf.mxu0
      %v2040 = vadd.f32 %v2020, %v2039
      %2041 = vdwg.mxu0
      %2042 = vmatpush.msra.mxu0 %v1986
      %2043 = vmatpush.msra.mxu0 %v1983
      %2044 = vmatpush.msra.mxu0 %v1980
      %2045 = vmatpush.msra.mxu0 %v1977
      %2046 = vmatpush.msra.mxu0 %v1974
      %2047 = vmatpush.msra.mxu0 %v1971
      %2048 = vmatpush.msra.mxu0 %v1968
      %2049 = vmatpush.msra.mxu0 %v1965
      %2050 = vmatpush.msra.mxu0 %v1962
      %2051 = vmatpush.msra.mxu0 %v1959
      %2052 = vmatpush.msra.mxu0 %v1956
      %2053 = vmatpush.msra.mxu0 %v1953
      %2054 = vmatpush.msra.mxu0 %v1950
      %2055 = vmatpush.msra.mxu0 %v1947
      %2056 = vmatpush.msra.mxu0 %v1944
      %2057 = vmatpush.msra.mxu0 %v1941
      %2058 = vmatmul.f32.gmra.mxu0 %v1998
      %v2059 = vpop.f32.mrf.mxu0
      %v2060 = vadd.f32 %v2040, %v2059
      %2061 = vdwg.mxu0
      %2062 = vmatpush.msra.mxu0 %v1891
      %2063 = vmatpush.msra.mxu0 %v1888
      %2064 = vmatpush.msra.mxu0 %v1885
      %2065 = vmatpush.msra.mxu0 %v1882
      %2066 = vmatpush.msra.mxu0 %v1879
      %2067 = vmatpush.msra.mxu0 %v1876
      %2068 = vmatpush.msra.mxu0 %v1873
      %2069 = vmatpush.msra.mxu0 %v1870
      %2070 = vmatpush.msra.mxu0 %v1867
      %2071 = vmatpush.msra.mxu0 %v1864
      %2072 = vmatpush.msra.mxu0 %v1861
      %2073 = vmatpush.msra.mxu0 %v1858
      %2074 = vmatpush.msra.mxu0 %v1855
      %2075 = vmatpush.msra.mxu0 %v1852
      %2076 = vmatpush.msra.mxu0 %v1849
      %2077 = vmatpush.msra.mxu0 %v1846
      %2078 = vmatmul.f32.gmra.mxu0 %v1992
      %v2079 = vpop.f32.mrf.mxu0
      %v2080 = vadd.f32 0.0, %v2079
      %2081 = vdwg.mxu0
      %2082 = vmatpush.msra.mxu0 %v1939
      %2083 = vmatpush.msra.mxu0 %v1936
      %2084 = vmatpush.msra.mxu0 %v1933
      %2085 = vmatpush.msra.mxu0 %v1930
      %2086 = vmatpush.msra.mxu0 %v1927
      %2087 = vmatpush.msra.mxu0 %v1924
      %2088 = vmatpush.msra.mxu0 %v1921
      %2089 = vmatpush.msra.mxu0 %v1918
      %2090 = vmatpush.msra.mxu0 %v1915
      %2091 = vmatpush.msra.mxu0 %v1912
      %2092 = vmatpush.msra.mxu0 %v1909
      %2093 = vmatpush.msra.mxu0 %v1906
      %2094 = vmatpush.msra.mxu0 %v1903
      %2095 = vmatpush.msra.mxu0 %v1900
      %2096 = vmatpush.msra.mxu0 %v1897
      %2097 = vmatpush.msra.mxu0 %v1894
      %2098 = vmatmul.f32.gmra.mxu0 %v1995
      %v2099 = vpop.f32.mrf.mxu0
      %v2100 = vadd.f32 %v2080, %v2099
      %2101 = vdwg.mxu0
      %2102 = vmatpush.msra.mxu0 %v1987
      %2103 = vmatpush.msra.mxu0 %v1984
      %2104 = vmatpush.msra.mxu0 %v1981
      %2105 = vmatpush.msra.mxu0 %v1978
      %2106 = vmatpush.msra.mxu0 %v1975
      %2107 = vmatpush.msra.mxu0 %v1972
      %2108 = vmatpush.msra.mxu0 %v1969
      %2109 = vmatpush.msra.mxu0 %v1966
      %2110 = vmatpush.msra.mxu0 %v1963
      %2111 = vmatpush.msra.mxu0 %v1960
      %2112 = vmatpush.msra.mxu0 %v1957
      %2113 = vmatpush.msra.mxu0 %v1954
      %2114 = vmatpush.msra.mxu0 %v1951
      %2115 = vmatpush.msra.mxu0 %v1948
      %2116 = vmatpush.msra.mxu0 %v1945
      %2117 = vmatpush.msra.mxu0 %v1942
      %2118 = vmatmul.f32.gmra.mxu0 %v1998
      %v2119 = vpop.f32.mrf.mxu0
      %v2120 = vadd.f32 %v2100, %v2119
      %2121 = vdwg.mxu0
      %2122 = vmatpush.msra.mxu0 %v1892
      %2123 = vmatpush.msra.mxu0 %v1889
      %2124 = vmatpush.msra.mxu0 %v1886
      %2125 = vmatpush.msra.mxu0 %v1883
      %2126 = vmatpush.msra.mxu0 %v1880
      %2127 = vmatpush.msra.mxu0 %v1877
      %2128 = vmatpush.msra.mxu0 %v1874
      %2129 = vmatpush.msra.mxu0 %v1871
      %2130 = vmatpush.msra.mxu0 %v1868
      %2131 = vmatpush.msra.mxu0 %v1865
      %2132 = vmatpush.msra.mxu0 %v1862
      %2133 = vmatpush.msra.mxu0 %v1859
      %2134 = vmatpush.msra.mxu0 %v1856
      %2135 = vmatpush.msra.mxu0 %v1853
      %2136 = vmatpush.msra.mxu0 %v1850
      %2137 = vmatpush.msra.mxu0 %v1847
      %2138 = vmatmul.f32.gmra.mxu0 %v1992
      %v2139 = vpop.f32.mrf.mxu0
      %v2140 = vadd.f32 0.0, %v2139
      %2141 = vdwg.mxu0
      %2142 = vmatpush.msra.mxu0 %v1940
      %2143 = vmatpush.msra.mxu0 %v1937
      %2144 = vmatpush.msra.mxu0 %v1934
      %2145 = vmatpush.msra.mxu0 %v1931
      %2146 = vmatpush.msra.mxu0 %v1928
      %2147 = vmatpush.msra.mxu0 %v1925
      %2148 = vmatpush.msra.mxu0 %v1922
      %2149 = vmatpush.msra.mxu0 %v1919
      %2150 = vmatpush.msra.mxu0 %v1916
      %2151 = vmatpush.msra.mxu0 %v1913
      %2152 = vmatpush.msra.mxu0 %v1910
      %2153 = vmatpush.msra.mxu0 %v1907
      %2154 = vmatpush.msra.mxu0 %v1904
      %2155 = vmatpush.msra.mxu0 %v1901
      %2156 = vmatpush.msra.mxu0 %v1898
      %2157 = vmatpush.msra.mxu0 %v1895
      %2158 = vmatmul.f32.gmra.mxu0 %v1995
      %v2159 = vpop.f32.mrf.mxu0
      %v2160 = vadd.f32 %v2140, %v2159
      %2161 = vdwg.mxu0
      %2162 = vmatpush.msra.mxu0 %v1988
      %2163 = vmatpush.msra.mxu0 %v1985
      %2164 = vmatpush.msra.mxu0 %v1982
      %2165 = vmatpush.msra.mxu0 %v1979
      %2166 = vmatpush.msra.mxu0 %v1976
      %2167 = vmatpush.msra.mxu0 %v1973
      %2168 = vmatpush.msra.mxu0 %v1970
      %2169 = vmatpush.msra.mxu0 %v1967
      %2170 = vmatpush.msra.mxu0 %v1964
      %2171 = vmatpush.msra.mxu0 %v1961
      %2172 = vmatpush.msra.mxu0 %v1958
      %2173 = vmatpush.msra.mxu0 %v1955
      %2174 = vmatpush.msra.mxu0 %v1952
      %2175 = vmatpush.msra.mxu0 %v1949
      %2176 = vmatpush.msra.mxu0 %v1946
      %2177 = vmatpush.msra.mxu0 %v1943
      %2178 = vmatmul.f32.gmra.mxu0 %v1998
      %v2179 = vpop.f32.mrf.mxu0
      %v2180 = vadd.f32 %v2160, %v2179
      %2181 = vdwg.mxu0
      %v2182 = vadd.f32 %v1841, %v2060
      %v2183 = vadd.f32 %v1842, %v2120
      %v2184 = vadd.f32 %v1843, %v2180
      %s2185 = scalar_lea.vmem %s4, 4608
      %v2186 = vld [vmem:[%s2185] sm:$0xff]
      %v2187 = vld [vmem:[%s2185 + $0x8] sm:$0xff]
      %v2188 = vld [vmem:[%s2185 + $0x10] sm:$0xff]
      %v2189 = vld [vmem:[%s2185 + $0x18] sm:$0xff]
      %v2190 = vld [vmem:[%s2185 + $0x20] sm:$0xff]
      %v2191 = vld [vmem:[%s2185 + $0x28] sm:$0xff]
      %v2192 = vld [vmem:[%s2185 + $0x30] sm:$0xff]
      %v2193 = vld [vmem:[%s2185 + $0x38] sm:$0xff]
      %v2194 = vld [vmem:[%s2185 + $0x40] sm:$0xff]
      %v2195 = vld [vmem:[%s2185 + $0x48] sm:$0xff]
      %v2196 = vld [vmem:[%s2185 + $0x50] sm:$0xff]
      %v2197 = vld [vmem:[%s2185 + $0x58] sm:$0xff]
      %v2198 = vld [vmem:[%s2185 + $0x60] sm:$0xff]
      %v2199 = vld [vmem:[%s2185 + $0x68] sm:$0xff]
      %v2200 = vld [vmem:[%s2185 + $0x70] sm:$0xff]
      %v2201 = vld [vmem:[%s2185 + $0x78] sm:$0xff]
      %v2202 = vld [vmem:[%s2185 + $0x80] sm:$0xff]
      %v2203 = vld [vmem:[%s2185 + $0x88] sm:$0xff]
      %v2204 = vld [vmem:[%s2185 + $0x90] sm:$0xff]
      %v2205 = vld [vmem:[%s2185 + $0x98] sm:$0xff]
      %v2206 = vld [vmem:[%s2185 + $0xa0] sm:$0xff]
      %v2207 = vld [vmem:[%s2185 + $0xa8] sm:$0xff]
      %v2208 = vld [vmem:[%s2185 + $0xb0] sm:$0xff]
      %v2209 = vld [vmem:[%s2185 + $0xb8] sm:$0xff]
      %v2210 = vld [vmem:[%s2185 + $0xc0] sm:$0xff]
      %v2211 = vld [vmem:[%s2185 + $0xc8] sm:$0xff]
      %v2212 = vld [vmem:[%s2185 + $0xd0] sm:$0xff]
      %v2213 = vld [vmem:[%s2185 + $0xd8] sm:$0xff]
      %v2214 = vld [vmem:[%s2185 + $0xe0] sm:$0xff]
      %v2215 = vld [vmem:[%s2185 + $0xe8] sm:$0xff]
      %v2216 = vld [vmem:[%s2185 + $0xf0] sm:$0xff]
      %v2217 = vld [vmem:[%s2185 + $0xf8] sm:$0xff]
      %v2218 = vld [vmem:[%s2185 + $0x100] sm:$0xff]
      %v2219 = vld [vmem:[%s2185 + $0x108] sm:$0xff]
      %v2220 = vld [vmem:[%s2185 + $0x110] sm:$0xff]
      %v2221 = vld [vmem:[%s2185 + $0x118] sm:$0xff]
      %v2222 = vld [vmem:[%s2185 + $0x120] sm:$0xff]
      %v2223 = vld [vmem:[%s2185 + $0x128] sm:$0xff]
      %v2224 = vld [vmem:[%s2185 + $0x130] sm:$0xff]
      %v2225 = vld [vmem:[%s2185 + $0x138] sm:$0xff]
      %v2226 = vld [vmem:[%s2185 + $0x140] sm:$0xff]
      %v2227 = vld [vmem:[%s2185 + $0x148] sm:$0xff]
      %v2228 = vld [vmem:[%s2185 + $0x150] sm:$0xff]
      %v2229 = vld [vmem:[%s2185 + $0x158] sm:$0xff]
      %v2230 = vld [vmem:[%s2185 + $0x160] sm:$0xff]
      %v2231 = vld [vmem:[%s2185 + $0x168] sm:$0xff]
      %v2232 = vld [vmem:[%s2185 + $0x170] sm:$0xff]
      %v2233 = vld [vmem:[%s2185 + $0x178] sm:$0xff]
      %v2234 = vld [vmem:[%s2185 + $0x180] sm:$0xff]
      %v2235 = vld [vmem:[%s2185 + $0x188] sm:$0xff]
      %v2236 = vld [vmem:[%s2185 + $0x190] sm:$0xff]
      %v2237 = vld [vmem:[%s2185 + $0x198] sm:$0xff]
      %v2238 = vld [vmem:[%s2185 + $0x1a0] sm:$0xff]
      %v2239 = vld [vmem:[%s2185 + $0x1a8] sm:$0xff]
      %v2240 = vld [vmem:[%s2185 + $0x1b0] sm:$0xff]
      %v2241 = vld [vmem:[%s2185 + $0x1b8] sm:$0xff]
      %v2242 = vld [vmem:[%s2185 + $0x1c0] sm:$0xff]
      %v2243 = vld [vmem:[%s2185 + $0x1c8] sm:$0xff]
      %v2244 = vld [vmem:[%s2185 + $0x1d0] sm:$0xff]
      %v2245 = vld [vmem:[%s2185 + $0x1d8] sm:$0xff]
      %v2246 = vld [vmem:[%s2185 + $0x1e0] sm:$0xff]
      %v2247 = vld [vmem:[%s2185 + $0x1e8] sm:$0xff]
      %v2248 = vld [vmem:[%s2185 + $0x1f0] sm:$0xff]
      %v2249 = vld [vmem:[%s2185 + $0x1f8] sm:$0xff]
      %v2250 = vld [vmem:[%s2185 + $0x200] sm:$0xff]
      %v2251 = vld [vmem:[%s2185 + $0x208] sm:$0xff]
      %v2252 = vld [vmem:[%s2185 + $0x210] sm:$0xff]
      %v2253 = vld [vmem:[%s2185 + $0x218] sm:$0xff]
      %v2254 = vld [vmem:[%s2185 + $0x220] sm:$0xff]
      %v2255 = vld [vmem:[%s2185 + $0x228] sm:$0xff]
      %v2256 = vld [vmem:[%s2185 + $0x230] sm:$0xff]
      %v2257 = vld [vmem:[%s2185 + $0x238] sm:$0xff]
      %v2258 = vld [vmem:[%s2185 + $0x240] sm:$0xff]
      %v2259 = vld [vmem:[%s2185 + $0x248] sm:$0xff]
      %v2260 = vld [vmem:[%s2185 + $0x250] sm:$0xff]
      %v2261 = vld [vmem:[%s2185 + $0x258] sm:$0xff]
      %v2262 = vld [vmem:[%s2185 + $0x260] sm:$0xff]
      %v2263 = vld [vmem:[%s2185 + $0x268] sm:$0xff]
      %v2264 = vld [vmem:[%s2185 + $0x270] sm:$0xff]
      %v2265 = vld [vmem:[%s2185 + $0x278] sm:$0xff]
      %v2266 = vld [vmem:[%s2185 + $0x280] sm:$0xff]
      %v2267 = vld [vmem:[%s2185 + $0x288] sm:$0xff]
      %v2268 = vld [vmem:[%s2185 + $0x290] sm:$0xff]
      %v2269 = vld [vmem:[%s2185 + $0x298] sm:$0xff]
      %v2270 = vld [vmem:[%s2185 + $0x2a0] sm:$0xff]
      %v2271 = vld [vmem:[%s2185 + $0x2a8] sm:$0xff]
      %v2272 = vld [vmem:[%s2185 + $0x2b0] sm:$0xff]
      %v2273 = vld [vmem:[%s2185 + $0x2b8] sm:$0xff]
      %v2274 = vld [vmem:[%s2185 + $0x2c0] sm:$0xff]
      %v2275 = vld [vmem:[%s2185 + $0x2c8] sm:$0xff]
      %v2276 = vld [vmem:[%s2185 + $0x2d0] sm:$0xff]
      %v2277 = vld [vmem:[%s2185 + $0x2d8] sm:$0xff]
      %v2278 = vld [vmem:[%s2185 + $0x2e0] sm:$0xff]
      %v2279 = vld [vmem:[%s2185 + $0x2e8] sm:$0xff]
      %v2280 = vld [vmem:[%s2185 + $0x2f0] sm:$0xff]
      %v2281 = vld [vmem:[%s2185 + $0x2f8] sm:$0xff]
      %v2282 = vld [vmem:[%s2185 + $0x300] sm:$0xff]
      %v2283 = vld [vmem:[%s2185 + $0x308] sm:$0xff]
      %v2284 = vld [vmem:[%s2185 + $0x310] sm:$0xff]
      %v2285 = vld [vmem:[%s2185 + $0x318] sm:$0xff]
      %v2286 = vld [vmem:[%s2185 + $0x320] sm:$0xff]
      %v2287 = vld [vmem:[%s2185 + $0x328] sm:$0xff]
      %v2288 = vld [vmem:[%s2185 + $0x330] sm:$0xff]
      %v2289 = vld [vmem:[%s2185 + $0x338] sm:$0xff]
      %v2290 = vld [vmem:[%s2185 + $0x340] sm:$0xff]
      %v2291 = vld [vmem:[%s2185 + $0x348] sm:$0xff]
      %v2292 = vld [vmem:[%s2185 + $0x350] sm:$0xff]
      %v2293 = vld [vmem:[%s2185 + $0x358] sm:$0xff]
      %v2294 = vld [vmem:[%s2185 + $0x360] sm:$0xff]
      %v2295 = vld [vmem:[%s2185 + $0x368] sm:$0xff]
      %v2296 = vld [vmem:[%s2185 + $0x370] sm:$0xff]
      %v2297 = vld [vmem:[%s2185 + $0x378] sm:$0xff]
      %v2298 = vld [vmem:[%s2185 + $0x380] sm:$0xff]
      %v2299 = vld [vmem:[%s2185 + $0x388] sm:$0xff]
      %v2300 = vld [vmem:[%s2185 + $0x390] sm:$0xff]
      %v2301 = vld [vmem:[%s2185 + $0x398] sm:$0xff]
      %v2302 = vld [vmem:[%s2185 + $0x3a0] sm:$0xff]
      %v2303 = vld [vmem:[%s2185 + $0x3a8] sm:$0xff]
      %v2304 = vld [vmem:[%s2185 + $0x3b0] sm:$0xff]
      %v2305 = vld [vmem:[%s2185 + $0x3b8] sm:$0xff]
      %v2306 = vld [vmem:[%s2185 + $0x3c0] sm:$0xff]
      %v2307 = vld [vmem:[%s2185 + $0x3c8] sm:$0xff]
      %v2308 = vld [vmem:[%s2185 + $0x3d0] sm:$0xff]
      %v2309 = vld [vmem:[%s2185 + $0x3d8] sm:$0xff]
      %v2310 = vld [vmem:[%s2185 + $0x3e0] sm:$0xff]
      %v2311 = vld [vmem:[%s2185 + $0x3e8] sm:$0xff]
      %v2312 = vld [vmem:[%s2185 + $0x3f0] sm:$0xff]
      %v2313 = vld [vmem:[%s2185 + $0x3f8] sm:$0xff]
      %v2314 = vld [vmem:[%s2185 + $0x400] sm:$0xff]
      %v2315 = vld [vmem:[%s2185 + $0x408] sm:$0xff]
      %v2316 = vld [vmem:[%s2185 + $0x410] sm:$0xff]
      %v2317 = vld [vmem:[%s2185 + $0x418] sm:$0xff]
      %v2318 = vld [vmem:[%s2185 + $0x420] sm:$0xff]
      %v2319 = vld [vmem:[%s2185 + $0x428] sm:$0xff]
      %v2320 = vld [vmem:[%s2185 + $0x430] sm:$0xff]
      %v2321 = vld [vmem:[%s2185 + $0x438] sm:$0xff]
      %v2322 = vld [vmem:[%s2185 + $0x440] sm:$0xff]
      %v2323 = vld [vmem:[%s2185 + $0x448] sm:$0xff]
      %v2324 = vld [vmem:[%s2185 + $0x450] sm:$0xff]
      %v2325 = vld [vmem:[%s2185 + $0x458] sm:$0xff]
      %v2326 = vld [vmem:[%s2185 + $0x460] sm:$0xff]
      %v2327 = vld [vmem:[%s2185 + $0x468] sm:$0xff]
      %v2328 = vld [vmem:[%s2185 + $0x470] sm:$0xff]
      %v2329 = vld [vmem:[%s2185 + $0x478] sm:$0xff]
      %v2330 = vrot.slane %v784, 4
      %v2331 = vrot.slane %v787, 4
      %v2332 = vsel %vm756, %v2330, %v2331
      %v2333 = vrot.slane %v807, 4
      %v2334 = vrot.slane %v810, 4
      %v2335 = vsel %vm756, %v2333, %v2334
      %v2336 = vrot.slane %v830, 4
      %v2337 = vrot.slane %v833, 4
      %v2338 = vsel %vm756, %v2336, %v2337
      %2342 = vmatpush.msra.mxu0 %v2231
      %2343 = vmatpush.msra.mxu0 %v2228
      %2344 = vmatpush.msra.mxu0 %v2225
      %2345 = vmatpush.msra.mxu0 %v2222
      %2346 = vmatpush.msra.mxu0 %v2219
      %2347 = vmatpush.msra.mxu0 %v2216
      %2348 = vmatpush.msra.mxu0 %v2213
      %2349 = vmatpush.msra.mxu0 %v2210
      %2350 = vmatpush.msra.mxu0 %v2207
      %2351 = vmatpush.msra.mxu0 %v2204
      %2352 = vmatpush.msra.mxu0 %v2201
      %2353 = vmatpush.msra.mxu0 %v2198
      %2354 = vmatpush.msra.mxu0 %v2195
      %2355 = vmatpush.msra.mxu0 %v2192
      %2356 = vmatpush.msra.mxu0 %v2189
      %2357 = vmatpush.msra.mxu0 %v2186
      %2358 = vmatmul.f32.gmra.mxu0 %v2332
      %v2359 = vpop.f32.mrf.mxu0
      %v2360 = vadd.f32 0.0, %v2359
      %2361 = vdwg.mxu0
      %2362 = vmatpush.msra.mxu0 %v2279
      %2363 = vmatpush.msra.mxu0 %v2276
      %2364 = vmatpush.msra.mxu0 %v2273
      %2365 = vmatpush.msra.mxu0 %v2270
      %2366 = vmatpush.msra.mxu0 %v2267
      %2367 = vmatpush.msra.mxu0 %v2264
      %2368 = vmatpush.msra.mxu0 %v2261
      %2369 = vmatpush.msra.mxu0 %v2258
      %2370 = vmatpush.msra.mxu0 %v2255
      %2371 = vmatpush.msra.mxu0 %v2252
      %2372 = vmatpush.msra.mxu0 %v2249
      %2373 = vmatpush.msra.mxu0 %v2246
      %2374 = vmatpush.msra.mxu0 %v2243
      %2375 = vmatpush.msra.mxu0 %v2240
      %2376 = vmatpush.msra.mxu0 %v2237
      %2377 = vmatpush.msra.mxu0 %v2234
      %2378 = vmatmul.f32.gmra.mxu0 %v2335
      %v2379 = vpop.f32.mrf.mxu0
      %v2380 = vadd.f32 %v2360, %v2379
      %2381 = vdwg.mxu0
      %2382 = vmatpush.msra.mxu0 %v2327
      %2383 = vmatpush.msra.mxu0 %v2324
      %2384 = vmatpush.msra.mxu0 %v2321
      %2385 = vmatpush.msra.mxu0 %v2318
      %2386 = vmatpush.msra.mxu0 %v2315
      %2387 = vmatpush.msra.mxu0 %v2312
      %2388 = vmatpush.msra.mxu0 %v2309
      %2389 = vmatpush.msra.mxu0 %v2306
      %2390 = vmatpush.msra.mxu0 %v2303
      %2391 = vmatpush.msra.mxu0 %v2300
      %2392 = vmatpush.msra.mxu0 %v2297
      %2393 = vmatpush.msra.mxu0 %v2294
      %2394 = vmatpush.msra.mxu0 %v2291
      %2395 = vmatpush.msra.mxu0 %v2288
      %2396 = vmatpush.msra.mxu0 %v2285
      %2397 = vmatpush.msra.mxu0 %v2282
      %2398 = vmatmul.f32.gmra.mxu0 %v2338
      %v2399 = vpop.f32.mrf.mxu0
      %v2400 = vadd.f32 %v2380, %v2399
      %2401 = vdwg.mxu0
      %2402 = vmatpush.msra.mxu0 %v2232
      %2403 = vmatpush.msra.mxu0 %v2229
      %2404 = vmatpush.msra.mxu0 %v2226
      %2405 = vmatpush.msra.mxu0 %v2223
      %2406 = vmatpush.msra.mxu0 %v2220
      %2407 = vmatpush.msra.mxu0 %v2217
      %2408 = vmatpush.msra.mxu0 %v2214
      %2409 = vmatpush.msra.mxu0 %v2211
      %2410 = vmatpush.msra.mxu0 %v2208
      %2411 = vmatpush.msra.mxu0 %v2205
      %2412 = vmatpush.msra.mxu0 %v2202
      %2413 = vmatpush.msra.mxu0 %v2199
      %2414 = vmatpush.msra.mxu0 %v2196
      %2415 = vmatpush.msra.mxu0 %v2193
      %2416 = vmatpush.msra.mxu0 %v2190
      %2417 = vmatpush.msra.mxu0 %v2187
      %2418 = vmatmul.f32.gmra.mxu0 %v2332
      %v2419 = vpop.f32.mrf.mxu0
      %v2420 = vadd.f32 0.0, %v2419
      %2421 = vdwg.mxu0
      %2422 = vmatpush.msra.mxu0 %v2280
      %2423 = vmatpush.msra.mxu0 %v2277
      %2424 = vmatpush.msra.mxu0 %v2274
      %2425 = vmatpush.msra.mxu0 %v2271
      %2426 = vmatpush.msra.mxu0 %v2268
      %2427 = vmatpush.msra.mxu0 %v2265
      %2428 = vmatpush.msra.mxu0 %v2262
      %2429 = vmatpush.msra.mxu0 %v2259
      %2430 = vmatpush.msra.mxu0 %v2256
      %2431 = vmatpush.msra.mxu0 %v2253
      %2432 = vmatpush.msra.mxu0 %v2250
      %2433 = vmatpush.msra.mxu0 %v2247
      %2434 = vmatpush.msra.mxu0 %v2244
      %2435 = vmatpush.msra.mxu0 %v2241
      %2436 = vmatpush.msra.mxu0 %v2238
      %2437 = vmatpush.msra.mxu0 %v2235
      %2438 = vmatmul.f32.gmra.mxu0 %v2335
      %v2439 = vpop.f32.mrf.mxu0
      %v2440 = vadd.f32 %v2420, %v2439
      %2441 = vdwg.mxu0
      %2442 = vmatpush.msra.mxu0 %v2328
      %2443 = vmatpush.msra.mxu0 %v2325
      %2444 = vmatpush.msra.mxu0 %v2322
      %2445 = vmatpush.msra.mxu0 %v2319
      %2446 = vmatpush.msra.mxu0 %v2316
      %2447 = vmatpush.msra.mxu0 %v2313
      %2448 = vmatpush.msra.mxu0 %v2310
      %2449 = vmatpush.msra.mxu0 %v2307
      %2450 = vmatpush.msra.mxu0 %v2304
      %2451 = vmatpush.msra.mxu0 %v2301
      %2452 = vmatpush.msra.mxu0 %v2298
      %2453 = vmatpush.msra.mxu0 %v2295
      %2454 = vmatpush.msra.mxu0 %v2292
      %2455 = vmatpush.msra.mxu0 %v2289
      %2456 = vmatpush.msra.mxu0 %v2286
      %2457 = vmatpush.msra.mxu0 %v2283
      %2458 = vmatmul.f32.gmra.mxu0 %v2338
      %v2459 = vpop.f32.mrf.mxu0
      %v2460 = vadd.f32 %v2440, %v2459
      %2461 = vdwg.mxu0
      %2462 = vmatpush.msra.mxu0 %v2233
      %2463 = vmatpush.msra.mxu0 %v2230
      %2464 = vmatpush.msra.mxu0 %v2227
      %2465 = vmatpush.msra.mxu0 %v2224
      %2466 = vmatpush.msra.mxu0 %v2221
      %2467 = vmatpush.msra.mxu0 %v2218
      %2468 = vmatpush.msra.mxu0 %v2215
      %2469 = vmatpush.msra.mxu0 %v2212
      %2470 = vmatpush.msra.mxu0 %v2209
      %2471 = vmatpush.msra.mxu0 %v2206
      %2472 = vmatpush.msra.mxu0 %v2203
      %2473 = vmatpush.msra.mxu0 %v2200
      %2474 = vmatpush.msra.mxu0 %v2197
      %2475 = vmatpush.msra.mxu0 %v2194
      %2476 = vmatpush.msra.mxu0 %v2191
      %2477 = vmatpush.msra.mxu0 %v2188
      %2478 = vmatmul.f32.gmra.mxu0 %v2332
      %v2479 = vpop.f32.mrf.mxu0
      %v2480 = vadd.f32 0.0, %v2479
      %2481 = vdwg.mxu0
      %2482 = vmatpush.msra.mxu0 %v2281
      %2483 = vmatpush.msra.mxu0 %v2278
      %2484 = vmatpush.msra.mxu0 %v2275
      %2485 = vmatpush.msra.mxu0 %v2272
      %2486 = vmatpush.msra.mxu0 %v2269
      %2487 = vmatpush.msra.mxu0 %v2266
      %2488 = vmatpush.msra.mxu0 %v2263
      %2489 = vmatpush.msra.mxu0 %v2260
      %2490 = vmatpush.msra.mxu0 %v2257
      %2491 = vmatpush.msra.mxu0 %v2254
      %2492 = vmatpush.msra.mxu0 %v2251
      %2493 = vmatpush.msra.mxu0 %v2248
      %2494 = vmatpush.msra.mxu0 %v2245
      %2495 = vmatpush.msra.mxu0 %v2242
      %2496 = vmatpush.msra.mxu0 %v2239
      %2497 = vmatpush.msra.mxu0 %v2236
      %2498 = vmatmul.f32.gmra.mxu0 %v2335
      %v2499 = vpop.f32.mrf.mxu0
      %v2500 = vadd.f32 %v2480, %v2499
      %2501 = vdwg.mxu0
      %2502 = vmatpush.msra.mxu0 %v2329
      %2503 = vmatpush.msra.mxu0 %v2326
      %2504 = vmatpush.msra.mxu0 %v2323
      %2505 = vmatpush.msra.mxu0 %v2320
      %2506 = vmatpush.msra.mxu0 %v2317
      %2507 = vmatpush.msra.mxu0 %v2314
      %2508 = vmatpush.msra.mxu0 %v2311
      %2509 = vmatpush.msra.mxu0 %v2308
      %2510 = vmatpush.msra.mxu0 %v2305
      %2511 = vmatpush.msra.mxu0 %v2302
      %2512 = vmatpush.msra.mxu0 %v2299
      %2513 = vmatpush.msra.mxu0 %v2296
      %2514 = vmatpush.msra.mxu0 %v2293
      %2515 = vmatpush.msra.mxu0 %v2290
      %2516 = vmatpush.msra.mxu0 %v2287
      %2517 = vmatpush.msra.mxu0 %v2284
      %2518 = vmatmul.f32.gmra.mxu0 %v2338
      %v2519 = vpop.f32.mrf.mxu0
      %v2520 = vadd.f32 %v2500, %v2519
      %2521 = vdwg.mxu0
      %v2522 = vadd.f32 %v2182, %v2400
      %v2523 = vadd.f32 %v2183, %v2460
      %v2524 = vadd.f32 %v2184, %v2520
      %v2525 = vld [vmem:[%s5] sm:$0x7]
      %v2527 = vperm.slane %v2525, 0
      %v2528 = vperm.slane %v2525, 1
      %v2529 = vperm.slane %v2525, 2
      %v2533 = vadd.f32 %v2522, %v2527
      %v2534 = vadd.f32 %v2523, %v2528
      %v2535 = vadd.f32 %v2524, %v2529
      %v2536 = vmax.f32 %v2533, 0.0
      %v2537 = vmax.f32 %v2534, 0.0
      %v2538 = vmax.f32 %v2535, 0.0
      %v2539 = vld [vmem:[%s6] sm:$0xff]
      %v2540 = vld [vmem:[%s6 + $0x8] sm:$0xff]
      %v2541 = vld [vmem:[%s6 + $0x10] sm:$0x3]
      %vm2542 = vcmask 56320
      %v2544 = vsel %vm2542, %v2539, 0
      %v2547 = vsel %vm2542, %v2540, 0
      %v2550 = vsel %vm2542, %v2541, 0
      %v2553 = vsel %vm1130, %v2536, 0
      %v2556 = vsel %vm1130, %v2537, 0
      %v2559 = vsel %vm1130, %v2538, 0
      %2561 = vmatpush.msra.mxu0 0.0
      %2562 = vmatpush.msra.mxu0 0.0
      %2563 = vmatpush.msra.mxu0 0.0
      %2564 = vmatpush.msra.mxu0 0.0
      %2565 = vmatpush.msra.mxu0 0.0
      %2566 = vmatpush.msra.mxu0 0.0
      %2567 = vmatpush.msra.mxu0 0.0
      %2568 = vmatpush.msra.mxu0 0.0
      %2569 = vmatpush.msra.mxu0 0.0
      %2570 = vmatpush.msra.mxu0 0.0
      %2571 = vmatpush.msra.mxu0 0.0
      %2572 = vmatpush.msra.mxu0 0.0
      %2573 = vmatpush.msra.mxu0 0.0
      %2574 = vmatpush.msra.mxu0 0.0
      %2575 = vmatpush.msra.mxu0 0.0
      %2576 = vmatpush.msra.mxu0 %v2553
      %2577 = vmatmul.f32.gmra.mxu0 %v2544
      %v2578 = vpop.f32.mrf.mxu0
      %v2579 = vadd.f32 0.0, %v2578
      %2580 = vmatmul.f32.gmra.mxu0 %v2547
      %v2581 = vpop.f32.mrf.mxu0
      %v2582 = vadd.f32 0.0, %v2581
      %2583 = vmatmul.f32.gmra.mxu0 %v2550
      %v2584 = vpop.f32.mrf.mxu0
      %v2585 = vadd.f32 0.0, %v2584
      %2586 = vdwg.mxu0
      %2587 = vmatpush.msra.mxu0 0.0
      %2588 = vmatpush.msra.mxu0 0.0
      %2589 = vmatpush.msra.mxu0 0.0
      %2590 = vmatpush.msra.mxu0 0.0
      %2591 = vmatpush.msra.mxu0 0.0
      %2592 = vmatpush.msra.mxu0 0.0
      %2593 = vmatpush.msra.mxu0 0.0
      %2594 = vmatpush.msra.mxu0 0.0
      %2595 = vmatpush.msra.mxu0 0.0
      %2596 = vmatpush.msra.mxu0 0.0
      %2597 = vmatpush.msra.mxu0 0.0
      %2598 = vmatpush.msra.mxu0 0.0
      %2599 = vmatpush.msra.mxu0 0.0
      %2600 = vmatpush.msra.mxu0 0.0
      %2601 = vmatpush.msra.mxu0 0.0
      %2602 = vmatpush.msra.mxu0 %v2556
      %2603 = vmatmul.f32.gmra.mxu0 %v2544
      %v2604 = vpop.f32.mrf.mxu0
      %v2605 = vadd.f32 0.0, %v2604
      %2606 = vmatmul.f32.gmra.mxu0 %v2547
      %v2607 = vpop.f32.mrf.mxu0
      %v2608 = vadd.f32 0.0, %v2607
      %2609 = vmatmul.f32.gmra.mxu0 %v2550
      %v2610 = vpop.f32.mrf.mxu0
      %v2611 = vadd.f32 0.0, %v2610
      %2612 = vdwg.mxu0
      %2613 = vmatpush.msra.mxu0 0.0
      %2614 = vmatpush.msra.mxu0 0.0
      %2615 = vmatpush.msra.mxu0 0.0
      %2616 = vmatpush.msra.mxu0 0.0
      %2617 = vmatpush.msra.mxu0 0.0
      %2618 = vmatpush.msra.mxu0 0.0
      %2619 = vmatpush.msra.mxu0 0.0
      %2620 = vmatpush.msra.mxu0 0.0
      %2621 = vmatpush.msra.mxu0 0.0
      %2622 = vmatpush.msra.mxu0 0.0
      %2623 = vmatpush.msra.mxu0 0.0
      %2624 = vmatpush.msra.mxu0 0.0
      %2625 = vmatpush.msra.mxu0 0.0
      %2626 = vmatpush.msra.mxu0 0.0
      %2627 = vmatpush.msra.mxu0 0.0
      %2628 = vmatpush.msra.mxu0 %v2559
      %2629 = vmatmul.f32.gmra.mxu0 %v2544
      %v2630 = vpop.f32.mrf.mxu0
      %v2631 = vadd.f32 0.0, %v2630
      %2632 = vmatmul.f32.gmra.mxu0 %v2547
      %v2633 = vpop.f32.mrf.mxu0
      %v2634 = vadd.f32 0.0, %v2633
      %2635 = vmatmul.f32.gmra.mxu0 %v2550
      %v2636 = vpop.f32.mrf.mxu0
      %v2637 = vadd.f32 0.0, %v2636
      %2638 = vdwg.mxu0
      %v2639 = vld [vmem:[%s7] sm:$0xff]
      %v2640 = vld [vmem:[%s7 + $0x8] sm:$0xff]
      %v2641 = vld [vmem:[%s7 + $0x10] sm:$0xff]
      %v2642 = vld [vmem:[%s7 + $0x18] sm:$0xff]
      %v2643 = vld [vmem:[%s7 + $0x20] sm:$0xff]
      %v2644 = vld [vmem:[%s7 + $0x28] sm:$0xff]
      %v2645 = vld [vmem:[%s7 + $0x30] sm:$0xff]
      %v2646 = vld [vmem:[%s7 + $0x38] sm:$0xff]
      %v2647 = vld [vmem:[%s7 + $0x40] sm:$0xff]
      %v2648 = vld [vmem:[%s7 + $0x48] sm:$0xff]
      %v2649 = vld [vmem:[%s7 + $0x50] sm:$0xff]
      %v2650 = vld [vmem:[%s7 + $0x58] sm:$0xff]
      %v2651 = vld [vmem:[%s7 + $0x60] sm:$0xff]
      %v2652 = vld [vmem:[%s7 + $0x68] sm:$0xff]
      %v2653 = vld [vmem:[%s7 + $0x70] sm:$0xff]
      %v2654 = vld [vmem:[%s7 + $0x78] sm:$0xff]
      %v2655 = vld [vmem:[%s7 + $0x80] sm:$0xff]
      %v2656 = vld [vmem:[%s7 + $0x88] sm:$0xff]
      %v2657 = vld [vmem:[%s7 + $0x90] sm:$0xff]
      %v2658 = vld [vmem:[%s7 + $0x98] sm:$0xff]
      %v2659 = vld [vmem:[%s7 + $0xa0] sm:$0xff]
      %v2660 = vld [vmem:[%s7 + $0xa8] sm:$0xff]
      %v2661 = vld [vmem:[%s7 + $0xb0] sm:$0xff]
      %v2662 = vld [vmem:[%s7 + $0xb8] sm:$0xff]
      %v2663 = vld [vmem:[%s7 + $0xc0] sm:$0xff]
      %v2664 = vld [vmem:[%s7 + $0xc8] sm:$0xff]
      %v2665 = vld [vmem:[%s7 + $0xd0] sm:$0xff]
      %v2666 = vld [vmem:[%s7 + $0xd8] sm:$0xff]
      %v2667 = vld [vmem:[%s7 + $0xe0] sm:$0xff]
      %v2668 = vld [vmem:[%s7 + $0xe8] sm:$0xff]
      %v2669 = vld [vmem:[%s7 + $0xf0] sm:$0xff]
      %v2670 = vld [vmem:[%s7 + $0xf8] sm:$0xff]
      %v2671 = vld [vmem:[%s7 + $0x100] sm:$0xff]
      %v2672 = vld [vmem:[%s7 + $0x108] sm:$0xff]
      %v2673 = vld [vmem:[%s7 + $0x110] sm:$0xff]
      %v2674 = vld [vmem:[%s7 + $0x118] sm:$0xff]
      %v2675 = vld [vmem:[%s7 + $0x120] sm:$0xff]
      %v2676 = vld [vmem:[%s7 + $0x128] sm:$0xff]
      %v2677 = vld [vmem:[%s7 + $0x130] sm:$0xff]
      %v2678 = vld [vmem:[%s7 + $0x138] sm:$0xff]
      %v2679 = vld [vmem:[%s7 + $0x140] sm:$0xff]
      %v2680 = vld [vmem:[%s7 + $0x148] sm:$0xff]
      %v2681 = vld [vmem:[%s7 + $0x150] sm:$0xff]
      %v2682 = vld [vmem:[%s7 + $0x158] sm:$0xff]
      %v2683 = vld [vmem:[%s7 + $0x160] sm:$0xff]
      %v2684 = vld [vmem:[%s7 + $0x168] sm:$0xff]
      %v2685 = vld [vmem:[%s7 + $0x170] sm:$0xff]
      %v2686 = vld [vmem:[%s7 + $0x178] sm:$0xff]
      %v2687 = vld [vmem:[%s7 + $0x180] sm:$0xff]
      %v2688 = vld [vmem:[%s7 + $0x188] sm:$0xff]
      %v2689 = vld [vmem:[%s7 + $0x190] sm:$0xff]
      %v2690 = vld [vmem:[%s7 + $0x198] sm:$0xff]
      %v2691 = vld [vmem:[%s7 + $0x1a0] sm:$0xff]
      %v2692 = vld [vmem:[%s7 + $0x1a8] sm:$0xff]
      %v2693 = vld [vmem:[%s7 + $0x1b0] sm:$0xff]
      %v2694 = vld [vmem:[%s7 + $0x1b8] sm:$0xff]
      %v2695 = vld [vmem:[%s7 + $0x1c0] sm:$0xff]
      %v2696 = vld [vmem:[%s7 + $0x1c8] sm:$0xff]
      %v2697 = vld [vmem:[%s7 + $0x1d0] sm:$0xff]
      %v2698 = vld [vmem:[%s7 + $0x1d8] sm:$0xff]
      %v2699 = vld [vmem:[%s7 + $0x1e0] sm:$0xff]
      %v2700 = vld [vmem:[%s7 + $0x1e8] sm:$0xff]
      %v2701 = vld [vmem:[%s7 + $0x1f0] sm:$0xff]
      %v2702 = vld [vmem:[%s7 + $0x1f8] sm:$0xff]
      %v2703 = vld [vmem:[%s7 + $0x200] sm:$0xff]
      %v2704 = vld [vmem:[%s7 + $0x208] sm:$0xff]
      %v2705 = vld [vmem:[%s7 + $0x210] sm:$0xff]
      %v2706 = vld [vmem:[%s7 + $0x218] sm:$0xff]
      %v2707 = vld [vmem:[%s7 + $0x220] sm:$0xff]
      %v2708 = vld [vmem:[%s7 + $0x228] sm:$0xff]
      %v2709 = vld [vmem:[%s7 + $0x230] sm:$0xff]
      %v2710 = vld [vmem:[%s7 + $0x238] sm:$0xff]
      %v2711 = vld [vmem:[%s7 + $0x240] sm:$0xff]
      %v2712 = vld [vmem:[%s7 + $0x248] sm:$0xff]
      %v2713 = vld [vmem:[%s7 + $0x250] sm:$0xff]
      %v2714 = vld [vmem:[%s7 + $0x258] sm:$0xff]
      %v2715 = vld [vmem:[%s7 + $0x260] sm:$0xff]
      %v2716 = vld [vmem:[%s7 + $0x268] sm:$0xff]
      %v2717 = vld [vmem:[%s7 + $0x270] sm:$0xff]
      %v2718 = vld [vmem:[%s7 + $0x278] sm:$0xff]
      %v2719 = vld [vmem:[%s7 + $0x280] sm:$0xff]
      %v2720 = vld [vmem:[%s7 + $0x288] sm:$0xff]
      %v2721 = vld [vmem:[%s7 + $0x290] sm:$0xff]
      %v2722 = vld [vmem:[%s7 + $0x298] sm:$0xff]
      %v2723 = vld [vmem:[%s7 + $0x2a0] sm:$0xff]
      %v2724 = vld [vmem:[%s7 + $0x2a8] sm:$0xff]
      %v2725 = vld [vmem:[%s7 + $0x2b0] sm:$0xff]
      %v2726 = vld [vmem:[%s7 + $0x2b8] sm:$0xff]
      %v2727 = vld [vmem:[%s7 + $0x2c0] sm:$0xff]
      %v2728 = vld [vmem:[%s7 + $0x2c8] sm:$0xff]
      %v2729 = vld [vmem:[%s7 + $0x2d0] sm:$0xff]
      %v2730 = vld [vmem:[%s7 + $0x2d8] sm:$0xff]
      %v2731 = vld [vmem:[%s7 + $0x2e0] sm:$0xff]
      %v2732 = vld [vmem:[%s7 + $0x2e8] sm:$0xff]
      %v2733 = vld [vmem:[%s7 + $0x2f0] sm:$0xff]
      %v2734 = vld [vmem:[%s7 + $0x2f8] sm:$0xff]
      %v2735 = vld [vmem:[%s7 + $0x300] sm:$0xff]
      %v2736 = vld [vmem:[%s7 + $0x308] sm:$0xff]
      %v2737 = vld [vmem:[%s7 + $0x310] sm:$0xff]
      %v2738 = vld [vmem:[%s7 + $0x318] sm:$0xff]
      %v2739 = vld [vmem:[%s7 + $0x320] sm:$0xff]
      %v2740 = vld [vmem:[%s7 + $0x328] sm:$0xff]
      %v2741 = vld [vmem:[%s7 + $0x330] sm:$0xff]
      %v2742 = vld [vmem:[%s7 + $0x338] sm:$0xff]
      %v2743 = vld [vmem:[%s7 + $0x340] sm:$0xff]
      %v2744 = vld [vmem:[%s7 + $0x348] sm:$0xff]
      %v2745 = vld [vmem:[%s7 + $0x350] sm:$0xff]
      %v2746 = vld [vmem:[%s7 + $0x358] sm:$0xff]
      %v2747 = vld [vmem:[%s7 + $0x360] sm:$0xff]
      %v2748 = vld [vmem:[%s7 + $0x368] sm:$0xff]
      %v2749 = vld [vmem:[%s7 + $0x370] sm:$0xff]
      %v2750 = vld [vmem:[%s7 + $0x378] sm:$0xff]
      %v2751 = vld [vmem:[%s7 + $0x380] sm:$0xff]
      %v2752 = vld [vmem:[%s7 + $0x388] sm:$0xff]
      %v2753 = vld [vmem:[%s7 + $0x390] sm:$0xff]
      %v2754 = vld [vmem:[%s7 + $0x398] sm:$0xff]
      %v2755 = vld [vmem:[%s7 + $0x3a0] sm:$0xff]
      %v2756 = vld [vmem:[%s7 + $0x3a8] sm:$0xff]
      %v2757 = vld [vmem:[%s7 + $0x3b0] sm:$0xff]
      %v2758 = vld [vmem:[%s7 + $0x3b8] sm:$0xff]
      %v2759 = vld [vmem:[%s7 + $0x3c0] sm:$0xff]
      %v2760 = vld [vmem:[%s7 + $0x3c8] sm:$0xff]
      %v2761 = vld [vmem:[%s7 + $0x3d0] sm:$0xff]
      %v2762 = vld [vmem:[%s7 + $0x3d8] sm:$0xff]
      %v2763 = vld [vmem:[%s7 + $0x3e0] sm:$0xff]
      %v2764 = vld [vmem:[%s7 + $0x3e8] sm:$0xff]
      %v2765 = vld [vmem:[%s7 + $0x3f0] sm:$0xff]
      %v2766 = vld [vmem:[%s7 + $0x3f8] sm:$0xff]
      %v2767 = vld [vmem:[%s7 + $0x400] sm:$0xff]
      %v2768 = vld [vmem:[%s7 + $0x408] sm:$0xff]
      %v2769 = vld [vmem:[%s7 + $0x410] sm:$0xff]
      %v2770 = vld [vmem:[%s7 + $0x418] sm:$0xff]
      %v2771 = vld [vmem:[%s7 + $0x420] sm:$0xff]
      %v2772 = vld [vmem:[%s7 + $0x428] sm:$0xff]
      %v2773 = vld [vmem:[%s7 + $0x430] sm:$0xff]
      %v2774 = vld [vmem:[%s7 + $0x438] sm:$0xff]
      %v2775 = vld [vmem:[%s7 + $0x440] sm:$0xff]
      %v2776 = vld [vmem:[%s7 + $0x448] sm:$0xff]
      %v2777 = vld [vmem:[%s7 + $0x450] sm:$0xff]
      %v2778 = vld [vmem:[%s7 + $0x458] sm:$0xff]
      %v2779 = vld [vmem:[%s7 + $0x460] sm:$0xff]
      %v2780 = vld [vmem:[%s7 + $0x468] sm:$0xff]
      %v2781 = vld [vmem:[%s7 + $0x470] sm:$0xff]
      %v2782 = vld [vmem:[%s7 + $0x478] sm:$0xff]
      %s2783 = scalar_lea.vmem %s7, 1152
      %v2784 = vld [vmem:[%s2783] sm:$0xff]
      %v2785 = vld [vmem:[%s2783 + $0x8] sm:$0xff]
      %v2786 = vld [vmem:[%s2783 + $0x10] sm:$0xff]
      %v2787 = vld [vmem:[%s2783 + $0x18] sm:$0xff]
      %v2788 = vld [vmem:[%s2783 + $0x20] sm:$0xff]
      %v2789 = vld [vmem:[%s2783 + $0x28] sm:$0xff]
      %v2790 = vld [vmem:[%s2783 + $0x30] sm:$0xff]
      %v2791 = vld [vmem:[%s2783 + $0x38] sm:$0xff]
      %v2792 = vld [vmem:[%s2783 + $0x40] sm:$0xff]
      %v2793 = vld [vmem:[%s2783 + $0x48] sm:$0xff]
      %v2794 = vld [vmem:[%s2783 + $0x50] sm:$0xff]
      %v2795 = vld [vmem:[%s2783 + $0x58] sm:$0xff]
      %v2796 = vld [vmem:[%s2783 + $0x60] sm:$0xff]
      %v2797 = vld [vmem:[%s2783 + $0x68] sm:$0xff]
      %v2798 = vld [vmem:[%s2783 + $0x70] sm:$0xff]
      %v2799 = vld [vmem:[%s2783 + $0x78] sm:$0xff]
      %v2800 = vld [vmem:[%s2783 + $0x80] sm:$0xff]
      %v2801 = vld [vmem:[%s2783 + $0x88] sm:$0xff]
      %v2802 = vld [vmem:[%s2783 + $0x90] sm:$0xff]
      %v2803 = vld [vmem:[%s2783 + $0x98] sm:$0xff]
      %v2804 = vld [vmem:[%s2783 + $0xa0] sm:$0xff]
      %v2805 = vld [vmem:[%s2783 + $0xa8] sm:$0xff]
      %v2806 = vld [vmem:[%s2783 + $0xb0] sm:$0xff]
      %v2807 = vld [vmem:[%s2783 + $0xb8] sm:$0xff]
      %v2808 = vld [vmem:[%s2783 + $0xc0] sm:$0xff]
      %v2809 = vld [vmem:[%s2783 + $0xc8] sm:$0xff]
      %v2810 = vld [vmem:[%s2783 + $0xd0] sm:$0xff]
      %v2811 = vld [vmem:[%s2783 + $0xd8] sm:$0xff]
      %v2812 = vld [vmem:[%s2783 + $0xe0] sm:$0xff]
      %v2813 = vld [vmem:[%s2783 + $0xe8] sm:$0xff]
      %v2814 = vld [vmem:[%s2783 + $0xf0] sm:$0xff]
      %v2815 = vld [vmem:[%s2783 + $0xf8] sm:$0xff]
      %v2816 = vld [vmem:[%s2783 + $0x100] sm:$0xff]
      %v2817 = vld [vmem:[%s2783 + $0x108] sm:$0xff]
      %v2818 = vld [vmem:[%s2783 + $0x110] sm:$0xff]
      %v2819 = vld [vmem:[%s2783 + $0x118] sm:$0xff]
      %v2820 = vld [vmem:[%s2783 + $0x120] sm:$0xff]
      %v2821 = vld [vmem:[%s2783 + $0x128] sm:$0xff]
      %v2822 = vld [vmem:[%s2783 + $0x130] sm:$0xff]
      %v2823 = vld [vmem:[%s2783 + $0x138] sm:$0xff]
      %v2824 = vld [vmem:[%s2783 + $0x140] sm:$0xff]
      %v2825 = vld [vmem:[%s2783 + $0x148] sm:$0xff]
      %v2826 = vld [vmem:[%s2783 + $0x150] sm:$0xff]
      %v2827 = vld [vmem:[%s2783 + $0x158] sm:$0xff]
      %v2828 = vld [vmem:[%s2783 + $0x160] sm:$0xff]
      %v2829 = vld [vmem:[%s2783 + $0x168] sm:$0xff]
      %v2830 = vld [vmem:[%s2783 + $0x170] sm:$0xff]
      %v2831 = vld [vmem:[%s2783 + $0x178] sm:$0xff]
      %v2832 = vld [vmem:[%s2783 + $0x180] sm:$0xff]
      %v2833 = vld [vmem:[%s2783 + $0x188] sm:$0xff]
      %v2834 = vld [vmem:[%s2783 + $0x190] sm:$0xff]
      %v2835 = vld [vmem:[%s2783 + $0x198] sm:$0xff]
      %v2836 = vld [vmem:[%s2783 + $0x1a0] sm:$0xff]
      %v2837 = vld [vmem:[%s2783 + $0x1a8] sm:$0xff]
      %v2838 = vld [vmem:[%s2783 + $0x1b0] sm:$0xff]
      %v2839 = vld [vmem:[%s2783 + $0x1b8] sm:$0xff]
      %v2840 = vld [vmem:[%s2783 + $0x1c0] sm:$0xff]
      %v2841 = vld [vmem:[%s2783 + $0x1c8] sm:$0xff]
      %v2842 = vld [vmem:[%s2783 + $0x1d0] sm:$0xff]
      %v2843 = vld [vmem:[%s2783 + $0x1d8] sm:$0xff]
      %v2844 = vld [vmem:[%s2783 + $0x1e0] sm:$0xff]
      %v2845 = vld [vmem:[%s2783 + $0x1e8] sm:$0xff]
      %v2846 = vld [vmem:[%s2783 + $0x1f0] sm:$0xff]
      %v2847 = vld [vmem:[%s2783 + $0x1f8] sm:$0xff]
      %v2848 = vld [vmem:[%s2783 + $0x200] sm:$0xff]
      %v2849 = vld [vmem:[%s2783 + $0x208] sm:$0xff]
      %v2850 = vld [vmem:[%s2783 + $0x210] sm:$0xff]
      %v2851 = vld [vmem:[%s2783 + $0x218] sm:$0xff]
      %v2852 = vld [vmem:[%s2783 + $0x220] sm:$0xff]
      %v2853 = vld [vmem:[%s2783 + $0x228] sm:$0xff]
      %v2854 = vld [vmem:[%s2783 + $0x230] sm:$0xff]
      %v2855 = vld [vmem:[%s2783 + $0x238] sm:$0xff]
      %v2856 = vld [vmem:[%s2783 + $0x240] sm:$0xff]
      %v2857 = vld [vmem:[%s2783 + $0x248] sm:$0xff]
      %v2858 = vld [vmem:[%s2783 + $0x250] sm:$0xff]
      %v2859 = vld [vmem:[%s2783 + $0x258] sm:$0xff]
      %v2860 = vld [vmem:[%s2783 + $0x260] sm:$0xff]
      %v2861 = vld [vmem:[%s2783 + $0x268] sm:$0xff]
      %v2862 = vld [vmem:[%s2783 + $0x270] sm:$0xff]
      %v2863 = vld [vmem:[%s2783 + $0x278] sm:$0xff]
      %v2864 = vld [vmem:[%s2783 + $0x280] sm:$0xff]
      %v2865 = vld [vmem:[%s2783 + $0x288] sm:$0xff]
      %v2866 = vld [vmem:[%s2783 + $0x290] sm:$0xff]
      %v2867 = vld [vmem:[%s2783 + $0x298] sm:$0xff]
      %v2868 = vld [vmem:[%s2783 + $0x2a0] sm:$0xff]
      %v2869 = vld [vmem:[%s2783 + $0x2a8] sm:$0xff]
      %v2870 = vld [vmem:[%s2783 + $0x2b0] sm:$0xff]
      %v2871 = vld [vmem:[%s2783 + $0x2b8] sm:$0xff]
      %v2872 = vld [vmem:[%s2783 + $0x2c0] sm:$0xff]
      %v2873 = vld [vmem:[%s2783 + $0x2c8] sm:$0xff]
      %v2874 = vld [vmem:[%s2783 + $0x2d0] sm:$0xff]
      %v2875 = vld [vmem:[%s2783 + $0x2d8] sm:$0xff]
      %v2876 = vld [vmem:[%s2783 + $0x2e0] sm:$0xff]
      %v2877 = vld [vmem:[%s2783 + $0x2e8] sm:$0xff]
      %v2878 = vld [vmem:[%s2783 + $0x2f0] sm:$0xff]
      %v2879 = vld [vmem:[%s2783 + $0x2f8] sm:$0xff]
      %v2880 = vld [vmem:[%s2783 + $0x300] sm:$0xff]
      %v2881 = vld [vmem:[%s2783 + $0x308] sm:$0xff]
      %v2882 = vld [vmem:[%s2783 + $0x310] sm:$0xff]
      %v2883 = vld [vmem:[%s2783 + $0x318] sm:$0xff]
      %v2884 = vld [vmem:[%s2783 + $0x320] sm:$0xff]
      %v2885 = vld [vmem:[%s2783 + $0x328] sm:$0xff]
      %v2886 = vld [vmem:[%s2783 + $0x330] sm:$0xff]
      %v2887 = vld [vmem:[%s2783 + $0x338] sm:$0xff]
      %v2888 = vld [vmem:[%s2783 + $0x340] sm:$0xff]
      %v2889 = vld [vmem:[%s2783 + $0x348] sm:$0xff]
      %v2890 = vld [vmem:[%s2783 + $0x350] sm:$0xff]
      %v2891 = vld [vmem:[%s2783 + $0x358] sm:$0xff]
      %v2892 = vld [vmem:[%s2783 + $0x360] sm:$0xff]
      %v2893 = vld [vmem:[%s2783 + $0x368] sm:$0xff]
      %v2894 = vld [vmem:[%s2783 + $0x370] sm:$0xff]
      %v2895 = vld [vmem:[%s2783 + $0x378] sm:$0xff]
      %v2896 = vld [vmem:[%s2783 + $0x380] sm:$0xff]
      %v2897 = vld [vmem:[%s2783 + $0x388] sm:$0xff]
      %v2898 = vld [vmem:[%s2783 + $0x390] sm:$0xff]
      %v2899 = vld [vmem:[%s2783 + $0x398] sm:$0xff]
      %v2900 = vld [vmem:[%s2783 + $0x3a0] sm:$0xff]
      %v2901 = vld [vmem:[%s2783 + $0x3a8] sm:$0xff]
      %v2902 = vld [vmem:[%s2783 + $0x3b0] sm:$0xff]
      %v2903 = vld [vmem:[%s2783 + $0x3b8] sm:$0xff]
      %v2904 = vld [vmem:[%s2783 + $0x3c0] sm:$0xff]
      %v2905 = vld [vmem:[%s2783 + $0x3c8] sm:$0xff]
      %v2906 = vld [vmem:[%s2783 + $0x3d0] sm:$0xff]
      %v2907 = vld [vmem:[%s2783 + $0x3d8] sm:$0xff]
      %v2908 = vld [vmem:[%s2783 + $0x3e0] sm:$0xff]
      %v2909 = vld [vmem:[%s2783 + $0x3e8] sm:$0xff]
      %v2910 = vld [vmem:[%s2783 + $0x3f0] sm:$0xff]
      %v2911 = vld [vmem:[%s2783 + $0x3f8] sm:$0xff]
      %v2912 = vld [vmem:[%s2783 + $0x400] sm:$0xff]
      %v2913 = vld [vmem:[%s2783 + $0x408] sm:$0xff]
      %v2914 = vld [vmem:[%s2783 + $0x410] sm:$0xff]
      %v2915 = vld [vmem:[%s2783 + $0x418] sm:$0xff]
      %v2916 = vld [vmem:[%s2783 + $0x420] sm:$0xff]
      %v2917 = vld [vmem:[%s2783 + $0x428] sm:$0xff]
      %v2918 = vld [vmem:[%s2783 + $0x430] sm:$0xff]
      %v2919 = vld [vmem:[%s2783 + $0x438] sm:$0xff]
      %v2920 = vld [vmem:[%s2783 + $0x440] sm:$0xff]
      %v2921 = vld [vmem:[%s2783 + $0x448] sm:$0xff]
      %v2922 = vld [vmem:[%s2783 + $0x450] sm:$0xff]
      %v2923 = vld [vmem:[%s2783 + $0x458] sm:$0xff]
      %v2924 = vld [vmem:[%s2783 + $0x460] sm:$0xff]
      %v2925 = vld [vmem:[%s2783 + $0x468] sm:$0xff]
      %v2926 = vld [vmem:[%s2783 + $0x470] sm:$0xff]
      %v2927 = vld [vmem:[%s2783 + $0x478] sm:$0xff]
      %v2934 = vrot.slane %v2579, 1
      %v2935 = vrot.slane %v2582, 1
      %v2936 = vsel %vm1130, %v2934, %v2935
      %v2937 = vrot.slane %v2605, 1
      %v2938 = vrot.slane %v2608, 1
      %v2939 = vsel %vm1130, %v2937, %v2938
      %v2940 = vrot.slane %v2631, 1
      %v2941 = vrot.slane %v2634, 1
      %v2942 = vsel %vm1130, %v2940, %v2941
      %2949 = vmatpush.msra.mxu0 %v2829
      %2950 = vmatpush.msra.mxu0 %v2826
      %2951 = vmatpush.msra.mxu0 %v2823
      %2952 = vmatpush.msra.mxu0 %v2820
      %2953 = vmatpush.msra.mxu0 %v2817
      %2954 = vmatpush.msra.mxu0 %v2814
      %2955 = vmatpush.msra.mxu0 %v2811
      %2956 = vmatpush.msra.mxu0 %v2808
      %2957 = vmatpush.msra.mxu0 %v2805
      %2958 = vmatpush.msra.mxu0 %v2802
      %2959 = vmatpush.msra.mxu0 %v2799
      %2960 = vmatpush.msra.mxu0 %v2796
      %2961 = vmatpush.msra.mxu0 %v2793
      %2962 = vmatpush.msra.mxu0 %v2790
      %2963 = vmatpush.msra.mxu0 %v2787
      %2964 = vmatpush.msra.mxu0 %v2784
      %2965 = vmatmul.f32.gmra.mxu0 %v2936
      %v2966 = vpop.f32.mrf.mxu0
      %v2967 = vadd.f32 0.0, %v2966
      %2968 = vmatmul.f32.gmra.mxu0 %v2935
      %v2969 = vpop.f32.mrf.mxu0
      %v2970 = vadd.f32 0.0, %v2969
      %2971 = vdwg.mxu0
      %2972 = vmatpush.msra.mxu0 %v2877
      %2973 = vmatpush.msra.mxu0 %v2874
      %2974 = vmatpush.msra.mxu0 %v2871
      %2975 = vmatpush.msra.mxu0 %v2868
      %2976 = vmatpush.msra.mxu0 %v2865
      %2977 = vmatpush.msra.mxu0 %v2862
      %2978 = vmatpush.msra.mxu0 %v2859
      %2979 = vmatpush.msra.mxu0 %v2856
      %2980 = vmatpush.msra.mxu0 %v2853
      %2981 = vmatpush.msra.mxu0 %v2850
      %2982 = vmatpush.msra.mxu0 %v2847
      %2983 = vmatpush.msra.mxu0 %v2844
      %2984 = vmatpush.msra.mxu0 %v2841
      %2985 = vmatpush.msra.mxu0 %v2838
      %2986 = vmatpush.msra.mxu0 %v2835
      %2987 = vmatpush.msra.mxu0 %v2832
      %2988 = vmatmul.f32.gmra.mxu0 %v2939
      %v2989 = vpop.f32.mrf.mxu0
      %v2990 = vadd.f32 %v2967, %v2989
      %2991 = vmatmul.f32.gmra.mxu0 %v2938
      %v2992 = vpop.f32.mrf.mxu0
      %v2993 = vadd.f32 %v2970, %v2992
      %2994 = vdwg.mxu0
      %2995 = vmatpush.msra.mxu0 %v2925
      %2996 = vmatpush.msra.mxu0 %v2922
      %2997 = vmatpush.msra.mxu0 %v2919
      %2998 = vmatpush.msra.mxu0 %v2916
      %2999 = vmatpush.msra.mxu0 %v2913
      %3000 = vmatpush.msra.mxu0 %v2910
      %3001 = vmatpush.msra.mxu0 %v2907
      %3002 = vmatpush.msra.mxu0 %v2904
      %3003 = vmatpush.msra.mxu0 %v2901
      %3004 = vmatpush.msra.mxu0 %v2898
      %3005 = vmatpush.msra.mxu0 %v2895
      %3006 = vmatpush.msra.mxu0 %v2892
      %3007 = vmatpush.msra.mxu0 %v2889
      %3008 = vmatpush.msra.mxu0 %v2886
      %3009 = vmatpush.msra.mxu0 %v2883
      %3010 = vmatpush.msra.mxu0 %v2880
      %3011 = vmatmul.f32.gmra.mxu0 %v2942
      %v3012 = vpop.f32.mrf.mxu0
      %v3013 = vadd.f32 %v2990, %v3012
      %3014 = vmatmul.f32.gmra.mxu0 %v2941
      %v3015 = vpop.f32.mrf.mxu0
      %v3016 = vadd.f32 %v2993, %v3015
      %3017 = vdwg.mxu0
      %3018 = vmatpush.msra.mxu0 %v2830
      %3019 = vmatpush.msra.mxu0 %v2827
      %3020 = vmatpush.msra.mxu0 %v2824
      %3021 = vmatpush.msra.mxu0 %v2821
      %3022 = vmatpush.msra.mxu0 %v2818
      %3023 = vmatpush.msra.mxu0 %v2815
      %3024 = vmatpush.msra.mxu0 %v2812
      %3025 = vmatpush.msra.mxu0 %v2809
      %3026 = vmatpush.msra.mxu0 %v2806
      %3027 = vmatpush.msra.mxu0 %v2803
      %3028 = vmatpush.msra.mxu0 %v2800
      %3029 = vmatpush.msra.mxu0 %v2797
      %3030 = vmatpush.msra.mxu0 %v2794
      %3031 = vmatpush.msra.mxu0 %v2791
      %3032 = vmatpush.msra.mxu0 %v2788
      %3033 = vmatpush.msra.mxu0 %v2785
      %3034 = vmatmul.f32.gmra.mxu0 %v2936
      %v3035 = vpop.f32.mrf.mxu0
      %v3036 = vadd.f32 0.0, %v3035
      %3037 = vmatmul.f32.gmra.mxu0 %v2935
      %v3038 = vpop.f32.mrf.mxu0
      %v3039 = vadd.f32 0.0, %v3038
      %3040 = vdwg.mxu0
      %3041 = vmatpush.msra.mxu0 %v2878
      %3042 = vmatpush.msra.mxu0 %v2875
      %3043 = vmatpush.msra.mxu0 %v2872
      %3044 = vmatpush.msra.mxu0 %v2869
      %3045 = vmatpush.msra.mxu0 %v2866
      %3046 = vmatpush.msra.mxu0 %v2863
      %3047 = vmatpush.msra.mxu0 %v2860
      %3048 = vmatpush.msra.mxu0 %v2857
      %3049 = vmatpush.msra.mxu0 %v2854
      %3050 = vmatpush.msra.mxu0 %v2851
      %3051 = vmatpush.msra.mxu0 %v2848
      %3052 = vmatpush.msra.mxu0 %v2845
      %3053 = vmatpush.msra.mxu0 %v2842
      %3054 = vmatpush.msra.mxu0 %v2839
      %3055 = vmatpush.msra.mxu0 %v2836
      %3056 = vmatpush.msra.mxu0 %v2833
      %3057 = vmatmul.f32.gmra.mxu0 %v2939
      %v3058 = vpop.f32.mrf.mxu0
      %v3059 = vadd.f32 %v3036, %v3058
      %3060 = vmatmul.f32.gmra.mxu0 %v2938
      %v3061 = vpop.f32.mrf.mxu0
      %v3062 = vadd.f32 %v3039, %v3061
      %3063 = vdwg.mxu0
      %3064 = vmatpush.msra.mxu0 %v2926
      %3065 = vmatpush.msra.mxu0 %v2923
      %3066 = vmatpush.msra.mxu0 %v2920
      %3067 = vmatpush.msra.mxu0 %v2917
      %3068 = vmatpush.msra.mxu0 %v2914
      %3069 = vmatpush.msra.mxu0 %v2911
      %3070 = vmatpush.msra.mxu0 %v2908
      %3071 = vmatpush.msra.mxu0 %v2905
      %3072 = vmatpush.msra.mxu0 %v2902
      %3073 = vmatpush.msra.mxu0 %v2899
      %3074 = vmatpush.msra.mxu0 %v2896
      %3075 = vmatpush.msra.mxu0 %v2893
      %3076 = vmatpush.msra.mxu0 %v2890
      %3077 = vmatpush.msra.mxu0 %v2887
      %3078 = vmatpush.msra.mxu0 %v2884
      %3079 = vmatpush.msra.mxu0 %v2881
      %3080 = vmatmul.f32.gmra.mxu0 %v2942
      %v3081 = vpop.f32.mrf.mxu0
      %v3082 = vadd.f32 %v3059, %v3081
      %3083 = vmatmul.f32.gmra.mxu0 %v2941
      %v3084 = vpop.f32.mrf.mxu0
      %v3085 = vadd.f32 %v3062, %v3084
      %3086 = vdwg.mxu0
      %3087 = vmatpush.msra.mxu0 %v2831
      %3088 = vmatpush.msra.mxu0 %v2828
      %3089 = vmatpush.msra.mxu0 %v2825
      %3090 = vmatpush.msra.mxu0 %v2822
      %3091 = vmatpush.msra.mxu0 %v2819
      %3092 = vmatpush.msra.mxu0 %v2816
      %3093 = vmatpush.msra.mxu0 %v2813
      %3094 = vmatpush.msra.mxu0 %v2810
      %3095 = vmatpush.msra.mxu0 %v2807
      %3096 = vmatpush.msra.mxu0 %v2804
      %3097 = vmatpush.msra.mxu0 %v2801
      %3098 = vmatpush.msra.mxu0 %v2798
      %3099 = vmatpush.msra.mxu0 %v2795
      %3100 = vmatpush.msra.mxu0 %v2792
      %3101 = vmatpush.msra.mxu0 %v2789
      %3102 = vmatpush.msra.mxu0 %v2786
      %3103 = vmatmul.f32.gmra.mxu0 %v2936
      %v3104 = vpop.f32.mrf.mxu0
      %v3105 = vadd.f32 0.0, %v3104
      %3106 = vmatmul.f32.gmra.mxu0 %v2935
      %v3107 = vpop.f32.mrf.mxu0
      %v3108 = vadd.f32 0.0, %v3107
      %3109 = vdwg.mxu0
      %3110 = vmatpush.msra.mxu0 %v2879
      %3111 = vmatpush.msra.mxu0 %v2876
      %3112 = vmatpush.msra.mxu0 %v2873
      %3113 = vmatpush.msra.mxu0 %v2870
      %3114 = vmatpush.msra.mxu0 %v2867
      %3115 = vmatpush.msra.mxu0 %v2864
      %3116 = vmatpush.msra.mxu0 %v2861
      %3117 = vmatpush.msra.mxu0 %v2858
      %3118 = vmatpush.msra.mxu0 %v2855
      %3119 = vmatpush.msra.mxu0 %v2852
      %3120 = vmatpush.msra.mxu0 %v2849
      %3121 = vmatpush.msra.mxu0 %v2846
      %3122 = vmatpush.msra.mxu0 %v2843
      %3123 = vmatpush.msra.mxu0 %v2840
      %3124 = vmatpush.msra.mxu0 %v2837
      %3125 = vmatpush.msra.mxu0 %v2834
      %3126 = vmatmul.f32.gmra.mxu0 %v2939
      %v3127 = vpop.f32.mrf.mxu0
      %v3128 = vadd.f32 %v3105, %v3127
      %3129 = vmatmul.f32.gmra.mxu0 %v2938
      %v3130 = vpop.f32.mrf.mxu0
      %v3131 = vadd.f32 %v3108, %v3130
      %3132 = vdwg.mxu0
      %3133 = vmatpush.msra.mxu0 %v2927
      %3134 = vmatpush.msra.mxu0 %v2924
      %3135 = vmatpush.msra.mxu0 %v2921
      %3136 = vmatpush.msra.mxu0 %v2918
      %3137 = vmatpush.msra.mxu0 %v2915
      %3138 = vmatpush.msra.mxu0 %v2912
      %3139 = vmatpush.msra.mxu0 %v2909
      %3140 = vmatpush.msra.mxu0 %v2906
      %3141 = vmatpush.msra.mxu0 %v2903
      %3142 = vmatpush.msra.mxu0 %v2900
      %3143 = vmatpush.msra.mxu0 %v2897
      %3144 = vmatpush.msra.mxu0 %v2894
      %3145 = vmatpush.msra.mxu0 %v2891
      %3146 = vmatpush.msra.mxu0 %v2888
      %3147 = vmatpush.msra.mxu0 %v2885
      %3148 = vmatpush.msra.mxu0 %v2882
      %3149 = vmatmul.f32.gmra.mxu0 %v2942
      %v3150 = vpop.f32.mrf.mxu0
      %v3151 = vadd.f32 %v3128, %v3150
      %3152 = vmatmul.f32.gmra.mxu0 %v2941
      %v3153 = vpop.f32.mrf.mxu0
      %v3154 = vadd.f32 %v3131, %v3153
      %3155 = vdwg.mxu0
      %3156 = vmatpush.msra.mxu0 %v2684
      %3157 = vmatpush.msra.mxu0 %v2681
      %3158 = vmatpush.msra.mxu0 %v2678
      %3159 = vmatpush.msra.mxu0 %v2675
      %3160 = vmatpush.msra.mxu0 %v2672
      %3161 = vmatpush.msra.mxu0 %v2669
      %3162 = vmatpush.msra.mxu0 %v2666
      %3163 = vmatpush.msra.mxu0 %v2663
      %3164 = vmatpush.msra.mxu0 %v2660
      %3165 = vmatpush.msra.mxu0 %v2657
      %3166 = vmatpush.msra.mxu0 %v2654
      %3167 = vmatpush.msra.mxu0 %v2651
      %3168 = vmatpush.msra.mxu0 %v2648
      %3169 = vmatpush.msra.mxu0 %v2645
      %3170 = vmatpush.msra.mxu0 %v2642
      %3171 = vmatpush.msra.mxu0 %v2639
      %3172 = vmatmul.f32.gmra.mxu0 %v2579
      %v3173 = vpop.f32.mrf.mxu0
      %v3174 = vadd.f32 %v3013, %v3173
      %3175 = vmatmul.f32.gmra.mxu0 %v2582
      %v3176 = vpop.f32.mrf.mxu0
      %v3177 = vadd.f32 %v3016, %v3176
      %3178 = vdwg.mxu0
      %3179 = vmatpush.msra.mxu0 %v2732
      %3180 = vmatpush.msra.mxu0 %v2729
      %3181 = vmatpush.msra.mxu0 %v2726
      %3182 = vmatpush.msra.mxu0 %v2723
      %3183 = vmatpush.msra.mxu0 %v2720
      %3184 = vmatpush.msra.mxu0 %v2717
      %3185 = vmatpush.msra.mxu0 %v2714
      %3186 = vmatpush.msra.mxu0 %v2711
      %3187 = vmatpush.msra.mxu0 %v2708
      %3188 = vmatpush.msra.mxu0 %v2705
      %3189 = vmatpush.msra.mxu0 %v2702
      %3190 = vmatpush.msra.mxu0 %v2699
      %3191 = vmatpush.msra.mxu0 %v2696
      %3192 = vmatpush.msra.mxu0 %v2693
      %3193 = vmatpush.msra.mxu0 %v2690
      %3194 = vmatpush.msra.mxu0 %v2687
      %3195 = vmatmul.f32.gmra.mxu0 %v2605
      %v3196 = vpop.f32.mrf.mxu0
      %v3197 = vadd.f32 %v3174, %v3196
      %3198 = vmatmul.f32.gmra.mxu0 %v2608
      %v3199 = vpop.f32.mrf.mxu0
      %v3200 = vadd.f32 %v3177, %v3199
      %3201 = vdwg.mxu0
      %3202 = vmatpush.msra.mxu0 %v2780
      %3203 = vmatpush.msra.mxu0 %v2777
      %3204 = vmatpush.msra.mxu0 %v2774
      %3205 = vmatpush.msra.mxu0 %v2771
      %3206 = vmatpush.msra.mxu0 %v2768
      %3207 = vmatpush.msra.mxu0 %v2765
      %3208 = vmatpush.msra.mxu0 %v2762
      %3209 = vmatpush.msra.mxu0 %v2759
      %3210 = vmatpush.msra.mxu0 %v2756
      %3211 = vmatpush.msra.mxu0 %v2753
      %3212 = vmatpush.msra.mxu0 %v2750
      %3213 = vmatpush.msra.mxu0 %v2747
      %3214 = vmatpush.msra.mxu0 %v2744
      %3215 = vmatpush.msra.mxu0 %v2741
      %3216 = vmatpush.msra.mxu0 %v2738
      %3217 = vmatpush.msra.mxu0 %v2735
      %3218 = vmatmul.f32.gmra.mxu0 %v2631
      %v3219 = vpop.f32.mrf.mxu0
      %v3220 = vadd.f32 %v3197, %v3219
      %3221 = vmatmul.f32.gmra.mxu0 %v2634
      %v3222 = vpop.f32.mrf.mxu0
      %v3223 = vadd.f32 %v3200, %v3222
      %3224 = vdwg.mxu0
      %3225 = vmatpush.msra.mxu0 %v2685
      %3226 = vmatpush.msra.mxu0 %v2682
      %3227 = vmatpush.msra.mxu0 %v2679
      %3228 = vmatpush.msra.mxu0 %v2676
      %3229 = vmatpush.msra.mxu0 %v2673
      %3230 = vmatpush.msra.mxu0 %v2670
      %3231 = vmatpush.msra.mxu0 %v2667
      %3232 = vmatpush.msra.mxu0 %v2664
      %3233 = vmatpush.msra.mxu0 %v2661
      %3234 = vmatpush.msra.mxu0 %v2658
      %3235 = vmatpush.msra.mxu0 %v2655
      %3236 = vmatpush.msra.mxu0 %v2652
      %3237 = vmatpush.msra.mxu0 %v2649
      %3238 = vmatpush.msra.mxu0 %v2646
      %3239 = vmatpush.msra.mxu0 %v2643
      %3240 = vmatpush.msra.mxu0 %v2640
      %3241 = vmatmul.f32.gmra.mxu0 %v2579
      %v3242 = vpop.f32.mrf.mxu0
      %v3243 = vadd.f32 %v3082, %v3242
      %3244 = vmatmul.f32.gmra.mxu0 %v2582
      %v3245 = vpop.f32.mrf.mxu0
      %v3246 = vadd.f32 %v3085, %v3245
      %3247 = vdwg.mxu0
      %3248 = vmatpush.msra.mxu0 %v2733
      %3249 = vmatpush.msra.mxu0 %v2730
      %3250 = vmatpush.msra.mxu0 %v2727
      %3251 = vmatpush.msra.mxu0 %v2724
      %3252 = vmatpush.msra.mxu0 %v2721
      %3253 = vmatpush.msra.mxu0 %v2718
      %3254 = vmatpush.msra.mxu0 %v2715
      %3255 = vmatpush.msra.mxu0 %v2712
      %3256 = vmatpush.msra.mxu0 %v2709
      %3257 = vmatpush.msra.mxu0 %v2706
      %3258 = vmatpush.msra.mxu0 %v2703
      %3259 = vmatpush.msra.mxu0 %v2700
      %3260 = vmatpush.msra.mxu0 %v2697
      %3261 = vmatpush.msra.mxu0 %v2694
      %3262 = vmatpush.msra.mxu0 %v2691
      %3263 = vmatpush.msra.mxu0 %v2688
      %3264 = vmatmul.f32.gmra.mxu0 %v2605
      %v3265 = vpop.f32.mrf.mxu0
      %v3266 = vadd.f32 %v3243, %v3265
      %3267 = vmatmul.f32.gmra.mxu0 %v2608
      %v3268 = vpop.f32.mrf.mxu0
      %v3269 = vadd.f32 %v3246, %v3268
      %3270 = vdwg.mxu0
      %3271 = vmatpush.msra.mxu0 %v2781
      %3272 = vmatpush.msra.mxu0 %v2778
      %3273 = vmatpush.msra.mxu0 %v2775
      %3274 = vmatpush.msra.mxu0 %v2772
      %3275 = vmatpush.msra.mxu0 %v2769
      %3276 = vmatpush.msra.mxu0 %v2766
      %3277 = vmatpush.msra.mxu0 %v2763
      %3278 = vmatpush.msra.mxu0 %v2760
      %3279 = vmatpush.msra.mxu0 %v2757
      %3280 = vmatpush.msra.mxu0 %v2754
      %3281 = vmatpush.msra.mxu0 %v2751
      %3282 = vmatpush.msra.mxu0 %v2748
      %3283 = vmatpush.msra.mxu0 %v2745
      %3284 = vmatpush.msra.mxu0 %v2742
      %3285 = vmatpush.msra.mxu0 %v2739
      %3286 = vmatpush.msra.mxu0 %v2736
      %3287 = vmatmul.f32.gmra.mxu0 %v2631
      %v3288 = vpop.f32.mrf.mxu0
      %v3289 = vadd.f32 %v3266, %v3288
      %3290 = vmatmul.f32.gmra.mxu0 %v2634
      %v3291 = vpop.f32.mrf.mxu0
      %v3292 = vadd.f32 %v3269, %v3291
      %3293 = vdwg.mxu0
      %3294 = vmatpush.msra.mxu0 %v2686
      %3295 = vmatpush.msra.mxu0 %v2683
      %3296 = vmatpush.msra.mxu0 %v2680
      %3297 = vmatpush.msra.mxu0 %v2677
      %3298 = vmatpush.msra.mxu0 %v2674
      %3299 = vmatpush.msra.mxu0 %v2671
      %3300 = vmatpush.msra.mxu0 %v2668
      %3301 = vmatpush.msra.mxu0 %v2665
      %3302 = vmatpush.msra.mxu0 %v2662
      %3303 = vmatpush.msra.mxu0 %v2659
      %3304 = vmatpush.msra.mxu0 %v2656
      %3305 = vmatpush.msra.mxu0 %v2653
      %3306 = vmatpush.msra.mxu0 %v2650
      %3307 = vmatpush.msra.mxu0 %v2647
      %3308 = vmatpush.msra.mxu0 %v2644
      %3309 = vmatpush.msra.mxu0 %v2641
      %3310 = vmatmul.f32.gmra.mxu0 %v2579
      %v3311 = vpop.f32.mrf.mxu0
      %v3312 = vadd.f32 %v3151, %v3311
      %3313 = vmatmul.f32.gmra.mxu0 %v2582
      %v3314 = vpop.f32.mrf.mxu0
      %v3315 = vadd.f32 %v3154, %v3314
      %3316 = vdwg.mxu0
      %3317 = vmatpush.msra.mxu0 %v2734
      %3318 = vmatpush.msra.mxu0 %v2731
      %3319 = vmatpush.msra.mxu0 %v2728
      %3320 = vmatpush.msra.mxu0 %v2725
      %3321 = vmatpush.msra.mxu0 %v2722
      %3322 = vmatpush.msra.mxu0 %v2719
      %3323 = vmatpush.msra.mxu0 %v2716
      %3324 = vmatpush.msra.mxu0 %v2713
      %3325 = vmatpush.msra.mxu0 %v2710
      %3326 = vmatpush.msra.mxu0 %v2707
      %3327 = vmatpush.msra.mxu0 %v2704
      %3328 = vmatpush.msra.mxu0 %v2701
      %3329 = vmatpush.msra.mxu0 %v2698
      %3330 = vmatpush.msra.mxu0 %v2695
      %3331 = vmatpush.msra.mxu0 %v2692
      %3332 = vmatpush.msra.mxu0 %v2689
      %3333 = vmatmul.f32.gmra.mxu0 %v2605
      %v3334 = vpop.f32.mrf.mxu0
      %v3335 = vadd.f32 %v3312, %v3334
      %3336 = vmatmul.f32.gmra.mxu0 %v2608
      %v3337 = vpop.f32.mrf.mxu0
      %v3338 = vadd.f32 %v3315, %v3337
      %3339 = vdwg.mxu0
      %3340 = vmatpush.msra.mxu0 %v2782
      %3341 = vmatpush.msra.mxu0 %v2779
      %3342 = vmatpush.msra.mxu0 %v2776
      %3343 = vmatpush.msra.mxu0 %v2773
      %3344 = vmatpush.msra.mxu0 %v2770
      %3345 = vmatpush.msra.mxu0 %v2767
      %3346 = vmatpush.msra.mxu0 %v2764
      %3347 = vmatpush.msra.mxu0 %v2761
      %3348 = vmatpush.msra.mxu0 %v2758
      %3349 = vmatpush.msra.mxu0 %v2755
      %3350 = vmatpush.msra.mxu0 %v2752
      %3351 = vmatpush.msra.mxu0 %v2749
      %3352 = vmatpush.msra.mxu0 %v2746
      %3353 = vmatpush.msra.mxu0 %v2743
      %3354 = vmatpush.msra.mxu0 %v2740
      %3355 = vmatpush.msra.mxu0 %v2737
      %3356 = vmatmul.f32.gmra.mxu0 %v2631
      %v3357 = vpop.f32.mrf.mxu0
      %v3358 = vadd.f32 %v3335, %v3357
      %3359 = vmatmul.f32.gmra.mxu0 %v2634
      %v3360 = vpop.f32.mrf.mxu0
      %v3361 = vadd.f32 %v3338, %v3360
      %3362 = vdwg.mxu0
      %s3363 = scalar_lea.vmem %s7, 2304
      %v3364 = vld [vmem:[%s3363] sm:$0xff]
      %v3365 = vld [vmem:[%s3363 + $0x8] sm:$0xff]
      %v3366 = vld [vmem:[%s3363 + $0x10] sm:$0xff]
      %v3367 = vld [vmem:[%s3363 + $0x18] sm:$0xff]
      %v3368 = vld [vmem:[%s3363 + $0x20] sm:$0xff]
      %v3369 = vld [vmem:[%s3363 + $0x28] sm:$0xff]
      %v3370 = vld [vmem:[%s3363 + $0x30] sm:$0xff]
      %v3371 = vld [vmem:[%s3363 + $0x38] sm:$0xff]
      %v3372 = vld [vmem:[%s3363 + $0x40] sm:$0xff]
      %v3373 = vld [vmem:[%s3363 + $0x48] sm:$0xff]
      %v3374 = vld [vmem:[%s3363 + $0x50] sm:$0xff]
      %v3375 = vld [vmem:[%s3363 + $0x58] sm:$0xff]
      %v3376 = vld [vmem:[%s3363 + $0x60] sm:$0xff]
      %v3377 = vld [vmem:[%s3363 + $0x68] sm:$0xff]
      %v3378 = vld [vmem:[%s3363 + $0x70] sm:$0xff]
      %v3379 = vld [vmem:[%s3363 + $0x78] sm:$0xff]
      %v3380 = vld [vmem:[%s3363 + $0x80] sm:$0xff]
      %v3381 = vld [vmem:[%s3363 + $0x88] sm:$0xff]
      %v3382 = vld [vmem:[%s3363 + $0x90] sm:$0xff]
      %v3383 = vld [vmem:[%s3363 + $0x98] sm:$0xff]
      %v3384 = vld [vmem:[%s3363 + $0xa0] sm:$0xff]
      %v3385 = vld [vmem:[%s3363 + $0xa8] sm:$0xff]
      %v3386 = vld [vmem:[%s3363 + $0xb0] sm:$0xff]
      %v3387 = vld [vmem:[%s3363 + $0xb8] sm:$0xff]
      %v3388 = vld [vmem:[%s3363 + $0xc0] sm:$0xff]
      %v3389 = vld [vmem:[%s3363 + $0xc8] sm:$0xff]
      %v3390 = vld [vmem:[%s3363 + $0xd0] sm:$0xff]
      %v3391 = vld [vmem:[%s3363 + $0xd8] sm:$0xff]
      %v3392 = vld [vmem:[%s3363 + $0xe0] sm:$0xff]
      %v3393 = vld [vmem:[%s3363 + $0xe8] sm:$0xff]
      %v3394 = vld [vmem:[%s3363 + $0xf0] sm:$0xff]
      %v3395 = vld [vmem:[%s3363 + $0xf8] sm:$0xff]
      %v3396 = vld [vmem:[%s3363 + $0x100] sm:$0xff]
      %v3397 = vld [vmem:[%s3363 + $0x108] sm:$0xff]
      %v3398 = vld [vmem:[%s3363 + $0x110] sm:$0xff]
      %v3399 = vld [vmem:[%s3363 + $0x118] sm:$0xff]
      %v3400 = vld [vmem:[%s3363 + $0x120] sm:$0xff]
      %v3401 = vld [vmem:[%s3363 + $0x128] sm:$0xff]
      %v3402 = vld [vmem:[%s3363 + $0x130] sm:$0xff]
      %v3403 = vld [vmem:[%s3363 + $0x138] sm:$0xff]
      %v3404 = vld [vmem:[%s3363 + $0x140] sm:$0xff]
      %v3405 = vld [vmem:[%s3363 + $0x148] sm:$0xff]
      %v3406 = vld [vmem:[%s3363 + $0x150] sm:$0xff]
      %v3407 = vld [vmem:[%s3363 + $0x158] sm:$0xff]
      %v3408 = vld [vmem:[%s3363 + $0x160] sm:$0xff]
      %v3409 = vld [vmem:[%s3363 + $0x168] sm:$0xff]
      %v3410 = vld [vmem:[%s3363 + $0x170] sm:$0xff]
      %v3411 = vld [vmem:[%s3363 + $0x178] sm:$0xff]
      %v3412 = vld [vmem:[%s3363 + $0x180] sm:$0xff]
      %v3413 = vld [vmem:[%s3363 + $0x188] sm:$0xff]
      %v3414 = vld [vmem:[%s3363 + $0x190] sm:$0xff]
      %v3415 = vld [vmem:[%s3363 + $0x198] sm:$0xff]
      %v3416 = vld [vmem:[%s3363 + $0x1a0] sm:$0xff]
      %v3417 = vld [vmem:[%s3363 + $0x1a8] sm:$0xff]
      %v3418 = vld [vmem:[%s3363 + $0x1b0] sm:$0xff]
      %v3419 = vld [vmem:[%s3363 + $0x1b8] sm:$0xff]
      %v3420 = vld [vmem:[%s3363 + $0x1c0] sm:$0xff]
      %v3421 = vld [vmem:[%s3363 + $0x1c8] sm:$0xff]
      %v3422 = vld [vmem:[%s3363 + $0x1d0] sm:$0xff]
      %v3423 = vld [vmem:[%s3363 + $0x1d8] sm:$0xff]
      %v3424 = vld [vmem:[%s3363 + $0x1e0] sm:$0xff]
      %v3425 = vld [vmem:[%s3363 + $0x1e8] sm:$0xff]
      %v3426 = vld [vmem:[%s3363 + $0x1f0] sm:$0xff]
      %v3427 = vld [vmem:[%s3363 + $0x1f8] sm:$0xff]
      %v3428 = vld [vmem:[%s3363 + $0x200] sm:$0xff]
      %v3429 = vld [vmem:[%s3363 + $0x208] sm:$0xff]
      %v3430 = vld [vmem:[%s3363 + $0x210] sm:$0xff]
      %v3431 = vld [vmem:[%s3363 + $0x218] sm:$0xff]
      %v3432 = vld [vmem:[%s3363 + $0x220] sm:$0xff]
      %v3433 = vld [vmem:[%s3363 + $0x228] sm:$0xff]
      %v3434 = vld [vmem:[%s3363 + $0x230] sm:$0xff]
      %v3435 = vld [vmem:[%s3363 + $0x238] sm:$0xff]
      %v3436 = vld [vmem:[%s3363 + $0x240] sm:$0xff]
      %v3437 = vld [vmem:[%s3363 + $0x248] sm:$0xff]
      %v3438 = vld [vmem:[%s3363 + $0x250] sm:$0xff]
      %v3439 = vld [vmem:[%s3363 + $0x258] sm:$0xff]
      %v3440 = vld [vmem:[%s3363 + $0x260] sm:$0xff]
      %v3441 = vld [vmem:[%s3363 + $0x268] sm:$0xff]
      %v3442 = vld [vmem:[%s3363 + $0x270] sm:$0xff]
      %v3443 = vld [vmem:[%s3363 + $0x278] sm:$0xff]
      %v3444 = vld [vmem:[%s3363 + $0x280] sm:$0xff]
      %v3445 = vld [vmem:[%s3363 + $0x288] sm:$0xff]
      %v3446 = vld [vmem:[%s3363 + $0x290] sm:$0xff]
      %v3447 = vld [vmem:[%s3363 + $0x298] sm:$0xff]
      %v3448 = vld [vmem:[%s3363 + $0x2a0] sm:$0xff]
      %v3449 = vld [vmem:[%s3363 + $0x2a8] sm:$0xff]
      %v3450 = vld [vmem:[%s3363 + $0x2b0] sm:$0xff]
      %v3451 = vld [vmem:[%s3363 + $0x2b8] sm:$0xff]
      %v3452 = vld [vmem:[%s3363 + $0x2c0] sm:$0xff]
      %v3453 = vld [vmem:[%s3363 + $0x2c8] sm:$0xff]
      %v3454 = vld [vmem:[%s3363 + $0x2d0] sm:$0xff]
      %v3455 = vld [vmem:[%s3363 + $0x2d8] sm:$0xff]
      %v3456 = vld [vmem:[%s3363 + $0x2e0] sm:$0xff]
      %v3457 = vld [vmem:[%s3363 + $0x2e8] sm:$0xff]
      %v3458 = vld [vmem:[%s3363 + $0x2f0] sm:$0xff]
      %v3459 = vld [vmem:[%s3363 + $0x2f8] sm:$0xff]
      %v3460 = vld [vmem:[%s3363 + $0x300] sm:$0xff]
      %v3461 = vld [vmem:[%s3363 + $0x308] sm:$0xff]
      %v3462 = vld [vmem:[%s3363 + $0x310] sm:$0xff]
      %v3463 = vld [vmem:[%s3363 + $0x318] sm:$0xff]
      %v3464 = vld [vmem:[%s3363 + $0x320] sm:$0xff]
      %v3465 = vld [vmem:[%s3363 + $0x328] sm:$0xff]
      %v3466 = vld [vmem:[%s3363 + $0x330] sm:$0xff]
      %v3467 = vld [vmem:[%s3363 + $0x338] sm:$0xff]
      %v3468 = vld [vmem:[%s3363 + $0x340] sm:$0xff]
      %v3469 = vld [vmem:[%s3363 + $0x348] sm:$0xff]
      %v3470 = vld [vmem:[%s3363 + $0x350] sm:$0xff]
      %v3471 = vld [vmem:[%s3363 + $0x358] sm:$0xff]
      %v3472 = vld [vmem:[%s3363 + $0x360] sm:$0xff]
      %v3473 = vld [vmem:[%s3363 + $0x368] sm:$0xff]
      %v3474 = vld [vmem:[%s3363 + $0x370] sm:$0xff]
      %v3475 = vld [vmem:[%s3363 + $0x378] sm:$0xff]
      %v3476 = vld [vmem:[%s3363 + $0x380] sm:$0xff]
      %v3477 = vld [vmem:[%s3363 + $0x388] sm:$0xff]
      %v3478 = vld [vmem:[%s3363 + $0x390] sm:$0xff]
      %v3479 = vld [vmem:[%s3363 + $0x398] sm:$0xff]
      %v3480 = vld [vmem:[%s3363 + $0x3a0] sm:$0xff]
      %v3481 = vld [vmem:[%s3363 + $0x3a8] sm:$0xff]
      %v3482 = vld [vmem:[%s3363 + $0x3b0] sm:$0xff]
      %v3483 = vld [vmem:[%s3363 + $0x3b8] sm:$0xff]
      %v3484 = vld [vmem:[%s3363 + $0x3c0] sm:$0xff]
      %v3485 = vld [vmem:[%s3363 + $0x3c8] sm:$0xff]
      %v3486 = vld [vmem:[%s3363 + $0x3d0] sm:$0xff]
      %v3487 = vld [vmem:[%s3363 + $0x3d8] sm:$0xff]
      %v3488 = vld [vmem:[%s3363 + $0x3e0] sm:$0xff]
      %v3489 = vld [vmem:[%s3363 + $0x3e8] sm:$0xff]
      %v3490 = vld [vmem:[%s3363 + $0x3f0] sm:$0xff]
      %v3491 = vld [vmem:[%s3363 + $0x3f8] sm:$0xff]
      %v3492 = vld [vmem:[%s3363 + $0x400] sm:$0xff]
      %v3493 = vld [vmem:[%s3363 + $0x408] sm:$0xff]
      %v3494 = vld [vmem:[%s3363 + $0x410] sm:$0xff]
      %v3495 = vld [vmem:[%s3363 + $0x418] sm:$0xff]
      %v3496 = vld [vmem:[%s3363 + $0x420] sm:$0xff]
      %v3497 = vld [vmem:[%s3363 + $0x428] sm:$0xff]
      %v3498 = vld [vmem:[%s3363 + $0x430] sm:$0xff]
      %v3499 = vld [vmem:[%s3363 + $0x438] sm:$0xff]
      %v3500 = vld [vmem:[%s3363 + $0x440] sm:$0xff]
      %v3501 = vld [vmem:[%s3363 + $0x448] sm:$0xff]
      %v3502 = vld [vmem:[%s3363 + $0x450] sm:$0xff]
      %v3503 = vld [vmem:[%s3363 + $0x458] sm:$0xff]
      %v3504 = vld [vmem:[%s3363 + $0x460] sm:$0xff]
      %v3505 = vld [vmem:[%s3363 + $0x468] sm:$0xff]
      %v3506 = vld [vmem:[%s3363 + $0x470] sm:$0xff]
      %v3507 = vld [vmem:[%s3363 + $0x478] sm:$0xff]
      %v3508 = vrot.slane %v2579, 2
      %v3509 = vrot.slane %v2582, 2
      %v3510 = vsel %vm1648, %v3508, %v3509
      %v3511 = vrot.slane %v2605, 2
      %v3512 = vrot.slane %v2608, 2
      %v3513 = vsel %vm1648, %v3511, %v3512
      %v3514 = vrot.slane %v2631, 2
      %v3515 = vrot.slane %v2634, 2
      %v3516 = vsel %vm1648, %v3514, %v3515
      %3523 = vmatpush.msra.mxu0 %v3409
      %3524 = vmatpush.msra.mxu0 %v3406
      %3525 = vmatpush.msra.mxu0 %v3403
      %3526 = vmatpush.msra.mxu0 %v3400
      %3527 = vmatpush.msra.mxu0 %v3397
      %3528 = vmatpush.msra.mxu0 %v3394
      %3529 = vmatpush.msra.mxu0 %v3391
      %3530 = vmatpush.msra.mxu0 %v3388
      %3531 = vmatpush.msra.mxu0 %v3385
      %3532 = vmatpush.msra.mxu0 %v3382
      %3533 = vmatpush.msra.mxu0 %v3379
      %3534 = vmatpush.msra.mxu0 %v3376
      %3535 = vmatpush.msra.mxu0 %v3373
      %3536 = vmatpush.msra.mxu0 %v3370
      %3537 = vmatpush.msra.mxu0 %v3367
      %3538 = vmatpush.msra.mxu0 %v3364
      %3539 = vmatmul.f32.gmra.mxu0 %v3510
      %v3540 = vpop.f32.mrf.mxu0
      %v3541 = vadd.f32 0.0, %v3540
      %3542 = vmatmul.f32.gmra.mxu0 %v3509
      %v3543 = vpop.f32.mrf.mxu0
      %v3544 = vadd.f32 0.0, %v3543
      %3545 = vdwg.mxu0
      %3546 = vmatpush.msra.mxu0 %v3457
      %3547 = vmatpush.msra.mxu0 %v3454
      %3548 = vmatpush.msra.mxu0 %v3451
      %3549 = vmatpush.msra.mxu0 %v3448
      %3550 = vmatpush.msra.mxu0 %v3445
      %3551 = vmatpush.msra.mxu0 %v3442
      %3552 = vmatpush.msra.mxu0 %v3439
      %3553 = vmatpush.msra.mxu0 %v3436
      %3554 = vmatpush.msra.mxu0 %v3433
      %3555 = vmatpush.msra.mxu0 %v3430
      %3556 = vmatpush.msra.mxu0 %v3427
      %3557 = vmatpush.msra.mxu0 %v3424
      %3558 = vmatpush.msra.mxu0 %v3421
      %3559 = vmatpush.msra.mxu0 %v3418
      %3560 = vmatpush.msra.mxu0 %v3415
      %3561 = vmatpush.msra.mxu0 %v3412
      %3562 = vmatmul.f32.gmra.mxu0 %v3513
      %v3563 = vpop.f32.mrf.mxu0
      %v3564 = vadd.f32 %v3541, %v3563
      %3565 = vmatmul.f32.gmra.mxu0 %v3512
      %v3566 = vpop.f32.mrf.mxu0
      %v3567 = vadd.f32 %v3544, %v3566
      %3568 = vdwg.mxu0
      %3569 = vmatpush.msra.mxu0 %v3505
      %3570 = vmatpush.msra.mxu0 %v3502
      %3571 = vmatpush.msra.mxu0 %v3499
      %3572 = vmatpush.msra.mxu0 %v3496
      %3573 = vmatpush.msra.mxu0 %v3493
      %3574 = vmatpush.msra.mxu0 %v3490
      %3575 = vmatpush.msra.mxu0 %v3487
      %3576 = vmatpush.msra.mxu0 %v3484
      %3577 = vmatpush.msra.mxu0 %v3481
      %3578 = vmatpush.msra.mxu0 %v3478
      %3579 = vmatpush.msra.mxu0 %v3475
      %3580 = vmatpush.msra.mxu0 %v3472
      %3581 = vmatpush.msra.mxu0 %v3469
      %3582 = vmatpush.msra.mxu0 %v3466
      %3583 = vmatpush.msra.mxu0 %v3463
      %3584 = vmatpush.msra.mxu0 %v3460
      %3585 = vmatmul.f32.gmra.mxu0 %v3516
      %v3586 = vpop.f32.mrf.mxu0
      %v3587 = vadd.f32 %v3564, %v3586
      %3588 = vmatmul.f32.gmra.mxu0 %v3515
      %v3589 = vpop.f32.mrf.mxu0
      %v3590 = vadd.f32 %v3567, %v3589
      %3591 = vdwg.mxu0
      %3592 = vmatpush.msra.mxu0 %v3410
      %3593 = vmatpush.msra.mxu0 %v3407
      %3594 = vmatpush.msra.mxu0 %v3404
      %3595 = vmatpush.msra.mxu0 %v3401
      %3596 = vmatpush.msra.mxu0 %v3398
      %3597 = vmatpush.msra.mxu0 %v3395
      %3598 = vmatpush.msra.mxu0 %v3392
      %3599 = vmatpush.msra.mxu0 %v3389
      %3600 = vmatpush.msra.mxu0 %v3386
      %3601 = vmatpush.msra.mxu0 %v3383
      %3602 = vmatpush.msra.mxu0 %v3380
      %3603 = vmatpush.msra.mxu0 %v3377
      %3604 = vmatpush.msra.mxu0 %v3374
      %3605 = vmatpush.msra.mxu0 %v3371
      %3606 = vmatpush.msra.mxu0 %v3368
      %3607 = vmatpush.msra.mxu0 %v3365
      %3608 = vmatmul.f32.gmra.mxu0 %v3510
      %v3609 = vpop.f32.mrf.mxu0
      %v3610 = vadd.f32 0.0, %v3609
      %3611 = vmatmul.f32.gmra.mxu0 %v3509
      %v3612 = vpop.f32.mrf.mxu0
      %v3613 = vadd.f32 0.0, %v3612
      %3614 = vdwg.mxu0
      %3615 = vmatpush.msra.mxu0 %v3458
      %3616 = vmatpush.msra.mxu0 %v3455
      %3617 = vmatpush.msra.mxu0 %v3452
      %3618 = vmatpush.msra.mxu0 %v3449
      %3619 = vmatpush.msra.mxu0 %v3446
      %3620 = vmatpush.msra.mxu0 %v3443
      %3621 = vmatpush.msra.mxu0 %v3440
      %3622 = vmatpush.msra.mxu0 %v3437
      %3623 = vmatpush.msra.mxu0 %v3434
      %3624 = vmatpush.msra.mxu0 %v3431
      %3625 = vmatpush.msra.mxu0 %v3428
      %3626 = vmatpush.msra.mxu0 %v3425
      %3627 = vmatpush.msra.mxu0 %v3422
      %3628 = vmatpush.msra.mxu0 %v3419
      %3629 = vmatpush.msra.mxu0 %v3416
      %3630 = vmatpush.msra.mxu0 %v3413
      %3631 = vmatmul.f32.gmra.mxu0 %v3513
      %v3632 = vpop.f32.mrf.mxu0
      %v3633 = vadd.f32 %v3610, %v3632
      %3634 = vmatmul.f32.gmra.mxu0 %v3512
      %v3635 = vpop.f32.mrf.mxu0
      %v3636 = vadd.f32 %v3613, %v3635
      %3637 = vdwg.mxu0
      %3638 = vmatpush.msra.mxu0 %v3506
      %3639 = vmatpush.msra.mxu0 %v3503
      %3640 = vmatpush.msra.mxu0 %v3500
      %3641 = vmatpush.msra.mxu0 %v3497
      %3642 = vmatpush.msra.mxu0 %v3494
      %3643 = vmatpush.msra.mxu0 %v3491
      %3644 = vmatpush.msra.mxu0 %v3488
      %3645 = vmatpush.msra.mxu0 %v3485
      %3646 = vmatpush.msra.mxu0 %v3482
      %3647 = vmatpush.msra.mxu0 %v3479
      %3648 = vmatpush.msra.mxu0 %v3476
      %3649 = vmatpush.msra.mxu0 %v3473
      %3650 = vmatpush.msra.mxu0 %v3470
      %3651 = vmatpush.msra.mxu0 %v3467
      %3652 = vmatpush.msra.mxu0 %v3464
      %3653 = vmatpush.msra.mxu0 %v3461
      %3654 = vmatmul.f32.gmra.mxu0 %v3516
      %v3655 = vpop.f32.mrf.mxu0
      %v3656 = vadd.f32 %v3633, %v3655
      %3657 = vmatmul.f32.gmra.mxu0 %v3515
      %v3658 = vpop.f32.mrf.mxu0
      %v3659 = vadd.f32 %v3636, %v3658
      %3660 = vdwg.mxu0
      %3661 = vmatpush.msra.mxu0 %v3411
      %3662 = vmatpush.msra.mxu0 %v3408
      %3663 = vmatpush.msra.mxu0 %v3405
      %3664 = vmatpush.msra.mxu0 %v3402
      %3665 = vmatpush.msra.mxu0 %v3399
      %3666 = vmatpush.msra.mxu0 %v3396
      %3667 = vmatpush.msra.mxu0 %v3393
      %3668 = vmatpush.msra.mxu0 %v3390
      %3669 = vmatpush.msra.mxu0 %v3387
      %3670 = vmatpush.msra.mxu0 %v3384
      %3671 = vmatpush.msra.mxu0 %v3381
      %3672 = vmatpush.msra.mxu0 %v3378
      %3673 = vmatpush.msra.mxu0 %v3375
      %3674 = vmatpush.msra.mxu0 %v3372
      %3675 = vmatpush.msra.mxu0 %v3369
      %3676 = vmatpush.msra.mxu0 %v3366
      %3677 = vmatmul.f32.gmra.mxu0 %v3510
      %v3678 = vpop.f32.mrf.mxu0
      %v3679 = vadd.f32 0.0, %v3678
      %3680 = vmatmul.f32.gmra.mxu0 %v3509
      %v3681 = vpop.f32.mrf.mxu0
      %v3682 = vadd.f32 0.0, %v3681
      %3683 = vdwg.mxu0
      %3684 = vmatpush.msra.mxu0 %v3459
      %3685 = vmatpush.msra.mxu0 %v3456
      %3686 = vmatpush.msra.mxu0 %v3453
      %3687 = vmatpush.msra.mxu0 %v3450
      %3688 = vmatpush.msra.mxu0 %v3447
      %3689 = vmatpush.msra.mxu0 %v3444
      %3690 = vmatpush.msra.mxu0 %v3441
      %3691 = vmatpush.msra.mxu0 %v3438
      %3692 = vmatpush.msra.mxu0 %v3435
      %3693 = vmatpush.msra.mxu0 %v3432
      %3694 = vmatpush.msra.mxu0 %v3429
      %3695 = vmatpush.msra.mxu0 %v3426
      %3696 = vmatpush.msra.mxu0 %v3423
      %3697 = vmatpush.msra.mxu0 %v3420
      %3698 = vmatpush.msra.mxu0 %v3417
      %3699 = vmatpush.msra.mxu0 %v3414
      %3700 = vmatmul.f32.gmra.mxu0 %v3513
      %v3701 = vpop.f32.mrf.mxu0
      %v3702 = vadd.f32 %v3679, %v3701
      %3703 = vmatmul.f32.gmra.mxu0 %v3512
      %v3704 = vpop.f32.mrf.mxu0
      %v3705 = vadd.f32 %v3682, %v3704
      %3706 = vdwg.mxu0
      %3707 = vmatpush.msra.mxu0 %v3507
      %3708 = vmatpush.msra.mxu0 %v3504
      %3709 = vmatpush.msra.mxu0 %v3501
      %3710 = vmatpush.msra.mxu0 %v3498
      %3711 = vmatpush.msra.mxu0 %v3495
      %3712 = vmatpush.msra.mxu0 %v3492
      %3713 = vmatpush.msra.mxu0 %v3489
      %3714 = vmatpush.msra.mxu0 %v3486
      %3715 = vmatpush.msra.mxu0 %v3483
      %3716 = vmatpush.msra.mxu0 %v3480
      %3717 = vmatpush.msra.mxu0 %v3477
      %3718 = vmatpush.msra.mxu0 %v3474
      %3719 = vmatpush.msra.mxu0 %v3471
      %3720 = vmatpush.msra.mxu0 %v3468
      %3721 = vmatpush.msra.mxu0 %v3465
      %3722 = vmatpush.msra.mxu0 %v3462
      %3723 = vmatmul.f32.gmra.mxu0 %v3516
      %v3724 = vpop.f32.mrf.mxu0
      %v3725 = vadd.f32 %v3702, %v3724
      %3726 = vmatmul.f32.gmra.mxu0 %v3515
      %v3727 = vpop.f32.mrf.mxu0
      %v3728 = vadd.f32 %v3705, %v3727
      %3729 = vdwg.mxu0
      %v3730 = vadd.f32 %v3220, %v3587
      %v3731 = vadd.f32 %v3289, %v3656
      %v3732 = vadd.f32 %v3358, %v3725
      %v3733 = vadd.f32 %v3223, %v3590
      %v3734 = vadd.f32 %v3292, %v3659
      %v3735 = vadd.f32 %v3361, %v3728
      %s3736 = scalar_lea.vmem %s7, 3456
      %v3737 = vld [vmem:[%s3736] sm:$0xff]
      %v3738 = vld [vmem:[%s3736 + $0x8] sm:$0xff]
      %v3739 = vld [vmem:[%s3736 + $0x10] sm:$0xff]
      %v3740 = vld [vmem:[%s3736 + $0x18] sm:$0xff]
      %v3741 = vld [vmem:[%s3736 + $0x20] sm:$0xff]
      %v3742 = vld [vmem:[%s3736 + $0x28] sm:$0xff]
      %v3743 = vld [vmem:[%s3736 + $0x30] sm:$0xff]
      %v3744 = vld [vmem:[%s3736 + $0x38] sm:$0xff]
      %v3745 = vld [vmem:[%s3736 + $0x40] sm:$0xff]
      %v3746 = vld [vmem:[%s3736 + $0x48] sm:$0xff]
      %v3747 = vld [vmem:[%s3736 + $0x50] sm:$0xff]
      %v3748 = vld [vmem:[%s3736 + $0x58] sm:$0xff]
      %v3749 = vld [vmem:[%s3736 + $0x60] sm:$0xff]
      %v3750 = vld [vmem:[%s3736 + $0x68] sm:$0xff]
      %v3751 = vld [vmem:[%s3736 + $0x70] sm:$0xff]
      %v3752 = vld [vmem:[%s3736 + $0x78] sm:$0xff]
      %v3753 = vld [vmem:[%s3736 + $0x80] sm:$0xff]
      %v3754 = vld [vmem:[%s3736 + $0x88] sm:$0xff]
      %v3755 = vld [vmem:[%s3736 + $0x90] sm:$0xff]
      %v3756 = vld [vmem:[%s3736 + $0x98] sm:$0xff]
      %v3757 = vld [vmem:[%s3736 + $0xa0] sm:$0xff]
      %v3758 = vld [vmem:[%s3736 + $0xa8] sm:$0xff]
      %v3759 = vld [vmem:[%s3736 + $0xb0] sm:$0xff]
      %v3760 = vld [vmem:[%s3736 + $0xb8] sm:$0xff]
      %v3761 = vld [vmem:[%s3736 + $0xc0] sm:$0xff]
      %v3762 = vld [vmem:[%s3736 + $0xc8] sm:$0xff]
      %v3763 = vld [vmem:[%s3736 + $0xd0] sm:$0xff]
      %v3764 = vld [vmem:[%s3736 + $0xd8] sm:$0xff]
      %v3765 = vld [vmem:[%s3736 + $0xe0] sm:$0xff]
      %v3766 = vld [vmem:[%s3736 + $0xe8] sm:$0xff]
      %v3767 = vld [vmem:[%s3736 + $0xf0] sm:$0xff]
      %v3768 = vld [vmem:[%s3736 + $0xf8] sm:$0xff]
      %v3769 = vld [vmem:[%s3736 + $0x100] sm:$0xff]
      %v3770 = vld [vmem:[%s3736 + $0x108] sm:$0xff]
      %v3771 = vld [vmem:[%s3736 + $0x110] sm:$0xff]
      %v3772 = vld [vmem:[%s3736 + $0x118] sm:$0xff]
      %v3773 = vld [vmem:[%s3736 + $0x120] sm:$0xff]
      %v3774 = vld [vmem:[%s3736 + $0x128] sm:$0xff]
      %v3775 = vld [vmem:[%s3736 + $0x130] sm:$0xff]
      %v3776 = vld [vmem:[%s3736 + $0x138] sm:$0xff]
      %v3777 = vld [vmem:[%s3736 + $0x140] sm:$0xff]
      %v3778 = vld [vmem:[%s3736 + $0x148] sm:$0xff]
      %v3779 = vld [vmem:[%s3736 + $0x150] sm:$0xff]
      %v3780 = vld [vmem:[%s3736 + $0x158] sm:$0xff]
      %v3781 = vld [vmem:[%s3736 + $0x160] sm:$0xff]
      %v3782 = vld [vmem:[%s3736 + $0x168] sm:$0xff]
      %v3783 = vld [vmem:[%s3736 + $0x170] sm:$0xff]
      %v3784 = vld [vmem:[%s3736 + $0x178] sm:$0xff]
      %v3785 = vld [vmem:[%s3736 + $0x180] sm:$0xff]
      %v3786 = vld [vmem:[%s3736 + $0x188] sm:$0xff]
      %v3787 = vld [vmem:[%s3736 + $0x190] sm:$0xff]
      %v3788 = vld [vmem:[%s3736 + $0x198] sm:$0xff]
      %v3789 = vld [vmem:[%s3736 + $0x1a0] sm:$0xff]
      %v3790 = vld [vmem:[%s3736 + $0x1a8] sm:$0xff]
      %v3791 = vld [vmem:[%s3736 + $0x1b0] sm:$0xff]
      %v3792 = vld [vmem:[%s3736 + $0x1b8] sm:$0xff]
      %v3793 = vld [vmem:[%s3736 + $0x1c0] sm:$0xff]
      %v3794 = vld [vmem:[%s3736 + $0x1c8] sm:$0xff]
      %v3795 = vld [vmem:[%s3736 + $0x1d0] sm:$0xff]
      %v3796 = vld [vmem:[%s3736 + $0x1d8] sm:$0xff]
      %v3797 = vld [vmem:[%s3736 + $0x1e0] sm:$0xff]
      %v3798 = vld [vmem:[%s3736 + $0x1e8] sm:$0xff]
      %v3799 = vld [vmem:[%s3736 + $0x1f0] sm:$0xff]
      %v3800 = vld [vmem:[%s3736 + $0x1f8] sm:$0xff]
      %v3801 = vld [vmem:[%s3736 + $0x200] sm:$0xff]
      %v3802 = vld [vmem:[%s3736 + $0x208] sm:$0xff]
      %v3803 = vld [vmem:[%s3736 + $0x210] sm:$0xff]
      %v3804 = vld [vmem:[%s3736 + $0x218] sm:$0xff]
      %v3805 = vld [vmem:[%s3736 + $0x220] sm:$0xff]
      %v3806 = vld [vmem:[%s3736 + $0x228] sm:$0xff]
      %v3807 = vld [vmem:[%s3736 + $0x230] sm:$0xff]
      %v3808 = vld [vmem:[%s3736 + $0x238] sm:$0xff]
      %v3809 = vld [vmem:[%s3736 + $0x240] sm:$0xff]
      %v3810 = vld [vmem:[%s3736 + $0x248] sm:$0xff]
      %v3811 = vld [vmem:[%s3736 + $0x250] sm:$0xff]
      %v3812 = vld [vmem:[%s3736 + $0x258] sm:$0xff]
      %v3813 = vld [vmem:[%s3736 + $0x260] sm:$0xff]
      %v3814 = vld [vmem:[%s3736 + $0x268] sm:$0xff]
      %v3815 = vld [vmem:[%s3736 + $0x270] sm:$0xff]
      %v3816 = vld [vmem:[%s3736 + $0x278] sm:$0xff]
      %v3817 = vld [vmem:[%s3736 + $0x280] sm:$0xff]
      %v3818 = vld [vmem:[%s3736 + $0x288] sm:$0xff]
      %v3819 = vld [vmem:[%s3736 + $0x290] sm:$0xff]
      %v3820 = vld [vmem:[%s3736 + $0x298] sm:$0xff]
      %v3821 = vld [vmem:[%s3736 + $0x2a0] sm:$0xff]
      %v3822 = vld [vmem:[%s3736 + $0x2a8] sm:$0xff]
      %v3823 = vld [vmem:[%s3736 + $0x2b0] sm:$0xff]
      %v3824 = vld [vmem:[%s3736 + $0x2b8] sm:$0xff]
      %v3825 = vld [vmem:[%s3736 + $0x2c0] sm:$0xff]
      %v3826 = vld [vmem:[%s3736 + $0x2c8] sm:$0xff]
      %v3827 = vld [vmem:[%s3736 + $0x2d0] sm:$0xff]
      %v3828 = vld [vmem:[%s3736 + $0x2d8] sm:$0xff]
      %v3829 = vld [vmem:[%s3736 + $0x2e0] sm:$0xff]
      %v3830 = vld [vmem:[%s3736 + $0x2e8] sm:$0xff]
      %v3831 = vld [vmem:[%s3736 + $0x2f0] sm:$0xff]
      %v3832 = vld [vmem:[%s3736 + $0x2f8] sm:$0xff]
      %v3833 = vld [vmem:[%s3736 + $0x300] sm:$0xff]
      %v3834 = vld [vmem:[%s3736 + $0x308] sm:$0xff]
      %v3835 = vld [vmem:[%s3736 + $0x310] sm:$0xff]
      %v3836 = vld [vmem:[%s3736 + $0x318] sm:$0xff]
      %v3837 = vld [vmem:[%s3736 + $0x320] sm:$0xff]
      %v3838 = vld [vmem:[%s3736 + $0x328] sm:$0xff]
      %v3839 = vld [vmem:[%s3736 + $0x330] sm:$0xff]
      %v3840 = vld [vmem:[%s3736 + $0x338] sm:$0xff]
      %v3841 = vld [vmem:[%s3736 + $0x340] sm:$0xff]
      %v3842 = vld [vmem:[%s3736 + $0x348] sm:$0xff]
      %v3843 = vld [vmem:[%s3736 + $0x350] sm:$0xff]
      %v3844 = vld [vmem:[%s3736 + $0x358] sm:$0xff]
      %v3845 = vld [vmem:[%s3736 + $0x360] sm:$0xff]
      %v3846 = vld [vmem:[%s3736 + $0x368] sm:$0xff]
      %v3847 = vld [vmem:[%s3736 + $0x370] sm:$0xff]
      %v3848 = vld [vmem:[%s3736 + $0x378] sm:$0xff]
      %v3849 = vld [vmem:[%s3736 + $0x380] sm:$0xff]
      %v3850 = vld [vmem:[%s3736 + $0x388] sm:$0xff]
      %v3851 = vld [vmem:[%s3736 + $0x390] sm:$0xff]
      %v3852 = vld [vmem:[%s3736 + $0x398] sm:$0xff]
      %v3853 = vld [vmem:[%s3736 + $0x3a0] sm:$0xff]
      %v3854 = vld [vmem:[%s3736 + $0x3a8] sm:$0xff]
      %v3855 = vld [vmem:[%s3736 + $0x3b0] sm:$0xff]
      %v3856 = vld [vmem:[%s3736 + $0x3b8] sm:$0xff]
      %v3857 = vld [vmem:[%s3736 + $0x3c0] sm:$0xff]
      %v3858 = vld [vmem:[%s3736 + $0x3c8] sm:$0xff]
      %v3859 = vld [vmem:[%s3736 + $0x3d0] sm:$0xff]
      %v3860 = vld [vmem:[%s3736 + $0x3d8] sm:$0xff]
      %v3861 = vld [vmem:[%s3736 + $0x3e0] sm:$0xff]
      %v3862 = vld [vmem:[%s3736 + $0x3e8] sm:$0xff]
      %v3863 = vld [vmem:[%s3736 + $0x3f0] sm:$0xff]
      %v3864 = vld [vmem:[%s3736 + $0x3f8] sm:$0xff]
      %v3865 = vld [vmem:[%s3736 + $0x400] sm:$0xff]
      %v3866 = vld [vmem:[%s3736 + $0x408] sm:$0xff]
      %v3867 = vld [vmem:[%s3736 + $0x410] sm:$0xff]
      %v3868 = vld [vmem:[%s3736 + $0x418] sm:$0xff]
      %v3869 = vld [vmem:[%s3736 + $0x420] sm:$0xff]
      %v3870 = vld [vmem:[%s3736 + $0x428] sm:$0xff]
      %v3871 = vld [vmem:[%s3736 + $0x430] sm:$0xff]
      %v3872 = vld [vmem:[%s3736 + $0x438] sm:$0xff]
      %v3873 = vld [vmem:[%s3736 + $0x440] sm:$0xff]
      %v3874 = vld [vmem:[%s3736 + $0x448] sm:$0xff]
      %v3875 = vld [vmem:[%s3736 + $0x450] sm:$0xff]
      %v3876 = vld [vmem:[%s3736 + $0x458] sm:$0xff]
      %v3877 = vld [vmem:[%s3736 + $0x460] sm:$0xff]
      %v3878 = vld [vmem:[%s3736 + $0x468] sm:$0xff]
      %v3879 = vld [vmem:[%s3736 + $0x470] sm:$0xff]
      %v3880 = vld [vmem:[%s3736 + $0x478] sm:$0xff]
      %v3884 = vrot.slane %v2579, 3
      %v3885 = vrot.slane %v2582, 3
      %v3886 = vsel %vm1989, %v3884, %v3885
      %v3887 = vrot.slane %v2605, 3
      %v3888 = vrot.slane %v2608, 3
      %v3889 = vsel %vm1989, %v3887, %v3888
      %v3890 = vrot.slane %v2631, 3
      %v3891 = vrot.slane %v2634, 3
      %v3892 = vsel %vm1989, %v3890, %v3891
      %v3893 = vrot.slane %v2585, 3
      %v3894 = vsel %vm1989, %v3885, %v3893
      %v3895 = vrot.slane %v2611, 3
      %v3896 = vsel %vm1989, %v3888, %v3895
      %v3897 = vrot.slane %v2637, 3
      %v3898 = vsel %vm1989, %v3891, %v3897
      %3905 = vmatpush.msra.mxu0 %v3782
      %3906 = vmatpush.msra.mxu0 %v3779
      %3907 = vmatpush.msra.mxu0 %v3776
      %3908 = vmatpush.msra.mxu0 %v3773
      %3909 = vmatpush.msra.mxu0 %v3770
      %3910 = vmatpush.msra.mxu0 %v3767
      %3911 = vmatpush.msra.mxu0 %v3764
      %3912 = vmatpush.msra.mxu0 %v3761
      %3913 = vmatpush.msra.mxu0 %v3758
      %3914 = vmatpush.msra.mxu0 %v3755
      %3915 = vmatpush.msra.mxu0 %v3752
      %3916 = vmatpush.msra.mxu0 %v3749
      %3917 = vmatpush.msra.mxu0 %v3746
      %3918 = vmatpush.msra.mxu0 %v3743
      %3919 = vmatpush.msra.mxu0 %v3740
      %3920 = vmatpush.msra.mxu0 %v3737
      %3921 = vmatmul.f32.gmra.mxu0 %v3886
      %v3922 = vpop.f32.mrf.mxu0
      %v3923 = vadd.f32 0.0, %v3922
      %3924 = vmatmul.f32.gmra.mxu0 %v3894
      %v3925 = vpop.f32.mrf.mxu0
      %v3926 = vadd.f32 0.0, %v3925
      %3927 = vdwg.mxu0
      %3928 = vmatpush.msra.mxu0 %v3830
      %3929 = vmatpush.msra.mxu0 %v3827
      %3930 = vmatpush.msra.mxu0 %v3824
      %3931 = vmatpush.msra.mxu0 %v3821
      %3932 = vmatpush.msra.mxu0 %v3818
      %3933 = vmatpush.msra.mxu0 %v3815
      %3934 = vmatpush.msra.mxu0 %v3812
      %3935 = vmatpush.msra.mxu0 %v3809
      %3936 = vmatpush.msra.mxu0 %v3806
      %3937 = vmatpush.msra.mxu0 %v3803
      %3938 = vmatpush.msra.mxu0 %v3800
      %3939 = vmatpush.msra.mxu0 %v3797
      %3940 = vmatpush.msra.mxu0 %v3794
      %3941 = vmatpush.msra.mxu0 %v3791
      %3942 = vmatpush.msra.mxu0 %v3788
      %3943 = vmatpush.msra.mxu0 %v3785
      %3944 = vmatmul.f32.gmra.mxu0 %v3889
      %v3945 = vpop.f32.mrf.mxu0
      %v3946 = vadd.f32 %v3923, %v3945
      %3947 = vmatmul.f32.gmra.mxu0 %v3896
      %v3948 = vpop.f32.mrf.mxu0
      %v3949 = vadd.f32 %v3926, %v3948
      %3950 = vdwg.mxu0
      %3951 = vmatpush.msra.mxu0 %v3878
      %3952 = vmatpush.msra.mxu0 %v3875
      %3953 = vmatpush.msra.mxu0 %v3872
      %3954 = vmatpush.msra.mxu0 %v3869
      %3955 = vmatpush.msra.mxu0 %v3866
      %3956 = vmatpush.msra.mxu0 %v3863
      %3957 = vmatpush.msra.mxu0 %v3860
      %3958 = vmatpush.msra.mxu0 %v3857
      %3959 = vmatpush.msra.mxu0 %v3854
      %3960 = vmatpush.msra.mxu0 %v3851
      %3961 = vmatpush.msra.mxu0 %v3848
      %3962 = vmatpush.msra.mxu0 %v3845
      %3963 = vmatpush.msra.mxu0 %v3842
      %3964 = vmatpush.msra.mxu0 %v3839
      %3965 = vmatpush.msra.mxu0 %v3836
      %3966 = vmatpush.msra.mxu0 %v3833
      %3967 = vmatmul.f32.gmra.mxu0 %v3892
      %v3968 = vpop.f32.mrf.mxu0
      %v3969 = vadd.f32 %v3946, %v3968
      %3970 = vmatmul.f32.gmra.mxu0 %v3898
      %v3971 = vpop.f32.mrf.mxu0
      %v3972 = vadd.f32 %v3949, %v3971
      %3973 = vdwg.mxu0
      %3974 = vmatpush.msra.mxu0 %v3783
      %3975 = vmatpush.msra.mxu0 %v3780
      %3976 = vmatpush.msra.mxu0 %v3777
      %3977 = vmatpush.msra.mxu0 %v3774
      %3978 = vmatpush.msra.mxu0 %v3771
      %3979 = vmatpush.msra.mxu0 %v3768
      %3980 = vmatpush.msra.mxu0 %v3765
      %3981 = vmatpush.msra.mxu0 %v3762
      %3982 = vmatpush.msra.mxu0 %v3759
      %3983 = vmatpush.msra.mxu0 %v3756
      %3984 = vmatpush.msra.mxu0 %v3753
      %3985 = vmatpush.msra.mxu0 %v3750
      %3986 = vmatpush.msra.mxu0 %v3747
      %3987 = vmatpush.msra.mxu0 %v3744
      %3988 = vmatpush.msra.mxu0 %v3741
      %3989 = vmatpush.msra.mxu0 %v3738
      %3990 = vmatmul.f32.gmra.mxu0 %v3886
      %v3991 = vpop.f32.mrf.mxu0
      %v3992 = vadd.f32 0.0, %v3991
      %3993 = vmatmul.f32.gmra.mxu0 %v3894
      %v3994 = vpop.f32.mrf.mxu0
      %v3995 = vadd.f32 0.0, %v3994
      %3996 = vdwg.mxu0
      %3997 = vmatpush.msra.mxu0 %v3831
      %3998 = vmatpush.msra.mxu0 %v3828
      %3999 = vmatpush.msra.mxu0 %v3825
      %4000 = vmatpush.msra.mxu0 %v3822
      %4001 = vmatpush.msra.mxu0 %v3819
      %4002 = vmatpush.msra.mxu0 %v3816
      %4003 = vmatpush.msra.mxu0 %v3813
      %4004 = vmatpush.msra.mxu0 %v3810
      %4005 = vmatpush.msra.mxu0 %v3807
      %4006 = vmatpush.msra.mxu0 %v3804
      %4007 = vmatpush.msra.mxu0 %v3801
      %4008 = vmatpush.msra.mxu0 %v3798
      %4009 = vmatpush.msra.mxu0 %v3795
      %4010 = vmatpush.msra.mxu0 %v3792
      %4011 = vmatpush.msra.mxu0 %v3789
      %4012 = vmatpush.msra.mxu0 %v3786
      %4013 = vmatmul.f32.gmra.mxu0 %v3889
      %v4014 = vpop.f32.mrf.mxu0
      %v4015 = vadd.f32 %v3992, %v4014
      %4016 = vmatmul.f32.gmra.mxu0 %v3896
      %v4017 = vpop.f32.mrf.mxu0
      %v4018 = vadd.f32 %v3995, %v4017
      %4019 = vdwg.mxu0
      %4020 = vmatpush.msra.mxu0 %v3879
      %4021 = vmatpush.msra.mxu0 %v3876
      %4022 = vmatpush.msra.mxu0 %v3873
      %4023 = vmatpush.msra.mxu0 %v3870
      %4024 = vmatpush.msra.mxu0 %v3867
      %4025 = vmatpush.msra.mxu0 %v3864
      %4026 = vmatpush.msra.mxu0 %v3861
      %4027 = vmatpush.msra.mxu0 %v3858
      %4028 = vmatpush.msra.mxu0 %v3855
      %4029 = vmatpush.msra.mxu0 %v3852
      %4030 = vmatpush.msra.mxu0 %v3849
      %4031 = vmatpush.msra.mxu0 %v3846
      %4032 = vmatpush.msra.mxu0 %v3843
      %4033 = vmatpush.msra.mxu0 %v3840
      %4034 = vmatpush.msra.mxu0 %v3837
      %4035 = vmatpush.msra.mxu0 %v3834
      %4036 = vmatmul.f32.gmra.mxu0 %v3892
      %v4037 = vpop.f32.mrf.mxu0
      %v4038 = vadd.f32 %v4015, %v4037
      %4039 = vmatmul.f32.gmra.mxu0 %v3898
      %v4040 = vpop.f32.mrf.mxu0
      %v4041 = vadd.f32 %v4018, %v4040
      %4042 = vdwg.mxu0
      %4043 = vmatpush.msra.mxu0 %v3784
      %4044 = vmatpush.msra.mxu0 %v3781
      %4045 = vmatpush.msra.mxu0 %v3778
      %4046 = vmatpush.msra.mxu0 %v3775
      %4047 = vmatpush.msra.mxu0 %v3772
      %4048 = vmatpush.msra.mxu0 %v3769
      %4049 = vmatpush.msra.mxu0 %v3766
      %4050 = vmatpush.msra.mxu0 %v3763
      %4051 = vmatpush.msra.mxu0 %v3760
      %4052 = vmatpush.msra.mxu0 %v3757
      %4053 = vmatpush.msra.mxu0 %v3754
      %4054 = vmatpush.msra.mxu0 %v3751
      %4055 = vmatpush.msra.mxu0 %v3748
      %4056 = vmatpush.msra.mxu0 %v3745
      %4057 = vmatpush.msra.mxu0 %v3742
      %4058 = vmatpush.msra.mxu0 %v3739
      %4059 = vmatmul.f32.gmra.mxu0 %v3886
      %v4060 = vpop.f32.mrf.mxu0
      %v4061 = vadd.f32 0.0, %v4060
      %4062 = vmatmul.f32.gmra.mxu0 %v3894
      %v4063 = vpop.f32.mrf.mxu0
      %v4064 = vadd.f32 0.0, %v4063
      %4065 = vdwg.mxu0
      %4066 = vmatpush.msra.mxu0 %v3832
      %4067 = vmatpush.msra.mxu0 %v3829
      %4068 = vmatpush.msra.mxu0 %v3826
      %4069 = vmatpush.msra.mxu0 %v3823
      %4070 = vmatpush.msra.mxu0 %v3820
      %4071 = vmatpush.msra.mxu0 %v3817
      %4072 = vmatpush.msra.mxu0 %v3814
      %4073 = vmatpush.msra.mxu0 %v3811
      %4074 = vmatpush.msra.mxu0 %v3808
      %4075 = vmatpush.msra.mxu0 %v3805
      %4076 = vmatpush.msra.mxu0 %v3802
      %4077 = vmatpush.msra.mxu0 %v3799
      %4078 = vmatpush.msra.mxu0 %v3796
      %4079 = vmatpush.msra.mxu0 %v3793
      %4080 = vmatpush.msra.mxu0 %v3790
      %4081 = vmatpush.msra.mxu0 %v3787
      %4082 = vmatmul.f32.gmra.mxu0 %v3889
      %v4083 = vpop.f32.mrf.mxu0
      %v4084 = vadd.f32 %v4061, %v4083
      %4085 = vmatmul.f32.gmra.mxu0 %v3896
      %v4086 = vpop.f32.mrf.mxu0
      %v4087 = vadd.f32 %v4064, %v4086
      %4088 = vdwg.mxu0
      %4089 = vmatpush.msra.mxu0 %v3880
      %4090 = vmatpush.msra.mxu0 %v3877
      %4091 = vmatpush.msra.mxu0 %v3874
      %4092 = vmatpush.msra.mxu0 %v3871
      %4093 = vmatpush.msra.mxu0 %v3868
      %4094 = vmatpush.msra.mxu0 %v3865
      %4095 = vmatpush.msra.mxu0 %v3862
      %4096 = vmatpush.msra.mxu0 %v3859
      %4097 = vmatpush.msra.mxu0 %v3856
      %4098 = vmatpush.msra.mxu0 %v3853
      %4099 = vmatpush.msra.mxu0 %v3850
      %4100 = vmatpush.msra.mxu0 %v3847
      %4101 = vmatpush.msra.mxu0 %v3844
      %4102 = vmatpush.msra.mxu0 %v3841
      %4103 = vmatpush.msra.mxu0 %v3838
      %4104 = vmatpush.msra.mxu0 %v3835
      %4105 = vmatmul.f32.gmra.mxu0 %v3892
      %v4106 = vpop.f32.mrf.mxu0
      %v4107 = vadd.f32 %v4084, %v4106
      %4108 = vmatmul.f32.gmra.mxu0 %v3898
      %v4109 = vpop.f32.mrf.mxu0
      %v4110 = vadd.f32 %v4087, %v4109
      %4111 = vdwg.mxu0
      %v4112 = vadd.f32 %v3730, %v3969
      %v4113 = vadd.f32 %v3731, %v4038
      %v4114 = vadd.f32 %v3732, %v4107
      %v4115 = vadd.f32 %v3733, %v3972
      %v4116 = vadd.f32 %v3734, %v4041
      %v4117 = vadd.f32 %v3735, %v4110
      %s4118 = scalar_lea.vmem %s7, 4608
      %v4119 = vld [vmem:[%s4118] sm:$0xff]
      %v4120 = vld [vmem:[%s4118 + $0x8] sm:$0xff]
      %v4121 = vld [vmem:[%s4118 + $0x10] sm:$0xff]
      %v4122 = vld [vmem:[%s4118 + $0x18] sm:$0xff]
      %v4123 = vld [vmem:[%s4118 + $0x20] sm:$0xff]
      %v4124 = vld [vmem:[%s4118 + $0x28] sm:$0xff]
      %v4125 = vld [vmem:[%s4118 + $0x30] sm:$0xff]
      %v4126 = vld [vmem:[%s4118 + $0x38] sm:$0xff]
      %v4127 = vld [vmem:[%s4118 + $0x40] sm:$0xff]
      %v4128 = vld [vmem:[%s4118 + $0x48] sm:$0xff]
      %v4129 = vld [vmem:[%s4118 + $0x50] sm:$0xff]
      %v4130 = vld [vmem:[%s4118 + $0x58] sm:$0xff]
      %v4131 = vld [vmem:[%s4118 + $0x60] sm:$0xff]
      %v4132 = vld [vmem:[%s4118 + $0x68] sm:$0xff]
      %v4133 = vld [vmem:[%s4118 + $0x70] sm:$0xff]
      %v4134 = vld [vmem:[%s4118 + $0x78] sm:$0xff]
      %v4135 = vld [vmem:[%s4118 + $0x80] sm:$0xff]
      %v4136 = vld [vmem:[%s4118 + $0x88] sm:$0xff]
      %v4137 = vld [vmem:[%s4118 + $0x90] sm:$0xff]
      %v4138 = vld [vmem:[%s4118 + $0x98] sm:$0xff]
      %v4139 = vld [vmem:[%s4118 + $0xa0] sm:$0xff]
      %v4140 = vld [vmem:[%s4118 + $0xa8] sm:$0xff]
      %v4141 = vld [vmem:[%s4118 + $0xb0] sm:$0xff]
      %v4142 = vld [vmem:[%s4118 + $0xb8] sm:$0xff]
      %v4143 = vld [vmem:[%s4118 + $0xc0] sm:$0xff]
      %v4144 = vld [vmem:[%s4118 + $0xc8] sm:$0xff]
      %v4145 = vld [vmem:[%s4118 + $0xd0] sm:$0xff]
      %v4146 = vld [vmem:[%s4118 + $0xd8] sm:$0xff]
      %v4147 = vld [vmem:[%s4118 + $0xe0] sm:$0xff]
      %v4148 = vld [vmem:[%s4118 + $0xe8] sm:$0xff]
      %v4149 = vld [vmem:[%s4118 + $0xf0] sm:$0xff]
      %v4150 = vld [vmem:[%s4118 + $0xf8] sm:$0xff]
      %v4151 = vld [vmem:[%s4118 + $0x100] sm:$0xff]
      %v4152 = vld [vmem:[%s4118 + $0x108] sm:$0xff]
      %v4153 = vld [vmem:[%s4118 + $0x110] sm:$0xff]
      %v4154 = vld [vmem:[%s4118 + $0x118] sm:$0xff]
      %v4155 = vld [vmem:[%s4118 + $0x120] sm:$0xff]
      %v4156 = vld [vmem:[%s4118 + $0x128] sm:$0xff]
      %v4157 = vld [vmem:[%s4118 + $0x130] sm:$0xff]
      %v4158 = vld [vmem:[%s4118 + $0x138] sm:$0xff]
      %v4159 = vld [vmem:[%s4118 + $0x140] sm:$0xff]
      %v4160 = vld [vmem:[%s4118 + $0x148] sm:$0xff]
      %v4161 = vld [vmem:[%s4118 + $0x150] sm:$0xff]
      %v4162 = vld [vmem:[%s4118 + $0x158] sm:$0xff]
      %v4163 = vld [vmem:[%s4118 + $0x160] sm:$0xff]
      %v4164 = vld [vmem:[%s4118 + $0x168] sm:$0xff]
      %v4165 = vld [vmem:[%s4118 + $0x170] sm:$0xff]
      %v4166 = vld [vmem:[%s4118 + $0x178] sm:$0xff]
      %v4167 = vld [vmem:[%s4118 + $0x180] sm:$0xff]
      %v4168 = vld [vmem:[%s4118 + $0x188] sm:$0xff]
      %v4169 = vld [vmem:[%s4118 + $0x190] sm:$0xff]
      %v4170 = vld [vmem:[%s4118 + $0x198] sm:$0xff]
      %v4171 = vld [vmem:[%s4118 + $0x1a0] sm:$0xff]
      %v4172 = vld [vmem:[%s4118 + $0x1a8] sm:$0xff]
      %v4173 = vld [vmem:[%s4118 + $0x1b0] sm:$0xff]
      %v4174 = vld [vmem:[%s4118 + $0x1b8] sm:$0xff]
      %v4175 = vld [vmem:[%s4118 + $0x1c0] sm:$0xff]
      %v4176 = vld [vmem:[%s4118 + $0x1c8] sm:$0xff]
      %v4177 = vld [vmem:[%s4118 + $0x1d0] sm:$0xff]
      %v4178 = vld [vmem:[%s4118 + $0x1d8] sm:$0xff]
      %v4179 = vld [vmem:[%s4118 + $0x1e0] sm:$0xff]
      %v4180 = vld [vmem:[%s4118 + $0x1e8] sm:$0xff]
      %v4181 = vld [vmem:[%s4118 + $0x1f0] sm:$0xff]
      %v4182 = vld [vmem:[%s4118 + $0x1f8] sm:$0xff]
      %v4183 = vld [vmem:[%s4118 + $0x200] sm:$0xff]
      %v4184 = vld [vmem:[%s4118 + $0x208] sm:$0xff]
      %v4185 = vld [vmem:[%s4118 + $0x210] sm:$0xff]
      %v4186 = vld [vmem:[%s4118 + $0x218] sm:$0xff]
      %v4187 = vld [vmem:[%s4118 + $0x220] sm:$0xff]
      %v4188 = vld [vmem:[%s4118 + $0x228] sm:$0xff]
      %v4189 = vld [vmem:[%s4118 + $0x230] sm:$0xff]
      %v4190 = vld [vmem:[%s4118 + $0x238] sm:$0xff]
      %v4191 = vld [vmem:[%s4118 + $0x240] sm:$0xff]
      %v4192 = vld [vmem:[%s4118 + $0x248] sm:$0xff]
      %v4193 = vld [vmem:[%s4118 + $0x250] sm:$0xff]
      %v4194 = vld [vmem:[%s4118 + $0x258] sm:$0xff]
      %v4195 = vld [vmem:[%s4118 + $0x260] sm:$0xff]
      %v4196 = vld [vmem:[%s4118 + $0x268] sm:$0xff]
      %v4197 = vld [vmem:[%s4118 + $0x270] sm:$0xff]
      %v4198 = vld [vmem:[%s4118 + $0x278] sm:$0xff]
      %v4199 = vld [vmem:[%s4118 + $0x280] sm:$0xff]
      %v4200 = vld [vmem:[%s4118 + $0x288] sm:$0xff]
      %v4201 = vld [vmem:[%s4118 + $0x290] sm:$0xff]
      %v4202 = vld [vmem:[%s4118 + $0x298] sm:$0xff]
      %v4203 = vld [vmem:[%s4118 + $0x2a0] sm:$0xff]
      %v4204 = vld [vmem:[%s4118 + $0x2a8] sm:$0xff]
      %v4205 = vld [vmem:[%s4118 + $0x2b0] sm:$0xff]
      %v4206 = vld [vmem:[%s4118 + $0x2b8] sm:$0xff]
      %v4207 = vld [vmem:[%s4118 + $0x2c0] sm:$0xff]
      %v4208 = vld [vmem:[%s4118 + $0x2c8] sm:$0xff]
      %v4209 = vld [vmem:[%s4118 + $0x2d0] sm:$0xff]
      %v4210 = vld [vmem:[%s4118 + $0x2d8] sm:$0xff]
      %v4211 = vld [vmem:[%s4118 + $0x2e0] sm:$0xff]
      %v4212 = vld [vmem:[%s4118 + $0x2e8] sm:$0xff]
      %v4213 = vld [vmem:[%s4118 + $0x2f0] sm:$0xff]
      %v4214 = vld [vmem:[%s4118 + $0x2f8] sm:$0xff]
      %v4215 = vld [vmem:[%s4118 + $0x300] sm:$0xff]
      %v4216 = vld [vmem:[%s4118 + $0x308] sm:$0xff]
      %v4217 = vld [vmem:[%s4118 + $0x310] sm:$0xff]
      %v4218 = vld [vmem:[%s4118 + $0x318] sm:$0xff]
      %v4219 = vld [vmem:[%s4118 + $0x320] sm:$0xff]
      %v4220 = vld [vmem:[%s4118 + $0x328] sm:$0xff]
      %v4221 = vld [vmem:[%s4118 + $0x330] sm:$0xff]
      %v4222 = vld [vmem:[%s4118 + $0x338] sm:$0xff]
      %v4223 = vld [vmem:[%s4118 + $0x340] sm:$0xff]
      %v4224 = vld [vmem:[%s4118 + $0x348] sm:$0xff]
      %v4225 = vld [vmem:[%s4118 + $0x350] sm:$0xff]
      %v4226 = vld [vmem:[%s4118 + $0x358] sm:$0xff]
      %v4227 = vld [vmem:[%s4118 + $0x360] sm:$0xff]
      %v4228 = vld [vmem:[%s4118 + $0x368] sm:$0xff]
      %v4229 = vld [vmem:[%s4118 + $0x370] sm:$0xff]
      %v4230 = vld [vmem:[%s4118 + $0x378] sm:$0xff]
      %v4231 = vld [vmem:[%s4118 + $0x380] sm:$0xff]
      %v4232 = vld [vmem:[%s4118 + $0x388] sm:$0xff]
      %v4233 = vld [vmem:[%s4118 + $0x390] sm:$0xff]
      %v4234 = vld [vmem:[%s4118 + $0x398] sm:$0xff]
      %v4235 = vld [vmem:[%s4118 + $0x3a0] sm:$0xff]
      %v4236 = vld [vmem:[%s4118 + $0x3a8] sm:$0xff]
      %v4237 = vld [vmem:[%s4118 + $0x3b0] sm:$0xff]
      %v4238 = vld [vmem:[%s4118 + $0x3b8] sm:$0xff]
      %v4239 = vld [vmem:[%s4118 + $0x3c0] sm:$0xff]
      %v4240 = vld [vmem:[%s4118 + $0x3c8] sm:$0xff]
      %v4241 = vld [vmem:[%s4118 + $0x3d0] sm:$0xff]
      %v4242 = vld [vmem:[%s4118 + $0x3d8] sm:$0xff]
      %v4243 = vld [vmem:[%s4118 + $0x3e0] sm:$0xff]
      %v4244 = vld [vmem:[%s4118 + $0x3e8] sm:$0xff]
      %v4245 = vld [vmem:[%s4118 + $0x3f0] sm:$0xff]
      %v4246 = vld [vmem:[%s4118 + $0x3f8] sm:$0xff]
      %v4247 = vld [vmem:[%s4118 + $0x400] sm:$0xff]
      %v4248 = vld [vmem:[%s4118 + $0x408] sm:$0xff]
      %v4249 = vld [vmem:[%s4118 + $0x410] sm:$0xff]
      %v4250 = vld [vmem:[%s4118 + $0x418] sm:$0xff]
      %v4251 = vld [vmem:[%s4118 + $0x420] sm:$0xff]
      %v4252 = vld [vmem:[%s4118 + $0x428] sm:$0xff]
      %v4253 = vld [vmem:[%s4118 + $0x430] sm:$0xff]
      %v4254 = vld [vmem:[%s4118 + $0x438] sm:$0xff]
      %v4255 = vld [vmem:[%s4118 + $0x440] sm:$0xff]
      %v4256 = vld [vmem:[%s4118 + $0x448] sm:$0xff]
      %v4257 = vld [vmem:[%s4118 + $0x450] sm:$0xff]
      %v4258 = vld [vmem:[%s4118 + $0x458] sm:$0xff]
      %v4259 = vld [vmem:[%s4118 + $0x460] sm:$0xff]
      %v4260 = vld [vmem:[%s4118 + $0x468] sm:$0xff]
      %v4261 = vld [vmem:[%s4118 + $0x470] sm:$0xff]
      %v4262 = vld [vmem:[%s4118 + $0x478] sm:$0xff]
      %v4263 = vrot.slane %v2579, 4
      %v4264 = vrot.slane %v2582, 4
      %v4265 = vsel %vm756, %v4263, %v4264
      %v4266 = vrot.slane %v2605, 4
      %v4267 = vrot.slane %v2608, 4
      %v4268 = vsel %vm756, %v4266, %v4267
      %v4269 = vrot.slane %v2631, 4
      %v4270 = vrot.slane %v2634, 4
      %v4271 = vsel %vm756, %v4269, %v4270
      %v4272 = vrot.slane %v2585, 4
      %v4273 = vsel %vm756, %v4264, %v4272
      %v4274 = vrot.slane %v2611, 4
      %v4275 = vsel %vm756, %v4267, %v4274
      %v4276 = vrot.slane %v2637, 4
      %v4277 = vsel %vm756, %v4270, %v4276
      %4284 = vmatpush.msra.mxu0 %v4164
      %4285 = vmatpush.msra.mxu0 %v4161
      %4286 = vmatpush.msra.mxu0 %v4158
      %4287 = vmatpush.msra.mxu0 %v4155
      %4288 = vmatpush.msra.mxu0 %v4152
      %4289 = vmatpush.msra.mxu0 %v4149
      %4290 = vmatpush.msra.mxu0 %v4146
      %4291 = vmatpush.msra.mxu0 %v4143
      %4292 = vmatpush.msra.mxu0 %v4140
      %4293 = vmatpush.msra.mxu0 %v4137
      %4294 = vmatpush.msra.mxu0 %v4134
      %4295 = vmatpush.msra.mxu0 %v4131
      %4296 = vmatpush.msra.mxu0 %v4128
      %4297 = vmatpush.msra.mxu0 %v4125
      %4298 = vmatpush.msra.mxu0 %v4122
      %4299 = vmatpush.msra.mxu0 %v4119
      %4300 = vmatmul.f32.gmra.mxu0 %v4265
      %v4301 = vpop.f32.mrf.mxu0
      %v4302 = vadd.f32 0.0, %v4301
      %4303 = vmatmul.f32.gmra.mxu0 %v4273
      %v4304 = vpop.f32.mrf.mxu0
      %v4305 = vadd.f32 0.0, %v4304
      %4306 = vdwg.mxu0
      %4307 = vmatpush.msra.mxu0 %v4212
      %4308 = vmatpush.msra.mxu0 %v4209
      %4309 = vmatpush.msra.mxu0 %v4206
      %4310 = vmatpush.msra.mxu0 %v4203
      %4311 = vmatpush.msra.mxu0 %v4200
      %4312 = vmatpush.msra.mxu0 %v4197
      %4313 = vmatpush.msra.mxu0 %v4194
      %4314 = vmatpush.msra.mxu0 %v4191
      %4315 = vmatpush.msra.mxu0 %v4188
      %4316 = vmatpush.msra.mxu0 %v4185
      %4317 = vmatpush.msra.mxu0 %v4182
      %4318 = vmatpush.msra.mxu0 %v4179
      %4319 = vmatpush.msra.mxu0 %v4176
      %4320 = vmatpush.msra.mxu0 %v4173
      %4321 = vmatpush.msra.mxu0 %v4170
      %4322 = vmatpush.msra.mxu0 %v4167
      %4323 = vmatmul.f32.gmra.mxu0 %v4268
      %v4324 = vpop.f32.mrf.mxu0
      %v4325 = vadd.f32 %v4302, %v4324
      %4326 = vmatmul.f32.gmra.mxu0 %v4275
      %v4327 = vpop.f32.mrf.mxu0
      %v4328 = vadd.f32 %v4305, %v4327
      %4329 = vdwg.mxu0
      %4330 = vmatpush.msra.mxu0 %v4260
      %4331 = vmatpush.msra.mxu0 %v4257
      %4332 = vmatpush.msra.mxu0 %v4254
      %4333 = vmatpush.msra.mxu0 %v4251
      %4334 = vmatpush.msra.mxu0 %v4248
      %4335 = vmatpush.msra.mxu0 %v4245
      %4336 = vmatpush.msra.mxu0 %v4242
      %4337 = vmatpush.msra.mxu0 %v4239
      %4338 = vmatpush.msra.mxu0 %v4236
      %4339 = vmatpush.msra.mxu0 %v4233
      %4340 = vmatpush.msra.mxu0 %v4230
      %4341 = vmatpush.msra.mxu0 %v4227
      %4342 = vmatpush.msra.mxu0 %v4224
      %4343 = vmatpush.msra.mxu0 %v4221
      %4344 = vmatpush.msra.mxu0 %v4218
      %4345 = vmatpush.msra.mxu0 %v4215
      %4346 = vmatmul.f32.gmra.mxu0 %v4271
      %v4347 = vpop.f32.mrf.mxu0
      %v4348 = vadd.f32 %v4325, %v4347
      %4349 = vmatmul.f32.gmra.mxu0 %v4277
      %v4350 = vpop.f32.mrf.mxu0
      %v4351 = vadd.f32 %v4328, %v4350
      %4352 = vdwg.mxu0
      %4353 = vmatpush.msra.mxu0 %v4165
      %4354 = vmatpush.msra.mxu0 %v4162
      %4355 = vmatpush.msra.mxu0 %v4159
      %4356 = vmatpush.msra.mxu0 %v4156
      %4357 = vmatpush.msra.mxu0 %v4153
      %4358 = vmatpush.msra.mxu0 %v4150
      %4359 = vmatpush.msra.mxu0 %v4147
      %4360 = vmatpush.msra.mxu0 %v4144
      %4361 = vmatpush.msra.mxu0 %v4141
      %4362 = vmatpush.msra.mxu0 %v4138
      %4363 = vmatpush.msra.mxu0 %v4135
      %4364 = vmatpush.msra.mxu0 %v4132
      %4365 = vmatpush.msra.mxu0 %v4129
      %4366 = vmatpush.msra.mxu0 %v4126
      %4367 = vmatpush.msra.mxu0 %v4123
      %4368 = vmatpush.msra.mxu0 %v4120
      %4369 = vmatmul.f32.gmra.mxu0 %v4265
      %v4370 = vpop.f32.mrf.mxu0
      %v4371 = vadd.f32 0.0, %v4370
      %4372 = vmatmul.f32.gmra.mxu0 %v4273
      %v4373 = vpop.f32.mrf.mxu0
      %v4374 = vadd.f32 0.0, %v4373
      %4375 = vdwg.mxu0
      %4376 = vmatpush.msra.mxu0 %v4213
      %4377 = vmatpush.msra.mxu0 %v4210
      %4378 = vmatpush.msra.mxu0 %v4207
      %4379 = vmatpush.msra.mxu0 %v4204
      %4380 = vmatpush.msra.mxu0 %v4201
      %4381 = vmatpush.msra.mxu0 %v4198
      %4382 = vmatpush.msra.mxu0 %v4195
      %4383 = vmatpush.msra.mxu0 %v4192
      %4384 = vmatpush.msra.mxu0 %v4189
      %4385 = vmatpush.msra.mxu0 %v4186
      %4386 = vmatpush.msra.mxu0 %v4183
      %4387 = vmatpush.msra.mxu0 %v4180
      %4388 = vmatpush.msra.mxu0 %v4177
      %4389 = vmatpush.msra.mxu0 %v4174
      %4390 = vmatpush.msra.mxu0 %v4171
      %4391 = vmatpush.msra.mxu0 %v4168
      %4392 = vmatmul.f32.gmra.mxu0 %v4268
      %v4393 = vpop.f32.mrf.mxu0
      %v4394 = vadd.f32 %v4371, %v4393
      %4395 = vmatmul.f32.gmra.mxu0 %v4275
      %v4396 = vpop.f32.mrf.mxu0
      %v4397 = vadd.f32 %v4374, %v4396
      %4398 = vdwg.mxu0
      %4399 = vmatpush.msra.mxu0 %v4261
      %4400 = vmatpush.msra.mxu0 %v4258
      %4401 = vmatpush.msra.mxu0 %v4255
      %4402 = vmatpush.msra.mxu0 %v4252
      %4403 = vmatpush.msra.mxu0 %v4249
      %4404 = vmatpush.msra.mxu0 %v4246
      %4405 = vmatpush.msra.mxu0 %v4243
      %4406 = vmatpush.msra.mxu0 %v4240
      %4407 = vmatpush.msra.mxu0 %v4237
      %4408 = vmatpush.msra.mxu0 %v4234
      %4409 = vmatpush.msra.mxu0 %v4231
      %4410 = vmatpush.msra.mxu0 %v4228
      %4411 = vmatpush.msra.mxu0 %v4225
      %4412 = vmatpush.msra.mxu0 %v4222
      %4413 = vmatpush.msra.mxu0 %v4219
      %4414 = vmatpush.msra.mxu0 %v4216
      %4415 = vmatmul.f32.gmra.mxu0 %v4271
      %v4416 = vpop.f32.mrf.mxu0
      %v4417 = vadd.f32 %v4394, %v4416
      %4418 = vmatmul.f32.gmra.mxu0 %v4277
      %v4419 = vpop.f32.mrf.mxu0
      %v4420 = vadd.f32 %v4397, %v4419
      %4421 = vdwg.mxu0
      %4422 = vmatpush.msra.mxu0 %v4166
      %4423 = vmatpush.msra.mxu0 %v4163
      %4424 = vmatpush.msra.mxu0 %v4160
      %4425 = vmatpush.msra.mxu0 %v4157
      %4426 = vmatpush.msra.mxu0 %v4154
      %4427 = vmatpush.msra.mxu0 %v4151
      %4428 = vmatpush.msra.mxu0 %v4148
      %4429 = vmatpush.msra.mxu0 %v4145
      %4430 = vmatpush.msra.mxu0 %v4142
      %4431 = vmatpush.msra.mxu0 %v4139
      %4432 = vmatpush.msra.mxu0 %v4136
      %4433 = vmatpush.msra.mxu0 %v4133
      %4434 = vmatpush.msra.mxu0 %v4130
      %4435 = vmatpush.msra.mxu0 %v4127
      %4436 = vmatpush.msra.mxu0 %v4124
      %4437 = vmatpush.msra.mxu0 %v4121
      %4438 = vmatmul.f32.gmra.mxu0 %v4265
      %v4439 = vpop.f32.mrf.mxu0
      %v4440 = vadd.f32 0.0, %v4439
      %4441 = vmatmul.f32.gmra.mxu0 %v4273
      %v4442 = vpop.f32.mrf.mxu0
      %v4443 = vadd.f32 0.0, %v4442
      %4444 = vdwg.mxu0
      %4445 = vmatpush.msra.mxu0 %v4214
      %4446 = vmatpush.msra.mxu0 %v4211
      %4447 = vmatpush.msra.mxu0 %v4208
      %4448 = vmatpush.msra.mxu0 %v4205
      %4449 = vmatpush.msra.mxu0 %v4202
      %4450 = vmatpush.msra.mxu0 %v4199
      %4451 = vmatpush.msra.mxu0 %v4196
      %4452 = vmatpush.msra.mxu0 %v4193
      %4453 = vmatpush.msra.mxu0 %v4190
      %4454 = vmatpush.msra.mxu0 %v4187
      %4455 = vmatpush.msra.mxu0 %v4184
      %4456 = vmatpush.msra.mxu0 %v4181
      %4457 = vmatpush.msra.mxu0 %v4178
      %4458 = vmatpush.msra.mxu0 %v4175
      %4459 = vmatpush.msra.mxu0 %v4172
      %4460 = vmatpush.msra.mxu0 %v4169
      %4461 = vmatmul.f32.gmra.mxu0 %v4268
      %v4462 = vpop.f32.mrf.mxu0
      %v4463 = vadd.f32 %v4440, %v4462
      %4464 = vmatmul.f32.gmra.mxu0 %v4275
      %v4465 = vpop.f32.mrf.mxu0
      %v4466 = vadd.f32 %v4443, %v4465
      %4467 = vdwg.mxu0
      %4468 = vmatpush.msra.mxu0 %v4262
      %4469 = vmatpush.msra.mxu0 %v4259
      %4470 = vmatpush.msra.mxu0 %v4256
      %4471 = vmatpush.msra.mxu0 %v4253
      %4472 = vmatpush.msra.mxu0 %v4250
      %4473 = vmatpush.msra.mxu0 %v4247
      %4474 = vmatpush.msra.mxu0 %v4244
      %4475 = vmatpush.msra.mxu0 %v4241
      %4476 = vmatpush.msra.mxu0 %v4238
      %4477 = vmatpush.msra.mxu0 %v4235
      %4478 = vmatpush.msra.mxu0 %v4232
      %4479 = vmatpush.msra.mxu0 %v4229
      %4480 = vmatpush.msra.mxu0 %v4226
      %4481 = vmatpush.msra.mxu0 %v4223
      %4482 = vmatpush.msra.mxu0 %v4220
      %4483 = vmatpush.msra.mxu0 %v4217
      %4484 = vmatmul.f32.gmra.mxu0 %v4271
      %v4485 = vpop.f32.mrf.mxu0
      %v4486 = vadd.f32 %v4463, %v4485
      %4487 = vmatmul.f32.gmra.mxu0 %v4277
      %v4488 = vpop.f32.mrf.mxu0
      %v4489 = vadd.f32 %v4466, %v4488
      %4490 = vdwg.mxu0
      %v4491 = vadd.f32 %v4112, %v4348
      %v4492 = vadd.f32 %v4113, %v4417
      %v4493 = vadd.f32 %v4114, %v4486
      %v4494 = vadd.f32 %v4115, %v4351
      %v4495 = vadd.f32 %v4116, %v4420
      %v4496 = vadd.f32 %v4117, %v4489
      %v4497 = vld [vmem:[%s8] sm:$0x7]
      %v4499 = vperm.slane %v4497, 0
      %v4500 = vperm.slane %v4497, 1
      %v4501 = vperm.slane %v4497, 2
      %v4505 = vadd.f32 %v4491, %v4499
      %v4506 = vadd.f32 %v4492, %v4500
      %v4507 = vadd.f32 %v4493, %v4501
      %v4508 = vadd.f32 %v4494, %v4499
      %v4509 = vadd.f32 %v4495, %v4500
      %v4510 = vadd.f32 %v4496, %v4501
      %v4511 = vmax.f32 %v4505, 0.0
      %v4512 = vmax.f32 %v4506, 0.0
      %v4513 = vmax.f32 %v4507, 0.0
      %v4514 = vmax.f32 %v4508, 0.0
      %v4515 = vmax.f32 %v4509, 0.0
      %v4516 = vmax.f32 %v4510, 0.0
      %v4517 = vld [vmem:[%s9] sm:$0xff]
      %v4518 = vld [vmem:[%s9 + $0x8] sm:$0xff]
      %v4519 = vld [vmem:[%s9 + $0x10] sm:$0xff]
      %v4520 = vld [vmem:[%s9 + $0x18] sm:$0xff]
      %vm4521 = vcmask 113664
      %v4523 = vsel %vm4521, %v4517, 0
      %v4526 = vsel %vm4521, %v4518, 0
      %v4529 = vsel %vm4521, %v4519, 0
      %v4532 = vsel %vm4521, %v4520, 0
      %v4535 = vsel %vm1648, %v4514, 0
      %v4538 = vsel %vm1648, %v4515, 0
      %v4541 = vsel %vm1648, %v4516, 0
      %4543 = vmatpush.msra.mxu0 0.0
      %4544 = vmatpush.msra.mxu0 0.0
      %4545 = vmatpush.msra.mxu0 0.0
      %4546 = vmatpush.msra.mxu0 0.0
      %4547 = vmatpush.msra.mxu0 0.0
      %4548 = vmatpush.msra.mxu0 0.0
      %4549 = vmatpush.msra.mxu0 0.0
      %4550 = vmatpush.msra.mxu0 0.0
      %4551 = vmatpush.msra.mxu0 0.0
      %4552 = vmatpush.msra.mxu0 0.0
      %4553 = vmatpush.msra.mxu0 0.0
      %4554 = vmatpush.msra.mxu0 0.0
      %4555 = vmatpush.msra.mxu0 0.0
      %4556 = vmatpush.msra.mxu0 0.0
      %4557 = vmatpush.msra.mxu0 %v4535
      %4558 = vmatpush.msra.mxu0 %v4511
      %4559 = vmatmul.f32.gmra.mxu0 %v4523
      %v4560 = vpop.f32.mrf.mxu0
      %v4561 = vadd.f32 0.0, %v4560
      %4562 = vmatmul.f32.gmra.mxu0 %v4526
      %v4563 = vpop.f32.mrf.mxu0
      %v4564 = vadd.f32 0.0, %v4563
      %4565 = vmatmul.f32.gmra.mxu0 %v4529
      %v4566 = vpop.f32.mrf.mxu0
      %v4567 = vadd.f32 0.0, %v4566
      %4568 = vmatmul.f32.gmra.mxu0 %v4532
      %v4569 = vpop.f32.mrf.mxu0
      %v4570 = vadd.f32 0.0, %v4569
      %4571 = vdwg.mxu0
      %4572 = vmatpush.msra.mxu0 0.0
      %4573 = vmatpush.msra.mxu0 0.0
      %4574 = vmatpush.msra.mxu0 0.0
      %4575 = vmatpush.msra.mxu0 0.0
      %4576 = vmatpush.msra.mxu0 0.0
      %4577 = vmatpush.msra.mxu0 0.0
      %4578 = vmatpush.msra.mxu0 0.0
      %4579 = vmatpush.msra.mxu0 0.0
      %4580 = vmatpush.msra.mxu0 0.0
      %4581 = vmatpush.msra.mxu0 0.0
      %4582 = vmatpush.msra.mxu0 0.0
      %4583 = vmatpush.msra.mxu0 0.0
      %4584 = vmatpush.msra.mxu0 0.0
      %4585 = vmatpush.msra.mxu0 0.0
      %4586 = vmatpush.msra.mxu0 %v4538
      %4587 = vmatpush.msra.mxu0 %v4512
      %4588 = vmatmul.f32.gmra.mxu0 %v4523
      %v4589 = vpop.f32.mrf.mxu0
      %v4590 = vadd.f32 0.0, %v4589
      %4591 = vmatmul.f32.gmra.mxu0 %v4526
      %v4592 = vpop.f32.mrf.mxu0
      %v4593 = vadd.f32 0.0, %v4592
      %4594 = vmatmul.f32.gmra.mxu0 %v4529
      %v4595 = vpop.f32.mrf.mxu0
      %v4596 = vadd.f32 0.0, %v4595
      %4597 = vmatmul.f32.gmra.mxu0 %v4532
      %v4598 = vpop.f32.mrf.mxu0
      %v4599 = vadd.f32 0.0, %v4598
      %4600 = vdwg.mxu0
      %4601 = vmatpush.msra.mxu0 0.0
      %4602 = vmatpush.msra.mxu0 0.0
      %4603 = vmatpush.msra.mxu0 0.0
      %4604 = vmatpush.msra.mxu0 0.0
      %4605 = vmatpush.msra.mxu0 0.0
      %4606 = vmatpush.msra.mxu0 0.0
      %4607 = vmatpush.msra.mxu0 0.0
      %4608 = vmatpush.msra.mxu0 0.0
      %4609 = vmatpush.msra.mxu0 0.0
      %4610 = vmatpush.msra.mxu0 0.0
      %4611 = vmatpush.msra.mxu0 0.0
      %4612 = vmatpush.msra.mxu0 0.0
      %4613 = vmatpush.msra.mxu0 0.0
      %4614 = vmatpush.msra.mxu0 0.0
      %4615 = vmatpush.msra.mxu0 %v4541
      %4616 = vmatpush.msra.mxu0 %v4513
      %4617 = vmatmul.f32.gmra.mxu0 %v4523
      %v4618 = vpop.f32.mrf.mxu0
      %v4619 = vadd.f32 0.0, %v4618
      %4620 = vmatmul.f32.gmra.mxu0 %v4526
      %v4621 = vpop.f32.mrf.mxu0
      %v4622 = vadd.f32 0.0, %v4621
      %4623 = vmatmul.f32.gmra.mxu0 %v4529
      %v4624 = vpop.f32.mrf.mxu0
      %v4625 = vadd.f32 0.0, %v4624
      %4626 = vmatmul.f32.gmra.mxu0 %v4532
      %v4627 = vpop.f32.mrf.mxu0
      %v4628 = vadd.f32 0.0, %v4627
      %4629 = vdwg.mxu0
      %v4630 = vld [vmem:[%s10] sm:$0xff]
      %v4631 = vld [vmem:[%s10 + $0x8] sm:$0xff]
      %v4632 = vld [vmem:[%s10 + $0x10] sm:$0xff]
      %v4633 = vld [vmem:[%s10 + $0x18] sm:$0xff]
      %v4634 = vld [vmem:[%s10 + $0x20] sm:$0xff]
      %v4635 = vld [vmem:[%s10 + $0x28] sm:$0xff]
      %v4636 = vld [vmem:[%s10 + $0x30] sm:$0xff]
      %v4637 = vld [vmem:[%s10 + $0x38] sm:$0xff]
      %v4638 = vld [vmem:[%s10 + $0x40] sm:$0xff]
      %v4639 = vld [vmem:[%s10 + $0x48] sm:$0xff]
      %v4640 = vld [vmem:[%s10 + $0x50] sm:$0xff]
      %v4641 = vld [vmem:[%s10 + $0x58] sm:$0xff]
      %v4642 = vld [vmem:[%s10 + $0x60] sm:$0xff]
      %v4643 = vld [vmem:[%s10 + $0x68] sm:$0xff]
      %v4644 = vld [vmem:[%s10 + $0x70] sm:$0xff]
      %v4645 = vld [vmem:[%s10 + $0x78] sm:$0xff]
      %v4646 = vld [vmem:[%s10 + $0x80] sm:$0xff]
      %v4647 = vld [vmem:[%s10 + $0x88] sm:$0xff]
      %v4648 = vld [vmem:[%s10 + $0x90] sm:$0xff]
      %v4649 = vld [vmem:[%s10 + $0x98] sm:$0xff]
      %v4650 = vld [vmem:[%s10 + $0xa0] sm:$0xff]
      %v4651 = vld [vmem:[%s10 + $0xa8] sm:$0xff]
      %v4652 = vld [vmem:[%s10 + $0xb0] sm:$0xff]
      %v4653 = vld [vmem:[%s10 + $0xb8] sm:$0xff]
      %v4654 = vld [vmem:[%s10 + $0xc0] sm:$0xff]
      %v4655 = vld [vmem:[%s10 + $0xc8] sm:$0xff]
      %v4656 = vld [vmem:[%s10 + $0xd0] sm:$0xff]
      %v4657 = vld [vmem:[%s10 + $0xd8] sm:$0xff]
      %v4658 = vld [vmem:[%s10 + $0xe0] sm:$0xff]
      %v4659 = vld [vmem:[%s10 + $0xe8] sm:$0xff]
      %v4660 = vld [vmem:[%s10 + $0xf0] sm:$0xff]
      %v4661 = vld [vmem:[%s10 + $0xf8] sm:$0xff]
      %v4662 = vld [vmem:[%s10 + $0x100] sm:$0xff]
      %v4663 = vld [vmem:[%s10 + $0x108] sm:$0xff]
      %v4664 = vld [vmem:[%s10 + $0x110] sm:$0xff]
      %v4665 = vld [vmem:[%s10 + $0x118] sm:$0xff]
      %v4666 = vld [vmem:[%s10 + $0x120] sm:$0xff]
      %v4667 = vld [vmem:[%s10 + $0x128] sm:$0xff]
      %v4668 = vld [vmem:[%s10 + $0x130] sm:$0xff]
      %v4669 = vld [vmem:[%s10 + $0x138] sm:$0xff]
      %v4670 = vld [vmem:[%s10 + $0x140] sm:$0xff]
      %v4671 = vld [vmem:[%s10 + $0x148] sm:$0xff]
      %s4672 = scalar_lea.vmem %s10, 336
      %v4673 = vld [vmem:[%s4672] sm:$0xff]
      %v4674 = vld [vmem:[%s4672 + $0x8] sm:$0xff]
      %v4675 = vld [vmem:[%s4672 + $0x10] sm:$0xff]
      %v4676 = vld [vmem:[%s4672 + $0x18] sm:$0xff]
      %v4677 = vld [vmem:[%s4672 + $0x20] sm:$0xff]
      %v4678 = vld [vmem:[%s4672 + $0x28] sm:$0xff]
      %v4679 = vld [vmem:[%s4672 + $0x30] sm:$0xff]
      %v4680 = vld [vmem:[%s4672 + $0x38] sm:$0xff]
      %v4681 = vld [vmem:[%s4672 + $0x40] sm:$0xff]
      %v4682 = vld [vmem:[%s4672 + $0x48] sm:$0xff]
      %v4683 = vld [vmem:[%s4672 + $0x50] sm:$0xff]
      %v4684 = vld [vmem:[%s4672 + $0x58] sm:$0xff]
      %v4685 = vld [vmem:[%s4672 + $0x60] sm:$0xff]
      %v4686 = vld [vmem:[%s4672 + $0x68] sm:$0xff]
      %v4687 = vld [vmem:[%s4672 + $0x70] sm:$0xff]
      %v4688 = vld [vmem:[%s4672 + $0x78] sm:$0xff]
      %v4689 = vld [vmem:[%s4672 + $0x80] sm:$0xff]
      %v4690 = vld [vmem:[%s4672 + $0x88] sm:$0xff]
      %v4691 = vld [vmem:[%s4672 + $0x90] sm:$0xff]
      %v4692 = vld [vmem:[%s4672 + $0x98] sm:$0xff]
      %v4693 = vld [vmem:[%s4672 + $0xa0] sm:$0xff]
      %v4694 = vld [vmem:[%s4672 + $0xa8] sm:$0xff]
      %v4695 = vld [vmem:[%s4672 + $0xb0] sm:$0xff]
      %v4696 = vld [vmem:[%s4672 + $0xb8] sm:$0xff]
      %v4697 = vld [vmem:[%s4672 + $0xc0] sm:$0xff]
      %v4698 = vld [vmem:[%s4672 + $0xc8] sm:$0xff]
      %v4699 = vld [vmem:[%s4672 + $0xd0] sm:$0xff]
      %v4700 = vld [vmem:[%s4672 + $0xd8] sm:$0xff]
      %v4701 = vld [vmem:[%s4672 + $0xe0] sm:$0xff]
      %v4702 = vld [vmem:[%s4672 + $0xe8] sm:$0xff]
      %v4703 = vld [vmem:[%s4672 + $0xf0] sm:$0xff]
      %v4704 = vld [vmem:[%s4672 + $0xf8] sm:$0xff]
      %v4705 = vld [vmem:[%s4672 + $0x100] sm:$0xff]
      %v4706 = vld [vmem:[%s4672 + $0x108] sm:$0xff]
      %v4707 = vld [vmem:[%s4672 + $0x110] sm:$0xff]
      %v4708 = vld [vmem:[%s4672 + $0x118] sm:$0xff]
      %v4709 = vld [vmem:[%s4672 + $0x120] sm:$0xff]
      %v4710 = vld [vmem:[%s4672 + $0x128] sm:$0xff]
      %v4711 = vld [vmem:[%s4672 + $0x130] sm:$0xff]
      %v4712 = vld [vmem:[%s4672 + $0x138] sm:$0xff]
      %v4713 = vld [vmem:[%s4672 + $0x140] sm:$0xff]
      %v4714 = vld [vmem:[%s4672 + $0x148] sm:$0xff]
      %v4727 = vrot.slane %v4561, 1
      %v4728 = vrot.slane %v4564, 1
      %v4729 = vsel %vm1130, %v4727, %v4728
      %v4730 = vrot.slane %v4590, 1
      %v4731 = vrot.slane %v4593, 1
      %v4732 = vsel %vm1130, %v4730, %v4731
      %v4733 = vrot.slane %v4619, 1
      %v4734 = vrot.slane %v4622, 1
      %v4735 = vsel %vm1130, %v4733, %v4734
      %v4736 = vrot.slane %v4567, 1
      %v4737 = vsel %vm1130, %v4728, %v4736
      %v4738 = vrot.slane %v4596, 1
      %v4739 = vsel %vm1130, %v4731, %v4738
      %v4740 = vrot.slane %v4625, 1
      %v4741 = vsel %vm1130, %v4734, %v4740
      %v4742 = vrot.slane %v4570, 1
      %v4743 = vsel %vm1130, %v4736, %v4742
      %v4744 = vrot.slane %v4599, 1
      %v4745 = vsel %vm1130, %v4738, %v4744
      %v4746 = vrot.slane %v4628, 1
      %v4747 = vsel %vm1130, %v4740, %v4746
      %vm4756 = vcmask 654336
      %v4757 = vsel %vm4756, %v4735, 0
      %v4759 = vsel %vm4756, %v4741, 0
      %v4761 = vsel %vm4756, %v4747, 0
      %v4763 = vsel %vm4756, %v4746, 0
      %4765 = vmatpush.msra.mxu0 %v4688
      %4766 = vmatpush.msra.mxu0 %v4687
      %4767 = vmatpush.msra.mxu0 %v4686
      %4768 = vmatpush.msra.mxu0 %v4685
      %4769 = vmatpush.msra.mxu0 %v4684
      %4770 = vmatpush.msra.mxu0 %v4683
      %4771 = vmatpush.msra.mxu0 %v4682
      %4772 = vmatpush.msra.mxu0 %v4681
      %4773 = vmatpush.msra.mxu0 %v4680
      %4774 = vmatpush.msra.mxu0 %v4679
      %4775 = vmatpush.msra.mxu0 %v4678
      %4776 = vmatpush.msra.mxu0 %v4677
      %4777 = vmatpush.msra.mxu0 %v4676
      %4778 = vmatpush.msra.mxu0 %v4675
      %4779 = vmatpush.msra.mxu0 %v4674
      %4780 = vmatpush.msra.mxu0 %v4673
      %4781 = vmatmul.f32.gmra.mxu0 %v4729
      %v4782 = vpop.f32.mrf.mxu0
      %v4783 = vadd.f32 0.0, %v4782
      %4784 = vmatmul.f32.gmra.mxu0 %v4737
      %v4785 = vpop.f32.mrf.mxu0
      %v4786 = vadd.f32 0.0, %v4785
      %4787 = vmatmul.f32.gmra.mxu0 %v4743
      %v4788 = vpop.f32.mrf.mxu0
      %v4789 = vadd.f32 0.0, %v4788
      %4790 = vmatmul.f32.gmra.mxu0 %v4742
      %v4791 = vpop.f32.mrf.mxu0
      %v4792 = vadd.f32 0.0, %v4791
      %4793 = vdwg.mxu0
      %4794 = vmatpush.msra.mxu0 %v4704
      %4795 = vmatpush.msra.mxu0 %v4703
      %4796 = vmatpush.msra.mxu0 %v4702
      %4797 = vmatpush.msra.mxu0 %v4701
      %4798 = vmatpush.msra.mxu0 %v4700
      %4799 = vmatpush.msra.mxu0 %v4699
      %4800 = vmatpush.msra.mxu0 %v4698
      %4801 = vmatpush.msra.mxu0 %v4697
      %4802 = vmatpush.msra.mxu0 %v4696
      %4803 = vmatpush.msra.mxu0 %v4695
      %4804 = vmatpush.msra.mxu0 %v4694
      %4805 = vmatpush.msra.mxu0 %v4693
      %4806 = vmatpush.msra.mxu0 %v4692
      %4807 = vmatpush.msra.mxu0 %v4691
      %4808 = vmatpush.msra.mxu0 %v4690
      %4809 = vmatpush.msra.mxu0 %v4689
      %4810 = vmatmul.f32.gmra.mxu0 %v4732
      %v4811 = vpop.f32.mrf.mxu0
      %v4812 = vadd.f32 %v4783, %v4811
      %4813 = vmatmul.f32.gmra.mxu0 %v4739
      %v4814 = vpop.f32.mrf.mxu0
      %v4815 = vadd.f32 %v4786, %v4814
      %4816 = vmatmul.f32.gmra.mxu0 %v4745
      %v4817 = vpop.f32.mrf.mxu0
      %v4818 = vadd.f32 %v4789, %v4817
      %4819 = vmatmul.f32.gmra.mxu0 %v4744
      %v4820 = vpop.f32.mrf.mxu0
      %v4821 = vadd.f32 %v4792, %v4820
      %4822 = vdwg.mxu0
      %4823 = vmatpush.msra.mxu0 0.0
      %4824 = vmatpush.msra.mxu0 0.0
      %4825 = vmatpush.msra.mxu0 0.0
      %4826 = vmatpush.msra.mxu0 0.0
      %4827 = vmatpush.msra.mxu0 0.0
      %4828 = vmatpush.msra.mxu0 0.0
      %4829 = vmatpush.msra.mxu0 %v4714
      %4830 = vmatpush.msra.mxu0 %v4713
      %4831 = vmatpush.msra.mxu0 %v4712
      %4832 = vmatpush.msra.mxu0 %v4711
      %4833 = vmatpush.msra.mxu0 %v4710
      %4834 = vmatpush.msra.mxu0 %v4709
      %4835 = vmatpush.msra.mxu0 %v4708
      %4836 = vmatpush.msra.mxu0 %v4707
      %4837 = vmatpush.msra.mxu0 %v4706
      %4838 = vmatpush.msra.mxu0 %v4705
      %4839 = vmatmul.f32.gmra.mxu0 %v4757
      %v4840 = vpop.f32.mrf.mxu0
      %v4841 = vadd.f32 %v4812, %v4840
      %4842 = vmatmul.f32.gmra.mxu0 %v4759
      %v4843 = vpop.f32.mrf.mxu0
      %v4844 = vadd.f32 %v4815, %v4843
      %4845 = vmatmul.f32.gmra.mxu0 %v4761
      %v4846 = vpop.f32.mrf.mxu0
      %v4847 = vadd.f32 %v4818, %v4846
      %4848 = vmatmul.f32.gmra.mxu0 %v4763
      %v4849 = vpop.f32.mrf.mxu0
      %v4850 = vadd.f32 %v4821, %v4849
      %4851 = vdwg.mxu0
      %v4852 = vsel %vm4756, %v4619, 0
      %v4854 = vsel %vm4756, %v4622, 0
      %v4856 = vsel %vm4756, %v4625, 0
      %v4858 = vsel %vm4756, %v4628, 0
      %4860 = vmatpush.msra.mxu0 %v4645
      %4861 = vmatpush.msra.mxu0 %v4644
      %4862 = vmatpush.msra.mxu0 %v4643
      %4863 = vmatpush.msra.mxu0 %v4642
      %4864 = vmatpush.msra.mxu0 %v4641
      %4865 = vmatpush.msra.mxu0 %v4640
      %4866 = vmatpush.msra.mxu0 %v4639
      %4867 = vmatpush.msra.mxu0 %v4638
      %4868 = vmatpush.msra.mxu0 %v4637
      %4869 = vmatpush.msra.mxu0 %v4636
      %4870 = vmatpush.msra.mxu0 %v4635
      %4871 = vmatpush.msra.mxu0 %v4634
      %4872 = vmatpush.msra.mxu0 %v4633
      %4873 = vmatpush.msra.mxu0 %v4632
      %4874 = vmatpush.msra.mxu0 %v4631
      %4875 = vmatpush.msra.mxu0 %v4630
      %4876 = vmatmul.f32.gmra.mxu0 %v4561
      %v4877 = vpop.f32.mrf.mxu0
      %v4878 = vadd.f32 %v4841, %v4877
      %4879 = vmatmul.f32.gmra.mxu0 %v4564
      %v4880 = vpop.f32.mrf.mxu0
      %v4881 = vadd.f32 %v4844, %v4880
      %4882 = vmatmul.f32.gmra.mxu0 %v4567
      %v4883 = vpop.f32.mrf.mxu0
      %v4884 = vadd.f32 %v4847, %v4883
      %4885 = vmatmul.f32.gmra.mxu0 %v4570
      %v4886 = vpop.f32.mrf.mxu0
      %v4887 = vadd.f32 %v4850, %v4886
      %4888 = vdwg.mxu0
      %4889 = vmatpush.msra.mxu0 %v4661
      %4890 = vmatpush.msra.mxu0 %v4660
      %4891 = vmatpush.msra.mxu0 %v4659
      %4892 = vmatpush.msra.mxu0 %v4658
      %4893 = vmatpush.msra.mxu0 %v4657
      %4894 = vmatpush.msra.mxu0 %v4656
      %4895 = vmatpush.msra.mxu0 %v4655
      %4896 = vmatpush.msra.mxu0 %v4654
      %4897 = vmatpush.msra.mxu0 %v4653
      %4898 = vmatpush.msra.mxu0 %v4652
      %4899 = vmatpush.msra.mxu0 %v4651
      %4900 = vmatpush.msra.mxu0 %v4650
      %4901 = vmatpush.msra.mxu0 %v4649
      %4902 = vmatpush.msra.mxu0 %v4648
      %4903 = vmatpush.msra.mxu0 %v4647
      %4904 = vmatpush.msra.mxu0 %v4646
      %4905 = vmatmul.f32.gmra.mxu0 %v4590
      %v4906 = vpop.f32.mrf.mxu0
      %v4907 = vadd.f32 %v4878, %v4906
      %4908 = vmatmul.f32.gmra.mxu0 %v4593
      %v4909 = vpop.f32.mrf.mxu0
      %v4910 = vadd.f32 %v4881, %v4909
      %4911 = vmatmul.f32.gmra.mxu0 %v4596
      %v4912 = vpop.f32.mrf.mxu0
      %v4913 = vadd.f32 %v4884, %v4912
      %4914 = vmatmul.f32.gmra.mxu0 %v4599
      %v4915 = vpop.f32.mrf.mxu0
      %v4916 = vadd.f32 %v4887, %v4915
      %4917 = vdwg.mxu0
      %4918 = vmatpush.msra.mxu0 0.0
      %4919 = vmatpush.msra.mxu0 0.0
      %4920 = vmatpush.msra.mxu0 0.0
      %4921 = vmatpush.msra.mxu0 0.0
      %4922 = vmatpush.msra.mxu0 0.0
      %4923 = vmatpush.msra.mxu0 0.0
      %4924 = vmatpush.msra.mxu0 %v4671
      %4925 = vmatpush.msra.mxu0 %v4670
      %4926 = vmatpush.msra.mxu0 %v4669
      %4927 = vmatpush.msra.mxu0 %v4668
      %4928 = vmatpush.msra.mxu0 %v4667
      %4929 = vmatpush.msra.mxu0 %v4666
      %4930 = vmatpush.msra.mxu0 %v4665
      %4931 = vmatpush.msra.mxu0 %v4664
      %4932 = vmatpush.msra.mxu0 %v4663
      %4933 = vmatpush.msra.mxu0 %v4662
      %4934 = vmatmul.f32.gmra.mxu0 %v4852
      %v4935 = vpop.f32.mrf.mxu0
      %v4936 = vadd.f32 %v4907, %v4935
      %4937 = vmatmul.f32.gmra.mxu0 %v4854
      %v4938 = vpop.f32.mrf.mxu0
      %v4939 = vadd.f32 %v4910, %v4938
      %4940 = vmatmul.f32.gmra.mxu0 %v4856
      %v4941 = vpop.f32.mrf.mxu0
      %v4942 = vadd.f32 %v4913, %v4941
      %4943 = vmatmul.f32.gmra.mxu0 %v4858
      %v4944 = vpop.f32.mrf.mxu0
      %v4945 = vadd.f32 %v4916, %v4944
      %4946 = vdwg.mxu0
      %s4947 = scalar_lea.vmem %s10, 672
      %v4948 = vld [vmem:[%s4947] sm:$0xff]
      %v4949 = vld [vmem:[%s4947 + $0x8] sm:$0xff]
      %v4950 = vld [vmem:[%s4947 + $0x10] sm:$0xff]
      %v4951 = vld [vmem:[%s4947 + $0x18] sm:$0xff]
      %v4952 = vld [vmem:[%s4947 + $0x20] sm:$0xff]
      %v4953 = vld [vmem:[%s4947 + $0x28] sm:$0xff]
      %v4954 = vld [vmem:[%s4947 + $0x30] sm:$0xff]
      %v4955 = vld [vmem:[%s4947 + $0x38] sm:$0xff]
      %v4956 = vld [vmem:[%s4947 + $0x40] sm:$0xff]
      %v4957 = vld [vmem:[%s4947 + $0x48] sm:$0xff]
      %v4958 = vld [vmem:[%s4947 + $0x50] sm:$0xff]
      %v4959 = vld [vmem:[%s4947 + $0x58] sm:$0xff]
      %v4960 = vld [vmem:[%s4947 + $0x60] sm:$0xff]
      %v4961 = vld [vmem:[%s4947 + $0x68] sm:$0xff]
      %v4962 = vld [vmem:[%s4947 + $0x70] sm:$0xff]
      %v4963 = vld [vmem:[%s4947 + $0x78] sm:$0xff]
      %v4964 = vld [vmem:[%s4947 + $0x80] sm:$0xff]
      %v4965 = vld [vmem:[%s4947 + $0x88] sm:$0xff]
      %v4966 = vld [vmem:[%s4947 + $0x90] sm:$0xff]
      %v4967 = vld [vmem:[%s4947 + $0x98] sm:$0xff]
      %v4968 = vld [vmem:[%s4947 + $0xa0] sm:$0xff]
      %v4969 = vld [vmem:[%s4947 + $0xa8] sm:$0xff]
      %v4970 = vld [vmem:[%s4947 + $0xb0] sm:$0xff]
      %v4971 = vld [vmem:[%s4947 + $0xb8] sm:$0xff]
      %v4972 = vld [vmem:[%s4947 + $0xc0] sm:$0xff]
      %v4973 = vld [vmem:[%s4947 + $0xc8] sm:$0xff]
      %v4974 = vld [vmem:[%s4947 + $0xd0] sm:$0xff]
      %v4975 = vld [vmem:[%s4947 + $0xd8] sm:$0xff]
      %v4976 = vld [vmem:[%s4947 + $0xe0] sm:$0xff]
      %v4977 = vld [vmem:[%s4947 + $0xe8] sm:$0xff]
      %v4978 = vld [vmem:[%s4947 + $0xf0] sm:$0xff]
      %v4979 = vld [vmem:[%s4947 + $0xf8] sm:$0xff]
      %v4980 = vld [vmem:[%s4947 + $0x100] sm:$0xff]
      %v4981 = vld [vmem:[%s4947 + $0x108] sm:$0xff]
      %v4982 = vld [vmem:[%s4947 + $0x110] sm:$0xff]
      %v4983 = vld [vmem:[%s4947 + $0x118] sm:$0xff]
      %v4984 = vld [vmem:[%s4947 + $0x120] sm:$0xff]
      %v4985 = vld [vmem:[%s4947 + $0x128] sm:$0xff]
      %v4986 = vld [vmem:[%s4947 + $0x130] sm:$0xff]
      %v4987 = vld [vmem:[%s4947 + $0x138] sm:$0xff]
      %v4988 = vld [vmem:[%s4947 + $0x140] sm:$0xff]
      %v4989 = vld [vmem:[%s4947 + $0x148] sm:$0xff]
      %v4990 = vrot.slane %v4561, 2
      %v4991 = vrot.slane %v4564, 2
      %v4992 = vsel %vm1648, %v4990, %v4991
      %v4993 = vrot.slane %v4590, 2
      %v4994 = vrot.slane %v4593, 2
      %v4995 = vsel %vm1648, %v4993, %v4994
      %v4996 = vrot.slane %v4619, 2
      %v4997 = vrot.slane %v4622, 2
      %v4998 = vsel %vm1648, %v4996, %v4997
      %v4999 = vrot.slane %v4567, 2
      %v5000 = vsel %vm1648, %v4991, %v4999
      %v5001 = vrot.slane %v4596, 2
      %v5002 = vsel %vm1648, %v4994, %v5001
      %v5003 = vrot.slane %v4625, 2
      %v5004 = vsel %vm1648, %v4997, %v5003
      %v5005 = vrot.slane %v4570, 2
      %v5006 = vsel %vm1648, %v4999, %v5005
      %v5007 = vrot.slane %v4599, 2
      %v5008 = vsel %vm1648, %v5001, %v5007
      %v5009 = vrot.slane %v4628, 2
      %v5010 = vsel %vm1648, %v5003, %v5009
      %v5019 = vsel %vm4756, %v4998, 0
      %v5021 = vsel %vm4756, %v5004, 0
      %v5023 = vsel %vm4756, %v5010, 0
      %v5025 = vsel %vm4756, %v5009, 0
      %5027 = vmatpush.msra.mxu0 %v4963
      %5028 = vmatpush.msra.mxu0 %v4962
      %5029 = vmatpush.msra.mxu0 %v4961
      %5030 = vmatpush.msra.mxu0 %v4960
      %5031 = vmatpush.msra.mxu0 %v4959
      %5032 = vmatpush.msra.mxu0 %v4958
      %5033 = vmatpush.msra.mxu0 %v4957
      %5034 = vmatpush.msra.mxu0 %v4956
      %5035 = vmatpush.msra.mxu0 %v4955
      %5036 = vmatpush.msra.mxu0 %v4954
      %5037 = vmatpush.msra.mxu0 %v4953
      %5038 = vmatpush.msra.mxu0 %v4952
      %5039 = vmatpush.msra.mxu0 %v4951
      %5040 = vmatpush.msra.mxu0 %v4950
      %5041 = vmatpush.msra.mxu0 %v4949
      %5042 = vmatpush.msra.mxu0 %v4948
      %5043 = vmatmul.f32.gmra.mxu0 %v4992
      %v5044 = vpop.f32.mrf.mxu0
      %v5045 = vadd.f32 0.0, %v5044
      %5046 = vmatmul.f32.gmra.mxu0 %v5000
      %v5047 = vpop.f32.mrf.mxu0
      %v5048 = vadd.f32 0.0, %v5047
      %5049 = vmatmul.f32.gmra.mxu0 %v5006
      %v5050 = vpop.f32.mrf.mxu0
      %v5051 = vadd.f32 0.0, %v5050
      %5052 = vmatmul.f32.gmra.mxu0 %v5005
      %v5053 = vpop.f32.mrf.mxu0
      %v5054 = vadd.f32 0.0, %v5053
      %5055 = vdwg.mxu0
      %5056 = vmatpush.msra.mxu0 %v4979
      %5057 = vmatpush.msra.mxu0 %v4978
      %5058 = vmatpush.msra.mxu0 %v4977
      %5059 = vmatpush.msra.mxu0 %v4976
      %5060 = vmatpush.msra.mxu0 %v4975
      %5061 = vmatpush.msra.mxu0 %v4974
      %5062 = vmatpush.msra.mxu0 %v4973
      %5063 = vmatpush.msra.mxu0 %v4972
      %5064 = vmatpush.msra.mxu0 %v4971
      %5065 = vmatpush.msra.mxu0 %v4970
      %5066 = vmatpush.msra.mxu0 %v4969
      %5067 = vmatpush.msra.mxu0 %v4968
      %5068 = vmatpush.msra.mxu0 %v4967
      %5069 = vmatpush.msra.mxu0 %v4966
      %5070 = vmatpush.msra.mxu0 %v4965
      %5071 = vmatpush.msra.mxu0 %v4964
      %5072 = vmatmul.f32.gmra.mxu0 %v4995
      %v5073 = vpop.f32.mrf.mxu0
      %v5074 = vadd.f32 %v5045, %v5073
      %5075 = vmatmul.f32.gmra.mxu0 %v5002
      %v5076 = vpop.f32.mrf.mxu0
      %v5077 = vadd.f32 %v5048, %v5076
      %5078 = vmatmul.f32.gmra.mxu0 %v5008
      %v5079 = vpop.f32.mrf.mxu0
      %v5080 = vadd.f32 %v5051, %v5079
      %5081 = vmatmul.f32.gmra.mxu0 %v5007
      %v5082 = vpop.f32.mrf.mxu0
      %v5083 = vadd.f32 %v5054, %v5082
      %5084 = vdwg.mxu0
      %5085 = vmatpush.msra.mxu0 0.0
      %5086 = vmatpush.msra.mxu0 0.0
      %5087 = vmatpush.msra.mxu0 0.0
      %5088 = vmatpush.msra.mxu0 0.0
      %5089 = vmatpush.msra.mxu0 0.0
      %5090 = vmatpush.msra.mxu0 0.0
      %5091 = vmatpush.msra.mxu0 %v4989
      %5092 = vmatpush.msra.mxu0 %v4988
      %5093 = vmatpush.msra.mxu0 %v4987
      %5094 = vmatpush.msra.mxu0 %v4986
      %5095 = vmatpush.msra.mxu0 %v4985
      %5096 = vmatpush.msra.mxu0 %v4984
      %5097 = vmatpush.msra.mxu0 %v4983
      %5098 = vmatpush.msra.mxu0 %v4982
      %5099 = vmatpush.msra.mxu0 %v4981
      %5100 = vmatpush.msra.mxu0 %v4980
      %5101 = vmatmul.f32.gmra.mxu0 %v5019
      %v5102 = vpop.f32.mrf.mxu0
      %v5103 = vadd.f32 %v5074, %v5102
      %5104 = vmatmul.f32.gmra.mxu0 %v5021
      %v5105 = vpop.f32.mrf.mxu0
      %v5106 = vadd.f32 %v5077, %v5105
      %5107 = vmatmul.f32.gmra.mxu0 %v5023
      %v5108 = vpop.f32.mrf.mxu0
      %v5109 = vadd.f32 %v5080, %v5108
      %5110 = vmatmul.f32.gmra.mxu0 %v5025
      %v5111 = vpop.f32.mrf.mxu0
      %v5112 = vadd.f32 %v5083, %v5111
      %5113 = vdwg.mxu0
      %v5114 = vadd.f32 %v4936, %v5103
      %v5115 = vadd.f32 %v4939, %v5106
      %v5116 = vadd.f32 %v4942, %v5109
      %v5117 = vadd.f32 %v4945, %v5112
      %s5118 = scalar_lea.vmem %s10, 1008
      %v5119 = vld [vmem:[%s5118] sm:$0xff]
      %v5120 = vld [vmem:[%s5118 + $0x8] sm:$0xff]
      %v5121 = vld [vmem:[%s5118 + $0x10] sm:$0xff]
      %v5122 = vld [vmem:[%s5118 + $0x18] sm:$0xff]
      %v5123 = vld [vmem:[%s5118 + $0x20] sm:$0xff]
      %v5124 = vld [vmem:[%s5118 + $0x28] sm:$0xff]
      %v5125 = vld [vmem:[%s5118 + $0x30] sm:$0xff]
      %v5126 = vld [vmem:[%s5118 + $0x38] sm:$0xff]
      %v5127 = vld [vmem:[%s5118 + $0x40] sm:$0xff]
      %v5128 = vld [vmem:[%s5118 + $0x48] sm:$0xff]
      %v5129 = vld [vmem:[%s5118 + $0x50] sm:$0xff]
      %v5130 = vld [vmem:[%s5118 + $0x58] sm:$0xff]
      %v5131 = vld [vmem:[%s5118 + $0x60] sm:$0xff]
      %v5132 = vld [vmem:[%s5118 + $0x68] sm:$0xff]
      %v5133 = vld [vmem:[%s5118 + $0x70] sm:$0xff]
      %v5134 = vld [vmem:[%s5118 + $0x78] sm:$0xff]
      %v5135 = vld [vmem:[%s5118 + $0x80] sm:$0xff]
      %v5136 = vld [vmem:[%s5118 + $0x88] sm:$0xff]
      %v5137 = vld [vmem:[%s5118 + $0x90] sm:$0xff]
      %v5138 = vld [vmem:[%s5118 + $0x98] sm:$0xff]
      %v5139 = vld [vmem:[%s5118 + $0xa0] sm:$0xff]
      %v5140 = vld [vmem:[%s5118 + $0xa8] sm:$0xff]
      %v5141 = vld [vmem:[%s5118 + $0xb0] sm:$0xff]
      %v5142 = vld [vmem:[%s5118 + $0xb8] sm:$0xff]
      %v5143 = vld [vmem:[%s5118 + $0xc0] sm:$0xff]
      %v5144 = vld [vmem:[%s5118 + $0xc8] sm:$0xff]
      %v5145 = vld [vmem:[%s5118 + $0xd0] sm:$0xff]
      %v5146 = vld [vmem:[%s5118 + $0xd8] sm:$0xff]
      %v5147 = vld [vmem:[%s5118 + $0xe0] sm:$0xff]
      %v5148 = vld [vmem:[%s5118 + $0xe8] sm:$0xff]
      %v5149 = vld [vmem:[%s5118 + $0xf0] sm:$0xff]
      %v5150 = vld [vmem:[%s5118 + $0xf8] sm:$0xff]
      %v5151 = vld [vmem:[%s5118 + $0x100] sm:$0xff]
      %v5152 = vld [vmem:[%s5118 + $0x108] sm:$0xff]
      %v5153 = vld [vmem:[%s5118 + $0x110] sm:$0xff]
      %v5154 = vld [vmem:[%s5118 + $0x118] sm:$0xff]
      %v5155 = vld [vmem:[%s5118 + $0x120] sm:$0xff]
      %v5156 = vld [vmem:[%s5118 + $0x128] sm:$0xff]
      %v5157 = vld [vmem:[%s5118 + $0x130] sm:$0xff]
      %v5158 = vld [vmem:[%s5118 + $0x138] sm:$0xff]
      %v5159 = vld [vmem:[%s5118 + $0x140] sm:$0xff]
      %v5160 = vld [vmem:[%s5118 + $0x148] sm:$0xff]
      %v5161 = vrot.slane %v4561, 3
      %v5162 = vrot.slane %v4564, 3
      %v5163 = vsel %vm1989, %v5161, %v5162
      %v5164 = vrot.slane %v4590, 3
      %v5165 = vrot.slane %v4593, 3
      %v5166 = vsel %vm1989, %v5164, %v5165
      %v5167 = vrot.slane %v4619, 3
      %v5168 = vrot.slane %v4622, 3
      %v5169 = vsel %vm1989, %v5167, %v5168
      %v5170 = vrot.slane %v4567, 3
      %v5171 = vsel %vm1989, %v5162, %v5170
      %v5172 = vrot.slane %v4596, 3
      %v5173 = vsel %vm1989, %v5165, %v5172
      %v5174 = vrot.slane %v4625, 3
      %v5175 = vsel %vm1989, %v5168, %v5174
      %v5176 = vrot.slane %v4570, 3
      %v5177 = vsel %vm1989, %v5170, %v5176
      %v5178 = vrot.slane %v4599, 3
      %v5179 = vsel %vm1989, %v5172, %v5178
      %v5180 = vrot.slane %v4628, 3
      %v5181 = vsel %vm1989, %v5174, %v5180
      %v5190 = vsel %vm4756, %v5169, 0
      %v5192 = vsel %vm4756, %v5175, 0
      %v5194 = vsel %vm4756, %v5181, 0
      %v5196 = vsel %vm4756, %v5180, 0
      %5198 = vmatpush.msra.mxu0 %v5134
      %5199 = vmatpush.msra.mxu0 %v5133
      %5200 = vmatpush.msra.mxu0 %v5132
      %5201 = vmatpush.msra.mxu0 %v5131
      %5202 = vmatpush.msra.mxu0 %v5130
      %5203 = vmatpush.msra.mxu0 %v5129
      %5204 = vmatpush.msra.mxu0 %v5128
      %5205 = vmatpush.msra.mxu0 %v5127
      %5206 = vmatpush.msra.mxu0 %v5126
      %5207 = vmatpush.msra.mxu0 %v5125
      %5208 = vmatpush.msra.mxu0 %v5124
      %5209 = vmatpush.msra.mxu0 %v5123
      %5210 = vmatpush.msra.mxu0 %v5122
      %5211 = vmatpush.msra.mxu0 %v5121
      %5212 = vmatpush.msra.mxu0 %v5120
      %5213 = vmatpush.msra.mxu0 %v5119
      %5214 = vmatmul.f32.gmra.mxu0 %v5163
      %v5215 = vpop.f32.mrf.mxu0
      %v5216 = vadd.f32 0.0, %v5215
      %5217 = vmatmul.f32.gmra.mxu0 %v5171
      %v5218 = vpop.f32.mrf.mxu0
      %v5219 = vadd.f32 0.0, %v5218
      %5220 = vmatmul.f32.gmra.mxu0 %v5177
      %v5221 = vpop.f32.mrf.mxu0
      %v5222 = vadd.f32 0.0, %v5221
      %5223 = vmatmul.f32.gmra.mxu0 %v5176
      %v5224 = vpop.f32.mrf.mxu0
      %v5225 = vadd.f32 0.0, %v5224
      %5226 = vdwg.mxu0
      %5227 = vmatpush.msra.mxu0 %v5150
      %5228 = vmatpush.msra.mxu0 %v5149
      %5229 = vmatpush.msra.mxu0 %v5148
      %5230 = vmatpush.msra.mxu0 %v5147
      %5231 = vmatpush.msra.mxu0 %v5146
      %5232 = vmatpush.msra.mxu0 %v5145
      %5233 = vmatpush.msra.mxu0 %v5144
      %5234 = vmatpush.msra.mxu0 %v5143
      %5235 = vmatpush.msra.mxu0 %v5142
      %5236 = vmatpush.msra.mxu0 %v5141
      %5237 = vmatpush.msra.mxu0 %v5140
      %5238 = vmatpush.msra.mxu0 %v5139
      %5239 = vmatpush.msra.mxu0 %v5138
      %5240 = vmatpush.msra.mxu0 %v5137
      %5241 = vmatpush.msra.mxu0 %v5136
      %5242 = vmatpush.msra.mxu0 %v5135
      %5243 = vmatmul.f32.gmra.mxu0 %v5166
      %v5244 = vpop.f32.mrf.mxu0
      %v5245 = vadd.f32 %v5216, %v5244
      %5246 = vmatmul.f32.gmra.mxu0 %v5173
      %v5247 = vpop.f32.mrf.mxu0
      %v5248 = vadd.f32 %v5219, %v5247
      %5249 = vmatmul.f32.gmra.mxu0 %v5179
      %v5250 = vpop.f32.mrf.mxu0
      %v5251 = vadd.f32 %v5222, %v5250
      %5252 = vmatmul.f32.gmra.mxu0 %v5178
      %v5253 = vpop.f32.mrf.mxu0
      %v5254 = vadd.f32 %v5225, %v5253
      %5255 = vdwg.mxu0
      %5256 = vmatpush.msra.mxu0 0.0
      %5257 = vmatpush.msra.mxu0 0.0
      %5258 = vmatpush.msra.mxu0 0.0
      %5259 = vmatpush.msra.mxu0 0.0
      %5260 = vmatpush.msra.mxu0 0.0
      %5261 = vmatpush.msra.mxu0 0.0
      %5262 = vmatpush.msra.mxu0 %v5160
      %5263 = vmatpush.msra.mxu0 %v5159
      %5264 = vmatpush.msra.mxu0 %v5158
      %5265 = vmatpush.msra.mxu0 %v5157
      %5266 = vmatpush.msra.mxu0 %v5156
      %5267 = vmatpush.msra.mxu0 %v5155
      %5268 = vmatpush.msra.mxu0 %v5154
      %5269 = vmatpush.msra.mxu0 %v5153
      %5270 = vmatpush.msra.mxu0 %v5152
      %5271 = vmatpush.msra.mxu0 %v5151
      %5272 = vmatmul.f32.gmra.mxu0 %v5190
      %v5273 = vpop.f32.mrf.mxu0
      %v5274 = vadd.f32 %v5245, %v5273
      %5275 = vmatmul.f32.gmra.mxu0 %v5192
      %v5276 = vpop.f32.mrf.mxu0
      %v5277 = vadd.f32 %v5248, %v5276
      %5278 = vmatmul.f32.gmra.mxu0 %v5194
      %v5279 = vpop.f32.mrf.mxu0
      %v5280 = vadd.f32 %v5251, %v5279
      %5281 = vmatmul.f32.gmra.mxu0 %v5196
      %v5282 = vpop.f32.mrf.mxu0
      %v5283 = vadd.f32 %v5254, %v5282
      %5284 = vdwg.mxu0
      %v5285 = vadd.f32 %v5114, %v5274
      %v5286 = vadd.f32 %v5115, %v5277
      %v5287 = vadd.f32 %v5116, %v5280
      %v5288 = vadd.f32 %v5117, %v5283
      %s5289 = scalar_lea.vmem %s10, 1344
      %v5290 = vld [vmem:[%s5289] sm:$0xff]
      %v5291 = vld [vmem:[%s5289 + $0x8] sm:$0xff]
      %v5292 = vld [vmem:[%s5289 + $0x10] sm:$0xff]
      %v5293 = vld [vmem:[%s5289 + $0x18] sm:$0xff]
      %v5294 = vld [vmem:[%s5289 + $0x20] sm:$0xff]
      %v5295 = vld [vmem:[%s5289 + $0x28] sm:$0xff]
      %v5296 = vld [vmem:[%s5289 + $0x30] sm:$0xff]
      %v5297 = vld [vmem:[%s5289 + $0x38] sm:$0xff]
      %v5298 = vld [vmem:[%s5289 + $0x40] sm:$0xff]
      %v5299 = vld [vmem:[%s5289 + $0x48] sm:$0xff]
      %v5300 = vld [vmem:[%s5289 + $0x50] sm:$0xff]
      %v5301 = vld [vmem:[%s5289 + $0x58] sm:$0xff]
      %v5302 = vld [vmem:[%s5289 + $0x60] sm:$0xff]
      %v5303 = vld [vmem:[%s5289 + $0x68] sm:$0xff]
      %v5304 = vld [vmem:[%s5289 + $0x70] sm:$0xff]
      %v5305 = vld [vmem:[%s5289 + $0x78] sm:$0xff]
      %v5306 = vld [vmem:[%s5289 + $0x80] sm:$0xff]
      %v5307 = vld [vmem:[%s5289 + $0x88] sm:$0xff]
      %v5308 = vld [vmem:[%s5289 + $0x90] sm:$0xff]
      %v5309 = vld [vmem:[%s5289 + $0x98] sm:$0xff]
      %v5310 = vld [vmem:[%s5289 + $0xa0] sm:$0xff]
      %v5311 = vld [vmem:[%s5289 + $0xa8] sm:$0xff]
      %v5312 = vld [vmem:[%s5289 + $0xb0] sm:$0xff]
      %v5313 = vld [vmem:[%s5289 + $0xb8] sm:$0xff]
      %v5314 = vld [vmem:[%s5289 + $0xc0] sm:$0xff]
      %v5315 = vld [vmem:[%s5289 + $0xc8] sm:$0xff]
      %v5316 = vld [vmem:[%s5289 + $0xd0] sm:$0xff]
      %v5317 = vld [vmem:[%s5289 + $0xd8] sm:$0xff]
      %v5318 = vld [vmem:[%s5289 + $0xe0] sm:$0xff]
      %v5319 = vld [vmem:[%s5289 + $0xe8] sm:$0xff]
      %v5320 = vld [vmem:[%s5289 + $0xf0] sm:$0xff]
      %v5321 = vld [vmem:[%s5289 + $0xf8] sm:$0xff]
      %v5322 = vld [vmem:[%s5289 + $0x100] sm:$0xff]
      %v5323 = vld [vmem:[%s5289 + $0x108] sm:$0xff]
      %v5324 = vld [vmem:[%s5289 + $0x110] sm:$0xff]
      %v5325 = vld [vmem:[%s5289 + $0x118] sm:$0xff]
      %v5326 = vld [vmem:[%s5289 + $0x120] sm:$0xff]
      %v5327 = vld [vmem:[%s5289 + $0x128] sm:$0xff]
      %v5328 = vld [vmem:[%s5289 + $0x130] sm:$0xff]
      %v5329 = vld [vmem:[%s5289 + $0x138] sm:$0xff]
      %v5330 = vld [vmem:[%s5289 + $0x140] sm:$0xff]
      %v5331 = vld [vmem:[%s5289 + $0x148] sm:$0xff]
      %v5332 = vrot.slane %v4561, 4
      %v5333 = vrot.slane %v4564, 4
      %v5334 = vsel %vm756, %v5332, %v5333
      %v5335 = vrot.slane %v4590, 4
      %v5336 = vrot.slane %v4593, 4
      %v5337 = vsel %vm756, %v5335, %v5336
      %v5338 = vrot.slane %v4619, 4
      %v5339 = vrot.slane %v4622, 4
      %v5340 = vsel %vm756, %v5338, %v5339
      %v5341 = vrot.slane %v4567, 4
      %v5342 = vsel %vm756, %v5333, %v5341
      %v5343 = vrot.slane %v4596, 4
      %v5344 = vsel %vm756, %v5336, %v5343
      %v5345 = vrot.slane %v4625, 4
      %v5346 = vsel %vm756, %v5339, %v5345
      %v5347 = vrot.slane %v4570, 4
      %v5348 = vsel %vm756, %v5341, %v5347
      %v5349 = vrot.slane %v4599, 4
      %v5350 = vsel %vm756, %v5343, %v5349
      %v5351 = vrot.slane %v4628, 4
      %v5352 = vsel %vm756, %v5345, %v5351
      %v5361 = vsel %vm4756, %v5340, 0
      %v5363 = vsel %vm4756, %v5346, 0
      %v5365 = vsel %vm4756, %v5352, 0
      %v5367 = vsel %vm4756, %v5351, 0
      %5369 = vmatpush.msra.mxu0 %v5305
      %5370 = vmatpush.msra.mxu0 %v5304
      %5371 = vmatpush.msra.mxu0 %v5303
      %5372 = vmatpush.msra.mxu0 %v5302
      %5373 = vmatpush.msra.mxu0 %v5301
      %5374 = vmatpush.msra.mxu0 %v5300
      %5375 = vmatpush.msra.mxu0 %v5299
      %5376 = vmatpush.msra.mxu0 %v5298
      %5377 = vmatpush.msra.mxu0 %v5297
      %5378 = vmatpush.msra.mxu0 %v5296
      %5379 = vmatpush.msra.mxu0 %v5295
      %5380 = vmatpush.msra.mxu0 %v5294
      %5381 = vmatpush.msra.mxu0 %v5293
      %5382 = vmatpush.msra.mxu0 %v5292
      %5383 = vmatpush.msra.mxu0 %v5291
      %5384 = vmatpush.msra.mxu0 %v5290
      %5385 = vmatmul.f32.gmra.mxu0 %v5334
      %v5386 = vpop.f32.mrf.mxu0
      %v5387 = vadd.f32 0.0, %v5386
      %5388 = vmatmul.f32.gmra.mxu0 %v5342
      %v5389 = vpop.f32.mrf.mxu0
      %v5390 = vadd.f32 0.0, %v5389
      %5391 = vmatmul.f32.gmra.mxu0 %v5348
      %v5392 = vpop.f32.mrf.mxu0
      %v5393 = vadd.f32 0.0, %v5392
      %5394 = vmatmul.f32.gmra.mxu0 %v5347
      %v5395 = vpop.f32.mrf.mxu0
      %v5396 = vadd.f32 0.0, %v5395
      %5397 = vdwg.mxu0
      %5398 = vmatpush.msra.mxu0 %v5321
      %5399 = vmatpush.msra.mxu0 %v5320
      %5400 = vmatpush.msra.mxu0 %v5319
      %5401 = vmatpush.msra.mxu0 %v5318
      %5402 = vmatpush.msra.mxu0 %v5317
      %5403 = vmatpush.msra.mxu0 %v5316
      %5404 = vmatpush.msra.mxu0 %v5315
      %5405 = vmatpush.msra.mxu0 %v5314
      %5406 = vmatpush.msra.mxu0 %v5313
      %5407 = vmatpush.msra.mxu0 %v5312
      %5408 = vmatpush.msra.mxu0 %v5311
      %5409 = vmatpush.msra.mxu0 %v5310
      %5410 = vmatpush.msra.mxu0 %v5309
      %5411 = vmatpush.msra.mxu0 %v5308
      %5412 = vmatpush.msra.mxu0 %v5307
      %5413 = vmatpush.msra.mxu0 %v5306
      %5414 = vmatmul.f32.gmra.mxu0 %v5337
      %v5415 = vpop.f32.mrf.mxu0
      %v5416 = vadd.f32 %v5387, %v5415
      %5417 = vmatmul.f32.gmra.mxu0 %v5344
      %v5418 = vpop.f32.mrf.mxu0
      %v5419 = vadd.f32 %v5390, %v5418
      %5420 = vmatmul.f32.gmra.mxu0 %v5350
      %v5421 = vpop.f32.mrf.mxu0
      %v5422 = vadd.f32 %v5393, %v5421
      %5423 = vmatmul.f32.gmra.mxu0 %v5349
      %v5424 = vpop.f32.mrf.mxu0
      %v5425 = vadd.f32 %v5396, %v5424
      %5426 = vdwg.mxu0
      %5427 = vmatpush.msra.mxu0 0.0
      %5428 = vmatpush.msra.mxu0 0.0
      %5429 = vmatpush.msra.mxu0 0.0
      %5430 = vmatpush.msra.mxu0 0.0
      %5431 = vmatpush.msra.mxu0 0.0
      %5432 = vmatpush.msra.mxu0 0.0
      %5433 = vmatpush.msra.mxu0 %v5331
      %5434 = vmatpush.msra.mxu0 %v5330
      %5435 = vmatpush.msra.mxu0 %v5329
      %5436 = vmatpush.msra.mxu0 %v5328
      %5437 = vmatpush.msra.mxu0 %v5327
      %5438 = vmatpush.msra.mxu0 %v5326
      %5439 = vmatpush.msra.mxu0 %v5325
      %5440 = vmatpush.msra.mxu0 %v5324
      %5441 = vmatpush.msra.mxu0 %v5323
      %5442 = vmatpush.msra.mxu0 %v5322
      %5443 = vmatmul.f32.gmra.mxu0 %v5361
      %v5444 = vpop.f32.mrf.mxu0
      %v5445 = vadd.f32 %v5416, %v5444
      %5446 = vmatmul.f32.gmra.mxu0 %v5363
      %v5447 = vpop.f32.mrf.mxu0
      %v5448 = vadd.f32 %v5419, %v5447
      %5449 = vmatmul.f32.gmra.mxu0 %v5365
      %v5450 = vpop.f32.mrf.mxu0
      %v5451 = vadd.f32 %v5422, %v5450
      %5452 = vmatmul.f32.gmra.mxu0 %v5367
      %v5453 = vpop.f32.mrf.mxu0
      %v5454 = vadd.f32 %v5425, %v5453
      %5455 = vdwg.mxu0
      %v5456 = vadd.f32 %v5285, %v5445
      %v5457 = vadd.f32 %v5286, %v5448
      %v5458 = vadd.f32 %v5287, %v5451
      %v5459 = vadd.f32 %v5288, %v5454
      %v5460 = vld [vmem:[%s11] sm:$0x1]
      %v5462 = vperm.slane %v5460, 0
      %v5464 = vadd.f32 %v5456, %v5462
      %v5465 = vadd.f32 %v5457, %v5462
      %v5466 = vadd.f32 %v5458, %v5462
      %v5467 = vadd.f32 %v5459, %v5462
      %v5468 = vxor.u32 %v5464, 2147483648
      %v5469 = vxor.u32 %v5465, 2147483648
      %v5470 = vxor.u32 %v5466, 2147483648
      %v5471 = vxor.u32 %v5467, 2147483648
      %v5472 = vmul.f32 %v5468, 1.442695
      %v5473 = vpow.pop %v5472
      %v5474 = vmul.f32 %v5469, 1.442695
      %v5475 = vpow.pop %v5474
      %v5476 = vmul.f32 %v5470, 1.442695
      %v5477 = vpow.pop %v5476
      %v5478 = vmul.f32 %v5471, 1.442695
      %v5479 = vpow.pop %v5478
      %v5480 = vadd.f32 %v5473, 1.0
      %v5481 = vadd.f32 %v5475, 1.0
      %v5482 = vadd.f32 %v5477, 1.0
      %v5483 = vadd.f32 %v5479, 1.0
      %v5484 = vrcp.pop %v5480
      %v5485 = vmul.f32 %v5480, %v5484
      %v5486 = vsub.f32 1.0, %v5485
      %v5487 = vmul.f32 %v5484, %v5486
      %v5488 = vadd.f32 %v5484, %v5487
      %vm5489 = vweird.f32 %v5480
      %vm5490 = vweird.f32 %v5484
      %vm5491 = vmor %vm5489, %vm5490
      %v5492 = vsel %vm5491, %v5484, %v5488
      %v5493 = vand.u32 2147483647, %v5480
      %vm5494 = vcmp.eq.f32.partialorder %v5493, 8.507059e+37
      %v5495 = vand.u32 %v5480, 2147483648
      %v5496 = vor.u32 1.1754944e-38, %v5495
      %v5497 = vsel %vm5494, %v5496, %v5492
      %v5498 = vmul.f32 1.0, %v5497
      %v5499 = vrcp.pop %v5481
      %v5500 = vmul.f32 %v5481, %v5499
      %v5501 = vsub.f32 1.0, %v5500
      %v5502 = vmul.f32 %v5499, %v5501
      %v5503 = vadd.f32 %v5499, %v5502
      %vm5504 = vweird.f32 %v5481
      %vm5505 = vweird.f32 %v5499
      %vm5506 = vmor %vm5504, %vm5505
      %v5507 = vsel %vm5506, %v5499, %v5503
      %v5508 = vand.u32 2147483647, %v5481
      %vm5509 = vcmp.eq.f32.partialorder %v5508, 8.507059e+37
      %v5510 = vand.u32 %v5481, 2147483648
      %v5511 = vor.u32 1.1754944e-38, %v5510
      %v5512 = vsel %vm5509, %v5511, %v5507
      %v5513 = vmul.f32 1.0, %v5512
      %v5514 = vrcp.pop %v5482
      %v5515 = vmul.f32 %v5482, %v5514
      %v5516 = vsub.f32 1.0, %v5515
      %v5517 = vmul.f32 %v5514, %v5516
      %v5518 = vadd.f32 %v5514, %v5517
      %vm5519 = vweird.f32 %v5482
      %vm5520 = vweird.f32 %v5514
      %vm5521 = vmor %vm5519, %vm5520
      %v5522 = vsel %vm5521, %v5514, %v5518
      %v5523 = vand.u32 2147483647, %v5482
      %vm5524 = vcmp.eq.f32.partialorder %v5523, 8.507059e+37
      %v5525 = vand.u32 %v5482, 2147483648
      %v5526 = vor.u32 1.1754944e-38, %v5525
      %v5527 = vsel %vm5524, %v5526, %v5522
      %v5528 = vmul.f32 1.0, %v5527
      %v5529 = vrcp.pop %v5483
      %v5530 = vmul.f32 %v5483, %v5529
      %v5531 = vsub.f32 1.0, %v5530
      %v5532 = vmul.f32 %v5529, %v5531
      %v5533 = vadd.f32 %v5529, %v5532
      %vm5534 = vweird.f32 %v5483
      %vm5535 = vweird.f32 %v5529
      %vm5536 = vmor %vm5534, %vm5535
      %v5537 = vsel %vm5536, %v5529, %v5533
      %v5538 = vand.u32 2147483647, %v5483
      %vm5539 = vcmp.eq.f32.partialorder %v5538, 8.507059e+37
      %v5540 = vand.u32 %v5483, 2147483648
      %v5541 = vor.u32 1.1754944e-38, %v5540
      %v5542 = vsel %vm5539, %v5541, %v5537
      %v5543 = vmul.f32 1.0, %v5542
      %vm5544 = vcmask 228352
      %5545 = vst.msk [vmem:[%s407] sm:$0xff] %vm5544, %v5498
      %5546 = vst.msk [vmem:[%s407 + $0x8] sm:$0xff] %vm5544, %v5513
      %5547 = vst.msk [vmem:[%s407 + $0x10] sm:$0xff] %vm5544, %v5528
      %vm5548 = vcmask 224256
      %5549 = vst.msk [vmem:[%s407 + $0x18] sm:$0xf] %vm5548, %v5543
      %p5550 = scmp.lt.s32.totalorder %s23, 1
      %s5551 = scalar_select %p5550, %s23, 1
      %s5552 = smul.addr %s5551, 4
      %s5553 = smul.addr %s5552, 8
      %s5554 = scalar_lea.vmem %s12, %s5553
      // Predicated region
      $region69: #{decoder_forward.1} parent=67 // pred_check
        %p5555 = pneg %p298
      $region70: #{decoder_forward.1} parent=67 // pred_check_branch
        %5557 = sbr.rel (%p5555) target = $region72
      $region71: #{decoder_forward.1} parent=67 // pred_region
        _
      $region72: #{decoder_forward.1} parent=67 // pred_fallthru
        _
    $region68: #{decoder_forward.1} parent=5 // pred_fallthru
      _
    %p5558 = scmp.le.s32.totalorder 2, %s18
    // Predicated region
    $region73: #{decoder_forward.1} parent=5 // pred_check
      %p5559 = pneg %p5558
    $region74: #{decoder_forward.1} parent=5 // pred_check_branch
      %5561 = sbr.rel (%p5559) target = $region76
    $region75: #{decoder_forward.1} parent=5 // pred_region
      %s5562 = ssub.s32 %s18, 2
      // Predicated region
      $region77: #{decoder_forward.1} parent=75 // pred_check
        %p5563 = pneg %p304
      $region78: #{decoder_forward.1} parent=75 // pred_check_branch
        %5565 = sbr.rel (%p5563) target = $region80
      $region79: #{decoder_forward.1} parent=75 // pred_region
        %p5566 = scmp.lt.s32.totalorder %s24, 1
        %s5567 = scalar_select %p5566, %s24, 1
        %s5568 = smul.addr %s5567, 4
        %s5569 = smul.addr %s5568, 8
        %s5570 = scalar_lea.vmem %s12, %s5569
      $region80: #{decoder_forward.1} parent=75 // pred_fallthru
        _
    $region76: #{decoder_forward.1} parent=5 // pred_fallthru
      _
  $region6: #{decoder_forward.1} parent=0 // loop_footer
    %s22 = sadd.s32 1, %s18
  $region7: #{decoder_forward.1} parent=0 // loop_footer_branch
    %17 = sbr.rel target = $region3
  $region8: #{decoder_forward.1} parent=0 // loop_exit
    _

</llo_original>
